<compile_context>
chip_gen: v7x
topology: tpu7x:2x2x1
jax: 0.10.0
libtpu: 0.0.40
codegen_flags: <defaults>
</compile_context>

<pallas_src>
import functools
import math

import jax
import jax.numpy as jnp
from jax.experimental import pallas as pl
from jax.experimental.pallas import tpu as pltpu

_EPS = 1e-5


# ---------------------------------------------------------------------------
# In-kernel helpers (pure functions on VMEM-resident values).
# ---------------------------------------------------------------------------

def _layernorm(x, g, b, eps):
    """Row-wise LayerNorm in f32; g/b are (1, D)."""
    mean = jnp.mean(x, axis=-1, keepdims=True)
    var = jnp.mean(jnp.square(x - mean), axis=-1, keepdims=True)
    return (x - mean) * jax.lax.rsqrt(var + eps) * g + b


def _mm(a_f32, w_bf16):
    """a:(M,K) f32 activation, w:(K,N) bf16 weight -> f32 via MXU."""
    return jnp.dot(a_f32.astype(jnp.bfloat16), w_bf16,
                   preferred_element_type=jnp.float32)


def _mha(q, k, v, nhead, dh):
    """Multi-head attention on VMEM values.

    q: (Lq, D) f32, already scaled by 1/sqrt(dh).  k, v: (Lk, D) f32.
    Heads are static lane slices; score / PV matmuls use bf16 operands with
    f32 accumulation; softmax stays f32 with an EUP approximate reciprocal.
    """
    outs = []
    for h in range(nhead):
        sl = slice(h * dh, (h + 1) * dh)
        qh = q[:, sl].astype(jnp.bfloat16)
        kh = k[:, sl].astype(jnp.bfloat16)
        vh = v[:, sl].astype(jnp.bfloat16)
        s = jax.lax.dot_general(qh, kh, (((1,), (1,)), ((), ())),
                                preferred_element_type=jnp.float32)  # (Lq, Lk)
        m = jnp.max(s, axis=-1, keepdims=True)
        p = jnp.exp(s - m)
        p = p * pl.reciprocal(jnp.sum(p, axis=-1, keepdims=True), approx=True)
        outs.append(jnp.dot(p.astype(jnp.bfloat16), vh,
                            preferred_element_type=jnp.float32))      # (Lq, dh)
    return jnp.concatenate(outs, axis=-1)                             # (Lq, D)


# ---------------------------------------------------------------------------
# Fused layer kernels (one grid step == one batch element).
# ---------------------------------------------------------------------------

def _encoder_layer_kernel(x_ref,
                          n1_g, n1_b,
                          sa_w, sa_b, sa_ow, sa_ob,
                          n2_g, n2_b,
                          l1_w, l1_b, l2_w, l2_b,
                          fin_g, fin_b,
                          o_ref, *, nhead, eps, apply_final_norm):
    x = x_ref[0].astype(jnp.float32)                      # (L, D)
    d = x.shape[-1]
    dh = d // nhead
    scale = 1.0 / math.sqrt(dh)

    # ---- self-attention sub-layer (pre-norm) ----
    x2 = _layernorm(x, n1_g[...], n1_b[...], eps)
    qkv = _mm(x2, sa_w[...]) + sa_b[...]                  # (L, 3D)
    attn = _mha(qkv[:, :d] * scale, qkv[:, d:2 * d], qkv[:, 2 * d:], nhead, dh)
    x = x + _mm(attn, sa_ow[...]) + sa_ob[...]            # residual fused

    # ---- FFN sub-layer (pre-norm) ----
    x2 = _layernorm(x, n2_g[...], n2_b[...], eps)
    h = jnp.maximum(_mm(x2, l1_w[...]) + l1_b[...], 0.0)  # ReLU
    x = x + _mm(h, l2_w[...]) + l2_b[...]

    if apply_final_norm:                                  # encoder final norm
        x = _layernorm(x, fin_g[...], fin_b[...], eps)
    o_ref[0] = x.astype(o_ref.dtype)


def _decoder_layer_kernel(tgt_ref, mem_ref,
                          n1_g, n1_b,
                          sa_w, sa_b, sa_ow, sa_ob,
                          n2_g, n2_b,
                          ca_qw, ca_qb, ca_kvw, ca_kvb, ca_ow, ca_ob,
                          n3_g, n3_b,
                          l1_w, l1_b, l2_w, l2_b,
                          fin_g, fin_b,
                          o_ref, *, nhead, eps, apply_final_norm):
    t = tgt_ref[0].astype(jnp.float32)                    # (Lq, D)
    mem = mem_ref[0].astype(jnp.float32)                  # (Lk, D)
    d = t.shape[-1]
    dh = d // nhead
    scale = 1.0 / math.sqrt(dh)

    # ---- self-attention sub-layer (pre-norm) ----
    x2 = _layernorm(t, n1_g[...], n1_b[...], eps)
    qkv = _mm(x2, sa_w[...]) + sa_b[...]
    attn = _mha(qkv[:, :d] * scale, qkv[:, d:2 * d], qkv[:, 2 * d:], nhead, dh)
    t = t + _mm(attn, sa_ow[...]) + sa_ob[...]

    # ---- cross-attention sub-layer (pre-norm; q from tgt, k/v from memory) ----
    x2 = _layernorm(t, n2_g[...], n2_b[...], eps)
    q = _mm(x2, ca_qw[...]) + ca_qb[...]                  # (Lq, D)
    kv = _mm(mem, ca_kvw[...]) + ca_kvb[...]              # (Lk, 2D)
    attn = _mha(q * scale, kv[:, :d], kv[:, d:], nhead, dh)
    t = t + _mm(attn, ca_ow[...]) + ca_ob[...]

    # ---- FFN sub-layer (pre-norm) ----
    x2 = _layernorm(t, n3_g[...], n3_b[...], eps)
    h = jnp.maximum(_mm(x2, l1_w[...]) + l1_b[...], 0.0)
    t = t + _mm(h, l2_w[...]) + l2_b[...]

    if apply_final_norm:                                  # decoder final norm
        t = _layernorm(t, fin_g[...], fin_b[...], eps)
    o_ref[0] = t.astype(o_ref.dtype)


# ---------------------------------------------------------------------------
# pallas_call wrappers.
# ---------------------------------------------------------------------------

def _full_spec(shape):
    """Whole-array block, same block for every grid step (no re-DMA)."""
    n = len(shape)
    return pl.BlockSpec(shape, lambda *_: (0,) * n)


def _batch_spec(l, d):
    """(1, L, D) block indexed by the batch grid axis."""
    return pl.BlockSpec((1, l, d), lambda i: (i, 0, 0))


def encoder_layer(x, p, enc_fin, nhead, apply_final_norm):
    b, seq, d = x.shape
    ff = p["l1_w"].shape[1]
    kern = functools.partial(_encoder_layer_kernel, nhead=nhead, eps=_EPS,
                             apply_final_norm=apply_final_norm)
    in_specs = [
        _batch_spec(seq, d),                              # x
        _full_spec((1, d)), _full_spec((1, d)),           # norm1
        _full_spec((d, 3 * d)), _full_spec((1, 3 * d)),   # self-attn in-proj
        _full_spec((d, d)), _full_spec((1, d)),           # self-attn out-proj
        _full_spec((1, d)), _full_spec((1, d)),           # norm2
        _full_spec((d, ff)), _full_spec((1, ff)),         # linear1
        _full_spec((ff, d)), _full_spec((1, d)),          # linear2
        _full_spec((1, d)), _full_spec((1, d)),           # encoder final norm
    ]
    return pl.pallas_call(
        kern,
        out_shape=jax.ShapeDtypeStruct((b, seq, d), x.dtype),
        grid=(b,),
        in_specs=in_specs,
        out_specs=_batch_spec(seq, d),
        compiler_params=pltpu.CompilerParams(dimension_semantics=("parallel",)),
    )(x,
      p["n1_g"], p["n1_b"],
      p["sa_in_w"], p["sa_in_b"], p["sa_out_w"], p["sa_out_b"],
      p["n2_g"], p["n2_b"],
      p["l1_w"], p["l1_b"], p["l2_w"], p["l2_b"],
      enc_fin[0], enc_fin[1])


def decoder_layer(tgt, memory, p, dec_fin, nhead, apply_final_norm):
    b, lq, d = tgt.shape
    lk = memory.shape[1]
    ff = p["l1_w"].shape[1]
    kern = functools.partial(_decoder_layer_kernel, nhead=nhead, eps=_EPS,
                             apply_final_norm=apply_final_norm)
    in_specs = [
        _batch_spec(lq, d),                               # tgt
        _batch_spec(lk, d),                               # memory
        _full_spec((1, d)), _full_spec((1, d)),           # norm1
        _full_spec((d, 3 * d)), _full_spec((1, 3 * d)),   # self-attn in-proj
        _full_spec((d, d)), _full_spec((1, d)),           # self-attn out-proj
        _full_spec((1, d)), _full_spec((1, d)),           # norm2
        _full_spec((d, d)), _full_spec((1, d)),           # cross-attn q-proj
        _full_spec((d, 2 * d)), _full_spec((1, 2 * d)),   # cross-attn kv-proj
        _full_spec((d, d)), _full_spec((1, d)),           # cross-attn out-proj
        _full_spec((1, d)), _full_spec((1, d)),           # norm3
        _full_spec((d, ff)), _full_spec((1, ff)),         # linear1
        _full_spec((ff, d)), _full_spec((1, d)),          # linear2
        _full_spec((1, d)), _full_spec((1, d)),           # decoder final norm
    ]
    return pl.pallas_call(
        kern,
        out_shape=jax.ShapeDtypeStruct((b, lq, d), tgt.dtype),
        grid=(b,),
        in_specs=in_specs,
        out_specs=_batch_spec(lq, d),
        compiler_params=pltpu.CompilerParams(dimension_semantics=("parallel",)),
    )(tgt, memory,
      p["n1_g"], p["n1_b"],
      p["sa_in_w"], p["sa_in_b"], p["sa_out_w"], p["sa_out_b"],
      p["n2_g"], p["n2_b"],
      p["ca_q_w"], p["ca_q_b"], p["ca_kv_w"], p["ca_kv_b"],
      p["ca_out_w"], p["ca_out_b"],
      p["n3_g"], p["n3_b"],
      p["l1_w"], p["l1_b"], p["l2_w"], p["l2_b"],
      dec_fin[0], dec_fin[1])


def transformer_forward(params, src, query_embed, nhead):
    """src: (bs, c, w), query_embed: (bs, nq, c) -> (bs, nq, c).

    Works in batch-major (B, L, D) layout; identical math to the reference's
    (L, N, E) layout since MHA is batch-independent.  The output already
    matches the reference's `hs.transpose(0, 1)`.
    """
    x = jnp.transpose(src, (0, 2, 1))            # (bs, w, c)
    tgt = query_embed                            # (bs, nq, c)

    enc_layers = params["enc_layers"]
    enc_fin = (params["enc_norm_g"], params["enc_norm_b"])
    mem = x
    for i, p in enumerate(enc_layers):
        mem = encoder_layer(mem, p, enc_fin, nhead,
                            apply_final_norm=(i == len(enc_layers) - 1))

    dec_layers = params["dec_layers"]
    dec_fin = (params["dec_norm_g"], params["dec_norm_b"])
    out = tgt
    for i, p in enumerate(dec_layers):
        out = decoder_layer(out, mem, p, dec_fin, nhead,
                            apply_final_norm=(i == len(dec_layers) - 1))
    return out                                   # (bs, nq, c)


# ---------------------------------------------------------------------------
# Parameter init (deterministic, mirrors the module's shapes).  Matmul weights
# are stored bf16 (MXU operands); biases / LayerNorm affine stay f32.
# NOTE: in-proj weights are stored as (d, 3d) = W^T (x @ W layout); loading a
# real PyTorch checkpoint would require transposing in_proj_weight.
# ---------------------------------------------------------------------------

def _xavier(key, shape):
    bound = math.sqrt(6.0 / (shape[0] + shape[1]))
    return jax.random.uniform(key, shape, jnp.float32, -bound, bound)


def _init_mha(key, d, prefix):
    k1, k2 = jax.random.split(key)
    return {
        f"{prefix}_in_w": _xavier(k1, (d, 3 * d)).astype(jnp.bfloat16),
        f"{prefix}_in_b": jnp.zeros((1, 3 * d), jnp.float32),
        f"{prefix}_out_w": _xavier(k2, (d, d)).astype(jnp.bfloat16),
        f"{prefix}_out_b": jnp.zeros((1, d), jnp.float32),
    }


def _init_cross_attn(key, d):
    k1, k2 = jax.random.split(key)
    in_w = _xavier(k1, (d, 3 * d))            # split once here, not per forward
    return {
        "ca_q_w": in_w[:, :d].astype(jnp.bfloat16),
        "ca_q_b": jnp.zeros((1, d), jnp.float32),
        "ca_kv_w": in_w[:, d:].astype(jnp.bfloat16),
        "ca_kv_b": jnp.zeros((1, 2 * d), jnp.float32),
        "ca_out_w": _xavier(k2, (d, d)).astype(jnp.bfloat16),
        "ca_out_b": jnp.zeros((1, d), jnp.float32),
    }


def _init_ffn(key, d, ff):
    k1, k2 = jax.random.split(key)
    return {
        "l1_w": _xavier(k1, (d, ff)).astype(jnp.bfloat16),
        "l1_b": jnp.zeros((1, ff), jnp.float32),
        "l2_w": _xavier(k2, (ff, d)).astype(jnp.bfloat16),
        "l2_b": jnp.zeros((1, d), jnp.float32),
    }


def _ln_params(d):
    return jnp.ones((1, d), jnp.float32), jnp.zeros((1, d), jnp.float32)


def init_transformer_params(key, d_model, dim_feedforward,
                            num_encoder_layers, num_decoder_layers):
    params = {"enc_layers": [], "dec_layers": []}
    for _ in range(num_encoder_layers):
        key, k_sa, k_ffn = jax.random.split(key, 3)
        p = {}
        p.update(_init_mha(k_sa, d_model, "sa"))
        p.update(_init_ffn(k_ffn, d_model, dim_feedforward))
        p["n1_g"], p["n1_b"] = _ln_params(d_model)
        p["n2_g"], p["n2_b"] = _ln_params(d_model)
        params["enc_layers"].append(p)
    for _ in range(num_decoder_layers):
        key, k_sa, k_ca, k_ffn = jax.random.split(key, 4)
        p = {}
        p.update(_init_mha(k_sa, d_model, "sa"))
        p.update(_init_cross_attn(k_ca, d_model))
        p.update(_init_ffn(k_ffn, d_model, dim_feedforward))
        p["n1_g"], p["n1_b"] = _ln_params(d_model)
        p["n2_g"], p["n2_b"] = _ln_params(d_model)
        p["n3_g"], p["n3_b"] = _ln_params(d_model)
        params["dec_layers"].append(p)
    params["enc_norm_g"], params["enc_norm_b"] = _ln_params(d_model)
    params["dec_norm_g"], params["dec_norm_b"] = _ln_params(d_model)
    return params


# ----------------------------------- main -----------------------------------

if __name__ == "__main__":
    d_model = 32
    nhead = 4
    num_encoder_layers = 2
    num_decoder_layers = 2
    dim_feedforward = 64
    bs, seq_len, num_queries = 2, 8, 8

    root = jax.random.PRNGKey(0)
    kp, ks, kq = jax.random.split(root, 3)

    params = init_transformer_params(kp, d_model, dim_feedforward,
                                     num_encoder_layers, num_decoder_layers)

    src = jax.random.normal(ks, (bs, d_model, seq_len), jnp.float32)      # (bs, c, w)
    query_embed = jax.random.normal(kq, (bs, num_queries, d_model), jnp.float32)

    fwd = jax.jit(functools.partial(transformer_forward, nhead=nhead))
    hs = fwd(params, src, query_embed)
    hs = jax.block_until_ready(hs)

    assert hs.shape == (bs, num_queries, d_model)
    assert bool(jnp.all(jnp.isfinite(hs)))
    print("KERNEL_OK")
</pallas_src>

<mosaic_0001>
module attributes {stable_mosaic.version = 11 : i64} {
  func.func @_decoder_layer_kernel(%arg0: i32, %arg1: memref<1x8x32xf32, #tpu.memory_space<vmem>>, %arg2: memref<1x8x32xf32, #tpu.memory_space<vmem>>, %arg3: memref<1x32xf32, #tpu.memory_space<vmem>>, %arg4: memref<1x32xf32, #tpu.memory_space<vmem>>, %arg5: memref<32x96xbf16, #tpu.memory_space<vmem>>, %arg6: memref<1x96xf32, #tpu.memory_space<vmem>>, %arg7: memref<32x32xbf16, #tpu.memory_space<vmem>>, %arg8: memref<1x32xf32, #tpu.memory_space<vmem>>, %arg9: memref<1x32xf32, #tpu.memory_space<vmem>>, %arg10: memref<1x32xf32, #tpu.memory_space<vmem>>, %arg11: memref<32x32xbf16, #tpu.memory_space<vmem>>, %arg12: memref<1x32xf32, #tpu.memory_space<vmem>>, %arg13: memref<32x64xbf16, #tpu.memory_space<vmem>>, %arg14: memref<1x64xf32, #tpu.memory_space<vmem>>, %arg15: memref<32x32xbf16, #tpu.memory_space<vmem>>, %arg16: memref<1x32xf32, #tpu.memory_space<vmem>>, %arg17: memref<1x32xf32, #tpu.memory_space<vmem>>, %arg18: memref<1x32xf32, #tpu.memory_space<vmem>>, %arg19: memref<32x64xbf16, #tpu.memory_space<vmem>>, %arg20: memref<1x64xf32, #tpu.memory_space<vmem>>, %arg21: memref<64x32xbf16, #tpu.memory_space<vmem>>, %arg22: memref<1x32xf32, #tpu.memory_space<vmem>>, %arg23: memref<1x32xf32, #tpu.memory_space<vmem>>, %arg24: memref<1x32xf32, #tpu.memory_space<vmem>>, %arg25: memref<1x8x32xf32, #tpu.memory_space<vmem>>) attributes {dimension_semantics = [#tpu.dimension_semantics<parallel>], iteration_bounds = array<i64: 2>, scalar_prefetch = 0 : i64, scratch_operands = 0 : i64, tpu.core_type = #tpu.core_type<tc>, window_params = [{transform_indices = @transform_0, window_bounds = array<i64: 1, 8, 32>}, {transform_indices = @transform_1, window_bounds = array<i64: 1, 8, 32>}, {pipeline_mode = #tpu.pipeline_mode<synchronous>, transform_indices = @transform_2, window_bounds = array<i64: 1, 32>}, {pipeline_mode = #tpu.pipeline_mode<synchronous>, transform_indices = @transform_3, window_bounds = array<i64: 1, 32>}, {pipeline_mode = #tpu.pipeline_mode<synchronous>, transform_indices = @transform_4, window_bounds = array<i64: 32, 96>}, {pipeline_mode = #tpu.pipeline_mode<synchronous>, transform_indices = @transform_5, window_bounds = array<i64: 1, 96>}, {pipeline_mode = #tpu.pipeline_mode<synchronous>, transform_indices = @transform_6, window_bounds = array<i64: 32, 32>}, {pipeline_mode = #tpu.pipeline_mode<synchronous>, transform_indices = @transform_7, window_bounds = array<i64: 1, 32>}, {pipeline_mode = #tpu.pipeline_mode<synchronous>, transform_indices = @transform_8, window_bounds = array<i64: 1, 32>}, {pipeline_mode = #tpu.pipeline_mode<synchronous>, transform_indices = @transform_9, window_bounds = array<i64: 1, 32>}, {pipeline_mode = #tpu.pipeline_mode<synchronous>, transform_indices = @transform_10, window_bounds = array<i64: 32, 32>}, {pipeline_mode = #tpu.pipeline_mode<synchronous>, transform_indices = @transform_11, window_bounds = array<i64: 1, 32>}, {pipeline_mode = #tpu.pipeline_mode<synchronous>, transform_indices = @transform_12, window_bounds = array<i64: 32, 64>}, {pipeline_mode = #tpu.pipeline_mode<synchronous>, transform_indices = @transform_13, window_bounds = array<i64: 1, 64>}, {pipeline_mode = #tpu.pipeline_mode<synchronous>, transform_indices = @transform_14, window_bounds = array<i64: 32, 32>}, {pipeline_mode = #tpu.pipeline_mode<synchronous>, transform_indices = @transform_15, window_bounds = array<i64: 1, 32>}, {pipeline_mode = #tpu.pipeline_mode<synchronous>, transform_indices = @transform_16, window_bounds = array<i64: 1, 32>}, {pipeline_mode = #tpu.pipeline_mode<synchronous>, transform_indices = @transform_17, window_bounds = array<i64: 1, 32>}, {pipeline_mode = #tpu.pipeline_mode<synchronous>, transform_indices = @transform_18, window_bounds = array<i64: 32, 64>}, {pipeline_mode = #tpu.pipeline_mode<synchronous>, transform_indices = @transform_19, window_bounds = array<i64: 1, 64>}, {pipeline_mode = #tpu.pipeline_mode<synchronous>, transform_indices = @transform_20, window_bounds = array<i64: 64, 32>}, {pipeline_mode = #tpu.pipeline_mode<synchronous>, transform_indices = @transform_21, window_bounds = array<i64: 1, 32>}, {pipeline_mode = #tpu.pipeline_mode<synchronous>, transform_indices = @transform_22, window_bounds = array<i64: 1, 32>}, {pipeline_mode = #tpu.pipeline_mode<synchronous>, transform_indices = @transform_23, window_bounds = array<i64: 1, 32>}, {transform_indices = @transform_24, window_bounds = array<i64: 1, 8, 32>}]} {
    %c0 = arith.constant 0 : index
    %c0_0 = arith.constant 0 : index
    %c0_1 = arith.constant 0 : index
    %0 = vector.load %arg1[%c0, %c0_0, %c0_1] : memref<1x8x32xf32, #tpu.memory_space<vmem>>, vector<1x8x32xf32>
    %1 = vector.shape_cast %0 : vector<1x8x32xf32> to vector<8x32xf32>
    %c0_2 = arith.constant 0 : index
    %c0_3 = arith.constant 0 : index
    %c0_4 = arith.constant 0 : index
    %2 = vector.load %arg2[%c0_2, %c0_3, %c0_4] : memref<1x8x32xf32, #tpu.memory_space<vmem>>, vector<1x8x32xf32>
    %3 = vector.shape_cast %2 : vector<1x8x32xf32> to vector<8x32xf32>
    %c0_5 = arith.constant 0 : index
    %c0_6 = arith.constant 0 : index
    %4 = vector.load %arg3[%c0_5, %c0_6] : memref<1x32xf32, #tpu.memory_space<vmem>>, vector<1x32xf32>
    %c0_7 = arith.constant 0 : index
    %c0_8 = arith.constant 0 : index
    %5 = vector.load %arg4[%c0_7, %c0_8] : memref<1x32xf32, #tpu.memory_space<vmem>>, vector<1x32xf32>
    %cst = arith.constant dense<0.000000e+00> : vector<8xf32>
    %6 = vector.multi_reduction <add>, %1, %cst [1] : vector<8x32xf32> to vector<8xf32>
    %7 = vector.shape_cast %6 : vector<8xf32> to vector<8x1xf32>
    %cst_9 = arith.constant 3.200000e+01 : f32
    %8 = vector.broadcast %cst_9 : f32 to vector<8x1xf32>
    %9 = arith.divf %7, %8 : vector<8x1xf32>
    %10 = vector.broadcast %9 : vector<8x1xf32> to vector<8x32xf32>
    %11 = arith.subf %1, %10 : vector<8x32xf32>
    %12 = arith.mulf %11, %11 : vector<8x32xf32>
    %cst_10 = arith.constant dense<0.000000e+00> : vector<8xf32>
    %13 = vector.multi_reduction <add>, %12, %cst_10 [1] : vector<8x32xf32> to vector<8xf32>
    %14 = vector.shape_cast %13 : vector<8xf32> to vector<8x1xf32>
    %cst_11 = arith.constant 3.200000e+01 : f32
    %15 = vector.broadcast %cst_11 : f32 to vector<8x1xf32>
    %16 = arith.divf %14, %15 : vector<8x1xf32>
    %17 = vector.broadcast %9 : vector<8x1xf32> to vector<8x32xf32>
    %18 = arith.subf %1, %17 : vector<8x32xf32>
    %cst_12 = arith.constant 9.99999974E-6 : f32
    %19 = vector.broadcast %cst_12 : f32 to vector<8x1xf32>
    %20 = arith.addf %16, %19 : vector<8x1xf32>
    %21 = math.rsqrt %20 : vector<8x1xf32>
    %22 = vector.broadcast %21 : vector<8x1xf32> to vector<8x32xf32>
    %23 = arith.mulf %18, %22 : vector<8x32xf32>
    %24 = vector.broadcast %4 : vector<1x32xf32> to vector<8x32xf32>
    %25 = arith.mulf %23, %24 : vector<8x32xf32>
    %26 = vector.broadcast %5 : vector<1x32xf32> to vector<8x32xf32>
    %27 = arith.addf %25, %26 : vector<8x32xf32>
    %c0_13 = arith.constant 0 : index
    %c0_14 = arith.constant 0 : index
    %28 = vector.load %arg5[%c0_13, %c0_14] : memref<32x96xbf16, #tpu.memory_space<vmem>>, vector<32x96xbf16>
    %29 = arith.truncf %27 : vector<8x32xf32> to vector<8x32xbf16>
    %cst_15 = arith.constant dense<0.000000e+00> : vector<8x96xf32>
    %30 = tpu.matmul %29, %28, %cst_15 {dimension_numbers = #tpu.dot_dimension_numbers<[1], [0], [0], [1], [0, 0, 1, 1], [], []>} : vector<8x32xbf16>, vector<32x96xbf16>, vector<8x96xf32> -> vector<8x96xf32>
    %c0_16 = arith.constant 0 : index
    %c0_17 = arith.constant 0 : index
    %31 = vector.load %arg6[%c0_16, %c0_17] : memref<1x96xf32, #tpu.memory_space<vmem>>, vector<1x96xf32>
    %32 = vector.broadcast %31 : vector<1x96xf32> to vector<8x96xf32>
    %33 = arith.addf %30, %32 : vector<8x96xf32>
    %34 = vector.extract_strided_slice %33 {offsets = [0, 0], sizes = [8, 32], strides = [1, 1]} : vector<8x96xf32> to vector<8x32xf32>
    %cst_18 = arith.constant 0.353553385 : f32
    %35 = vector.broadcast %cst_18 : f32 to vector<8x32xf32>
    %36 = arith.mulf %34, %35 : vector<8x32xf32>
    %37 = vector.extract_strided_slice %33 {offsets = [0, 32], sizes = [8, 32], strides = [1, 1]} : vector<8x96xf32> to vector<8x32xf32>
    %38 = vector.extract_strided_slice %33 {offsets = [0, 64], sizes = [8, 32], strides = [1, 1]} : vector<8x96xf32> to vector<8x32xf32>
    %39 = vector.extract_strided_slice %36 {offsets = [0, 0], sizes = [8, 8], strides = [1, 1]} : vector<8x32xf32> to vector<8x8xf32>
    %40 = arith.truncf %39 : vector<8x8xf32> to vector<8x8xbf16>
    %41 = vector.extract_strided_slice %37 {offsets = [0, 0], sizes = [8, 8], strides = [1, 1]} : vector<8x32xf32> to vector<8x8xf32>
    %42 = arith.truncf %41 : vector<8x8xf32> to vector<8x8xbf16>
    %43 = vector.extract_strided_slice %38 {offsets = [0, 0], sizes = [8, 8], strides = [1, 1]} : vector<8x32xf32> to vector<8x8xf32>
    %44 = arith.truncf %43 : vector<8x8xf32> to vector<8x8xbf16>
    %cst_19 = arith.constant dense<0.000000e+00> : vector<8x8xf32>
    %45 = tpu.matmul %40, %42, %cst_19 {dimension_numbers = #tpu.dot_dimension_numbers<[1], [1], [0], [0], [0, 0, 1, 0], [], []>} : vector<8x8xbf16>, vector<8x8xbf16>, vector<8x8xf32> -> vector<8x8xf32>
    %cst_20 = arith.constant dense<0xFF800000> : vector<8xf32>
    %46 = vector.multi_reduction <maximumf>, %45, %cst_20 [1] : vector<8x8xf32> to vector<8xf32>
    %47 = vector.shape_cast %46 : vector<8xf32> to vector<8x1xf32>
    %48 = vector.broadcast %47 : vector<8x1xf32> to vector<8x8xf32>
    %49 = arith.subf %45, %48 : vector<8x8xf32>
    %50 = math.exp %49 : vector<8x8xf32>
    %cst_21 = arith.constant dense<0.000000e+00> : vector<8xf32>
    %51 = vector.multi_reduction <add>, %50, %cst_21 [1] : vector<8x8xf32> to vector<8xf32>
    %52 = vector.shape_cast %51 : vector<8xf32> to vector<8x1xf32>
    %53 = tpu.reciprocal %52 {approx = true} : vector<8x1xf32> -> vector<8x1xf32>
    %54 = vector.broadcast %53 : vector<8x1xf32> to vector<8x8xf32>
    %55 = arith.mulf %50, %54 : vector<8x8xf32>
    %56 = arith.truncf %55 : vector<8x8xf32> to vector<8x8xbf16>
    %cst_22 = arith.constant dense<0.000000e+00> : vector<8x8xf32>
    %57 = tpu.matmul %56, %44, %cst_22 {dimension_numbers = #tpu.dot_dimension_numbers<[1], [0], [0], [1], [0, 0, 1, 1], [], []>} : vector<8x8xbf16>, vector<8x8xbf16>, vector<8x8xf32> -> vector<8x8xf32>
    %58 = vector.extract_strided_slice %36 {offsets = [0, 8], sizes = [8, 8], strides = [1, 1]} : vector<8x32xf32> to vector<8x8xf32>
    %59 = arith.truncf %58 : vector<8x8xf32> to vector<8x8xbf16>
    %60 = vector.extract_strided_slice %37 {offsets = [0, 8], sizes = [8, 8], strides = [1, 1]} : vector<8x32xf32> to vector<8x8xf32>
    %61 = arith.truncf %60 : vector<8x8xf32> to vector<8x8xbf16>
    %62 = vector.extract_strided_slice %38 {offsets = [0, 8], sizes = [8, 8], strides = [1, 1]} : vector<8x32xf32> to vector<8x8xf32>
    %63 = arith.truncf %62 : vector<8x8xf32> to vector<8x8xbf16>
    %cst_23 = arith.constant dense<0.000000e+00> : vector<8x8xf32>
    %64 = tpu.matmul %59, %61, %cst_23 {dimension_numbers = #tpu.dot_dimension_numbers<[1], [1], [0], [0], [0, 0, 1, 0], [], []>} : vector<8x8xbf16>, vector<8x8xbf16>, vector<8x8xf32> -> vector<8x8xf32>
    %cst_24 = arith.constant dense<0xFF800000> : vector<8xf32>
    %65 = vector.multi_reduction <maximumf>, %64, %cst_24 [1] : vector<8x8xf32> to vector<8xf32>
    %66 = vector.shape_cast %65 : vector<8xf32> to vector<8x1xf32>
    %67 = vector.broadcast %66 : vector<8x1xf32> to vector<8x8xf32>
    %68 = arith.subf %64, %67 : vector<8x8xf32>
    %69 = math.exp %68 : vector<8x8xf32>
    %cst_25 = arith.constant dense<0.000000e+00> : vector<8xf32>
    %70 = vector.multi_reduction <add>, %69, %cst_25 [1] : vector<8x8xf32> to vector<8xf32>
    %71 = vector.shape_cast %70 : vector<8xf32> to vector<8x1xf32>
    %72 = tpu.reciprocal %71 {approx = true} : vector<8x1xf32> -> vector<8x1xf32>
    %73 = vector.broadcast %72 : vector<8x1xf32> to vector<8x8xf32>
    %74 = arith.mulf %69, %73 : vector<8x8xf32>
    %75 = arith.truncf %74 : vector<8x8xf32> to vector<8x8xbf16>
    %cst_26 = arith.constant dense<0.000000e+00> : vector<8x8xf32>
    %76 = tpu.matmul %75, %63, %cst_26 {dimension_numbers = #tpu.dot_dimension_numbers<[1], [0], [0], [1], [0, 0, 1, 1], [], []>} : vector<8x8xbf16>, vector<8x8xbf16>, vector<8x8xf32> -> vector<8x8xf32>
    %77 = vector.extract_strided_slice %36 {offsets = [0, 16], sizes = [8, 8], strides = [1, 1]} : vector<8x32xf32> to vector<8x8xf32>
    %78 = arith.truncf %77 : vector<8x8xf32> to vector<8x8xbf16>
    %79 = vector.extract_strided_slice %37 {offsets = [0, 16], sizes = [8, 8], strides = [1, 1]} : vector<8x32xf32> to vector<8x8xf32>
    %80 = arith.truncf %79 : vector<8x8xf32> to vector<8x8xbf16>
    %81 = vector.extract_strided_slice %38 {offsets = [0, 16], sizes = [8, 8], strides = [1, 1]} : vector<8x32xf32> to vector<8x8xf32>
    %82 = arith.truncf %81 : vector<8x8xf32> to vector<8x8xbf16>
    %cst_27 = arith.constant dense<0.000000e+00> : vector<8x8xf32>
    %83 = tpu.matmul %78, %80, %cst_27 {dimension_numbers = #tpu.dot_dimension_numbers<[1], [1], [0], [0], [0, 0, 1, 0], [], []>} : vector<8x8xbf16>, vector<8x8xbf16>, vector<8x8xf32> -> vector<8x8xf32>
    %cst_28 = arith.constant dense<0xFF800000> : vector<8xf32>
    %84 = vector.multi_reduction <maximumf>, %83, %cst_28 [1] : vector<8x8xf32> to vector<8xf32>
    %85 = vector.shape_cast %84 : vector<8xf32> to vector<8x1xf32>
    %86 = vector.broadcast %85 : vector<8x1xf32> to vector<8x8xf32>
    %87 = arith.subf %83, %86 : vector<8x8xf32>
    %88 = math.exp %87 : vector<8x8xf32>
    %cst_29 = arith.constant dense<0.000000e+00> : vector<8xf32>
    %89 = vector.multi_reduction <add>, %88, %cst_29 [1] : vector<8x8xf32> to vector<8xf32>
    %90 = vector.shape_cast %89 : vector<8xf32> to vector<8x1xf32>
    %91 = tpu.reciprocal %90 {approx = true} : vector<8x1xf32> -> vector<8x1xf32>
    %92 = vector.broadcast %91 : vector<8x1xf32> to vector<8x8xf32>
    %93 = arith.mulf %88, %92 : vector<8x8xf32>
    %94 = arith.truncf %93 : vector<8x8xf32> to vector<8x8xbf16>
    %cst_30 = arith.constant dense<0.000000e+00> : vector<8x8xf32>
    %95 = tpu.matmul %94, %82, %cst_30 {dimension_numbers = #tpu.dot_dimension_numbers<[1], [0], [0], [1], [0, 0, 1, 1], [], []>} : vector<8x8xbf16>, vector<8x8xbf16>, vector<8x8xf32> -> vector<8x8xf32>
    %96 = vector.extract_strided_slice %36 {offsets = [0, 24], sizes = [8, 8], strides = [1, 1]} : vector<8x32xf32> to vector<8x8xf32>
    %97 = arith.truncf %96 : vector<8x8xf32> to vector<8x8xbf16>
    %98 = vector.extract_strided_slice %37 {offsets = [0, 24], sizes = [8, 8], strides = [1, 1]} : vector<8x32xf32> to vector<8x8xf32>
    %99 = arith.truncf %98 : vector<8x8xf32> to vector<8x8xbf16>
    %100 = vector.extract_strided_slice %38 {offsets = [0, 24], sizes = [8, 8], strides = [1, 1]} : vector<8x32xf32> to vector<8x8xf32>
    %101 = arith.truncf %100 : vector<8x8xf32> to vector<8x8xbf16>
    %cst_31 = arith.constant dense<0.000000e+00> : vector<8x8xf32>
    %102 = tpu.matmul %97, %99, %cst_31 {dimension_numbers = #tpu.dot_dimension_numbers<[1], [1], [0], [0], [0, 0, 1, 0], [], []>} : vector<8x8xbf16>, vector<8x8xbf16>, vector<8x8xf32> -> vector<8x8xf32>
    %cst_32 = arith.constant dense<0xFF800000> : vector<8xf32>
    %103 = vector.multi_reduction <maximumf>, %102, %cst_32 [1] : vector<8x8xf32> to vector<8xf32>
    %104 = vector.shape_cast %103 : vector<8xf32> to vector<8x1xf32>
    %105 = vector.broadcast %104 : vector<8x1xf32> to vector<8x8xf32>
    %106 = arith.subf %102, %105 : vector<8x8xf32>
    %107 = math.exp %106 : vector<8x8xf32>
    %cst_33 = arith.constant dense<0.000000e+00> : vector<8xf32>
    %108 = vector.multi_reduction <add>, %107, %cst_33 [1] : vector<8x8xf32> to vector<8xf32>
    %109 = vector.shape_cast %108 : vector<8xf32> to vector<8x1xf32>
    %110 = tpu.reciprocal %109 {approx = true} : vector<8x1xf32> -> vector<8x1xf32>
    %111 = vector.broadcast %110 : vector<8x1xf32> to vector<8x8xf32>
    %112 = arith.mulf %107, %111 : vector<8x8xf32>
    %113 = arith.truncf %112 : vector<8x8xf32> to vector<8x8xbf16>
    %cst_34 = arith.constant dense<0.000000e+00> : vector<8x8xf32>
    %114 = tpu.matmul %113, %101, %cst_34 {dimension_numbers = #tpu.dot_dimension_numbers<[1], [0], [0], [1], [0, 0, 1, 1], [], []>} : vector<8x8xbf16>, vector<8x8xbf16>, vector<8x8xf32> -> vector<8x8xf32>
    %115 = tpu.concatenate %57, %76, %95, %114 in 1 : vector<8x8xf32>, vector<8x8xf32>, vector<8x8xf32>, vector<8x8xf32> -> vector<8x32xf32>
    %c0_35 = arith.constant 0 : index
    %c0_36 = arith.constant 0 : index
    %116 = vector.load %arg7[%c0_35, %c0_36] : memref<32x32xbf16, #tpu.memory_space<vmem>>, vector<32x32xbf16>
    %117 = arith.truncf %115 : vector<8x32xf32> to vector<8x32xbf16>
    %cst_37 = arith.constant dense<0.000000e+00> : vector<8x32xf32>
    %118 = tpu.matmul %117, %116, %cst_37 {dimension_numbers = #tpu.dot_dimension_numbers<[1], [0], [0], [1], [0, 0, 1, 1], [], []>} : vector<8x32xbf16>, vector<32x32xbf16>, vector<8x32xf32> -> vector<8x32xf32>
    %119 = arith.addf %1, %118 : vector<8x32xf32>
    %c0_38 = arith.constant 0 : index
    %c0_39 = arith.constant 0 : index
    %120 = vector.load %arg8[%c0_38, %c0_39] : memref<1x32xf32, #tpu.memory_space<vmem>>, vector<1x32xf32>
    %121 = vector.broadcast %120 : vector<1x32xf32> to vector<8x32xf32>
    %122 = arith.addf %119, %121 : vector<8x32xf32>
    %c0_40 = arith.constant 0 : index
    %c0_41 = arith.constant 0 : index
    %123 = vector.load %arg9[%c0_40, %c0_41] : memref<1x32xf32, #tpu.memory_space<vmem>>, vector<1x32xf32>
    %c0_42 = arith.constant 0 : index
    %c0_43 = arith.constant 0 : index
    %124 = vector.load %arg10[%c0_42, %c0_43] : memref<1x32xf32, #tpu.memory_space<vmem>>, vector<1x32xf32>
    %cst_44 = arith.constant dense<0.000000e+00> : vector<8xf32>
    %125 = vector.multi_reduction <add>, %122, %cst_44 [1] : vector<8x32xf32> to vector<8xf32>
    %126 = vector.shape_cast %125 : vector<8xf32> to vector<8x1xf32>
    %cst_45 = arith.constant 3.200000e+01 : f32
    %127 = vector.broadcast %cst_45 : f32 to vector<8x1xf32>
    %128 = arith.divf %126, %127 : vector<8x1xf32>
    %129 = vector.broadcast %128 : vector<8x1xf32> to vector<8x32xf32>
    %130 = arith.subf %122, %129 : vector<8x32xf32>
    %131 = arith.mulf %130, %130 : vector<8x32xf32>
    %cst_46 = arith.constant dense<0.000000e+00> : vector<8xf32>
    %132 = vector.multi_reduction <add>, %131, %cst_46 [1] : vector<8x32xf32> to vector<8xf32>
    %133 = vector.shape_cast %132 : vector<8xf32> to vector<8x1xf32>
    %cst_47 = arith.constant 3.200000e+01 : f32
    %134 = vector.broadcast %cst_47 : f32 to vector<8x1xf32>
    %135 = arith.divf %133, %134 : vector<8x1xf32>
    %136 = vector.broadcast %128 : vector<8x1xf32> to vector<8x32xf32>
    %137 = arith.subf %122, %136 : vector<8x32xf32>
    %cst_48 = arith.constant 9.99999974E-6 : f32
    %138 = vector.broadcast %cst_48 : f32 to vector<8x1xf32>
    %139 = arith.addf %135, %138 : vector<8x1xf32>
    %140 = math.rsqrt %139 : vector<8x1xf32>
    %141 = vector.broadcast %140 : vector<8x1xf32> to vector<8x32xf32>
    %142 = arith.mulf %137, %141 : vector<8x32xf32>
    %143 = vector.broadcast %123 : vector<1x32xf32> to vector<8x32xf32>
    %144 = arith.mulf %142, %143 : vector<8x32xf32>
    %145 = vector.broadcast %124 : vector<1x32xf32> to vector<8x32xf32>
    %146 = arith.addf %144, %145 : vector<8x32xf32>
    %c0_49 = arith.constant 0 : index
    %c0_50 = arith.constant 0 : index
    %147 = vector.load %arg11[%c0_49, %c0_50] : memref<32x32xbf16, #tpu.memory_space<vmem>>, vector<32x32xbf16>
    %148 = arith.truncf %146 : vector<8x32xf32> to vector<8x32xbf16>
    %cst_51 = arith.constant dense<0.000000e+00> : vector<8x32xf32>
    %149 = tpu.matmul %148, %147, %cst_51 {dimension_numbers = #tpu.dot_dimension_numbers<[1], [0], [0], [1], [0, 0, 1, 1], [], []>} : vector<8x32xbf16>, vector<32x32xbf16>, vector<8x32xf32> -> vector<8x32xf32>
    %c0_52 = arith.constant 0 : index
    %c0_53 = arith.constant 0 : index
    %150 = vector.load %arg12[%c0_52, %c0_53] : memref<1x32xf32, #tpu.memory_space<vmem>>, vector<1x32xf32>
    %151 = vector.broadcast %150 : vector<1x32xf32> to vector<8x32xf32>
    %152 = arith.addf %149, %151 : vector<8x32xf32>
    %c0_54 = arith.constant 0 : index
    %c0_55 = arith.constant 0 : index
    %153 = vector.load %arg13[%c0_54, %c0_55] : memref<32x64xbf16, #tpu.memory_space<vmem>>, vector<32x64xbf16>
    %154 = arith.truncf %3 : vector<8x32xf32> to vector<8x32xbf16>
    %cst_56 = arith.constant dense<0.000000e+00> : vector<8x64xf32>
    %155 = tpu.matmul %154, %153, %cst_56 {dimension_numbers = #tpu.dot_dimension_numbers<[1], [0], [0], [1], [0, 0, 1, 1], [], []>} : vector<8x32xbf16>, vector<32x64xbf16>, vector<8x64xf32> -> vector<8x64xf32>
    %c0_57 = arith.constant 0 : index
    %c0_58 = arith.constant 0 : index
    %156 = vector.load %arg14[%c0_57, %c0_58] : memref<1x64xf32, #tpu.memory_space<vmem>>, vector<1x64xf32>
    %157 = vector.broadcast %156 : vector<1x64xf32> to vector<8x64xf32>
    %158 = arith.addf %155, %157 : vector<8x64xf32>
    %cst_59 = arith.constant 0.353553385 : f32
    %159 = vector.broadcast %cst_59 : f32 to vector<8x32xf32>
    %160 = arith.mulf %152, %159 : vector<8x32xf32>
    %161 = vector.extract_strided_slice %158 {offsets = [0, 0], sizes = [8, 32], strides = [1, 1]} : vector<8x64xf32> to vector<8x32xf32>
    %162 = vector.extract_strided_slice %158 {offsets = [0, 32], sizes = [8, 32], strides = [1, 1]} : vector<8x64xf32> to vector<8x32xf32>
    %163 = vector.extract_strided_slice %160 {offsets = [0, 0], sizes = [8, 8], strides = [1, 1]} : vector<8x32xf32> to vector<8x8xf32>
    %164 = arith.truncf %163 : vector<8x8xf32> to vector<8x8xbf16>
    %165 = vector.extract_strided_slice %161 {offsets = [0, 0], sizes = [8, 8], strides = [1, 1]} : vector<8x32xf32> to vector<8x8xf32>
    %166 = arith.truncf %165 : vector<8x8xf32> to vector<8x8xbf16>
    %167 = vector.extract_strided_slice %162 {offsets = [0, 0], sizes = [8, 8], strides = [1, 1]} : vector<8x32xf32> to vector<8x8xf32>
    %168 = arith.truncf %167 : vector<8x8xf32> to vector<8x8xbf16>
    %cst_60 = arith.constant dense<0.000000e+00> : vector<8x8xf32>
    %169 = tpu.matmul %164, %166, %cst_60 {dimension_numbers = #tpu.dot_dimension_numbers<[1], [1], [0], [0], [0, 0, 1, 0], [], []>} : vector<8x8xbf16>, vector<8x8xbf16>, vector<8x8xf32> -> vector<8x8xf32>
    %cst_61 = arith.constant dense<0xFF800000> : vector<8xf32>
    %170 = vector.multi_reduction <maximumf>, %169, %cst_61 [1] : vector<8x8xf32> to vector<8xf32>
    %171 = vector.shape_cast %170 : vector<8xf32> to vector<8x1xf32>
    %172 = vector.broadcast %171 : vector<8x1xf32> to vector<8x8xf32>
    %173 = arith.subf %169, %172 : vector<8x8xf32>
    %174 = math.exp %173 : vector<8x8xf32>
    %cst_62 = arith.constant dense<0.000000e+00> : vector<8xf32>
    %175 = vector.multi_reduction <add>, %174, %cst_62 [1] : vector<8x8xf32> to vector<8xf32>
    %176 = vector.shape_cast %175 : vector<8xf32> to vector<8x1xf32>
    %177 = tpu.reciprocal %176 {approx = true} : vector<8x1xf32> -> vector<8x1xf32>
    %178 = vector.broadcast %177 : vector<8x1xf32> to vector<8x8xf32>
    %179 = arith.mulf %174, %178 : vector<8x8xf32>
    %180 = arith.truncf %179 : vector<8x8xf32> to vector<8x8xbf16>
    %cst_63 = arith.constant dense<0.000000e+00> : vector<8x8xf32>
    %181 = tpu.matmul %180, %168, %cst_63 {dimension_numbers = #tpu.dot_dimension_numbers<[1], [0], [0], [1], [0, 0, 1, 1], [], []>} : vector<8x8xbf16>, vector<8x8xbf16>, vector<8x8xf32> -> vector<8x8xf32>
    %182 = vector.extract_strided_slice %160 {offsets = [0, 8], sizes = [8, 8], strides = [1, 1]} : vector<8x32xf32> to vector<8x8xf32>
    %183 = arith.truncf %182 : vector<8x8xf32> to vector<8x8xbf16>
    %184 = vector.extract_strided_slice %161 {offsets = [0, 8], sizes = [8, 8], strides = [1, 1]} : vector<8x32xf32> to vector<8x8xf32>
    %185 = arith.truncf %184 : vector<8x8xf32> to vector<8x8xbf16>
    %186 = vector.extract_strided_slice %162 {offsets = [0, 8], sizes = [8, 8], strides = [1, 1]} : vector<8x32xf32> to vector<8x8xf32>
    %187 = arith.truncf %186 : vector<8x8xf32> to vector<8x8xbf16>
    %cst_64 = arith.constant dense<0.000000e+00> : vector<8x8xf32>
    %188 = tpu.matmul %183, %185, %cst_64 {dimension_numbers = #tpu.dot_dimension_numbers<[1], [1], [0], [0], [0, 0, 1, 0], [], []>} : vector<8x8xbf16>, vector<8x8xbf16>, vector<8x8xf32> -> vector<8x8xf32>
    %cst_65 = arith.constant dense<0xFF800000> : vector<8xf32>
    %189 = vector.multi_reduction <maximumf>, %188, %cst_65 [1] : vector<8x8xf32> to vector<8xf32>
    %190 = vector.shape_cast %189 : vector<8xf32> to vector<8x1xf32>
    %191 = vector.broadcast %190 : vector<8x1xf32> to vector<8x8xf32>
    %192 = arith.subf %188, %191 : vector<8x8xf32>
    %193 = math.exp %192 : vector<8x8xf32>
    %cst_66 = arith.constant dense<0.000000e+00> : vector<8xf32>
    %194 = vector.multi_reduction <add>, %193, %cst_66 [1] : vector<8x8xf32> to vector<8xf32>
    %195 = vector.shape_cast %194 : vector<8xf32> to vector<8x1xf32>
    %196 = tpu.reciprocal %195 {approx = true} : vector<8x1xf32> -> vector<8x1xf32>
    %197 = vector.broadcast %196 : vector<8x1xf32> to vector<8x8xf32>
    %198 = arith.mulf %193, %197 : vector<8x8xf32>
    %199 = arith.truncf %198 : vector<8x8xf32> to vector<8x8xbf16>
    %cst_67 = arith.constant dense<0.000000e+00> : vector<8x8xf32>
    %200 = tpu.matmul %199, %187, %cst_67 {dimension_numbers = #tpu.dot_dimension_numbers<[1], [0], [0], [1], [0, 0, 1, 1], [], []>} : vector<8x8xbf16>, vector<8x8xbf16>, vector<8x8xf32> -> vector<8x8xf32>
    %201 = vector.extract_strided_slice %160 {offsets = [0, 16], sizes = [8, 8], strides = [1, 1]} : vector<8x32xf32> to vector<8x8xf32>
    %202 = arith.truncf %201 : vector<8x8xf32> to vector<8x8xbf16>
    %203 = vector.extract_strided_slice %161 {offsets = [0, 16], sizes = [8, 8], strides = [1, 1]} : vector<8x32xf32> to vector<8x8xf32>
    %204 = arith.truncf %203 : vector<8x8xf32> to vector<8x8xbf16>
    %205 = vector.extract_strided_slice %162 {offsets = [0, 16], sizes = [8, 8], strides = [1, 1]} : vector<8x32xf32> to vector<8x8xf32>
    %206 = arith.truncf %205 : vector<8x8xf32> to vector<8x8xbf16>
    %cst_68 = arith.constant dense<0.000000e+00> : vector<8x8xf32>
    %207 = tpu.matmul %202, %204, %cst_68 {dimension_numbers = #tpu.dot_dimension_numbers<[1], [1], [0], [0], [0, 0, 1, 0], [], []>} : vector<8x8xbf16>, vector<8x8xbf16>, vector<8x8xf32> -> vector<8x8xf32>
    %cst_69 = arith.constant dense<0xFF800000> : vector<8xf32>
    %208 = vector.multi_reduction <maximumf>, %207, %cst_69 [1] : vector<8x8xf32> to vector<8xf32>
    %209 = vector.shape_cast %208 : vector<8xf32> to vector<8x1xf32>
    %210 = vector.broadcast %209 : vector<8x1xf32> to vector<8x8xf32>
    %211 = arith.subf %207, %210 : vector<8x8xf32>
    %212 = math.exp %211 : vector<8x8xf32>
    %cst_70 = arith.constant dense<0.000000e+00> : vector<8xf32>
    %213 = vector.multi_reduction <add>, %212, %cst_70 [1] : vector<8x8xf32> to vector<8xf32>
    %214 = vector.shape_cast %213 : vector<8xf32> to vector<8x1xf32>
    %215 = tpu.reciprocal %214 {approx = true} : vector<8x1xf32> -> vector<8x1xf32>
    %216 = vector.broadcast %215 : vector<8x1xf32> to vector<8x8xf32>
    %217 = arith.mulf %212, %216 : vector<8x8xf32>
    %218 = arith.truncf %217 : vector<8x8xf32> to vector<8x8xbf16>
    %cst_71 = arith.constant dense<0.000000e+00> : vector<8x8xf32>
    %219 = tpu.matmul %218, %206, %cst_71 {dimension_numbers = #tpu.dot_dimension_numbers<[1], [0], [0], [1], [0, 0, 1, 1], [], []>} : vector<8x8xbf16>, vector<8x8xbf16>, vector<8x8xf32> -> vector<8x8xf32>
    %220 = vector.extract_strided_slice %160 {offsets = [0, 24], sizes = [8, 8], strides = [1, 1]} : vector<8x32xf32> to vector<8x8xf32>
    %221 = arith.truncf %220 : vector<8x8xf32> to vector<8x8xbf16>
    %222 = vector.extract_strided_slice %161 {offsets = [0, 24], sizes = [8, 8], strides = [1, 1]} : vector<8x32xf32> to vector<8x8xf32>
    %223 = arith.truncf %222 : vector<8x8xf32> to vector<8x8xbf16>
    %224 = vector.extract_strided_slice %162 {offsets = [0, 24], sizes = [8, 8], strides = [1, 1]} : vector<8x32xf32> to vector<8x8xf32>
    %225 = arith.truncf %224 : vector<8x8xf32> to vector<8x8xbf16>
    %cst_72 = arith.constant dense<0.000000e+00> : vector<8x8xf32>
    %226 = tpu.matmul %221, %223, %cst_72 {dimension_numbers = #tpu.dot_dimension_numbers<[1], [1], [0], [0], [0, 0, 1, 0], [], []>} : vector<8x8xbf16>, vector<8x8xbf16>, vector<8x8xf32> -> vector<8x8xf32>
    %cst_73 = arith.constant dense<0xFF800000> : vector<8xf32>
    %227 = vector.multi_reduction <maximumf>, %226, %cst_73 [1] : vector<8x8xf32> to vector<8xf32>
    %228 = vector.shape_cast %227 : vector<8xf32> to vector<8x1xf32>
    %229 = vector.broadcast %228 : vector<8x1xf32> to vector<8x8xf32>
    %230 = arith.subf %226, %229 : vector<8x8xf32>
    %231 = math.exp %230 : vector<8x8xf32>
    %cst_74 = arith.constant dense<0.000000e+00> : vector<8xf32>
    %232 = vector.multi_reduction <add>, %231, %cst_74 [1] : vector<8x8xf32> to vector<8xf32>
    %233 = vector.shape_cast %232 : vector<8xf32> to vector<8x1xf32>
    %234 = tpu.reciprocal %233 {approx = true} : vector<8x1xf32> -> vector<8x1xf32>
    %235 = vector.broadcast %234 : vector<8x1xf32> to vector<8x8xf32>
    %236 = arith.mulf %231, %235 : vector<8x8xf32>
    %237 = arith.truncf %236 : vector<8x8xf32> to vector<8x8xbf16>
    %cst_75 = arith.constant dense<0.000000e+00> : vector<8x8xf32>
    %238 = tpu.matmul %237, %225, %cst_75 {dimension_numbers = #tpu.dot_dimension_numbers<[1], [0], [0], [1], [0, 0, 1, 1], [], []>} : vector<8x8xbf16>, vector<8x8xbf16>, vector<8x8xf32> -> vector<8x8xf32>
    %239 = tpu.concatenate %181, %200, %219, %238 in 1 : vector<8x8xf32>, vector<8x8xf32>, vector<8x8xf32>, vector<8x8xf32> -> vector<8x32xf32>
    %c0_76 = arith.constant 0 : index
    %c0_77 = arith.constant 0 : index
    %240 = vector.load %arg15[%c0_76, %c0_77] : memref<32x32xbf16, #tpu.memory_space<vmem>>, vector<32x32xbf16>
    %241 = arith.truncf %239 : vector<8x32xf32> to vector<8x32xbf16>
    %cst_78 = arith.constant dense<0.000000e+00> : vector<8x32xf32>
    %242 = tpu.matmul %241, %240, %cst_78 {dimension_numbers = #tpu.dot_dimension_numbers<[1], [0], [0], [1], [0, 0, 1, 1], [], []>} : vector<8x32xbf16>, vector<32x32xbf16>, vector<8x32xf32> -> vector<8x32xf32>
    %243 = arith.addf %122, %242 : vector<8x32xf32>
    %c0_79 = arith.constant 0 : index
    %c0_80 = arith.constant 0 : index
    %244 = vector.load %arg16[%c0_79, %c0_80] : memref<1x32xf32, #tpu.memory_space<vmem>>, vector<1x32xf32>
    %245 = vector.broadcast %244 : vector<1x32xf32> to vector<8x32xf32>
    %246 = arith.addf %243, %245 : vector<8x32xf32>
    %c0_81 = arith.constant 0 : index
    %c0_82 = arith.constant 0 : index
    %247 = vector.load %arg17[%c0_81, %c0_82] : memref<1x32xf32, #tpu.memory_space<vmem>>, vector<1x32xf32>
    %c0_83 = arith.constant 0 : index
    %c0_84 = arith.constant 0 : index
    %248 = vector.load %arg18[%c0_83, %c0_84] : memref<1x32xf32, #tpu.memory_space<vmem>>, vector<1x32xf32>
    %cst_85 = arith.constant dense<0.000000e+00> : vector<8xf32>
    %249 = vector.multi_reduction <add>, %246, %cst_85 [1] : vector<8x32xf32> to vector<8xf32>
    %250 = vector.shape_cast %249 : vector<8xf32> to vector<8x1xf32>
    %cst_86 = arith.constant 3.200000e+01 : f32
    %251 = vector.broadcast %cst_86 : f32 to vector<8x1xf32>
    %252 = arith.divf %250, %251 : vector<8x1xf32>
    %253 = vector.broadcast %252 : vector<8x1xf32> to vector<8x32xf32>
    %254 = arith.subf %246, %253 : vector<8x32xf32>
    %255 = arith.mulf %254, %254 : vector<8x32xf32>
    %cst_87 = arith.constant dense<0.000000e+00> : vector<8xf32>
    %256 = vector.multi_reduction <add>, %255, %cst_87 [1] : vector<8x32xf32> to vector<8xf32>
    %257 = vector.shape_cast %256 : vector<8xf32> to vector<8x1xf32>
    %cst_88 = arith.constant 3.200000e+01 : f32
    %258 = vector.broadcast %cst_88 : f32 to vector<8x1xf32>
    %259 = arith.divf %257, %258 : vector<8x1xf32>
    %260 = vector.broadcast %252 : vector<8x1xf32> to vector<8x32xf32>
    %261 = arith.subf %246, %260 : vector<8x32xf32>
    %cst_89 = arith.constant 9.99999974E-6 : f32
    %262 = vector.broadcast %cst_89 : f32 to vector<8x1xf32>
    %263 = arith.addf %259, %262 : vector<8x1xf32>
    %264 = math.rsqrt %263 : vector<8x1xf32>
    %265 = vector.broadcast %264 : vector<8x1xf32> to vector<8x32xf32>
    %266 = arith.mulf %261, %265 : vector<8x32xf32>
    %267 = vector.broadcast %247 : vector<1x32xf32> to vector<8x32xf32>
    %268 = arith.mulf %266, %267 : vector<8x32xf32>
    %269 = vector.broadcast %248 : vector<1x32xf32> to vector<8x32xf32>
    %270 = arith.addf %268, %269 : vector<8x32xf32>
    %c0_90 = arith.constant 0 : index
    %c0_91 = arith.constant 0 : index
    %271 = vector.load %arg19[%c0_90, %c0_91] : memref<32x64xbf16, #tpu.memory_space<vmem>>, vector<32x64xbf16>
    %272 = arith.truncf %270 : vector<8x32xf32> to vector<8x32xbf16>
    %cst_92 = arith.constant dense<0.000000e+00> : vector<8x64xf32>
    %273 = tpu.matmul %272, %271, %cst_92 {dimension_numbers = #tpu.dot_dimension_numbers<[1], [0], [0], [1], [0, 0, 1, 1], [], []>} : vector<8x32xbf16>, vector<32x64xbf16>, vector<8x64xf32> -> vector<8x64xf32>
    %c0_93 = arith.constant 0 : index
    %c0_94 = arith.constant 0 : index
    %274 = vector.load %arg20[%c0_93, %c0_94] : memref<1x64xf32, #tpu.memory_space<vmem>>, vector<1x64xf32>
    %275 = vector.broadcast %274 : vector<1x64xf32> to vector<8x64xf32>
    %276 = arith.addf %273, %275 : vector<8x64xf32>
    %cst_95 = arith.constant 0.000000e+00 : f32
    %277 = vector.broadcast %cst_95 : f32 to vector<8x64xf32>
    %278 = arith.maximumf %276, %277 : vector<8x64xf32>
    %c0_96 = arith.constant 0 : index
    %c0_97 = arith.constant 0 : index
    %279 = vector.load %arg21[%c0_96, %c0_97] : memref<64x32xbf16, #tpu.memory_space<vmem>>, vector<64x32xbf16>
    %280 = arith.truncf %278 : vector<8x64xf32> to vector<8x64xbf16>
    %cst_98 = arith.constant dense<0.000000e+00> : vector<8x32xf32>
    %281 = tpu.matmul %280, %279, %cst_98 {dimension_numbers = #tpu.dot_dimension_numbers<[1], [0], [0], [1], [0, 0, 1, 1], [], []>} : vector<8x64xbf16>, vector<64x32xbf16>, vector<8x32xf32> -> vector<8x32xf32>
    %282 = arith.addf %246, %281 : vector<8x32xf32>
    %c0_99 = arith.constant 0 : index
    %c0_100 = arith.constant 0 : index
    %283 = vector.load %arg22[%c0_99, %c0_100] : memref<1x32xf32, #tpu.memory_space<vmem>>, vector<1x32xf32>
    %284 = vector.broadcast %283 : vector<1x32xf32> to vector<8x32xf32>
    %285 = arith.addf %282, %284 : vector<8x32xf32>
    %c0_101 = arith.constant 0 : index
    %c0_102 = arith.constant 0 : index
    %c0_103 = arith.constant 0 : index
    %286 = vector.load %arg25[%c0_101, %c0_102, %c0_103] : memref<1x8x32xf32, #tpu.memory_space<vmem>>, vector<1x8x32xf32>
    %287 = vector.shape_cast %286 : vector<1x8x32xf32> to vector<8x32xf32>
    %288 = vector.shape_cast %285 : vector<8x32xf32> to vector<1x8x32xf32>
    tpu.vector_store %arg25[%c0_101, %c0_102, %c0_103], %288 {strides = array<i32>} : memref<1x8x32xf32, #tpu.memory_space<vmem>>, vector<1x8x32xf32>,
    return
  }
  func.func @transform_0(%arg0: i32) -> (i32, i32, i32) {
    %c0_i32 = arith.constant 0 : i32
    %c0_i32_0 = arith.constant 0 : i32
    %c0_i32_1 = arith.constant 0 : i32
    return %arg0, %c0_i32, %c0_i32_0 : i32, i32, i32
  }
  func.func @transform_1(%arg0: i32) -> (i32, i32, i32) {
    %c0_i32 = arith.constant 0 : i32
    %c0_i32_0 = arith.constant 0 : i32
    %c0_i32_1 = arith.constant 0 : i32
    return %arg0, %c0_i32, %c0_i32_0 : i32, i32, i32
  }
  func.func @transform_2(%arg0: i32) -> (i32, i32) {
    %c0_i32 = arith.constant 0 : i32
    %c0_i32_0 = arith.constant 0 : i32
    %c0_i32_1 = arith.constant 0 : i32
    return %c0_i32, %c0_i32_0 : i32, i32
  }
  func.func @transform_3(%arg0: i32) -> (i32, i32) {
    %c0_i32 = arith.constant 0 : i32
    %c0_i32_0 = arith.constant 0 : i32
    %c0_i32_1 = arith.constant 0 : i32
    return %c0_i32, %c0_i32_0 : i32, i32
  }
  func.func @transform_4(%arg0: i32) -> (i32, i32) {
    %c0_i32 = arith.constant 0 : i32
    %c0_i32_0 = arith.constant 0 : i32
    %c0_i32_1 = arith.constant 0 : i32
    return %c0_i32, %c0_i32_0 : i32, i32
  }
  func.func @transform_5(%arg0: i32) -> (i32, i32) {
    %c0_i32 = arith.constant 0 : i32
    %c0_i32_0 = arith.constant 0 : i32
    %c0_i32_1 = arith.constant 0 : i32
    return %c0_i32, %c0_i32_0 : i32, i32
  }
  func.func @transform_6(%arg0: i32) -> (i32, i32) {
    %c0_i32 = arith.constant 0 : i32
    %c0_i32_0 = arith.constant 0 : i32
    %c0_i32_1 = arith.constant 0 : i32
    return %c0_i32, %c0_i32_0 : i32, i32
  }
  func.func @transform_7(%arg0: i32) -> (i32, i32) {
    %c0_i32 = arith.constant 0 : i32
    %c0_i32_0 = arith.constant 0 : i32
    %c0_i32_1 = arith.constant 0 : i32
    return %c0_i32, %c0_i32_0 : i32, i32
  }
  func.func @transform_8(%arg0: i32) -> (i32, i32) {
    %c0_i32 = arith.constant 0 : i32
    %c0_i32_0 = arith.constant 0 : i32
    %c0_i32_1 = arith.constant 0 : i32
    return %c0_i32, %c0_i32_0 : i32, i32
  }
  func.func @transform_9(%arg0: i32) -> (i32, i32) {
    %c0_i32 = arith.constant 0 : i32
    %c0_i32_0 = arith.constant 0 : i32
    %c0_i32_1 = arith.constant 0 : i32
    return %c0_i32, %c0_i32_0 : i32, i32
  }
  func.func @transform_10(%arg0: i32) -> (i32, i32) {
    %c0_i32 = arith.constant 0 : i32
    %c0_i32_0 = arith.constant 0 : i32
    %c0_i32_1 = arith.constant 0 : i32
    return %c0_i32, %c0_i32_0 : i32, i32
  }
  func.func @transform_11(%arg0: i32) -> (i32, i32) {
    %c0_i32 = arith.constant 0 : i32
    %c0_i32_0 = arith.constant 0 : i32
    %c0_i32_1 = arith.constant 0 : i32
    return %c0_i32, %c0_i32_0 : i32, i32
  }
  func.func @transform_12(%arg0: i32) -> (i32, i32) {
    %c0_i32 = arith.constant 0 : i32
    %c0_i32_0 = arith.constant 0 : i32
    %c0_i32_1 = arith.constant 0 : i32
    return %c0_i32, %c0_i32_0 : i32, i32
  }
  func.func @transform_13(%arg0: i32) -> (i32, i32) {
    %c0_i32 = arith.constant 0 : i32
    %c0_i32_0 = arith.constant 0 : i32
    %c0_i32_1 = arith.constant 0 : i32
    return %c0_i32, %c0_i32_0 : i32, i32
  }
  func.func @transform_14(%arg0: i32) -> (i32, i32) {
    %c0_i32 = arith.constant 0 : i32
    %c0_i32_0 = arith.constant 0 : i32
    %c0_i32_1 = arith.constant 0 : i32
    return %c0_i32, %c0_i32_0 : i32, i32
  }
  func.func @transform_15(%arg0: i32) -> (i32, i32) {
    %c0_i32 = arith.constant 0 : i32
    %c0_i32_0 = arith.constant 0 : i32
    %c0_i32_1 = arith.constant 0 : i32
    return %c0_i32, %c0_i32_0 : i32, i32
  }
  func.func @transform_16(%arg0: i32) -> (i32, i32) {
    %c0_i32 = arith.constant 0 : i32
    %c0_i32_0 = arith.constant 0 : i32
    %c0_i32_1 = arith.constant 0 : i32
    return %c0_i32, %c0_i32_0 : i32, i32
  }
  func.func @transform_17(%arg0: i32) -> (i32, i32) {
    %c0_i32 = arith.constant 0 : i32
    %c0_i32_0 = arith.constant 0 : i32
    %c0_i32_1 = arith.constant 0 : i32
    return %c0_i32, %c0_i32_0 : i32, i32
  }
  func.func @transform_18(%arg0: i32) -> (i32, i32) {
    %c0_i32 = arith.constant 0 : i32
    %c0_i32_0 = arith.constant 0 : i32
    %c0_i32_1 = arith.constant 0 : i32
    return %c0_i32, %c0_i32_0 : i32, i32
  }
  func.func @transform_19(%arg0: i32) -> (i32, i32) {
    %c0_i32 = arith.constant 0 : i32
    %c0_i32_0 = arith.constant 0 : i32
    %c0_i32_1 = arith.constant 0 : i32
    return %c0_i32, %c0_i32_0 : i32, i32
  }
  func.func @transform_20(%arg0: i32) -> (i32, i32) {
    %c0_i32 = arith.constant 0 : i32
    %c0_i32_0 = arith.constant 0 : i32
    %c0_i32_1 = arith.constant 0 : i32
    return %c0_i32, %c0_i32_0 : i32, i32
  }
  func.func @transform_21(%arg0: i32) -> (i32, i32) {
    %c0_i32 = arith.constant 0 : i32
    %c0_i32_0 = arith.constant 0 : i32
    %c0_i32_1 = arith.constant 0 : i32
    return %c0_i32, %c0_i32_0 : i32, i32
  }
  func.func @transform_22(%arg0: i32) -> (i32, i32) {
    %c0_i32 = arith.constant 0 : i32
    %c0_i32_0 = arith.constant 0 : i32
    %c0_i32_1 = arith.constant 0 : i32
    return %c0_i32, %c0_i32_0 : i32, i32
  }
  func.func @transform_23(%arg0: i32) -> (i32, i32) {
    %c0_i32 = arith.constant 0 : i32
    %c0_i32_0 = arith.constant 0 : i32
    %c0_i32_1 = arith.constant 0 : i32
    return %c0_i32, %c0_i32_0 : i32, i32
  }
  func.func @transform_24(%arg0: i32) -> (i32, i32, i32) {
    %c0_i32 = arith.constant 0 : i32
    %c0_i32_0 = arith.constant 0 : i32
    %c0_i32_1 = arith.constant 0 : i32
    return %arg0, %c0_i32, %c0_i32_0 : i32, i32, i32
  }
}

module attributes {stable_mosaic.version = 11 : i64} {
  func.func @_encoder_layer_kernel(%arg0: i32, %arg1: memref<1x8x32xf32, #tpu.memory_space<vmem>>, %arg2: memref<1x32xf32, #tpu.memory_space<vmem>>, %arg3: memref<1x32xf32, #tpu.memory_space<vmem>>, %arg4: memref<32x96xbf16, #tpu.memory_space<vmem>>, %arg5: memref<1x96xf32, #tpu.memory_space<vmem>>, %arg6: memref<32x32xbf16, #tpu.memory_space<vmem>>, %arg7: memref<1x32xf32, #tpu.memory_space<vmem>>, %arg8: memref<1x32xf32, #tpu.memory_space<vmem>>, %arg9: memref<1x32xf32, #tpu.memory_space<vmem>>, %arg10: memref<32x64xbf16, #tpu.memory_space<vmem>>, %arg11: memref<1x64xf32, #tpu.memory_space<vmem>>, %arg12: memref<64x32xbf16, #tpu.memory_space<vmem>>, %arg13: memref<1x32xf32, #tpu.memory_space<vmem>>, %arg14: memref<1x32xf32, #tpu.memory_space<vmem>>, %arg15: memref<1x32xf32, #tpu.memory_space<vmem>>, %arg16: memref<1x8x32xf32, #tpu.memory_space<vmem>>) attributes {dimension_semantics = [#tpu.dimension_semantics<parallel>], iteration_bounds = array<i64: 2>, scalar_prefetch = 0 : i64, scratch_operands = 0 : i64, tpu.core_type = #tpu.core_type<tc>, window_params = [{transform_indices = @transform_0, window_bounds = array<i64: 1, 8, 32>}, {pipeline_mode = #tpu.pipeline_mode<synchronous>, transform_indices = @transform_1, window_bounds = array<i64: 1, 32>}, {pipeline_mode = #tpu.pipeline_mode<synchronous>, transform_indices = @transform_2, window_bounds = array<i64: 1, 32>}, {pipeline_mode = #tpu.pipeline_mode<synchronous>, transform_indices = @transform_3, window_bounds = array<i64: 32, 96>}, {pipeline_mode = #tpu.pipeline_mode<synchronous>, transform_indices = @transform_4, window_bounds = array<i64: 1, 96>}, {pipeline_mode = #tpu.pipeline_mode<synchronous>, transform_indices = @transform_5, window_bounds = array<i64: 32, 32>}, {pipeline_mode = #tpu.pipeline_mode<synchronous>, transform_indices = @transform_6, window_bounds = array<i64: 1, 32>}, {pipeline_mode = #tpu.pipeline_mode<synchronous>, transform_indices = @transform_7, window_bounds = array<i64: 1, 32>}, {pipeline_mode = #tpu.pipeline_mode<synchronous>, transform_indices = @transform_8, window_bounds = array<i64: 1, 32>}, {pipeline_mode = #tpu.pipeline_mode<synchronous>, transform_indices = @transform_9, window_bounds = array<i64: 32, 64>}, {pipeline_mode = #tpu.pipeline_mode<synchronous>, transform_indices = @transform_10, window_bounds = array<i64: 1, 64>}, {pipeline_mode = #tpu.pipeline_mode<synchronous>, transform_indices = @transform_11, window_bounds = array<i64: 64, 32>}, {pipeline_mode = #tpu.pipeline_mode<synchronous>, transform_indices = @transform_12, window_bounds = array<i64: 1, 32>}, {pipeline_mode = #tpu.pipeline_mode<synchronous>, transform_indices = @transform_13, window_bounds = array<i64: 1, 32>}, {pipeline_mode = #tpu.pipeline_mode<synchronous>, transform_indices = @transform_14, window_bounds = array<i64: 1, 32>}, {transform_indices = @transform_15, window_bounds = array<i64: 1, 8, 32>}]} {
    %c0 = arith.constant 0 : index
    %c0_0 = arith.constant 0 : index
    %c0_1 = arith.constant 0 : index
    %0 = vector.load %arg1[%c0, %c0_0, %c0_1] : memref<1x8x32xf32, #tpu.memory_space<vmem>>, vector<1x8x32xf32>
    %1 = vector.shape_cast %0 : vector<1x8x32xf32> to vector<8x32xf32>
    %c0_2 = arith.constant 0 : index
    %c0_3 = arith.constant 0 : index
    %2 = vector.load %arg2[%c0_2, %c0_3] : memref<1x32xf32, #tpu.memory_space<vmem>>, vector<1x32xf32>
    %c0_4 = arith.constant 0 : index
    %c0_5 = arith.constant 0 : index
    %3 = vector.load %arg3[%c0_4, %c0_5] : memref<1x32xf32, #tpu.memory_space<vmem>>, vector<1x32xf32>
    %cst = arith.constant dense<0.000000e+00> : vector<8xf32>
    %4 = vector.multi_reduction <add>, %1, %cst [1] : vector<8x32xf32> to vector<8xf32>
    %5 = vector.shape_cast %4 : vector<8xf32> to vector<8x1xf32>
    %cst_6 = arith.constant 3.200000e+01 : f32
    %6 = vector.broadcast %cst_6 : f32 to vector<8x1xf32>
    %7 = arith.divf %5, %6 : vector<8x1xf32>
    %8 = vector.broadcast %7 : vector<8x1xf32> to vector<8x32xf32>
    %9 = arith.subf %1, %8 : vector<8x32xf32>
    %10 = arith.mulf %9, %9 : vector<8x32xf32>
    %cst_7 = arith.constant dense<0.000000e+00> : vector<8xf32>
    %11 = vector.multi_reduction <add>, %10, %cst_7 [1] : vector<8x32xf32> to vector<8xf32>
    %12 = vector.shape_cast %11 : vector<8xf32> to vector<8x1xf32>
    %cst_8 = arith.constant 3.200000e+01 : f32
    %13 = vector.broadcast %cst_8 : f32 to vector<8x1xf32>
    %14 = arith.divf %12, %13 : vector<8x1xf32>
    %15 = vector.broadcast %7 : vector<8x1xf32> to vector<8x32xf32>
    %16 = arith.subf %1, %15 : vector<8x32xf32>
    %cst_9 = arith.constant 9.99999974E-6 : f32
    %17 = vector.broadcast %cst_9 : f32 to vector<8x1xf32>
    %18 = arith.addf %14, %17 : vector<8x1xf32>
    %19 = math.rsqrt %18 : vector<8x1xf32>
    %20 = vector.broadcast %19 : vector<8x1xf32> to vector<8x32xf32>
    %21 = arith.mulf %16, %20 : vector<8x32xf32>
    %22 = vector.broadcast %2 : vector<1x32xf32> to vector<8x32xf32>
    %23 = arith.mulf %21, %22 : vector<8x32xf32>
    %24 = vector.broadcast %3 : vector<1x32xf32> to vector<8x32xf32>
    %25 = arith.addf %23, %24 : vector<8x32xf32>
    %c0_10 = arith.constant 0 : index
    %c0_11 = arith.constant 0 : index
    %26 = vector.load %arg4[%c0_10, %c0_11] : memref<32x96xbf16, #tpu.memory_space<vmem>>, vector<32x96xbf16>
    %27 = arith.truncf %25 : vector<8x32xf32> to vector<8x32xbf16>
    %cst_12 = arith.constant dense<0.000000e+00> : vector<8x96xf32>
    %28 = tpu.matmul %27, %26, %cst_12 {dimension_numbers = #tpu.dot_dimension_numbers<[1], [0], [0], [1], [0, 0, 1, 1], [], []>} : vector<8x32xbf16>, vector<32x96xbf16>, vector<8x96xf32> -> vector<8x96xf32>
    %c0_13 = arith.constant 0 : index
    %c0_14 = arith.constant 0 : index
    %29 = vector.load %arg5[%c0_13, %c0_14] : memref<1x96xf32, #tpu.memory_space<vmem>>, vector<1x96xf32>
    %30 = vector.broadcast %29 : vector<1x96xf32> to vector<8x96xf32>
    %31 = arith.addf %28, %30 : vector<8x96xf32>
    %32 = vector.extract_strided_slice %31 {offsets = [0, 0], sizes = [8, 32], strides = [1, 1]} : vector<8x96xf32> to vector<8x32xf32>
    %cst_15 = arith.constant 0.353553385 : f32
    %33 = vector.broadcast %cst_15 : f32 to vector<8x32xf32>
    %34 = arith.mulf %32, %33 : vector<8x32xf32>
    %35 = vector.extract_strided_slice %31 {offsets = [0, 32], sizes = [8, 32], strides = [1, 1]} : vector<8x96xf32> to vector<8x32xf32>
    %36 = vector.extract_strided_slice %31 {offsets = [0, 64], sizes = [8, 32], strides = [1, 1]} : vector<8x96xf32> to vector<8x32xf32>
    %37 = vector.extract_strided_slice %34 {offsets = [0, 0], sizes = [8, 8], strides = [1, 1]} : vector<8x32xf32> to vector<8x8xf32>
    %38 = arith.truncf %37 : vector<8x8xf32> to vector<8x8xbf16>
    %39 = vector.extract_strided_slice %35 {offsets = [0, 0], sizes = [8, 8], strides = [1, 1]} : vector<8x32xf32> to vector<8x8xf32>
    %40 = arith.truncf %39 : vector<8x8xf32> to vector<8x8xbf16>
    %41 = vector.extract_strided_slice %36 {offsets = [0, 0], sizes = [8, 8], strides = [1, 1]} : vector<8x32xf32> to vector<8x8xf32>
    %42 = arith.truncf %41 : vector<8x8xf32> to vector<8x8xbf16>
    %cst_16 = arith.constant dense<0.000000e+00> : vector<8x8xf32>
    %43 = tpu.matmul %38, %40, %cst_16 {dimension_numbers = #tpu.dot_dimension_numbers<[1], [1], [0], [0], [0, 0, 1, 0], [], []>} : vector<8x8xbf16>, vector<8x8xbf16>, vector<8x8xf32> -> vector<8x8xf32>
    %cst_17 = arith.constant dense<0xFF800000> : vector<8xf32>
    %44 = vector.multi_reduction <maximumf>, %43, %cst_17 [1] : vector<8x8xf32> to vector<8xf32>
    %45 = vector.shape_cast %44 : vector<8xf32> to vector<8x1xf32>
    %46 = vector.broadcast %45 : vector<8x1xf32> to vector<8x8xf32>
    %47 = arith.subf %43, %46 : vector<8x8xf32>
    %48 = math.exp %47 : vector<8x8xf32>
    %cst_18 = arith.constant dense<0.000000e+00> : vector<8xf32>
    %49 = vector.multi_reduction <add>, %48, %cst_18 [1] : vector<8x8xf32> to vector<8xf32>
    %50 = vector.shape_cast %49 : vector<8xf32> to vector<8x1xf32>
    %51 = tpu.reciprocal %50 {approx = true} : vector<8x1xf32> -> vector<8x1xf32>
    %52 = vector.broadcast %51 : vector<8x1xf32> to vector<8x8xf32>
    %53 = arith.mulf %48, %52 : vector<8x8xf32>
    %54 = arith.truncf %53 : vector<8x8xf32> to vector<8x8xbf16>
    %cst_19 = arith.constant dense<0.000000e+00> : vector<8x8xf32>
    %55 = tpu.matmul %54, %42, %cst_19 {dimension_numbers = #tpu.dot_dimension_numbers<[1], [0], [0], [1], [0, 0, 1, 1], [], []>} : vector<8x8xbf16>, vector<8x8xbf16>, vector<8x8xf32> -> vector<8x8xf32>
    %56 = vector.extract_strided_slice %34 {offsets = [0, 8], sizes = [8, 8], strides = [1, 1]} : vector<8x32xf32> to vector<8x8xf32>
    %57 = arith.truncf %56 : vector<8x8xf32> to vector<8x8xbf16>
    %58 = vector.extract_strided_slice %35 {offsets = [0, 8], sizes = [8, 8], strides = [1, 1]} : vector<8x32xf32> to vector<8x8xf32>
    %59 = arith.truncf %58 : vector<8x8xf32> to vector<8x8xbf16>
    %60 = vector.extract_strided_slice %36 {offsets = [0, 8], sizes = [8, 8], strides = [1, 1]} : vector<8x32xf32> to vector<8x8xf32>
    %61 = arith.truncf %60 : vector<8x8xf32> to vector<8x8xbf16>
    %cst_20 = arith.constant dense<0.000000e+00> : vector<8x8xf32>
    %62 = tpu.matmul %57, %59, %cst_20 {dimension_numbers = #tpu.dot_dimension_numbers<[1], [1], [0], [0], [0, 0, 1, 0], [], []>} : vector<8x8xbf16>, vector<8x8xbf16>, vector<8x8xf32> -> vector<8x8xf32>
    %cst_21 = arith.constant dense<0xFF800000> : vector<8xf32>
    %63 = vector.multi_reduction <maximumf>, %62, %cst_21 [1] : vector<8x8xf32> to vector<8xf32>
    %64 = vector.shape_cast %63 : vector<8xf32> to vector<8x1xf32>
    %65 = vector.broadcast %64 : vector<8x1xf32> to vector<8x8xf32>
    %66 = arith.subf %62, %65 : vector<8x8xf32>
    %67 = math.exp %66 : vector<8x8xf32>
    %cst_22 = arith.constant dense<0.000000e+00> : vector<8xf32>
    %68 = vector.multi_reduction <add>, %67, %cst_22 [1] : vector<8x8xf32> to vector<8xf32>
    %69 = vector.shape_cast %68 : vector<8xf32> to vector<8x1xf32>
    %70 = tpu.reciprocal %69 {approx = true} : vector<8x1xf32> -> vector<8x1xf32>
    %71 = vector.broadcast %70 : vector<8x1xf32> to vector<8x8xf32>
    %72 = arith.mulf %67, %71 : vector<8x8xf32>
    %73 = arith.truncf %72 : vector<8x8xf32> to vector<8x8xbf16>
    %cst_23 = arith.constant dense<0.000000e+00> : vector<8x8xf32>
    %74 = tpu.matmul %73, %61, %cst_23 {dimension_numbers = #tpu.dot_dimension_numbers<[1], [0], [0], [1], [0, 0, 1, 1], [], []>} : vector<8x8xbf16>, vector<8x8xbf16>, vector<8x8xf32> -> vector<8x8xf32>
    %75 = vector.extract_strided_slice %34 {offsets = [0, 16], sizes = [8, 8], strides = [1, 1]} : vector<8x32xf32> to vector<8x8xf32>
    %76 = arith.truncf %75 : vector<8x8xf32> to vector<8x8xbf16>
    %77 = vector.extract_strided_slice %35 {offsets = [0, 16], sizes = [8, 8], strides = [1, 1]} : vector<8x32xf32> to vector<8x8xf32>
    %78 = arith.truncf %77 : vector<8x8xf32> to vector<8x8xbf16>
    %79 = vector.extract_strided_slice %36 {offsets = [0, 16], sizes = [8, 8], strides = [1, 1]} : vector<8x32xf32> to vector<8x8xf32>
    %80 = arith.truncf %79 : vector<8x8xf32> to vector<8x8xbf16>
    %cst_24 = arith.constant dense<0.000000e+00> : vector<8x8xf32>
    %81 = tpu.matmul %76, %78, %cst_24 {dimension_numbers = #tpu.dot_dimension_numbers<[1], [1], [0], [0], [0, 0, 1, 0], [], []>} : vector<8x8xbf16>, vector<8x8xbf16>, vector<8x8xf32> -> vector<8x8xf32>
    %cst_25 = arith.constant dense<0xFF800000> : vector<8xf32>
    %82 = vector.multi_reduction <maximumf>, %81, %cst_25 [1] : vector<8x8xf32> to vector<8xf32>
    %83 = vector.shape_cast %82 : vector<8xf32> to vector<8x1xf32>
    %84 = vector.broadcast %83 : vector<8x1xf32> to vector<8x8xf32>
    %85 = arith.subf %81, %84 : vector<8x8xf32>
    %86 = math.exp %85 : vector<8x8xf32>
    %cst_26 = arith.constant dense<0.000000e+00> : vector<8xf32>
    %87 = vector.multi_reduction <add>, %86, %cst_26 [1] : vector<8x8xf32> to vector<8xf32>
    %88 = vector.shape_cast %87 : vector<8xf32> to vector<8x1xf32>
    %89 = tpu.reciprocal %88 {approx = true} : vector<8x1xf32> -> vector<8x1xf32>
    %90 = vector.broadcast %89 : vector<8x1xf32> to vector<8x8xf32>
    %91 = arith.mulf %86, %90 : vector<8x8xf32>
    %92 = arith.truncf %91 : vector<8x8xf32> to vector<8x8xbf16>
    %cst_27 = arith.constant dense<0.000000e+00> : vector<8x8xf32>
    %93 = tpu.matmul %92, %80, %cst_27 {dimension_numbers = #tpu.dot_dimension_numbers<[1], [0], [0], [1], [0, 0, 1, 1], [], []>} : vector<8x8xbf16>, vector<8x8xbf16>, vector<8x8xf32> -> vector<8x8xf32>
    %94 = vector.extract_strided_slice %34 {offsets = [0, 24], sizes = [8, 8], strides = [1, 1]} : vector<8x32xf32> to vector<8x8xf32>
    %95 = arith.truncf %94 : vector<8x8xf32> to vector<8x8xbf16>
    %96 = vector.extract_strided_slice %35 {offsets = [0, 24], sizes = [8, 8], strides = [1, 1]} : vector<8x32xf32> to vector<8x8xf32>
    %97 = arith.truncf %96 : vector<8x8xf32> to vector<8x8xbf16>
    %98 = vector.extract_strided_slice %36 {offsets = [0, 24], sizes = [8, 8], strides = [1, 1]} : vector<8x32xf32> to vector<8x8xf32>
    %99 = arith.truncf %98 : vector<8x8xf32> to vector<8x8xbf16>
    %cst_28 = arith.constant dense<0.000000e+00> : vector<8x8xf32>
    %100 = tpu.matmul %95, %97, %cst_28 {dimension_numbers = #tpu.dot_dimension_numbers<[1], [1], [0], [0], [0, 0, 1, 0], [], []>} : vector<8x8xbf16>, vector<8x8xbf16>, vector<8x8xf32> -> vector<8x8xf32>
    %cst_29 = arith.constant dense<0xFF800000> : vector<8xf32>
    %101 = vector.multi_reduction <maximumf>, %100, %cst_29 [1] : vector<8x8xf32> to vector<8xf32>
    %102 = vector.shape_cast %101 : vector<8xf32> to vector<8x1xf32>
    %103 = vector.broadcast %102 : vector<8x1xf32> to vector<8x8xf32>
    %104 = arith.subf %100, %103 : vector<8x8xf32>
    %105 = math.exp %104 : vector<8x8xf32>
    %cst_30 = arith.constant dense<0.000000e+00> : vector<8xf32>
    %106 = vector.multi_reduction <add>, %105, %cst_30 [1] : vector<8x8xf32> to vector<8xf32>
    %107 = vector.shape_cast %106 : vector<8xf32> to vector<8x1xf32>
    %108 = tpu.reciprocal %107 {approx = true} : vector<8x1xf32> -> vector<8x1xf32>
    %109 = vector.broadcast %108 : vector<8x1xf32> to vector<8x8xf32>
    %110 = arith.mulf %105, %109 : vector<8x8xf32>
    %111 = arith.truncf %110 : vector<8x8xf32> to vector<8x8xbf16>
    %cst_31 = arith.constant dense<0.000000e+00> : vector<8x8xf32>
    %112 = tpu.matmul %111, %99, %cst_31 {dimension_numbers = #tpu.dot_dimension_numbers<[1], [0], [0], [1], [0, 0, 1, 1], [], []>} : vector<8x8xbf16>, vector<8x8xbf16>, vector<8x8xf32> -> vector<8x8xf32>
    %113 = tpu.concatenate %55, %74, %93, %112 in 1 : vector<8x8xf32>, vector<8x8xf32>, vector<8x8xf32>, vector<8x8xf32> -> vector<8x32xf32>
    %c0_32 = arith.constant 0 : index
    %c0_33 = arith.constant 0 : index
    %114 = vector.load %arg6[%c0_32, %c0_33] : memref<32x32xbf16, #tpu.memory_space<vmem>>, vector<32x32xbf16>
    %115 = arith.truncf %113 : vector<8x32xf32> to vector<8x32xbf16>
    %cst_34 = arith.constant dense<0.000000e+00> : vector<8x32xf32>
    %116 = tpu.matmul %115, %114, %cst_34 {dimension_numbers = #tpu.dot_dimension_numbers<[1], [0], [0], [1], [0, 0, 1, 1], [], []>} : vector<8x32xbf16>, vector<32x32xbf16>, vector<8x32xf32> -> vector<8x32xf32>
    %117 = arith.addf %1, %116 : vector<8x32xf32>
    %c0_35 = arith.constant 0 : index
    %c0_36 = arith.constant 0 : index
    %118 = vector.load %arg7[%c0_35, %c0_36] : memref<1x32xf32, #tpu.memory_space<vmem>>, vector<1x32xf32>
    %119 = vector.broadcast %118 : vector<1x32xf32> to vector<8x32xf32>
    %120 = arith.addf %117, %119 : vector<8x32xf32>
    %c0_37 = arith.constant 0 : index
    %c0_38 = arith.constant 0 : index
    %121 = vector.load %arg8[%c0_37, %c0_38] : memref<1x32xf32, #tpu.memory_space<vmem>>, vector<1x32xf32>
    %c0_39 = arith.constant 0 : index
    %c0_40 = arith.constant 0 : index
    %122 = vector.load %arg9[%c0_39, %c0_40] : memref<1x32xf32, #tpu.memory_space<vmem>>, vector<1x32xf32>
    %cst_41 = arith.constant dense<0.000000e+00> : vector<8xf32>
    %123 = vector.multi_reduction <add>, %120, %cst_41 [1] : vector<8x32xf32> to vector<8xf32>
    %124 = vector.shape_cast %123 : vector<8xf32> to vector<8x1xf32>
    %cst_42 = arith.constant 3.200000e+01 : f32
    %125 = vector.broadcast %cst_42 : f32 to vector<8x1xf32>
    %126 = arith.divf %124, %125 : vector<8x1xf32>
    %127 = vector.broadcast %126 : vector<8x1xf32> to vector<8x32xf32>
    %128 = arith.subf %120, %127 : vector<8x32xf32>
    %129 = arith.mulf %128, %128 : vector<8x32xf32>
    %cst_43 = arith.constant dense<0.000000e+00> : vector<8xf32>
    %130 = vector.multi_reduction <add>, %129, %cst_43 [1] : vector<8x32xf32> to vector<8xf32>
    %131 = vector.shape_cast %130 : vector<8xf32> to vector<8x1xf32>
    %cst_44 = arith.constant 3.200000e+01 : f32
    %132 = vector.broadcast %cst_44 : f32 to vector<8x1xf32>
    %133 = arith.divf %131, %132 : vector<8x1xf32>
    %134 = vector.broadcast %126 : vector<8x1xf32> to vector<8x32xf32>
    %135 = arith.subf %120, %134 : vector<8x32xf32>
    %cst_45 = arith.constant 9.99999974E-6 : f32
    %136 = vector.broadcast %cst_45 : f32 to vector<8x1xf32>
    %137 = arith.addf %133, %136 : vector<8x1xf32>
    %138 = math.rsqrt %137 : vector<8x1xf32>
    %139 = vector.broadcast %138 : vector<8x1xf32> to vector<8x32xf32>
    %140 = arith.mulf %135, %139 : vector<8x32xf32>
    %141 = vector.broadcast %121 : vector<1x32xf32> to vector<8x32xf32>
    %142 = arith.mulf %140, %141 : vector<8x32xf32>
    %143 = vector.broadcast %122 : vector<1x32xf32> to vector<8x32xf32>
    %144 = arith.addf %142, %143 : vector<8x32xf32>
    %c0_46 = arith.constant 0 : index
    %c0_47 = arith.constant 0 : index
    %145 = vector.load %arg10[%c0_46, %c0_47] : memref<32x64xbf16, #tpu.memory_space<vmem>>, vector<32x64xbf16>
    %146 = arith.truncf %144 : vector<8x32xf32> to vector<8x32xbf16>
    %cst_48 = arith.constant dense<0.000000e+00> : vector<8x64xf32>
    %147 = tpu.matmul %146, %145, %cst_48 {dimension_numbers = #tpu.dot_dimension_numbers<[1], [0], [0], [1], [0, 0, 1, 1], [], []>} : vector<8x32xbf16>, vector<32x64xbf16>, vector<8x64xf32> -> vector<8x64xf32>
    %c0_49 = arith.constant 0 : index
    %c0_50 = arith.constant 0 : index
    %148 = vector.load %arg11[%c0_49, %c0_50] : memref<1x64xf32, #tpu.memory_space<vmem>>, vector<1x64xf32>
    %149 = vector.broadcast %148 : vector<1x64xf32> to vector<8x64xf32>
    %150 = arith.addf %147, %149 : vector<8x64xf32>
    %cst_51 = arith.constant 0.000000e+00 : f32
    %151 = vector.broadcast %cst_51 : f32 to vector<8x64xf32>
    %152 = arith.maximumf %150, %151 : vector<8x64xf32>
    %c0_52 = arith.constant 0 : index
    %c0_53 = arith.constant 0 : index
    %153 = vector.load %arg12[%c0_52, %c0_53] : memref<64x32xbf16, #tpu.memory_space<vmem>>, vector<64x32xbf16>
    %154 = arith.truncf %152 : vector<8x64xf32> to vector<8x64xbf16>
    %cst_54 = arith.constant dense<0.000000e+00> : vector<8x32xf32>
    %155 = tpu.matmul %154, %153, %cst_54 {dimension_numbers = #tpu.dot_dimension_numbers<[1], [0], [0], [1], [0, 0, 1, 1], [], []>} : vector<8x64xbf16>, vector<64x32xbf16>, vector<8x32xf32> -> vector<8x32xf32>
    %156 = arith.addf %120, %155 : vector<8x32xf32>
    %c0_55 = arith.constant 0 : index
    %c0_56 = arith.constant 0 : index
    %157 = vector.load %arg13[%c0_55, %c0_56] : memref<1x32xf32, #tpu.memory_space<vmem>>, vector<1x32xf32>
    %158 = vector.broadcast %157 : vector<1x32xf32> to vector<8x32xf32>
    %159 = arith.addf %156, %158 : vector<8x32xf32>
    %c0_57 = arith.constant 0 : index
    %c0_58 = arith.constant 0 : index
    %c0_59 = arith.constant 0 : index
    %160 = vector.load %arg16[%c0_57, %c0_58, %c0_59] : memref<1x8x32xf32, #tpu.memory_space<vmem>>, vector<1x8x32xf32>
    %161 = vector.shape_cast %160 : vector<1x8x32xf32> to vector<8x32xf32>
    %162 = vector.shape_cast %159 : vector<8x32xf32> to vector<1x8x32xf32>
    tpu.vector_store %arg16[%c0_57, %c0_58, %c0_59], %162 {strides = array<i32>} : memref<1x8x32xf32, #tpu.memory_space<vmem>>, vector<1x8x32xf32>,
    return
  }
  func.func @transform_0(%arg0: i32) -> (i32, i32, i32) {
    %c0_i32 = arith.constant 0 : i32
    %c0_i32_0 = arith.constant 0 : i32
    %c0_i32_1 = arith.constant 0 : i32
    return %arg0, %c0_i32, %c0_i32_0 : i32, i32, i32
  }
  func.func @transform_1(%arg0: i32) -> (i32, i32) {
    %c0_i32 = arith.constant 0 : i32
    %c0_i32_0 = arith.constant 0 : i32
    %c0_i32_1 = arith.constant 0 : i32
    return %c0_i32, %c0_i32_0 : i32, i32
  }
  func.func @transform_2(%arg0: i32) -> (i32, i32) {
    %c0_i32 = arith.constant 0 : i32
    %c0_i32_0 = arith.constant 0 : i32
    %c0_i32_1 = arith.constant 0 : i32
    return %c0_i32, %c0_i32_0 : i32, i32
  }
  func.func @transform_3(%arg0: i32) -> (i32, i32) {
    %c0_i32 = arith.constant 0 : i32
    %c0_i32_0 = arith.constant 0 : i32
    %c0_i32_1 = arith.constant 0 : i32
    return %c0_i32, %c0_i32_0 : i32, i32
  }
  func.func @transform_4(%arg0: i32) -> (i32, i32) {
    %c0_i32 = arith.constant 0 : i32
    %c0_i32_0 = arith.constant 0 : i32
    %c0_i32_1 = arith.constant 0 : i32
    return %c0_i32, %c0_i32_0 : i32, i32
  }
  func.func @transform_5(%arg0: i32) -> (i32, i32) {
    %c0_i32 = arith.constant 0 : i32
    %c0_i32_0 = arith.constant 0 : i32
    %c0_i32_1 = arith.constant 0 : i32
    return %c0_i32, %c0_i32_0 : i32, i32
  }
  func.func @transform_6(%arg0: i32) -> (i32, i32) {
    %c0_i32 = arith.constant 0 : i32
    %c0_i32_0 = arith.constant 0 : i32
    %c0_i32_1 = arith.constant 0 : i32
    return %c0_i32, %c0_i32_0 : i32, i32
  }
  func.func @transform_7(%arg0: i32) -> (i32, i32) {
    %c0_i32 = arith.constant 0 : i32
    %c0_i32_0 = arith.constant 0 : i32
    %c0_i32_1 = arith.constant 0 : i32
    return %c0_i32, %c0_i32_0 : i32, i32
  }
  func.func @transform_8(%arg0: i32) -> (i32, i32) {
    %c0_i32 = arith.constant 0 : i32
    %c0_i32_0 = arith.constant 0 : i32
    %c0_i32_1 = arith.constant 0 : i32
    return %c0_i32, %c0_i32_0 : i32, i32
  }
  func.func @transform_9(%arg0: i32) -> (i32, i32) {
    %c0_i32 = arith.constant 0 : i32
    %c0_i32_0 = arith.constant 0 : i32
    %c0_i32_1 = arith.constant 0 : i32
    return %c0_i32, %c0_i32_0 : i32, i32
  }
  func.func @transform_10(%arg0: i32) -> (i32, i32) {
    %c0_i32 = arith.constant 0 : i32
    %c0_i32_0 = arith.constant 0 : i32
    %c0_i32_1 = arith.constant 0 : i32
    return %c0_i32, %c0_i32_0 : i32, i32
  }
  func.func @transform_11(%arg0: i32) -> (i32, i32) {
    %c0_i32 = arith.constant 0 : i32
    %c0_i32_0 = arith.constant 0 : i32
    %c0_i32_1 = arith.constant 0 : i32
    return %c0_i32, %c0_i32_0 : i32, i32
  }
  func.func @transform_12(%arg0: i32) -> (i32, i32) {
    %c0_i32 = arith.constant 0 : i32
    %c0_i32_0 = arith.constant 0 : i32
    %c0_i32_1 = arith.constant 0 : i32
    return %c0_i32, %c0_i32_0 : i32, i32
  }
  func.func @transform_13(%arg0: i32) -> (i32, i32) {
    %c0_i32 = arith.constant 0 : i32
    %c0_i32_0 = arith.constant 0 : i32
    %c0_i32_1 = arith.constant 0 : i32
    return %c0_i32, %c0_i32_0 : i32, i32
  }
  func.func @transform_14(%arg0: i32) -> (i32, i32) {
    %c0_i32 = arith.constant 0 : i32
    %c0_i32_0 = arith.constant 0 : i32
    %c0_i32_1 = arith.constant 0 : i32
    return %c0_i32, %c0_i32_0 : i32, i32
  }
  func.func @transform_15(%arg0: i32) -> (i32, i32, i32) {
    %c0_i32 = arith.constant 0 : i32
    %c0_i32_0 = arith.constant 0 : i32
    %c0_i32_1 = arith.constant 0 : i32
    return %arg0, %c0_i32, %c0_i32_0 : i32, i32, i32
  }
}

module attributes {stable_mosaic.version = 11 : i64} {
  func.func @_encoder_layer_kernel(%arg0: i32, %arg1: memref<1x8x32xf32, #tpu.memory_space<vmem>>, %arg2: memref<1x32xf32, #tpu.memory_space<vmem>>, %arg3: memref<1x32xf32, #tpu.memory_space<vmem>>, %arg4: memref<32x96xbf16, #tpu.memory_space<vmem>>, %arg5: memref<1x96xf32, #tpu.memory_space<vmem>>, %arg6: memref<32x32xbf16, #tpu.memory_space<vmem>>, %arg7: memref<1x32xf32, #tpu.memory_space<vmem>>, %arg8: memref<1x32xf32, #tpu.memory_space<vmem>>, %arg9: memref<1x32xf32, #tpu.memory_space<vmem>>, %arg10: memref<32x64xbf16, #tpu.memory_space<vmem>>, %arg11: memref<1x64xf32, #tpu.memory_space<vmem>>, %arg12: memref<64x32xbf16, #tpu.memory_space<vmem>>, %arg13: memref<1x32xf32, #tpu.memory_space<vmem>>, %arg14: memref<1x32xf32, #tpu.memory_space<vmem>>, %arg15: memref<1x32xf32, #tpu.memory_space<vmem>>, %arg16: memref<1x8x32xf32, #tpu.memory_space<vmem>>) attributes {dimension_semantics = [#tpu.dimension_semantics<parallel>], iteration_bounds = array<i64: 2>, scalar_prefetch = 0 : i64, scratch_operands = 0 : i64, tpu.core_type = #tpu.core_type<tc>, window_params = [{transform_indices = @transform_0, window_bounds = array<i64: 1, 8, 32>}, {pipeline_mode = #tpu.pipeline_mode<synchronous>, transform_indices = @transform_1, window_bounds = array<i64: 1, 32>}, {pipeline_mode = #tpu.pipeline_mode<synchronous>, transform_indices = @transform_2, window_bounds = array<i64: 1, 32>}, {pipeline_mode = #tpu.pipeline_mode<synchronous>, transform_indices = @transform_3, window_bounds = array<i64: 32, 96>}, {pipeline_mode = #tpu.pipeline_mode<synchronous>, transform_indices = @transform_4, window_bounds = array<i64: 1, 96>}, {pipeline_mode = #tpu.pipeline_mode<synchronous>, transform_indices = @transform_5, window_bounds = array<i64: 32, 32>}, {pipeline_mode = #tpu.pipeline_mode<synchronous>, transform_indices = @transform_6, window_bounds = array<i64: 1, 32>}, {pipeline_mode = #tpu.pipeline_mode<synchronous>, transform_indices = @transform_7, window_bounds = array<i64: 1, 32>}, {pipeline_mode = #tpu.pipeline_mode<synchronous>, transform_indices = @transform_8, window_bounds = array<i64: 1, 32>}, {pipeline_mode = #tpu.pipeline_mode<synchronous>, transform_indices = @transform_9, window_bounds = array<i64: 32, 64>}, {pipeline_mode = #tpu.pipeline_mode<synchronous>, transform_indices = @transform_10, window_bounds = array<i64: 1, 64>}, {pipeline_mode = #tpu.pipeline_mode<synchronous>, transform_indices = @transform_11, window_bounds = array<i64: 64, 32>}, {pipeline_mode = #tpu.pipeline_mode<synchronous>, transform_indices = @transform_12, window_bounds = array<i64: 1, 32>}, {pipeline_mode = #tpu.pipeline_mode<synchronous>, transform_indices = @transform_13, window_bounds = array<i64: 1, 32>}, {pipeline_mode = #tpu.pipeline_mode<synchronous>, transform_indices = @transform_14, window_bounds = array<i64: 1, 32>}, {transform_indices = @transform_15, window_bounds = array<i64: 1, 8, 32>}]} {
    %c0 = arith.constant 0 : index
    %c0_0 = arith.constant 0 : index
    %c0_1 = arith.constant 0 : index
    %0 = vector.load %arg1[%c0, %c0_0, %c0_1] : memref<1x8x32xf32, #tpu.memory_space<vmem>>, vector<1x8x32xf32>
    %1 = vector.shape_cast %0 : vector<1x8x32xf32> to vector<8x32xf32>
    %c0_2 = arith.constant 0 : index
    %c0_3 = arith.constant 0 : index
    %2 = vector.load %arg2[%c0_2, %c0_3] : memref<1x32xf32, #tpu.memory_space<vmem>>, vector<1x32xf32>
    %c0_4 = arith.constant 0 : index
    %c0_5 = arith.constant 0 : index
    %3 = vector.load %arg3[%c0_4, %c0_5] : memref<1x32xf32, #tpu.memory_space<vmem>>, vector<1x32xf32>
    %cst = arith.constant dense<0.000000e+00> : vector<8xf32>
    %4 = vector.multi_reduction <add>, %1, %cst [1] : vector<8x32xf32> to vector<8xf32>
    %5 = vector.shape_cast %4 : vector<8xf32> to vector<8x1xf32>
    %cst_6 = arith.constant 3.200000e+01 : f32
    %6 = vector.broadcast %cst_6 : f32 to vector<8x1xf32>
    %7 = arith.divf %5, %6 : vector<8x1xf32>
    %8 = vector.broadcast %7 : vector<8x1xf32> to vector<8x32xf32>
    %9 = arith.subf %1, %8 : vector<8x32xf32>
    %10 = arith.mulf %9, %9 : vector<8x32xf32>
    %cst_7 = arith.constant dense<0.000000e+00> : vector<8xf32>
    %11 = vector.multi_reduction <add>, %10, %cst_7 [1] : vector<8x32xf32> to vector<8xf32>
    %12 = vector.shape_cast %11 : vector<8xf32> to vector<8x1xf32>
    %cst_8 = arith.constant 3.200000e+01 : f32
    %13 = vector.broadcast %cst_8 : f32 to vector<8x1xf32>
    %14 = arith.divf %12, %13 : vector<8x1xf32>
    %15 = vector.broadcast %7 : vector<8x1xf32> to vector<8x32xf32>
    %16 = arith.subf %1, %15 : vector<8x32xf32>
    %cst_9 = arith.constant 9.99999974E-6 : f32
    %17 = vector.broadcast %cst_9 : f32 to vector<8x1xf32>
    %18 = arith.addf %14, %17 : vector<8x1xf32>
    %19 = math.rsqrt %18 : vector<8x1xf32>
    %20 = vector.broadcast %19 : vector<8x1xf32> to vector<8x32xf32>
    %21 = arith.mulf %16, %20 : vector<8x32xf32>
    %22 = vector.broadcast %2 : vector<1x32xf32> to vector<8x32xf32>
    %23 = arith.mulf %21, %22 : vector<8x32xf32>
    %24 = vector.broadcast %3 : vector<1x32xf32> to vector<8x32xf32>
    %25 = arith.addf %23, %24 : vector<8x32xf32>
    %c0_10 = arith.constant 0 : index
    %c0_11 = arith.constant 0 : index
    %26 = vector.load %arg4[%c0_10, %c0_11] : memref<32x96xbf16, #tpu.memory_space<vmem>>, vector<32x96xbf16>
    %27 = arith.truncf %25 : vector<8x32xf32> to vector<8x32xbf16>
    %cst_12 = arith.constant dense<0.000000e+00> : vector<8x96xf32>
    %28 = tpu.matmul %27, %26, %cst_12 {dimension_numbers = #tpu.dot_dimension_numbers<[1], [0], [0], [1], [0, 0, 1, 1], [], []>} : vector<8x32xbf16>, vector<32x96xbf16>, vector<8x96xf32> -> vector<8x96xf32>
    %c0_13 = arith.constant 0 : index
    %c0_14 = arith.constant 0 : index
    %29 = vector.load %arg5[%c0_13, %c0_14] : memref<1x96xf32, #tpu.memory_space<vmem>>, vector<1x96xf32>
    %30 = vector.broadcast %29 : vector<1x96xf32> to vector<8x96xf32>
    %31 = arith.addf %28, %30 : vector<8x96xf32>
    %32 = vector.extract_strided_slice %31 {offsets = [0, 0], sizes = [8, 32], strides = [1, 1]} : vector<8x96xf32> to vector<8x32xf32>
    %cst_15 = arith.constant 0.353553385 : f32
    %33 = vector.broadcast %cst_15 : f32 to vector<8x32xf32>
    %34 = arith.mulf %32, %33 : vector<8x32xf32>
    %35 = vector.extract_strided_slice %31 {offsets = [0, 32], sizes = [8, 32], strides = [1, 1]} : vector<8x96xf32> to vector<8x32xf32>
    %36 = vector.extract_strided_slice %31 {offsets = [0, 64], sizes = [8, 32], strides = [1, 1]} : vector<8x96xf32> to vector<8x32xf32>
    %37 = vector.extract_strided_slice %34 {offsets = [0, 0], sizes = [8, 8], strides = [1, 1]} : vector<8x32xf32> to vector<8x8xf32>
    %38 = arith.truncf %37 : vector<8x8xf32> to vector<8x8xbf16>
    %39 = vector.extract_strided_slice %35 {offsets = [0, 0], sizes = [8, 8], strides = [1, 1]} : vector<8x32xf32> to vector<8x8xf32>
    %40 = arith.truncf %39 : vector<8x8xf32> to vector<8x8xbf16>
    %41 = vector.extract_strided_slice %36 {offsets = [0, 0], sizes = [8, 8], strides = [1, 1]} : vector<8x32xf32> to vector<8x8xf32>
    %42 = arith.truncf %41 : vector<8x8xf32> to vector<8x8xbf16>
    %cst_16 = arith.constant dense<0.000000e+00> : vector<8x8xf32>
    %43 = tpu.matmul %38, %40, %cst_16 {dimension_numbers = #tpu.dot_dimension_numbers<[1], [1], [0], [0], [0, 0, 1, 0], [], []>} : vector<8x8xbf16>, vector<8x8xbf16>, vector<8x8xf32> -> vector<8x8xf32>
    %cst_17 = arith.constant dense<0xFF800000> : vector<8xf32>
    %44 = vector.multi_reduction <maximumf>, %43, %cst_17 [1] : vector<8x8xf32> to vector<8xf32>
    %45 = vector.shape_cast %44 : vector<8xf32> to vector<8x1xf32>
    %46 = vector.broadcast %45 : vector<8x1xf32> to vector<8x8xf32>
    %47 = arith.subf %43, %46 : vector<8x8xf32>
    %48 = math.exp %47 : vector<8x8xf32>
    %cst_18 = arith.constant dense<0.000000e+00> : vector<8xf32>
    %49 = vector.multi_reduction <add>, %48, %cst_18 [1] : vector<8x8xf32> to vector<8xf32>
    %50 = vector.shape_cast %49 : vector<8xf32> to vector<8x1xf32>
    %51 = tpu.reciprocal %50 {approx = true} : vector<8x1xf32> -> vector<8x1xf32>
    %52 = vector.broadcast %51 : vector<8x1xf32> to vector<8x8xf32>
    %53 = arith.mulf %48, %52 : vector<8x8xf32>
    %54 = arith.truncf %53 : vector<8x8xf32> to vector<8x8xbf16>
    %cst_19 = arith.constant dense<0.000000e+00> : vector<8x8xf32>
    %55 = tpu.matmul %54, %42, %cst_19 {dimension_numbers = #tpu.dot_dimension_numbers<[1], [0], [0], [1], [0, 0, 1, 1], [], []>} : vector<8x8xbf16>, vector<8x8xbf16>, vector<8x8xf32> -> vector<8x8xf32>
    %56 = vector.extract_strided_slice %34 {offsets = [0, 8], sizes = [8, 8], strides = [1, 1]} : vector<8x32xf32> to vector<8x8xf32>
    %57 = arith.truncf %56 : vector<8x8xf32> to vector<8x8xbf16>
    %58 = vector.extract_strided_slice %35 {offsets = [0, 8], sizes = [8, 8], strides = [1, 1]} : vector<8x32xf32> to vector<8x8xf32>
    %59 = arith.truncf %58 : vector<8x8xf32> to vector<8x8xbf16>
    %60 = vector.extract_strided_slice %36 {offsets = [0, 8], sizes = [8, 8], strides = [1, 1]} : vector<8x32xf32> to vector<8x8xf32>
    %61 = arith.truncf %60 : vector<8x8xf32> to vector<8x8xbf16>
    %cst_20 = arith.constant dense<0.000000e+00> : vector<8x8xf32>
    %62 = tpu.matmul %57, %59, %cst_20 {dimension_numbers = #tpu.dot_dimension_numbers<[1], [1], [0], [0], [0, 0, 1, 0], [], []>} : vector<8x8xbf16>, vector<8x8xbf16>, vector<8x8xf32> -> vector<8x8xf32>
    %cst_21 = arith.constant dense<0xFF800000> : vector<8xf32>
    %63 = vector.multi_reduction <maximumf>, %62, %cst_21 [1] : vector<8x8xf32> to vector<8xf32>
    %64 = vector.shape_cast %63 : vector<8xf32> to vector<8x1xf32>
    %65 = vector.broadcast %64 : vector<8x1xf32> to vector<8x8xf32>
    %66 = arith.subf %62, %65 : vector<8x8xf32>
    %67 = math.exp %66 : vector<8x8xf32>
    %cst_22 = arith.constant dense<0.000000e+00> : vector<8xf32>
    %68 = vector.multi_reduction <add>, %67, %cst_22 [1] : vector<8x8xf32> to vector<8xf32>
    %69 = vector.shape_cast %68 : vector<8xf32> to vector<8x1xf32>
    %70 = tpu.reciprocal %69 {approx = true} : vector<8x1xf32> -> vector<8x1xf32>
    %71 = vector.broadcast %70 : vector<8x1xf32> to vector<8x8xf32>
    %72 = arith.mulf %67, %71 : vector<8x8xf32>
    %73 = arith.truncf %72 : vector<8x8xf32> to vector<8x8xbf16>
    %cst_23 = arith.constant dense<0.000000e+00> : vector<8x8xf32>
    %74 = tpu.matmul %73, %61, %cst_23 {dimension_numbers = #tpu.dot_dimension_numbers<[1], [0], [0], [1], [0, 0, 1, 1], [], []>} : vector<8x8xbf16>, vector<8x8xbf16>, vector<8x8xf32> -> vector<8x8xf32>
    %75 = vector.extract_strided_slice %34 {offsets = [0, 16], sizes = [8, 8], strides = [1, 1]} : vector<8x32xf32> to vector<8x8xf32>
    %76 = arith.truncf %75 : vector<8x8xf32> to vector<8x8xbf16>
    %77 = vector.extract_strided_slice %35 {offsets = [0, 16], sizes = [8, 8], strides = [1, 1]} : vector<8x32xf32> to vector<8x8xf32>
    %78 = arith.truncf %77 : vector<8x8xf32> to vector<8x8xbf16>
    %79 = vector.extract_strided_slice %36 {offsets = [0, 16], sizes = [8, 8], strides = [1, 1]} : vector<8x32xf32> to vector<8x8xf32>
    %80 = arith.truncf %79 : vector<8x8xf32> to vector<8x8xbf16>
    %cst_24 = arith.constant dense<0.000000e+00> : vector<8x8xf32>
    %81 = tpu.matmul %76, %78, %cst_24 {dimension_numbers = #tpu.dot_dimension_numbers<[1], [1], [0], [0], [0, 0, 1, 0], [], []>} : vector<8x8xbf16>, vector<8x8xbf16>, vector<8x8xf32> -> vector<8x8xf32>
    %cst_25 = arith.constant dense<0xFF800000> : vector<8xf32>
    %82 = vector.multi_reduction <maximumf>, %81, %cst_25 [1] : vector<8x8xf32> to vector<8xf32>
    %83 = vector.shape_cast %82 : vector<8xf32> to vector<8x1xf32>
    %84 = vector.broadcast %83 : vector<8x1xf32> to vector<8x8xf32>
    %85 = arith.subf %81, %84 : vector<8x8xf32>
    %86 = math.exp %85 : vector<8x8xf32>
    %cst_26 = arith.constant dense<0.000000e+00> : vector<8xf32>
    %87 = vector.multi_reduction <add>, %86, %cst_26 [1] : vector<8x8xf32> to vector<8xf32>
    %88 = vector.shape_cast %87 : vector<8xf32> to vector<8x1xf32>
    %89 = tpu.reciprocal %88 {approx = true} : vector<8x1xf32> -> vector<8x1xf32>
    %90 = vector.broadcast %89 : vector<8x1xf32> to vector<8x8xf32>
    %91 = arith.mulf %86, %90 : vector<8x8xf32>
    %92 = arith.truncf %91 : vector<8x8xf32> to vector<8x8xbf16>
    %cst_27 = arith.constant dense<0.000000e+00> : vector<8x8xf32>
    %93 = tpu.matmul %92, %80, %cst_27 {dimension_numbers = #tpu.dot_dimension_numbers<[1], [0], [0], [1], [0, 0, 1, 1], [], []>} : vector<8x8xbf16>, vector<8x8xbf16>, vector<8x8xf32> -> vector<8x8xf32>
    %94 = vector.extract_strided_slice %34 {offsets = [0, 24], sizes = [8, 8], strides = [1, 1]} : vector<8x32xf32> to vector<8x8xf32>
    %95 = arith.truncf %94 : vector<8x8xf32> to vector<8x8xbf16>
    %96 = vector.extract_strided_slice %35 {offsets = [0, 24], sizes = [8, 8], strides = [1, 1]} : vector<8x32xf32> to vector<8x8xf32>
    %97 = arith.truncf %96 : vector<8x8xf32> to vector<8x8xbf16>
    %98 = vector.extract_strided_slice %36 {offsets = [0, 24], sizes = [8, 8], strides = [1, 1]} : vector<8x32xf32> to vector<8x8xf32>
    %99 = arith.truncf %98 : vector<8x8xf32> to vector<8x8xbf16>
    %cst_28 = arith.constant dense<0.000000e+00> : vector<8x8xf32>
    %100 = tpu.matmul %95, %97, %cst_28 {dimension_numbers = #tpu.dot_dimension_numbers<[1], [1], [0], [0], [0, 0, 1, 0], [], []>} : vector<8x8xbf16>, vector<8x8xbf16>, vector<8x8xf32> -> vector<8x8xf32>
    %cst_29 = arith.constant dense<0xFF800000> : vector<8xf32>
    %101 = vector.multi_reduction <maximumf>, %100, %cst_29 [1] : vector<8x8xf32> to vector<8xf32>
    %102 = vector.shape_cast %101 : vector<8xf32> to vector<8x1xf32>
    %103 = vector.broadcast %102 : vector<8x1xf32> to vector<8x8xf32>
    %104 = arith.subf %100, %103 : vector<8x8xf32>
    %105 = math.exp %104 : vector<8x8xf32>
    %cst_30 = arith.constant dense<0.000000e+00> : vector<8xf32>
    %106 = vector.multi_reduction <add>, %105, %cst_30 [1] : vector<8x8xf32> to vector<8xf32>
    %107 = vector.shape_cast %106 : vector<8xf32> to vector<8x1xf32>
    %108 = tpu.reciprocal %107 {approx = true} : vector<8x1xf32> -> vector<8x1xf32>
    %109 = vector.broadcast %108 : vector<8x1xf32> to vector<8x8xf32>
    %110 = arith.mulf %105, %109 : vector<8x8xf32>
    %111 = arith.truncf %110 : vector<8x8xf32> to vector<8x8xbf16>
    %cst_31 = arith.constant dense<0.000000e+00> : vector<8x8xf32>
    %112 = tpu.matmul %111, %99, %cst_31 {dimension_numbers = #tpu.dot_dimension_numbers<[1], [0], [0], [1], [0, 0, 1, 1], [], []>} : vector<8x8xbf16>, vector<8x8xbf16>, vector<8x8xf32> -> vector<8x8xf32>
    %113 = tpu.concatenate %55, %74, %93, %112 in 1 : vector<8x8xf32>, vector<8x8xf32>, vector<8x8xf32>, vector<8x8xf32> -> vector<8x32xf32>
    %c0_32 = arith.constant 0 : index
    %c0_33 = arith.constant 0 : index
    %114 = vector.load %arg6[%c0_32, %c0_33] : memref<32x32xbf16, #tpu.memory_space<vmem>>, vector<32x32xbf16>
    %115 = arith.truncf %113 : vector<8x32xf32> to vector<8x32xbf16>
    %cst_34 = arith.constant dense<0.000000e+00> : vector<8x32xf32>
    %116 = tpu.matmul %115, %114, %cst_34 {dimension_numbers = #tpu.dot_dimension_numbers<[1], [0], [0], [1], [0, 0, 1, 1], [], []>} : vector<8x32xbf16>, vector<32x32xbf16>, vector<8x32xf32> -> vector<8x32xf32>
    %117 = arith.addf %1, %116 : vector<8x32xf32>
    %c0_35 = arith.constant 0 : index
    %c0_36 = arith.constant 0 : index
    %118 = vector.load %arg7[%c0_35, %c0_36] : memref<1x32xf32, #tpu.memory_space<vmem>>, vector<1x32xf32>
    %119 = vector.broadcast %118 : vector<1x32xf32> to vector<8x32xf32>
    %120 = arith.addf %117, %119 : vector<8x32xf32>
    %c0_37 = arith.constant 0 : index
    %c0_38 = arith.constant 0 : index
    %121 = vector.load %arg8[%c0_37, %c0_38] : memref<1x32xf32, #tpu.memory_space<vmem>>, vector<1x32xf32>
    %c0_39 = arith.constant 0 : index
    %c0_40 = arith.constant 0 : index
    %122 = vector.load %arg9[%c0_39, %c0_40] : memref<1x32xf32, #tpu.memory_space<vmem>>, vector<1x32xf32>
    %cst_41 = arith.constant dense<0.000000e+00> : vector<8xf32>
    %123 = vector.multi_reduction <add>, %120, %cst_41 [1] : vector<8x32xf32> to vector<8xf32>
    %124 = vector.shape_cast %123 : vector<8xf32> to vector<8x1xf32>
    %cst_42 = arith.constant 3.200000e+01 : f32
    %125 = vector.broadcast %cst_42 : f32 to vector<8x1xf32>
    %126 = arith.divf %124, %125 : vector<8x1xf32>
    %127 = vector.broadcast %126 : vector<8x1xf32> to vector<8x32xf32>
    %128 = arith.subf %120, %127 : vector<8x32xf32>
    %129 = arith.mulf %128, %128 : vector<8x32xf32>
    %cst_43 = arith.constant dense<0.000000e+00> : vector<8xf32>
    %130 = vector.multi_reduction <add>, %129, %cst_43 [1] : vector<8x32xf32> to vector<8xf32>
    %131 = vector.shape_cast %130 : vector<8xf32> to vector<8x1xf32>
    %cst_44 = arith.constant 3.200000e+01 : f32
    %132 = vector.broadcast %cst_44 : f32 to vector<8x1xf32>
    %133 = arith.divf %131, %132 : vector<8x1xf32>
    %134 = vector.broadcast %126 : vector<8x1xf32> to vector<8x32xf32>
    %135 = arith.subf %120, %134 : vector<8x32xf32>
    %cst_45 = arith.constant 9.99999974E-6 : f32
    %136 = vector.broadcast %cst_45 : f32 to vector<8x1xf32>
    %137 = arith.addf %133, %136 : vector<8x1xf32>
    %138 = math.rsqrt %137 : vector<8x1xf32>
    %139 = vector.broadcast %138 : vector<8x1xf32> to vector<8x32xf32>
    %140 = arith.mulf %135, %139 : vector<8x32xf32>
    %141 = vector.broadcast %121 : vector<1x32xf32> to vector<8x32xf32>
    %142 = arith.mulf %140, %141 : vector<8x32xf32>
    %143 = vector.broadcast %122 : vector<1x32xf32> to vector<8x32xf32>
    %144 = arith.addf %142, %143 : vector<8x32xf32>
    %c0_46 = arith.constant 0 : index
    %c0_47 = arith.constant 0 : index
    %145 = vector.load %arg10[%c0_46, %c0_47] : memref<32x64xbf16, #tpu.memory_space<vmem>>, vector<32x64xbf16>
    %146 = arith.truncf %144 : vector<8x32xf32> to vector<8x32xbf16>
    %cst_48 = arith.constant dense<0.000000e+00> : vector<8x64xf32>
    %147 = tpu.matmul %146, %145, %cst_48 {dimension_numbers = #tpu.dot_dimension_numbers<[1], [0], [0], [1], [0, 0, 1, 1], [], []>} : vector<8x32xbf16>, vector<32x64xbf16>, vector<8x64xf32> -> vector<8x64xf32>
    %c0_49 = arith.constant 0 : index
    %c0_50 = arith.constant 0 : index
    %148 = vector.load %arg11[%c0_49, %c0_50] : memref<1x64xf32, #tpu.memory_space<vmem>>, vector<1x64xf32>
    %149 = vector.broadcast %148 : vector<1x64xf32> to vector<8x64xf32>
    %150 = arith.addf %147, %149 : vector<8x64xf32>
    %cst_51 = arith.constant 0.000000e+00 : f32
    %151 = vector.broadcast %cst_51 : f32 to vector<8x64xf32>
    %152 = arith.maximumf %150, %151 : vector<8x64xf32>
    %c0_52 = arith.constant 0 : index
    %c0_53 = arith.constant 0 : index
    %153 = vector.load %arg12[%c0_52, %c0_53] : memref<64x32xbf16, #tpu.memory_space<vmem>>, vector<64x32xbf16>
    %154 = arith.truncf %152 : vector<8x64xf32> to vector<8x64xbf16>
    %cst_54 = arith.constant dense<0.000000e+00> : vector<8x32xf32>
    %155 = tpu.matmul %154, %153, %cst_54 {dimension_numbers = #tpu.dot_dimension_numbers<[1], [0], [0], [1], [0, 0, 1, 1], [], []>} : vector<8x64xbf16>, vector<64x32xbf16>, vector<8x32xf32> -> vector<8x32xf32>
    %156 = arith.addf %120, %155 : vector<8x32xf32>
    %c0_55 = arith.constant 0 : index
    %c0_56 = arith.constant 0 : index
    %157 = vector.load %arg13[%c0_55, %c0_56] : memref<1x32xf32, #tpu.memory_space<vmem>>, vector<1x32xf32>
    %158 = vector.broadcast %157 : vector<1x32xf32> to vector<8x32xf32>
    %159 = arith.addf %156, %158 : vector<8x32xf32>
    %c0_57 = arith.constant 0 : index
    %c0_58 = arith.constant 0 : index
    %160 = vector.load %arg14[%c0_57, %c0_58] : memref<1x32xf32, #tpu.memory_space<vmem>>, vector<1x32xf32>
    %c0_59 = arith.constant 0 : index
    %c0_60 = arith.constant 0 : index
    %161 = vector.load %arg15[%c0_59, %c0_60] : memref<1x32xf32, #tpu.memory_space<vmem>>, vector<1x32xf32>
    %cst_61 = arith.constant dense<0.000000e+00> : vector<8xf32>
    %162 = vector.multi_reduction <add>, %159, %cst_61 [1] : vector<8x32xf32> to vector<8xf32>
    %163 = vector.shape_cast %162 : vector<8xf32> to vector<8x1xf32>
    %cst_62 = arith.constant 3.200000e+01 : f32
    %164 = vector.broadcast %cst_62 : f32 to vector<8x1xf32>
    %165 = arith.divf %163, %164 : vector<8x1xf32>
    %166 = vector.broadcast %165 : vector<8x1xf32> to vector<8x32xf32>
    %167 = arith.subf %159, %166 : vector<8x32xf32>
    %168 = arith.mulf %167, %167 : vector<8x32xf32>
    %cst_63 = arith.constant dense<0.000000e+00> : vector<8xf32>
    %169 = vector.multi_reduction <add>, %168, %cst_63 [1] : vector<8x32xf32> to vector<8xf32>
    %170 = vector.shape_cast %169 : vector<8xf32> to vector<8x1xf32>
    %cst_64 = arith.constant 3.200000e+01 : f32
    %171 = vector.broadcast %cst_64 : f32 to vector<8x1xf32>
    %172 = arith.divf %170, %171 : vector<8x1xf32>
    %173 = vector.broadcast %165 : vector<8x1xf32> to vector<8x32xf32>
    %174 = arith.subf %159, %173 : vector<8x32xf32>
    %cst_65 = arith.constant 9.99999974E-6 : f32
    %175 = vector.broadcast %cst_65 : f32 to vector<8x1xf32>
    %176 = arith.addf %172, %175 : vector<8x1xf32>
    %177 = math.rsqrt %176 : vector<8x1xf32>
    %178 = vector.broadcast %177 : vector<8x1xf32> to vector<8x32xf32>
    %179 = arith.mulf %174, %178 : vector<8x32xf32>
    %180 = vector.broadcast %160 : vector<1x32xf32> to vector<8x32xf32>
    %181 = arith.mulf %179, %180 : vector<8x32xf32>
    %182 = vector.broadcast %161 : vector<1x32xf32> to vector<8x32xf32>
    %183 = arith.addf %181, %182 : vector<8x32xf32>
    %c0_66 = arith.constant 0 : index
    %c0_67 = arith.constant 0 : index
    %c0_68 = arith.constant 0 : index
    %184 = vector.load %arg16[%c0_66, %c0_67, %c0_68] : memref<1x8x32xf32, #tpu.memory_space<vmem>>, vector<1x8x32xf32>
    %185 = vector.shape_cast %184 : vector<1x8x32xf32> to vector<8x32xf32>
    %186 = vector.shape_cast %183 : vector<8x32xf32> to vector<1x8x32xf32>
    tpu.vector_store %arg16[%c0_66, %c0_67, %c0_68], %186 {strides = array<i32>} : memref<1x8x32xf32, #tpu.memory_space<vmem>>, vector<1x8x32xf32>,
    return
  }
  func.func @transform_0(%arg0: i32) -> (i32, i32, i32) {
    %c0_i32 = arith.constant 0 : i32
    %c0_i32_0 = arith.constant 0 : i32
    %c0_i32_1 = arith.constant 0 : i32
    return %arg0, %c0_i32, %c0_i32_0 : i32, i32, i32
  }
  func.func @transform_1(%arg0: i32) -> (i32, i32) {
    %c0_i32 = arith.constant 0 : i32
    %c0_i32_0 = arith.constant 0 : i32
    %c0_i32_1 = arith.constant 0 : i32
    return %c0_i32, %c0_i32_0 : i32, i32
  }
  func.func @transform_2(%arg0: i32) -> (i32, i32) {
    %c0_i32 = arith.constant 0 : i32
    %c0_i32_0 = arith.constant 0 : i32
    %c0_i32_1 = arith.constant 0 : i32
    return %c0_i32, %c0_i32_0 : i32, i32
  }
  func.func @transform_3(%arg0: i32) -> (i32, i32) {
    %c0_i32 = arith.constant 0 : i32
    %c0_i32_0 = arith.constant 0 : i32
    %c0_i32_1 = arith.constant 0 : i32
    return %c0_i32, %c0_i32_0 : i32, i32
  }
  func.func @transform_4(%arg0: i32) -> (i32, i32) {
    %c0_i32 = arith.constant 0 : i32
    %c0_i32_0 = arith.constant 0 : i32
    %c0_i32_1 = arith.constant 0 : i32
    return %c0_i32, %c0_i32_0 : i32, i32
  }
  func.func @transform_5(%arg0: i32) -> (i32, i32) {
    %c0_i32 = arith.constant 0 : i32
    %c0_i32_0 = arith.constant 0 : i32
    %c0_i32_1 = arith.constant 0 : i32
    return %c0_i32, %c0_i32_0 : i32, i32
  }
  func.func @transform_6(%arg0: i32) -> (i32, i32) {
    %c0_i32 = arith.constant 0 : i32
    %c0_i32_0 = arith.constant 0 : i32
    %c0_i32_1 = arith.constant 0 : i32
    return %c0_i32, %c0_i32_0 : i32, i32
  }
  func.func @transform_7(%arg0: i32) -> (i32, i32) {
    %c0_i32 = arith.constant 0 : i32
    %c0_i32_0 = arith.constant 0 : i32
    %c0_i32_1 = arith.constant 0 : i32
    return %c0_i32, %c0_i32_0 : i32, i32
  }
  func.func @transform_8(%arg0: i32) -> (i32, i32) {
    %c0_i32 = arith.constant 0 : i32
    %c0_i32_0 = arith.constant 0 : i32
    %c0_i32_1 = arith.constant 0 : i32
    return %c0_i32, %c0_i32_0 : i32, i32
  }
  func.func @transform_9(%arg0: i32) -> (i32, i32) {
    %c0_i32 = arith.constant 0 : i32
    %c0_i32_0 = arith.constant 0 : i32
    %c0_i32_1 = arith.constant 0 : i32
    return %c0_i32, %c0_i32_0 : i32, i32
  }
  func.func @transform_10(%arg0: i32) -> (i32, i32) {
    %c0_i32 = arith.constant 0 : i32
    %c0_i32_0 = arith.constant 0 : i32
    %c0_i32_1 = arith.constant 0 : i32
    return %c0_i32, %c0_i32_0 : i32, i32
  }
  func.func @transform_11(%arg0: i32) -> (i32, i32) {
    %c0_i32 = arith.constant 0 : i32
    %c0_i32_0 = arith.constant 0 : i32
    %c0_i32_1 = arith.constant 0 : i32
    return %c0_i32, %c0_i32_0 : i32, i32
  }
  func.func @transform_12(%arg0: i32) -> (i32, i32) {
    %c0_i32 = arith.constant 0 : i32
    %c0_i32_0 = arith.constant 0 : i32
    %c0_i32_1 = arith.constant 0 : i32
    return %c0_i32, %c0_i32_0 : i32, i32
  }
  func.func @transform_13(%arg0: i32) -> (i32, i32) {
    %c0_i32 = arith.constant 0 : i32
    %c0_i32_0 = arith.constant 0 : i32
    %c0_i32_1 = arith.constant 0 : i32
    return %c0_i32, %c0_i32_0 : i32, i32
  }
  func.func @transform_14(%arg0: i32) -> (i32, i32) {
    %c0_i32 = arith.constant 0 : i32
    %c0_i32_0 = arith.constant 0 : i32
    %c0_i32_1 = arith.constant 0 : i32
    return %c0_i32, %c0_i32_0 : i32, i32
  }
  func.func @transform_15(%arg0: i32) -> (i32, i32, i32) {
    %c0_i32 = arith.constant 0 : i32
    %c0_i32_0 = arith.constant 0 : i32
    %c0_i32_1 = arith.constant 0 : i32
    return %arg0, %c0_i32, %c0_i32_0 : i32, i32, i32
  }
}

module attributes {stable_mosaic.version = 11 : i64} {
  func.func @_decoder_layer_kernel(%arg0: i32, %arg1: memref<1x8x32xf32, #tpu.memory_space<vmem>>, %arg2: memref<1x8x32xf32, #tpu.memory_space<vmem>>, %arg3: memref<1x32xf32, #tpu.memory_space<vmem>>, %arg4: memref<1x32xf32, #tpu.memory_space<vmem>>, %arg5: memref<32x96xbf16, #tpu.memory_space<vmem>>, %arg6: memref<1x96xf32, #tpu.memory_space<vmem>>, %arg7: memref<32x32xbf16, #tpu.memory_space<vmem>>, %arg8: memref<1x32xf32, #tpu.memory_space<vmem>>, %arg9: memref<1x32xf32, #tpu.memory_space<vmem>>, %arg10: memref<1x32xf32, #tpu.memory_space<vmem>>, %arg11: memref<32x32xbf16, #tpu.memory_space<vmem>>, %arg12: memref<1x32xf32, #tpu.memory_space<vmem>>, %arg13: memref<32x64xbf16, #tpu.memory_space<vmem>>, %arg14: memref<1x64xf32, #tpu.memory_space<vmem>>, %arg15: memref<32x32xbf16, #tpu.memory_space<vmem>>, %arg16: memref<1x32xf32, #tpu.memory_space<vmem>>, %arg17: memref<1x32xf32, #tpu.memory_space<vmem>>, %arg18: memref<1x32xf32, #tpu.memory_space<vmem>>, %arg19: memref<32x64xbf16, #tpu.memory_space<vmem>>, %arg20: memref<1x64xf32, #tpu.memory_space<vmem>>, %arg21: memref<64x32xbf16, #tpu.memory_space<vmem>>, %arg22: memref<1x32xf32, #tpu.memory_space<vmem>>, %arg23: memref<1x32xf32, #tpu.memory_space<vmem>>, %arg24: memref<1x32xf32, #tpu.memory_space<vmem>>, %arg25: memref<1x8x32xf32, #tpu.memory_space<vmem>>) attributes {dimension_semantics = [#tpu.dimension_semantics<parallel>], iteration_bounds = array<i64: 2>, scalar_prefetch = 0 : i64, scratch_operands = 0 : i64, tpu.core_type = #tpu.core_type<tc>, window_params = [{transform_indices = @transform_0, window_bounds = array<i64: 1, 8, 32>}, {transform_indices = @transform_1, window_bounds = array<i64: 1, 8, 32>}, {pipeline_mode = #tpu.pipeline_mode<synchronous>, transform_indices = @transform_2, window_bounds = array<i64: 1, 32>}, {pipeline_mode = #tpu.pipeline_mode<synchronous>, transform_indices = @transform_3, window_bounds = array<i64: 1, 32>}, {pipeline_mode = #tpu.pipeline_mode<synchronous>, transform_indices = @transform_4, window_bounds = array<i64: 32, 96>}, {pipeline_mode = #tpu.pipeline_mode<synchronous>, transform_indices = @transform_5, window_bounds = array<i64: 1, 96>}, {pipeline_mode = #tpu.pipeline_mode<synchronous>, transform_indices = @transform_6, window_bounds = array<i64: 32, 32>}, {pipeline_mode = #tpu.pipeline_mode<synchronous>, transform_indices = @transform_7, window_bounds = array<i64: 1, 32>}, {pipeline_mode = #tpu.pipeline_mode<synchronous>, transform_indices = @transform_8, window_bounds = array<i64: 1, 32>}, {pipeline_mode = #tpu.pipeline_mode<synchronous>, transform_indices = @transform_9, window_bounds = array<i64: 1, 32>}, {pipeline_mode = #tpu.pipeline_mode<synchronous>, transform_indices = @transform_10, window_bounds = array<i64: 32, 32>}, {pipeline_mode = #tpu.pipeline_mode<synchronous>, transform_indices = @transform_11, window_bounds = array<i64: 1, 32>}, {pipeline_mode = #tpu.pipeline_mode<synchronous>, transform_indices = @transform_12, window_bounds = array<i64: 32, 64>}, {pipeline_mode = #tpu.pipeline_mode<synchronous>, transform_indices = @transform_13, window_bounds = array<i64: 1, 64>}, {pipeline_mode = #tpu.pipeline_mode<synchronous>, transform_indices = @transform_14, window_bounds = array<i64: 32, 32>}, {pipeline_mode = #tpu.pipeline_mode<synchronous>, transform_indices = @transform_15, window_bounds = array<i64: 1, 32>}, {pipeline_mode = #tpu.pipeline_mode<synchronous>, transform_indices = @transform_16, window_bounds = array<i64: 1, 32>}, {pipeline_mode = #tpu.pipeline_mode<synchronous>, transform_indices = @transform_17, window_bounds = array<i64: 1, 32>}, {pipeline_mode = #tpu.pipeline_mode<synchronous>, transform_indices = @transform_18, window_bounds = array<i64: 32, 64>}, {pipeline_mode = #tpu.pipeline_mode<synchronous>, transform_indices = @transform_19, window_bounds = array<i64: 1, 64>}, {pipeline_mode = #tpu.pipeline_mode<synchronous>, transform_indices = @transform_20, window_bounds = array<i64: 64, 32>}, {pipeline_mode = #tpu.pipeline_mode<synchronous>, transform_indices = @transform_21, window_bounds = array<i64: 1, 32>}, {pipeline_mode = #tpu.pipeline_mode<synchronous>, transform_indices = @transform_22, window_bounds = array<i64: 1, 32>}, {pipeline_mode = #tpu.pipeline_mode<synchronous>, transform_indices = @transform_23, window_bounds = array<i64: 1, 32>}, {transform_indices = @transform_24, window_bounds = array<i64: 1, 8, 32>}]} {
    %c0 = arith.constant 0 : index
    %c0_0 = arith.constant 0 : index
    %c0_1 = arith.constant 0 : index
    %0 = vector.load %arg1[%c0, %c0_0, %c0_1] : memref<1x8x32xf32, #tpu.memory_space<vmem>>, vector<1x8x32xf32>
    %1 = vector.shape_cast %0 : vector<1x8x32xf32> to vector<8x32xf32>
    %c0_2 = arith.constant 0 : index
    %c0_3 = arith.constant 0 : index
    %c0_4 = arith.constant 0 : index
    %2 = vector.load %arg2[%c0_2, %c0_3, %c0_4] : memref<1x8x32xf32, #tpu.memory_space<vmem>>, vector<1x8x32xf32>
    %3 = vector.shape_cast %2 : vector<1x8x32xf32> to vector<8x32xf32>
    %c0_5 = arith.constant 0 : index
    %c0_6 = arith.constant 0 : index
    %4 = vector.load %arg3[%c0_5, %c0_6] : memref<1x32xf32, #tpu.memory_space<vmem>>, vector<1x32xf32>
    %c0_7 = arith.constant 0 : index
    %c0_8 = arith.constant 0 : index
    %5 = vector.load %arg4[%c0_7, %c0_8] : memref<1x32xf32, #tpu.memory_space<vmem>>, vector<1x32xf32>
    %cst = arith.constant dense<0.000000e+00> : vector<8xf32>
    %6 = vector.multi_reduction <add>, %1, %cst [1] : vector<8x32xf32> to vector<8xf32>
    %7 = vector.shape_cast %6 : vector<8xf32> to vector<8x1xf32>
    %cst_9 = arith.constant 3.200000e+01 : f32
    %8 = vector.broadcast %cst_9 : f32 to vector<8x1xf32>
    %9 = arith.divf %7, %8 : vector<8x1xf32>
    %10 = vector.broadcast %9 : vector<8x1xf32> to vector<8x32xf32>
    %11 = arith.subf %1, %10 : vector<8x32xf32>
    %12 = arith.mulf %11, %11 : vector<8x32xf32>
    %cst_10 = arith.constant dense<0.000000e+00> : vector<8xf32>
    %13 = vector.multi_reduction <add>, %12, %cst_10 [1] : vector<8x32xf32> to vector<8xf32>
    %14 = vector.shape_cast %13 : vector<8xf32> to vector<8x1xf32>
    %cst_11 = arith.constant 3.200000e+01 : f32
    %15 = vector.broadcast %cst_11 : f32 to vector<8x1xf32>
    %16 = arith.divf %14, %15 : vector<8x1xf32>
    %17 = vector.broadcast %9 : vector<8x1xf32> to vector<8x32xf32>
    %18 = arith.subf %1, %17 : vector<8x32xf32>
    %cst_12 = arith.constant 9.99999974E-6 : f32
    %19 = vector.broadcast %cst_12 : f32 to vector<8x1xf32>
    %20 = arith.addf %16, %19 : vector<8x1xf32>
    %21 = math.rsqrt %20 : vector<8x1xf32>
    %22 = vector.broadcast %21 : vector<8x1xf32> to vector<8x32xf32>
    %23 = arith.mulf %18, %22 : vector<8x32xf32>
    %24 = vector.broadcast %4 : vector<1x32xf32> to vector<8x32xf32>
    %25 = arith.mulf %23, %24 : vector<8x32xf32>
    %26 = vector.broadcast %5 : vector<1x32xf32> to vector<8x32xf32>
    %27 = arith.addf %25, %26 : vector<8x32xf32>
    %c0_13 = arith.constant 0 : index
    %c0_14 = arith.constant 0 : index
    %28 = vector.load %arg5[%c0_13, %c0_14] : memref<32x96xbf16, #tpu.memory_space<vmem>>, vector<32x96xbf16>
    %29 = arith.truncf %27 : vector<8x32xf32> to vector<8x32xbf16>
    %cst_15 = arith.constant dense<0.000000e+00> : vector<8x96xf32>
    %30 = tpu.matmul %29, %28, %cst_15 {dimension_numbers = #tpu.dot_dimension_numbers<[1], [0], [0], [1], [0, 0, 1, 1], [], []>} : vector<8x32xbf16>, vector<32x96xbf16>, vector<8x96xf32> -> vector<8x96xf32>
    %c0_16 = arith.constant 0 : index
    %c0_17 = arith.constant 0 : index
    %31 = vector.load %arg6[%c0_16, %c0_17] : memref<1x96xf32, #tpu.memory_space<vmem>>, vector<1x96xf32>
    %32 = vector.broadcast %31 : vector<1x96xf32> to vector<8x96xf32>
    %33 = arith.addf %30, %32 : vector<8x96xf32>
    %34 = vector.extract_strided_slice %33 {offsets = [0, 0], sizes = [8, 32], strides = [1, 1]} : vector<8x96xf32> to vector<8x32xf32>
    %cst_18 = arith.constant 0.353553385 : f32
    %35 = vector.broadcast %cst_18 : f32 to vector<8x32xf32>
    %36 = arith.mulf %34, %35 : vector<8x32xf32>
    %37 = vector.extract_strided_slice %33 {offsets = [0, 32], sizes = [8, 32], strides = [1, 1]} : vector<8x96xf32> to vector<8x32xf32>
    %38 = vector.extract_strided_slice %33 {offsets = [0, 64], sizes = [8, 32], strides = [1, 1]} : vector<8x96xf32> to vector<8x32xf32>
    %39 = vector.extract_strided_slice %36 {offsets = [0, 0], sizes = [8, 8], strides = [1, 1]} : vector<8x32xf32> to vector<8x8xf32>
    %40 = arith.truncf %39 : vector<8x8xf32> to vector<8x8xbf16>
    %41 = vector.extract_strided_slice %37 {offsets = [0, 0], sizes = [8, 8], strides = [1, 1]} : vector<8x32xf32> to vector<8x8xf32>
    %42 = arith.truncf %41 : vector<8x8xf32> to vector<8x8xbf16>
    %43 = vector.extract_strided_slice %38 {offsets = [0, 0], sizes = [8, 8], strides = [1, 1]} : vector<8x32xf32> to vector<8x8xf32>
    %44 = arith.truncf %43 : vector<8x8xf32> to vector<8x8xbf16>
    %cst_19 = arith.constant dense<0.000000e+00> : vector<8x8xf32>
    %45 = tpu.matmul %40, %42, %cst_19 {dimension_numbers = #tpu.dot_dimension_numbers<[1], [1], [0], [0], [0, 0, 1, 0], [], []>} : vector<8x8xbf16>, vector<8x8xbf16>, vector<8x8xf32> -> vector<8x8xf32>
    %cst_20 = arith.constant dense<0xFF800000> : vector<8xf32>
    %46 = vector.multi_reduction <maximumf>, %45, %cst_20 [1] : vector<8x8xf32> to vector<8xf32>
    %47 = vector.shape_cast %46 : vector<8xf32> to vector<8x1xf32>
    %48 = vector.broadcast %47 : vector<8x1xf32> to vector<8x8xf32>
    %49 = arith.subf %45, %48 : vector<8x8xf32>
    %50 = math.exp %49 : vector<8x8xf32>
    %cst_21 = arith.constant dense<0.000000e+00> : vector<8xf32>
    %51 = vector.multi_reduction <add>, %50, %cst_21 [1] : vector<8x8xf32> to vector<8xf32>
    %52 = vector.shape_cast %51 : vector<8xf32> to vector<8x1xf32>
    %53 = tpu.reciprocal %52 {approx = true} : vector<8x1xf32> -> vector<8x1xf32>
    %54 = vector.broadcast %53 : vector<8x1xf32> to vector<8x8xf32>
    %55 = arith.mulf %50, %54 : vector<8x8xf32>
    %56 = arith.truncf %55 : vector<8x8xf32> to vector<8x8xbf16>
    %cst_22 = arith.constant dense<0.000000e+00> : vector<8x8xf32>
    %57 = tpu.matmul %56, %44, %cst_22 {dimension_numbers = #tpu.dot_dimension_numbers<[1], [0], [0], [1], [0, 0, 1, 1], [], []>} : vector<8x8xbf16>, vector<8x8xbf16>, vector<8x8xf32> -> vector<8x8xf32>
    %58 = vector.extract_strided_slice %36 {offsets = [0, 8], sizes = [8, 8], strides = [1, 1]} : vector<8x32xf32> to vector<8x8xf32>
    %59 = arith.truncf %58 : vector<8x8xf32> to vector<8x8xbf16>
    %60 = vector.extract_strided_slice %37 {offsets = [0, 8], sizes = [8, 8], strides = [1, 1]} : vector<8x32xf32> to vector<8x8xf32>
    %61 = arith.truncf %60 : vector<8x8xf32> to vector<8x8xbf16>
    %62 = vector.extract_strided_slice %38 {offsets = [0, 8], sizes = [8, 8], strides = [1, 1]} : vector<8x32xf32> to vector<8x8xf32>
    %63 = arith.truncf %62 : vector<8x8xf32> to vector<8x8xbf16>
    %cst_23 = arith.constant dense<0.000000e+00> : vector<8x8xf32>
    %64 = tpu.matmul %59, %61, %cst_23 {dimension_numbers = #tpu.dot_dimension_numbers<[1], [1], [0], [0], [0, 0, 1, 0], [], []>} : vector<8x8xbf16>, vector<8x8xbf16>, vector<8x8xf32> -> vector<8x8xf32>
    %cst_24 = arith.constant dense<0xFF800000> : vector<8xf32>
    %65 = vector.multi_reduction <maximumf>, %64, %cst_24 [1] : vector<8x8xf32> to vector<8xf32>
    %66 = vector.shape_cast %65 : vector<8xf32> to vector<8x1xf32>
    %67 = vector.broadcast %66 : vector<8x1xf32> to vector<8x8xf32>
    %68 = arith.subf %64, %67 : vector<8x8xf32>
    %69 = math.exp %68 : vector<8x8xf32>
    %cst_25 = arith.constant dense<0.000000e+00> : vector<8xf32>
    %70 = vector.multi_reduction <add>, %69, %cst_25 [1] : vector<8x8xf32> to vector<8xf32>
    %71 = vector.shape_cast %70 : vector<8xf32> to vector<8x1xf32>
    %72 = tpu.reciprocal %71 {approx = true} : vector<8x1xf32> -> vector<8x1xf32>
    %73 = vector.broadcast %72 : vector<8x1xf32> to vector<8x8xf32>
    %74 = arith.mulf %69, %73 : vector<8x8xf32>
    %75 = arith.truncf %74 : vector<8x8xf32> to vector<8x8xbf16>
    %cst_26 = arith.constant dense<0.000000e+00> : vector<8x8xf32>
    %76 = tpu.matmul %75, %63, %cst_26 {dimension_numbers = #tpu.dot_dimension_numbers<[1], [0], [0], [1], [0, 0, 1, 1], [], []>} : vector<8x8xbf16>, vector<8x8xbf16>, vector<8x8xf32> -> vector<8x8xf32>
    %77 = vector.extract_strided_slice %36 {offsets = [0, 16], sizes = [8, 8], strides = [1, 1]} : vector<8x32xf32> to vector<8x8xf32>
    %78 = arith.truncf %77 : vector<8x8xf32> to vector<8x8xbf16>
    %79 = vector.extract_strided_slice %37 {offsets = [0, 16], sizes = [8, 8], strides = [1, 1]} : vector<8x32xf32> to vector<8x8xf32>
    %80 = arith.truncf %79 : vector<8x8xf32> to vector<8x8xbf16>
    %81 = vector.extract_strided_slice %38 {offsets = [0, 16], sizes = [8, 8], strides = [1, 1]} : vector<8x32xf32> to vector<8x8xf32>
    %82 = arith.truncf %81 : vector<8x8xf32> to vector<8x8xbf16>
    %cst_27 = arith.constant dense<0.000000e+00> : vector<8x8xf32>
    %83 = tpu.matmul %78, %80, %cst_27 {dimension_numbers = #tpu.dot_dimension_numbers<[1], [1], [0], [0], [0, 0, 1, 0], [], []>} : vector<8x8xbf16>, vector<8x8xbf16>, vector<8x8xf32> -> vector<8x8xf32>
    %cst_28 = arith.constant dense<0xFF800000> : vector<8xf32>
    %84 = vector.multi_reduction <maximumf>, %83, %cst_28 [1] : vector<8x8xf32> to vector<8xf32>
    %85 = vector.shape_cast %84 : vector<8xf32> to vector<8x1xf32>
    %86 = vector.broadcast %85 : vector<8x1xf32> to vector<8x8xf32>
    %87 = arith.subf %83, %86 : vector<8x8xf32>
    %88 = math.exp %87 : vector<8x8xf32>
    %cst_29 = arith.constant dense<0.000000e+00> : vector<8xf32>
    %89 = vector.multi_reduction <add>, %88, %cst_29 [1] : vector<8x8xf32> to vector<8xf32>
    %90 = vector.shape_cast %89 : vector<8xf32> to vector<8x1xf32>
    %91 = tpu.reciprocal %90 {approx = true} : vector<8x1xf32> -> vector<8x1xf32>
    %92 = vector.broadcast %91 : vector<8x1xf32> to vector<8x8xf32>
    %93 = arith.mulf %88, %92 : vector<8x8xf32>
    %94 = arith.truncf %93 : vector<8x8xf32> to vector<8x8xbf16>
    %cst_30 = arith.constant dense<0.000000e+00> : vector<8x8xf32>
    %95 = tpu.matmul %94, %82, %cst_30 {dimension_numbers = #tpu.dot_dimension_numbers<[1], [0], [0], [1], [0, 0, 1, 1], [], []>} : vector<8x8xbf16>, vector<8x8xbf16>, vector<8x8xf32> -> vector<8x8xf32>
    %96 = vector.extract_strided_slice %36 {offsets = [0, 24], sizes = [8, 8], strides = [1, 1]} : vector<8x32xf32> to vector<8x8xf32>
    %97 = arith.truncf %96 : vector<8x8xf32> to vector<8x8xbf16>
    %98 = vector.extract_strided_slice %37 {offsets = [0, 24], sizes = [8, 8], strides = [1, 1]} : vector<8x32xf32> to vector<8x8xf32>
    %99 = arith.truncf %98 : vector<8x8xf32> to vector<8x8xbf16>
    %100 = vector.extract_strided_slice %38 {offsets = [0, 24], sizes = [8, 8], strides = [1, 1]} : vector<8x32xf32> to vector<8x8xf32>
    %101 = arith.truncf %100 : vector<8x8xf32> to vector<8x8xbf16>
    %cst_31 = arith.constant dense<0.000000e+00> : vector<8x8xf32>
    %102 = tpu.matmul %97, %99, %cst_31 {dimension_numbers = #tpu.dot_dimension_numbers<[1], [1], [0], [0], [0, 0, 1, 0], [], []>} : vector<8x8xbf16>, vector<8x8xbf16>, vector<8x8xf32> -> vector<8x8xf32>
    %cst_32 = arith.constant dense<0xFF800000> : vector<8xf32>
    %103 = vector.multi_reduction <maximumf>, %102, %cst_32 [1] : vector<8x8xf32> to vector<8xf32>
    %104 = vector.shape_cast %103 : vector<8xf32> to vector<8x1xf32>
    %105 = vector.broadcast %104 : vector<8x1xf32> to vector<8x8xf32>
    %106 = arith.subf %102, %105 : vector<8x8xf32>
    %107 = math.exp %106 : vector<8x8xf32>
    %cst_33 = arith.constant dense<0.000000e+00> : vector<8xf32>
    %108 = vector.multi_reduction <add>, %107, %cst_33 [1] : vector<8x8xf32> to vector<8xf32>
    %109 = vector.shape_cast %108 : vector<8xf32> to vector<8x1xf32>
    %110 = tpu.reciprocal %109 {approx = true} : vector<8x1xf32> -> vector<8x1xf32>
    %111 = vector.broadcast %110 : vector<8x1xf32> to vector<8x8xf32>
    %112 = arith.mulf %107, %111 : vector<8x8xf32>
    %113 = arith.truncf %112 : vector<8x8xf32> to vector<8x8xbf16>
    %cst_34 = arith.constant dense<0.000000e+00> : vector<8x8xf32>
    %114 = tpu.matmul %113, %101, %cst_34 {dimension_numbers = #tpu.dot_dimension_numbers<[1], [0], [0], [1], [0, 0, 1, 1], [], []>} : vector<8x8xbf16>, vector<8x8xbf16>, vector<8x8xf32> -> vector<8x8xf32>
    %115 = tpu.concatenate %57, %76, %95, %114 in 1 : vector<8x8xf32>, vector<8x8xf32>, vector<8x8xf32>, vector<8x8xf32> -> vector<8x32xf32>
    %c0_35 = arith.constant 0 : index
    %c0_36 = arith.constant 0 : index
    %116 = vector.load %arg7[%c0_35, %c0_36] : memref<32x32xbf16, #tpu.memory_space<vmem>>, vector<32x32xbf16>
    %117 = arith.truncf %115 : vector<8x32xf32> to vector<8x32xbf16>
    %cst_37 = arith.constant dense<0.000000e+00> : vector<8x32xf32>
    %118 = tpu.matmul %117, %116, %cst_37 {dimension_numbers = #tpu.dot_dimension_numbers<[1], [0], [0], [1], [0, 0, 1, 1], [], []>} : vector<8x32xbf16>, vector<32x32xbf16>, vector<8x32xf32> -> vector<8x32xf32>
    %119 = arith.addf %1, %118 : vector<8x32xf32>
    %c0_38 = arith.constant 0 : index
    %c0_39 = arith.constant 0 : index
    %120 = vector.load %arg8[%c0_38, %c0_39] : memref<1x32xf32, #tpu.memory_space<vmem>>, vector<1x32xf32>
    %121 = vector.broadcast %120 : vector<1x32xf32> to vector<8x32xf32>
    %122 = arith.addf %119, %121 : vector<8x32xf32>
    %c0_40 = arith.constant 0 : index
    %c0_41 = arith.constant 0 : index
    %123 = vector.load %arg9[%c0_40, %c0_41] : memref<1x32xf32, #tpu.memory_space<vmem>>, vector<1x32xf32>
    %c0_42 = arith.constant 0 : index
    %c0_43 = arith.constant 0 : index
    %124 = vector.load %arg10[%c0_42, %c0_43] : memref<1x32xf32, #tpu.memory_space<vmem>>, vector<1x32xf32>
    %cst_44 = arith.constant dense<0.000000e+00> : vector<8xf32>
    %125 = vector.multi_reduction <add>, %122, %cst_44 [1] : vector<8x32xf32> to vector<8xf32>
    %126 = vector.shape_cast %125 : vector<8xf32> to vector<8x1xf32>
    %cst_45 = arith.constant 3.200000e+01 : f32
    %127 = vector.broadcast %cst_45 : f32 to vector<8x1xf32>
    %128 = arith.divf %126, %127 : vector<8x1xf32>
    %129 = vector.broadcast %128 : vector<8x1xf32> to vector<8x32xf32>
    %130 = arith.subf %122, %129 : vector<8x32xf32>
    %131 = arith.mulf %130, %130 : vector<8x32xf32>
    %cst_46 = arith.constant dense<0.000000e+00> : vector<8xf32>
    %132 = vector.multi_reduction <add>, %131, %cst_46 [1] : vector<8x32xf32> to vector<8xf32>
    %133 = vector.shape_cast %132 : vector<8xf32> to vector<8x1xf32>
    %cst_47 = arith.constant 3.200000e+01 : f32
    %134 = vector.broadcast %cst_47 : f32 to vector<8x1xf32>
    %135 = arith.divf %133, %134 : vector<8x1xf32>
    %136 = vector.broadcast %128 : vector<8x1xf32> to vector<8x32xf32>
    %137 = arith.subf %122, %136 : vector<8x32xf32>
    %cst_48 = arith.constant 9.99999974E-6 : f32
    %138 = vector.broadcast %cst_48 : f32 to vector<8x1xf32>
    %139 = arith.addf %135, %138 : vector<8x1xf32>
    %140 = math.rsqrt %139 : vector<8x1xf32>
    %141 = vector.broadcast %140 : vector<8x1xf32> to vector<8x32xf32>
    %142 = arith.mulf %137, %141 : vector<8x32xf32>
    %143 = vector.broadcast %123 : vector<1x32xf32> to vector<8x32xf32>
    %144 = arith.mulf %142, %143 : vector<8x32xf32>
    %145 = vector.broadcast %124 : vector<1x32xf32> to vector<8x32xf32>
    %146 = arith.addf %144, %145 : vector<8x32xf32>
    %c0_49 = arith.constant 0 : index
    %c0_50 = arith.constant 0 : index
    %147 = vector.load %arg11[%c0_49, %c0_50] : memref<32x32xbf16, #tpu.memory_space<vmem>>, vector<32x32xbf16>
    %148 = arith.truncf %146 : vector<8x32xf32> to vector<8x32xbf16>
    %cst_51 = arith.constant dense<0.000000e+00> : vector<8x32xf32>
    %149 = tpu.matmul %148, %147, %cst_51 {dimension_numbers = #tpu.dot_dimension_numbers<[1], [0], [0], [1], [0, 0, 1, 1], [], []>} : vector<8x32xbf16>, vector<32x32xbf16>, vector<8x32xf32> -> vector<8x32xf32>
    %c0_52 = arith.constant 0 : index
    %c0_53 = arith.constant 0 : index
    %150 = vector.load %arg12[%c0_52, %c0_53] : memref<1x32xf32, #tpu.memory_space<vmem>>, vector<1x32xf32>
    %151 = vector.broadcast %150 : vector<1x32xf32> to vector<8x32xf32>
    %152 = arith.addf %149, %151 : vector<8x32xf32>
    %c0_54 = arith.constant 0 : index
    %c0_55 = arith.constant 0 : index
    %153 = vector.load %arg13[%c0_54, %c0_55] : memref<32x64xbf16, #tpu.memory_space<vmem>>, vector<32x64xbf16>
    %154 = arith.truncf %3 : vector<8x32xf32> to vector<8x32xbf16>
    %cst_56 = arith.constant dense<0.000000e+00> : vector<8x64xf32>
    %155 = tpu.matmul %154, %153, %cst_56 {dimension_numbers = #tpu.dot_dimension_numbers<[1], [0], [0], [1], [0, 0, 1, 1], [], []>} : vector<8x32xbf16>, vector<32x64xbf16>, vector<8x64xf32> -> vector<8x64xf32>
    %c0_57 = arith.constant 0 : index
    %c0_58 = arith.constant 0 : index
    %156 = vector.load %arg14[%c0_57, %c0_58] : memref<1x64xf32, #tpu.memory_space<vmem>>, vector<1x64xf32>
    %157 = vector.broadcast %156 : vector<1x64xf32> to vector<8x64xf32>
    %158 = arith.addf %155, %157 : vector<8x64xf32>
    %cst_59 = arith.constant 0.353553385 : f32
    %159 = vector.broadcast %cst_59 : f32 to vector<8x32xf32>
    %160 = arith.mulf %152, %159 : vector<8x32xf32>
    %161 = vector.extract_strided_slice %158 {offsets = [0, 0], sizes = [8, 32], strides = [1, 1]} : vector<8x64xf32> to vector<8x32xf32>
    %162 = vector.extract_strided_slice %158 {offsets = [0, 32], sizes = [8, 32], strides = [1, 1]} : vector<8x64xf32> to vector<8x32xf32>
    %163 = vector.extract_strided_slice %160 {offsets = [0, 0], sizes = [8, 8], strides = [1, 1]} : vector<8x32xf32> to vector<8x8xf32>
    %164 = arith.truncf %163 : vector<8x8xf32> to vector<8x8xbf16>
    %165 = vector.extract_strided_slice %161 {offsets = [0, 0], sizes = [8, 8], strides = [1, 1]} : vector<8x32xf32> to vector<8x8xf32>
    %166 = arith.truncf %165 : vector<8x8xf32> to vector<8x8xbf16>
    %167 = vector.extract_strided_slice %162 {offsets = [0, 0], sizes = [8, 8], strides = [1, 1]} : vector<8x32xf32> to vector<8x8xf32>
    %168 = arith.truncf %167 : vector<8x8xf32> to vector<8x8xbf16>
    %cst_60 = arith.constant dense<0.000000e+00> : vector<8x8xf32>
    %169 = tpu.matmul %164, %166, %cst_60 {dimension_numbers = #tpu.dot_dimension_numbers<[1], [1], [0], [0], [0, 0, 1, 0], [], []>} : vector<8x8xbf16>, vector<8x8xbf16>, vector<8x8xf32> -> vector<8x8xf32>
    %cst_61 = arith.constant dense<0xFF800000> : vector<8xf32>
    %170 = vector.multi_reduction <maximumf>, %169, %cst_61 [1] : vector<8x8xf32> to vector<8xf32>
    %171 = vector.shape_cast %170 : vector<8xf32> to vector<8x1xf32>
    %172 = vector.broadcast %171 : vector<8x1xf32> to vector<8x8xf32>
    %173 = arith.subf %169, %172 : vector<8x8xf32>
    %174 = math.exp %173 : vector<8x8xf32>
    %cst_62 = arith.constant dense<0.000000e+00> : vector<8xf32>
    %175 = vector.multi_reduction <add>, %174, %cst_62 [1] : vector<8x8xf32> to vector<8xf32>
    %176 = vector.shape_cast %175 : vector<8xf32> to vector<8x1xf32>
    %177 = tpu.reciprocal %176 {approx = true} : vector<8x1xf32> -> vector<8x1xf32>
    %178 = vector.broadcast %177 : vector<8x1xf32> to vector<8x8xf32>
    %179 = arith.mulf %174, %178 : vector<8x8xf32>
    %180 = arith.truncf %179 : vector<8x8xf32> to vector<8x8xbf16>
    %cst_63 = arith.constant dense<0.000000e+00> : vector<8x8xf32>
    %181 = tpu.matmul %180, %168, %cst_63 {dimension_numbers = #tpu.dot_dimension_numbers<[1], [0], [0], [1], [0, 0, 1, 1], [], []>} : vector<8x8xbf16>, vector<8x8xbf16>, vector<8x8xf32> -> vector<8x8xf32>
    %182 = vector.extract_strided_slice %160 {offsets = [0, 8], sizes = [8, 8], strides = [1, 1]} : vector<8x32xf32> to vector<8x8xf32>
    %183 = arith.truncf %182 : vector<8x8xf32> to vector<8x8xbf16>
    %184 = vector.extract_strided_slice %161 {offsets = [0, 8], sizes = [8, 8], strides = [1, 1]} : vector<8x32xf32> to vector<8x8xf32>
    %185 = arith.truncf %184 : vector<8x8xf32> to vector<8x8xbf16>
    %186 = vector.extract_strided_slice %162 {offsets = [0, 8], sizes = [8, 8], strides = [1, 1]} : vector<8x32xf32> to vector<8x8xf32>
    %187 = arith.truncf %186 : vector<8x8xf32> to vector<8x8xbf16>
    %cst_64 = arith.constant dense<0.000000e+00> : vector<8x8xf32>
    %188 = tpu.matmul %183, %185, %cst_64 {dimension_numbers = #tpu.dot_dimension_numbers<[1], [1], [0], [0], [0, 0, 1, 0], [], []>} : vector<8x8xbf16>, vector<8x8xbf16>, vector<8x8xf32> -> vector<8x8xf32>
    %cst_65 = arith.constant dense<0xFF800000> : vector<8xf32>
    %189 = vector.multi_reduction <maximumf>, %188, %cst_65 [1] : vector<8x8xf32> to vector<8xf32>
    %190 = vector.shape_cast %189 : vector<8xf32> to vector<8x1xf32>
    %191 = vector.broadcast %190 : vector<8x1xf32> to vector<8x8xf32>
    %192 = arith.subf %188, %191 : vector<8x8xf32>
    %193 = math.exp %192 : vector<8x8xf32>
    %cst_66 = arith.constant dense<0.000000e+00> : vector<8xf32>
    %194 = vector.multi_reduction <add>, %193, %cst_66 [1] : vector<8x8xf32> to vector<8xf32>
    %195 = vector.shape_cast %194 : vector<8xf32> to vector<8x1xf32>
    %196 = tpu.reciprocal %195 {approx = true} : vector<8x1xf32> -> vector<8x1xf32>
    %197 = vector.broadcast %196 : vector<8x1xf32> to vector<8x8xf32>
    %198 = arith.mulf %193, %197 : vector<8x8xf32>
    %199 = arith.truncf %198 : vector<8x8xf32> to vector<8x8xbf16>
    %cst_67 = arith.constant dense<0.000000e+00> : vector<8x8xf32>
    %200 = tpu.matmul %199, %187, %cst_67 {dimension_numbers = #tpu.dot_dimension_numbers<[1], [0], [0], [1], [0, 0, 1, 1], [], []>} : vector<8x8xbf16>, vector<8x8xbf16>, vector<8x8xf32> -> vector<8x8xf32>
    %201 = vector.extract_strided_slice %160 {offsets = [0, 16], sizes = [8, 8], strides = [1, 1]} : vector<8x32xf32> to vector<8x8xf32>
    %202 = arith.truncf %201 : vector<8x8xf32> to vector<8x8xbf16>
    %203 = vector.extract_strided_slice %161 {offsets = [0, 16], sizes = [8, 8], strides = [1, 1]} : vector<8x32xf32> to vector<8x8xf32>
    %204 = arith.truncf %203 : vector<8x8xf32> to vector<8x8xbf16>
    %205 = vector.extract_strided_slice %162 {offsets = [0, 16], sizes = [8, 8], strides = [1, 1]} : vector<8x32xf32> to vector<8x8xf32>
    %206 = arith.truncf %205 : vector<8x8xf32> to vector<8x8xbf16>
    %cst_68 = arith.constant dense<0.000000e+00> : vector<8x8xf32>
    %207 = tpu.matmul %202, %204, %cst_68 {dimension_numbers = #tpu.dot_dimension_numbers<[1], [1], [0], [0], [0, 0, 1, 0], [], []>} : vector<8x8xbf16>, vector<8x8xbf16>, vector<8x8xf32> -> vector<8x8xf32>
    %cst_69 = arith.constant dense<0xFF800000> : vector<8xf32>
    %208 = vector.multi_reduction <maximumf>, %207, %cst_69 [1] : vector<8x8xf32> to vector<8xf32>
    %209 = vector.shape_cast %208 : vector<8xf32> to vector<8x1xf32>
    %210 = vector.broadcast %209 : vector<8x1xf32> to vector<8x8xf32>
    %211 = arith.subf %207, %210 : vector<8x8xf32>
    %212 = math.exp %211 : vector<8x8xf32>
    %cst_70 = arith.constant dense<0.000000e+00> : vector<8xf32>
    %213 = vector.multi_reduction <add>, %212, %cst_70 [1] : vector<8x8xf32> to vector<8xf32>
    %214 = vector.shape_cast %213 : vector<8xf32> to vector<8x1xf32>
    %215 = tpu.reciprocal %214 {approx = true} : vector<8x1xf32> -> vector<8x1xf32>
    %216 = vector.broadcast %215 : vector<8x1xf32> to vector<8x8xf32>
    %217 = arith.mulf %212, %216 : vector<8x8xf32>
    %218 = arith.truncf %217 : vector<8x8xf32> to vector<8x8xbf16>
    %cst_71 = arith.constant dense<0.000000e+00> : vector<8x8xf32>
    %219 = tpu.matmul %218, %206, %cst_71 {dimension_numbers = #tpu.dot_dimension_numbers<[1], [0], [0], [1], [0, 0, 1, 1], [], []>} : vector<8x8xbf16>, vector<8x8xbf16>, vector<8x8xf32> -> vector<8x8xf32>
    %220 = vector.extract_strided_slice %160 {offsets = [0, 24], sizes = [8, 8], strides = [1, 1]} : vector<8x32xf32> to vector<8x8xf32>
    %221 = arith.truncf %220 : vector<8x8xf32> to vector<8x8xbf16>
    %222 = vector.extract_strided_slice %161 {offsets = [0, 24], sizes = [8, 8], strides = [1, 1]} : vector<8x32xf32> to vector<8x8xf32>
    %223 = arith.truncf %222 : vector<8x8xf32> to vector<8x8xbf16>
    %224 = vector.extract_strided_slice %162 {offsets = [0, 24], sizes = [8, 8], strides = [1, 1]} : vector<8x32xf32> to vector<8x8xf32>
    %225 = arith.truncf %224 : vector<8x8xf32> to vector<8x8xbf16>
    %cst_72 = arith.constant dense<0.000000e+00> : vector<8x8xf32>
    %226 = tpu.matmul %221, %223, %cst_72 {dimension_numbers = #tpu.dot_dimension_numbers<[1], [1], [0], [0], [0, 0, 1, 0], [], []>} : vector<8x8xbf16>, vector<8x8xbf16>, vector<8x8xf32> -> vector<8x8xf32>
    %cst_73 = arith.constant dense<0xFF800000> : vector<8xf32>
    %227 = vector.multi_reduction <maximumf>, %226, %cst_73 [1] : vector<8x8xf32> to vector<8xf32>
    %228 = vector.shape_cast %227 : vector<8xf32> to vector<8x1xf32>
    %229 = vector.broadcast %228 : vector<8x1xf32> to vector<8x8xf32>
    %230 = arith.subf %226, %229 : vector<8x8xf32>
    %231 = math.exp %230 : vector<8x8xf32>
    %cst_74 = arith.constant dense<0.000000e+00> : vector<8xf32>
    %232 = vector.multi_reduction <add>, %231, %cst_74 [1] : vector<8x8xf32> to vector<8xf32>
    %233 = vector.shape_cast %232 : vector<8xf32> to vector<8x1xf32>
    %234 = tpu.reciprocal %233 {approx = true} : vector<8x1xf32> -> vector<8x1xf32>
    %235 = vector.broadcast %234 : vector<8x1xf32> to vector<8x8xf32>
    %236 = arith.mulf %231, %235 : vector<8x8xf32>
    %237 = arith.truncf %236 : vector<8x8xf32> to vector<8x8xbf16>
    %cst_75 = arith.constant dense<0.000000e+00> : vector<8x8xf32>
    %238 = tpu.matmul %237, %225, %cst_75 {dimension_numbers = #tpu.dot_dimension_numbers<[1], [0], [0], [1], [0, 0, 1, 1], [], []>} : vector<8x8xbf16>, vector<8x8xbf16>, vector<8x8xf32> -> vector<8x8xf32>
    %239 = tpu.concatenate %181, %200, %219, %238 in 1 : vector<8x8xf32>, vector<8x8xf32>, vector<8x8xf32>, vector<8x8xf32> -> vector<8x32xf32>
    %c0_76 = arith.constant 0 : index
    %c0_77 = arith.constant 0 : index
    %240 = vector.load %arg15[%c0_76, %c0_77] : memref<32x32xbf16, #tpu.memory_space<vmem>>, vector<32x32xbf16>
    %241 = arith.truncf %239 : vector<8x32xf32> to vector<8x32xbf16>
    %cst_78 = arith.constant dense<0.000000e+00> : vector<8x32xf32>
    %242 = tpu.matmul %241, %240, %cst_78 {dimension_numbers = #tpu.dot_dimension_numbers<[1], [0], [0], [1], [0, 0, 1, 1], [], []>} : vector<8x32xbf16>, vector<32x32xbf16>, vector<8x32xf32> -> vector<8x32xf32>
    %243 = arith.addf %122, %242 : vector<8x32xf32>
    %c0_79 = arith.constant 0 : index
    %c0_80 = arith.constant 0 : index
    %244 = vector.load %arg16[%c0_79, %c0_80] : memref<1x32xf32, #tpu.memory_space<vmem>>, vector<1x32xf32>
    %245 = vector.broadcast %244 : vector<1x32xf32> to vector<8x32xf32>
    %246 = arith.addf %243, %245 : vector<8x32xf32>
    %c0_81 = arith.constant 0 : index
    %c0_82 = arith.constant 0 : index
    %247 = vector.load %arg17[%c0_81, %c0_82] : memref<1x32xf32, #tpu.memory_space<vmem>>, vector<1x32xf32>
    %c0_83 = arith.constant 0 : index
    %c0_84 = arith.constant 0 : index
    %248 = vector.load %arg18[%c0_83, %c0_84] : memref<1x32xf32, #tpu.memory_space<vmem>>, vector<1x32xf32>
    %cst_85 = arith.constant dense<0.000000e+00> : vector<8xf32>
    %249 = vector.multi_reduction <add>, %246, %cst_85 [1] : vector<8x32xf32> to vector<8xf32>
    %250 = vector.shape_cast %249 : vector<8xf32> to vector<8x1xf32>
    %cst_86 = arith.constant 3.200000e+01 : f32
    %251 = vector.broadcast %cst_86 : f32 to vector<8x1xf32>
    %252 = arith.divf %250, %251 : vector<8x1xf32>
    %253 = vector.broadcast %252 : vector<8x1xf32> to vector<8x32xf32>
    %254 = arith.subf %246, %253 : vector<8x32xf32>
    %255 = arith.mulf %254, %254 : vector<8x32xf32>
    %cst_87 = arith.constant dense<0.000000e+00> : vector<8xf32>
    %256 = vector.multi_reduction <add>, %255, %cst_87 [1] : vector<8x32xf32> to vector<8xf32>
    %257 = vector.shape_cast %256 : vector<8xf32> to vector<8x1xf32>
    %cst_88 = arith.constant 3.200000e+01 : f32
    %258 = vector.broadcast %cst_88 : f32 to vector<8x1xf32>
    %259 = arith.divf %257, %258 : vector<8x1xf32>
    %260 = vector.broadcast %252 : vector<8x1xf32> to vector<8x32xf32>
    %261 = arith.subf %246, %260 : vector<8x32xf32>
    %cst_89 = arith.constant 9.99999974E-6 : f32
    %262 = vector.broadcast %cst_89 : f32 to vector<8x1xf32>
    %263 = arith.addf %259, %262 : vector<8x1xf32>
    %264 = math.rsqrt %263 : vector<8x1xf32>
    %265 = vector.broadcast %264 : vector<8x1xf32> to vector<8x32xf32>
    %266 = arith.mulf %261, %265 : vector<8x32xf32>
    %267 = vector.broadcast %247 : vector<1x32xf32> to vector<8x32xf32>
    %268 = arith.mulf %266, %267 : vector<8x32xf32>
    %269 = vector.broadcast %248 : vector<1x32xf32> to vector<8x32xf32>
    %270 = arith.addf %268, %269 : vector<8x32xf32>
    %c0_90 = arith.constant 0 : index
    %c0_91 = arith.constant 0 : index
    %271 = vector.load %arg19[%c0_90, %c0_91] : memref<32x64xbf16, #tpu.memory_space<vmem>>, vector<32x64xbf16>
    %272 = arith.truncf %270 : vector<8x32xf32> to vector<8x32xbf16>
    %cst_92 = arith.constant dense<0.000000e+00> : vector<8x64xf32>
    %273 = tpu.matmul %272, %271, %cst_92 {dimension_numbers = #tpu.dot_dimension_numbers<[1], [0], [0], [1], [0, 0, 1, 1], [], []>} : vector<8x32xbf16>, vector<32x64xbf16>, vector<8x64xf32> -> vector<8x64xf32>
    %c0_93 = arith.constant 0 : index
    %c0_94 = arith.constant 0 : index
    %274 = vector.load %arg20[%c0_93, %c0_94] : memref<1x64xf32, #tpu.memory_space<vmem>>, vector<1x64xf32>
    %275 = vector.broadcast %274 : vector<1x64xf32> to vector<8x64xf32>
    %276 = arith.addf %273, %275 : vector<8x64xf32>
    %cst_95 = arith.constant 0.000000e+00 : f32
    %277 = vector.broadcast %cst_95 : f32 to vector<8x64xf32>
    %278 = arith.maximumf %276, %277 : vector<8x64xf32>
    %c0_96 = arith.constant 0 : index
    %c0_97 = arith.constant 0 : index
    %279 = vector.load %arg21[%c0_96, %c0_97] : memref<64x32xbf16, #tpu.memory_space<vmem>>, vector<64x32xbf16>
    %280 = arith.truncf %278 : vector<8x64xf32> to vector<8x64xbf16>
    %cst_98 = arith.constant dense<0.000000e+00> : vector<8x32xf32>
    %281 = tpu.matmul %280, %279, %cst_98 {dimension_numbers = #tpu.dot_dimension_numbers<[1], [0], [0], [1], [0, 0, 1, 1], [], []>} : vector<8x64xbf16>, vector<64x32xbf16>, vector<8x32xf32> -> vector<8x32xf32>
    %282 = arith.addf %246, %281 : vector<8x32xf32>
    %c0_99 = arith.constant 0 : index
    %c0_100 = arith.constant 0 : index
    %283 = vector.load %arg22[%c0_99, %c0_100] : memref<1x32xf32, #tpu.memory_space<vmem>>, vector<1x32xf32>
    %284 = vector.broadcast %283 : vector<1x32xf32> to vector<8x32xf32>
    %285 = arith.addf %282, %284 : vector<8x32xf32>
    %c0_101 = arith.constant 0 : index
    %c0_102 = arith.constant 0 : index
    %286 = vector.load %arg23[%c0_101, %c0_102] : memref<1x32xf32, #tpu.memory_space<vmem>>, vector<1x32xf32>
    %c0_103 = arith.constant 0 : index
    %c0_104 = arith.constant 0 : index
    %287 = vector.load %arg24[%c0_103, %c0_104] : memref<1x32xf32, #tpu.memory_space<vmem>>, vector<1x32xf32>
    %cst_105 = arith.constant dense<0.000000e+00> : vector<8xf32>
    %288 = vector.multi_reduction <add>, %285, %cst_105 [1] : vector<8x32xf32> to vector<8xf32>
    %289 = vector.shape_cast %288 : vector<8xf32> to vector<8x1xf32>
    %cst_106 = arith.constant 3.200000e+01 : f32
    %290 = vector.broadcast %cst_106 : f32 to vector<8x1xf32>
    %291 = arith.divf %289, %290 : vector<8x1xf32>
    %292 = vector.broadcast %291 : vector<8x1xf32> to vector<8x32xf32>
    %293 = arith.subf %285, %292 : vector<8x32xf32>
    %294 = arith.mulf %293, %293 : vector<8x32xf32>
    %cst_107 = arith.constant dense<0.000000e+00> : vector<8xf32>
    %295 = vector.multi_reduction <add>, %294, %cst_107 [1] : vector<8x32xf32> to vector<8xf32>
    %296 = vector.shape_cast %295 : vector<8xf32> to vector<8x1xf32>
    %cst_108 = arith.constant 3.200000e+01 : f32
    %297 = vector.broadcast %cst_108 : f32 to vector<8x1xf32>
    %298 = arith.divf %296, %297 : vector<8x1xf32>
    %299 = vector.broadcast %291 : vector<8x1xf32> to vector<8x32xf32>
    %300 = arith.subf %285, %299 : vector<8x32xf32>
    %cst_109 = arith.constant 9.99999974E-6 : f32
    %301 = vector.broadcast %cst_109 : f32 to vector<8x1xf32>
    %302 = arith.addf %298, %301 : vector<8x1xf32>
    %303 = math.rsqrt %302 : vector<8x1xf32>
    %304 = vector.broadcast %303 : vector<8x1xf32> to vector<8x32xf32>
    %305 = arith.mulf %300, %304 : vector<8x32xf32>
    %306 = vector.broadcast %286 : vector<1x32xf32> to vector<8x32xf32>
    %307 = arith.mulf %305, %306 : vector<8x32xf32>
    %308 = vector.broadcast %287 : vector<1x32xf32> to vector<8x32xf32>
    %309 = arith.addf %307, %308 : vector<8x32xf32>
    %c0_110 = arith.constant 0 : index
    %c0_111 = arith.constant 0 : index
    %c0_112 = arith.constant 0 : index
    %310 = vector.load %arg25[%c0_110, %c0_111, %c0_112] : memref<1x8x32xf32, #tpu.memory_space<vmem>>, vector<1x8x32xf32>
    %311 = vector.shape_cast %310 : vector<1x8x32xf32> to vector<8x32xf32>
    %312 = vector.shape_cast %309 : vector<8x32xf32> to vector<1x8x32xf32>
    tpu.vector_store %arg25[%c0_110, %c0_111, %c0_112], %312 {strides = array<i32>} : memref<1x8x32xf32, #tpu.memory_space<vmem>>, vector<1x8x32xf32>,
    return
  }
  func.func @transform_0(%arg0: i32) -> (i32, i32, i32) {
    %c0_i32 = arith.constant 0 : i32
    %c0_i32_0 = arith.constant 0 : i32
    %c0_i32_1 = arith.constant 0 : i32
    return %arg0, %c0_i32, %c0_i32_0 : i32, i32, i32
  }
  func.func @transform_1(%arg0: i32) -> (i32, i32, i32) {
    %c0_i32 = arith.constant 0 : i32
    %c0_i32_0 = arith.constant 0 : i32
    %c0_i32_1 = arith.constant 0 : i32
    return %arg0, %c0_i32, %c0_i32_0 : i32, i32, i32
  }
  func.func @transform_2(%arg0: i32) -> (i32, i32) {
    %c0_i32 = arith.constant 0 : i32
    %c0_i32_0 = arith.constant 0 : i32
    %c0_i32_1 = arith.constant 0 : i32
    return %c0_i32, %c0_i32_0 : i32, i32
  }
  func.func @transform_3(%arg0: i32) -> (i32, i32) {
    %c0_i32 = arith.constant 0 : i32
    %c0_i32_0 = arith.constant 0 : i32
    %c0_i32_1 = arith.constant 0 : i32
    return %c0_i32, %c0_i32_0 : i32, i32
  }
  func.func @transform_4(%arg0: i32) -> (i32, i32) {
    %c0_i32 = arith.constant 0 : i32
    %c0_i32_0 = arith.constant 0 : i32
    %c0_i32_1 = arith.constant 0 : i32
    return %c0_i32, %c0_i32_0 : i32, i32
  }
  func.func @transform_5(%arg0: i32) -> (i32, i32) {
    %c0_i32 = arith.constant 0 : i32
    %c0_i32_0 = arith.constant 0 : i32
    %c0_i32_1 = arith.constant 0 : i32
    return %c0_i32, %c0_i32_0 : i32, i32
  }
  func.func @transform_6(%arg0: i32) -> (i32, i32) {
    %c0_i32 = arith.constant 0 : i32
    %c0_i32_0 = arith.constant 0 : i32
    %c0_i32_1 = arith.constant 0 : i32
    return %c0_i32, %c0_i32_0 : i32, i32
  }
  func.func @transform_7(%arg0: i32) -> (i32, i32) {
    %c0_i32 = arith.constant 0 : i32
    %c0_i32_0 = arith.constant 0 : i32
    %c0_i32_1 = arith.constant 0 : i32
    return %c0_i32, %c0_i32_0 : i32, i32
  }
  func.func @transform_8(%arg0: i32) -> (i32, i32) {
    %c0_i32 = arith.constant 0 : i32
    %c0_i32_0 = arith.constant 0 : i32
    %c0_i32_1 = arith.constant 0 : i32
    return %c0_i32, %c0_i32_0 : i32, i32
  }
  func.func @transform_9(%arg0: i32) -> (i32, i32) {
    %c0_i32 = arith.constant 0 : i32
    %c0_i32_0 = arith.constant 0 : i32
    %c0_i32_1 = arith.constant 0 : i32
    return %c0_i32, %c0_i32_0 : i32, i32
  }
  func.func @transform_10(%arg0: i32) -> (i32, i32) {
    %c0_i32 = arith.constant 0 : i32
    %c0_i32_0 = arith.constant 0 : i32
    %c0_i32_1 = arith.constant 0 : i32
    return %c0_i32, %c0_i32_0 : i32, i32
  }
  func.func @transform_11(%arg0: i32) -> (i32, i32) {
    %c0_i32 = arith.constant 0 : i32
    %c0_i32_0 = arith.constant 0 : i32
    %c0_i32_1 = arith.constant 0 : i32
    return %c0_i32, %c0_i32_0 : i32, i32
  }
  func.func @transform_12(%arg0: i32) -> (i32, i32) {
    %c0_i32 = arith.constant 0 : i32
    %c0_i32_0 = arith.constant 0 : i32
    %c0_i32_1 = arith.constant 0 : i32
    return %c0_i32, %c0_i32_0 : i32, i32
  }
  func.func @transform_13(%arg0: i32) -> (i32, i32) {
    %c0_i32 = arith.constant 0 : i32
    %c0_i32_0 = arith.constant 0 : i32
    %c0_i32_1 = arith.constant 0 : i32
    return %c0_i32, %c0_i32_0 : i32, i32
  }
  func.func @transform_14(%arg0: i32) -> (i32, i32) {
    %c0_i32 = arith.constant 0 : i32
    %c0_i32_0 = arith.constant 0 : i32
    %c0_i32_1 = arith.constant 0 : i32
    return %c0_i32, %c0_i32_0 : i32, i32
  }
  func.func @transform_15(%arg0: i32) -> (i32, i32) {
    %c0_i32 = arith.constant 0 : i32
    %c0_i32_0 = arith.constant 0 : i32
    %c0_i32_1 = arith.constant 0 : i32
    return %c0_i32, %c0_i32_0 : i32, i32
  }
  func.func @transform_16(%arg0: i32) -> (i32, i32) {
    %c0_i32 = arith.constant 0 : i32
    %c0_i32_0 = arith.constant 0 : i32
    %c0_i32_1 = arith.constant 0 : i32
    return %c0_i32, %c0_i32_0 : i32, i32
  }
  func.func @transform_17(%arg0: i32) -> (i32, i32) {
    %c0_i32 = arith.constant 0 : i32
    %c0_i32_0 = arith.constant 0 : i32
    %c0_i32_1 = arith.constant 0 : i32
    return %c0_i32, %c0_i32_0 : i32, i32
  }
  func.func @transform_18(%arg0: i32) -> (i32, i32) {
    %c0_i32 = arith.constant 0 : i32
    %c0_i32_0 = arith.constant 0 : i32
    %c0_i32_1 = arith.constant 0 : i32
    return %c0_i32, %c0_i32_0 : i32, i32
  }
  func.func @transform_19(%arg0: i32) -> (i32, i32) {
    %c0_i32 = arith.constant 0 : i32
    %c0_i32_0 = arith.constant 0 : i32
    %c0_i32_1 = arith.constant 0 : i32
    return %c0_i32, %c0_i32_0 : i32, i32
  }
  func.func @transform_20(%arg0: i32) -> (i32, i32) {
    %c0_i32 = arith.constant 0 : i32
    %c0_i32_0 = arith.constant 0 : i32
    %c0_i32_1 = arith.constant 0 : i32
    return %c0_i32, %c0_i32_0 : i32, i32
  }
  func.func @transform_21(%arg0: i32) -> (i32, i32) {
    %c0_i32 = arith.constant 0 : i32
    %c0_i32_0 = arith.constant 0 : i32
    %c0_i32_1 = arith.constant 0 : i32
    return %c0_i32, %c0_i32_0 : i32, i32
  }
  func.func @transform_22(%arg0: i32) -> (i32, i32) {
    %c0_i32 = arith.constant 0 : i32
    %c0_i32_0 = arith.constant 0 : i32
    %c0_i32_1 = arith.constant 0 : i32
    return %c0_i32, %c0_i32_0 : i32, i32
  }
  func.func @transform_23(%arg0: i32) -> (i32, i32) {
    %c0_i32 = arith.constant 0 : i32
    %c0_i32_0 = arith.constant 0 : i32
    %c0_i32_1 = arith.constant 0 : i32
    return %c0_i32, %c0_i32_0 : i32, i32
  }
  func.func @transform_24(%arg0: i32) -> (i32, i32, i32) {
    %c0_i32 = arith.constant 0 : i32
    %c0_i32_0 = arith.constant 0 : i32
    %c0_i32_1 = arith.constant 0 : i32
    return %arg0, %c0_i32, %c0_i32_0 : i32, i32, i32
  }
}

</mosaic_0001>

<llo_original>
// kernel: transformer_forward.5
$region0: #{transformer_forward.5}
  #allocation0 [shape = 'u32[]', space=smem, size = 0x4, offset = 0x4, fixed_abs, tag = 'smem constant byte address 0x4 - core index']
  #allocation1 [shape = 'u32[144,128]{1,0:T(1,128)}', space=vmem, size = 0x12000, scoped, tag = 'internal scratch']
  %s0 = inlined_call_operand.vmem [shape: f32[2,8,32], index: 0, kind: input, shape index: {}]
  %s1 = inlined_call_operand.vmem [shape: f32[1,32], index: 1, kind: input, shape index: {}]
  %s2 = inlined_call_operand.vmem [shape: f32[1,32], index: 2, kind: input, shape index: {}]
  %s3 = inlined_call_operand.vmem [shape: bf16[32,96], index: 3, kind: input, shape index: {}]
  %s4 = inlined_call_operand.vmem [shape: f32[1,96], index: 4, kind: input, shape index: {}]
  %s5 = inlined_call_operand.vmem [shape: bf16[32,32], index: 5, kind: input, shape index: {}]
  %s6 = inlined_call_operand.vmem [shape: f32[1,32], index: 6, kind: input, shape index: {}]
  %s7 = inlined_call_operand.vmem [shape: f32[1,32], index: 7, kind: input, shape index: {}]
  %s8 = inlined_call_operand.vmem [shape: f32[1,32], index: 8, kind: input, shape index: {}]
  %s9 = inlined_call_operand.vmem [shape: bf16[32,64], index: 9, kind: input, shape index: {}]
  %s10 = inlined_call_operand.vmem [shape: f32[1,64], index: 10, kind: input, shape index: {}]
  %s11 = inlined_call_operand.vmem [shape: bf16[64,32], index: 11, kind: input, shape index: {}]
  %s12 = inlined_call_operand.vmem [shape: f32[1,32], index: 12, kind: input, shape index: {}]
  %s13 = inlined_call_operand.vmem [shape: f32[1,32], index: 13, kind: input, shape index: {}]
  %s14 = inlined_call_operand.vmem [shape: f32[1,32], index: 14, kind: input, shape index: {}]
  %s15 = inlined_call_operand.vmem [shape: f32[2,8,32], index: 15, kind: output, shape index: {}]
  %s16 = sld [smem:[#allocation0]]
  $region93: #{transformer_forward.5} parent=0
    _
  %s18 = ssub.s32 1, %s16
  %s19 = scalar_select 0, %s18, %s16
  loop: start=0, step=1, limit=4
  $region2: #{transformer_forward.5} parent=0 // loop_pre_header
    _
  $region3: #{transformer_forward.5} parent=0 // loop_header
    %s21 = sphi 0, %s25
    %p22 = scmp.ge.s32.totalorder %s21, 4
    %s31 = sphi 0, %s33
    %s34 = sphi 0, %s31
    %s35 = sphi 0, %s34
    %s51 = sphi 0, %s35
    %s55 = sphi 0, %s55
    %s57 = sphi 0, %s55
    %s58 = sphi 0, %s57
    %s72 = sphi 0, %s58
    %s76 = sphi 0, %s76
    %s78 = sphi 0, %s76
    %s79 = sphi 0, %s78
    %s93 = sphi 0, %s79
    %s97 = sphi 0, %s97
    %s99 = sphi 0, %s97
    %s100 = sphi 0, %s99
    %s114 = sphi 0, %s100
    %s118 = sphi 0, %s118
    %s120 = sphi 0, %s118
    %s121 = sphi 0, %s120
    %s135 = sphi 0, %s121
    %s139 = sphi 0, %s139
    %s141 = sphi 0, %s139
    %s142 = sphi 0, %s141
    %s156 = sphi 0, %s142
    %s160 = sphi 0, %s160
    %s162 = sphi 0, %s160
    %s163 = sphi 0, %s162
    %s177 = sphi 0, %s163
    %s181 = sphi 0, %s181
    %s183 = sphi 0, %s181
    %s184 = sphi 0, %s183
    %s198 = sphi 0, %s184
    %s202 = sphi 0, %s202
    %s204 = sphi 0, %s202
    %s205 = sphi 0, %s204
    %s219 = sphi 0, %s205
    %s223 = sphi 0, %s223
    %s225 = sphi 0, %s223
    %s226 = sphi 0, %s225
    %s240 = sphi 0, %s226
    %s244 = sphi 0, %s244
    %s246 = sphi 0, %s244
    %s247 = sphi 0, %s246
    %s261 = sphi 0, %s247
    %s265 = sphi 0, %s265
    %s267 = sphi 0, %s265
    %s268 = sphi 0, %s267
    %s282 = sphi 0, %s268
    %s286 = sphi 0, %s286
    %s288 = sphi 0, %s286
    %s289 = sphi 0, %s288
    %s303 = sphi 0, %s289
    %s307 = sphi 0, %s307
    %s309 = sphi 0, %s307
    %s310 = sphi 0, %s309
    %s324 = sphi 0, %s310
    %s328 = sphi 0, %s328
    %s330 = sphi 0, %s328
    %s331 = sphi 0, %s330
    %s345 = sphi 0, %s331
    %s351 = sphi 0, %s353
    %s354 = sphi 0, %s351
    %s355 = sphi 0, %s354
    %s371 = sphi 0, %s355
  $region4: #{transformer_forward.5} parent=0 // loop_header_branch
    %24 = sbr.rel (%p22) target = $region8
  $region5: #{transformer_forward.5} parent=0 // loop_body
    %s26 = ssub.s32 %s21, 1
    %s27 = ssub.s32 %s21, 2
    %s28 = sadd.s32 %s21, 1
    %s29 = ssub.s32 %s21, %s28
    %p30 = scmp.eq.s32.totalorder %s29, 0
    %s32 = sadd.s32 %s31, 1
    %s33 = scalar_select %p30, %s31, %s32
    %p36 = pneg %p30
    %p37 = scmp.eq.s32.totalorder %s21, 1
    %p38 = por %p36, %p37
    %p39 = scmp.ne.s32.totalorder %s31, %s34
    %p40 = scmp.eq.s32.totalorder %s21, 0
    %p41 = por %p39, %p40
    %p42 = scmp.ne.s32.totalorder %s31, %s34
    %p43 = scmp.eq.s32.totalorder %s26, 1
    %p44 = por %p42, %p43
    %p45 = scmp.ne.s32.totalorder %s34, %s35
    %p46 = scmp.eq.s32.totalorder %s26, 0
    %p47 = por %p45, %p46
    %p48 = scmp.ne.s32.totalorder %s34, %s35
    %p49 = scmp.eq.s32.totalorder %s27, 1
    %p50 = por %p48, %p49
    %p52 = scmp.ne.s32.totalorder %s35, %s51
    %p53 = scmp.eq.s32.totalorder %s27, 0
    %p54 = por %p52, %p53
    %s56 = sadd.s32 %s55, 1
    %p59 = scmp.eq.s32.totalorder %s21, 1
    %p60 = scmp.ne.s32.totalorder %s55, %s57
    %p61 = scmp.eq.s32.totalorder %s21, 0
    %p62 = por %p60, %p61
    %p63 = scmp.ne.s32.totalorder %s55, %s57
    %p64 = scmp.eq.s32.totalorder %s26, 1
    %p65 = por %p63, %p64
    %p66 = scmp.ne.s32.totalorder %s57, %s58
    %p67 = scmp.eq.s32.totalorder %s26, 0
    %p68 = por %p66, %p67
    %p69 = scmp.ne.s32.totalorder %s57, %s58
    %p70 = scmp.eq.s32.totalorder %s27, 1
    %p71 = por %p69, %p70
    %p73 = scmp.ne.s32.totalorder %s58, %s72
    %p74 = scmp.eq.s32.totalorder %s27, 0
    %p75 = por %p73, %p74
    %s77 = sadd.s32 %s76, 1
    %p80 = scmp.eq.s32.totalorder %s21, 1
    %p81 = scmp.ne.s32.totalorder %s76, %s78
    %p82 = scmp.eq.s32.totalorder %s21, 0
    %p83 = por %p81, %p82
    %p84 = scmp.ne.s32.totalorder %s76, %s78
    %p85 = scmp.eq.s32.totalorder %s26, 1
    %p86 = por %p84, %p85
    %p87 = scmp.ne.s32.totalorder %s78, %s79
    %p88 = scmp.eq.s32.totalorder %s26, 0
    %p89 = por %p87, %p88
    %p90 = scmp.ne.s32.totalorder %s78, %s79
    %p91 = scmp.eq.s32.totalorder %s27, 1
    %p92 = por %p90, %p91
    %p94 = scmp.ne.s32.totalorder %s79, %s93
    %p95 = scmp.eq.s32.totalorder %s27, 0
    %p96 = por %p94, %p95
    %s98 = sadd.s32 %s97, 1
    %p101 = scmp.eq.s32.totalorder %s21, 1
    %p102 = scmp.ne.s32.totalorder %s97, %s99
    %p103 = scmp.eq.s32.totalorder %s21, 0
    %p104 = por %p102, %p103
    %p105 = scmp.ne.s32.totalorder %s97, %s99
    %p106 = scmp.eq.s32.totalorder %s26, 1
    %p107 = por %p105, %p106
    %p108 = scmp.ne.s32.totalorder %s99, %s100
    %p109 = scmp.eq.s32.totalorder %s26, 0
    %p110 = por %p108, %p109
    %p111 = scmp.ne.s32.totalorder %s99, %s100
    %p112 = scmp.eq.s32.totalorder %s27, 1
    %p113 = por %p111, %p112
    %p115 = scmp.ne.s32.totalorder %s100, %s114
    %p116 = scmp.eq.s32.totalorder %s27, 0
    %p117 = por %p115, %p116
    %s119 = sadd.s32 %s118, 1
    %p122 = scmp.eq.s32.totalorder %s21, 1
    %p123 = scmp.ne.s32.totalorder %s118, %s120
    %p124 = scmp.eq.s32.totalorder %s21, 0
    %p125 = por %p123, %p124
    %p126 = scmp.ne.s32.totalorder %s118, %s120
    %p127 = scmp.eq.s32.totalorder %s26, 1
    %p128 = por %p126, %p127
    %p129 = scmp.ne.s32.totalorder %s120, %s121
    %p130 = scmp.eq.s32.totalorder %s26, 0
    %p131 = por %p129, %p130
    %p132 = scmp.ne.s32.totalorder %s120, %s121
    %p133 = scmp.eq.s32.totalorder %s27, 1
    %p134 = por %p132, %p133
    %p136 = scmp.ne.s32.totalorder %s121, %s135
    %p137 = scmp.eq.s32.totalorder %s27, 0
    %p138 = por %p136, %p137
    %s140 = sadd.s32 %s139, 1
    %p143 = scmp.eq.s32.totalorder %s21, 1
    %p144 = scmp.ne.s32.totalorder %s139, %s141
    %p145 = scmp.eq.s32.totalorder %s21, 0
    %p146 = por %p144, %p145
    %p147 = scmp.ne.s32.totalorder %s139, %s141
    %p148 = scmp.eq.s32.totalorder %s26, 1
    %p149 = por %p147, %p148
    %p150 = scmp.ne.s32.totalorder %s141, %s142
    %p151 = scmp.eq.s32.totalorder %s26, 0
    %p152 = por %p150, %p151
    %p153 = scmp.ne.s32.totalorder %s141, %s142
    %p154 = scmp.eq.s32.totalorder %s27, 1
    %p155 = por %p153, %p154
    %p157 = scmp.ne.s32.totalorder %s142, %s156
    %p158 = scmp.eq.s32.totalorder %s27, 0
    %p159 = por %p157, %p158
    %s161 = sadd.s32 %s160, 1
    %p164 = scmp.eq.s32.totalorder %s21, 1
    %p165 = scmp.ne.s32.totalorder %s160, %s162
    %p166 = scmp.eq.s32.totalorder %s21, 0
    %p167 = por %p165, %p166
    %p168 = scmp.ne.s32.totalorder %s160, %s162
    %p169 = scmp.eq.s32.totalorder %s26, 1
    %p170 = por %p168, %p169
    %p171 = scmp.ne.s32.totalorder %s162, %s163
    %p172 = scmp.eq.s32.totalorder %s26, 0
    %p173 = por %p171, %p172
    %p174 = scmp.ne.s32.totalorder %s162, %s163
    %p175 = scmp.eq.s32.totalorder %s27, 1
    %p176 = por %p174, %p175
    %p178 = scmp.ne.s32.totalorder %s163, %s177
    %p179 = scmp.eq.s32.totalorder %s27, 0
    %p180 = por %p178, %p179
    %s182 = sadd.s32 %s181, 1
    %p185 = scmp.eq.s32.totalorder %s21, 1
    %p186 = scmp.ne.s32.totalorder %s181, %s183
    %p187 = scmp.eq.s32.totalorder %s21, 0
    %p188 = por %p186, %p187
    %p189 = scmp.ne.s32.totalorder %s181, %s183
    %p190 = scmp.eq.s32.totalorder %s26, 1
    %p191 = por %p189, %p190
    %p192 = scmp.ne.s32.totalorder %s183, %s184
    %p193 = scmp.eq.s32.totalorder %s26, 0
    %p194 = por %p192, %p193
    %p195 = scmp.ne.s32.totalorder %s183, %s184
    %p196 = scmp.eq.s32.totalorder %s27, 1
    %p197 = por %p195, %p196
    %p199 = scmp.ne.s32.totalorder %s184, %s198
    %p200 = scmp.eq.s32.totalorder %s27, 0
    %p201 = por %p199, %p200
    %s203 = sadd.s32 %s202, 1
    %p206 = scmp.eq.s32.totalorder %s21, 1
    %p207 = scmp.ne.s32.totalorder %s202, %s204
    %p208 = scmp.eq.s32.totalorder %s21, 0
    %p209 = por %p207, %p208
    %p210 = scmp.ne.s32.totalorder %s202, %s204
    %p211 = scmp.eq.s32.totalorder %s26, 1
    %p212 = por %p210, %p211
    %p213 = scmp.ne.s32.totalorder %s204, %s205
    %p214 = scmp.eq.s32.totalorder %s26, 0
    %p215 = por %p213, %p214
    %p216 = scmp.ne.s32.totalorder %s204, %s205
    %p217 = scmp.eq.s32.totalorder %s27, 1
    %p218 = por %p216, %p217
    %p220 = scmp.ne.s32.totalorder %s205, %s219
    %p221 = scmp.eq.s32.totalorder %s27, 0
    %p222 = por %p220, %p221
    %s224 = sadd.s32 %s223, 1
    %p227 = scmp.eq.s32.totalorder %s21, 1
    %p228 = scmp.ne.s32.totalorder %s223, %s225
    %p229 = scmp.eq.s32.totalorder %s21, 0
    %p230 = por %p228, %p229
    %p231 = scmp.ne.s32.totalorder %s223, %s225
    %p232 = scmp.eq.s32.totalorder %s26, 1
    %p233 = por %p231, %p232
    %p234 = scmp.ne.s32.totalorder %s225, %s226
    %p235 = scmp.eq.s32.totalorder %s26, 0
    %p236 = por %p234, %p235
    %p237 = scmp.ne.s32.totalorder %s225, %s226
    %p238 = scmp.eq.s32.totalorder %s27, 1
    %p239 = por %p237, %p238
    %p241 = scmp.ne.s32.totalorder %s226, %s240
    %p242 = scmp.eq.s32.totalorder %s27, 0
    %p243 = por %p241, %p242
    %s245 = sadd.s32 %s244, 1
    %p248 = scmp.eq.s32.totalorder %s21, 1
    %p249 = scmp.ne.s32.totalorder %s244, %s246
    %p250 = scmp.eq.s32.totalorder %s21, 0
    %p251 = por %p249, %p250
    %p252 = scmp.ne.s32.totalorder %s244, %s246
    %p253 = scmp.eq.s32.totalorder %s26, 1
    %p254 = por %p252, %p253
    %p255 = scmp.ne.s32.totalorder %s246, %s247
    %p256 = scmp.eq.s32.totalorder %s26, 0
    %p257 = por %p255, %p256
    %p258 = scmp.ne.s32.totalorder %s246, %s247
    %p259 = scmp.eq.s32.totalorder %s27, 1
    %p260 = por %p258, %p259
    %p262 = scmp.ne.s32.totalorder %s247, %s261
    %p263 = scmp.eq.s32.totalorder %s27, 0
    %p264 = por %p262, %p263
    %s266 = sadd.s32 %s265, 1
    %p269 = scmp.eq.s32.totalorder %s21, 1
    %p270 = scmp.ne.s32.totalorder %s265, %s267
    %p271 = scmp.eq.s32.totalorder %s21, 0
    %p272 = por %p270, %p271
    %p273 = scmp.ne.s32.totalorder %s265, %s267
    %p274 = scmp.eq.s32.totalorder %s26, 1
    %p275 = por %p273, %p274
    %p276 = scmp.ne.s32.totalorder %s267, %s268
    %p277 = scmp.eq.s32.totalorder %s26, 0
    %p278 = por %p276, %p277
    %p279 = scmp.ne.s32.totalorder %s267, %s268
    %p280 = scmp.eq.s32.totalorder %s27, 1
    %p281 = por %p279, %p280
    %p283 = scmp.ne.s32.totalorder %s268, %s282
    %p284 = scmp.eq.s32.totalorder %s27, 0
    %p285 = por %p283, %p284
    %s287 = sadd.s32 %s286, 1
    %p290 = scmp.eq.s32.totalorder %s21, 1
    %p291 = scmp.ne.s32.totalorder %s286, %s288
    %p292 = scmp.eq.s32.totalorder %s21, 0
    %p293 = por %p291, %p292
    %p294 = scmp.ne.s32.totalorder %s286, %s288
    %p295 = scmp.eq.s32.totalorder %s26, 1
    %p296 = por %p294, %p295
    %p297 = scmp.ne.s32.totalorder %s288, %s289
    %p298 = scmp.eq.s32.totalorder %s26, 0
    %p299 = por %p297, %p298
    %p300 = scmp.ne.s32.totalorder %s288, %s289
    %p301 = scmp.eq.s32.totalorder %s27, 1
    %p302 = por %p300, %p301
    %p304 = scmp.ne.s32.totalorder %s289, %s303
    %p305 = scmp.eq.s32.totalorder %s27, 0
    %p306 = por %p304, %p305
    %s308 = sadd.s32 %s307, 1
    %p311 = scmp.eq.s32.totalorder %s21, 1
    %p312 = scmp.ne.s32.totalorder %s307, %s309
    %p313 = scmp.eq.s32.totalorder %s21, 0
    %p314 = por %p312, %p313
    %p315 = scmp.ne.s32.totalorder %s307, %s309
    %p316 = scmp.eq.s32.totalorder %s26, 1
    %p317 = por %p315, %p316
    %p318 = scmp.ne.s32.totalorder %s309, %s310
    %p319 = scmp.eq.s32.totalorder %s26, 0
    %p320 = por %p318, %p319
    %p321 = scmp.ne.s32.totalorder %s309, %s310
    %p322 = scmp.eq.s32.totalorder %s27, 1
    %p323 = por %p321, %p322
    %p325 = scmp.ne.s32.totalorder %s310, %s324
    %p326 = scmp.eq.s32.totalorder %s27, 0
    %p327 = por %p325, %p326
    %s329 = sadd.s32 %s328, 1
    %p332 = scmp.eq.s32.totalorder %s21, 1
    %p333 = scmp.ne.s32.totalorder %s328, %s330
    %p334 = scmp.eq.s32.totalorder %s21, 0
    %p335 = por %p333, %p334
    %p336 = scmp.ne.s32.totalorder %s328, %s330
    %p337 = scmp.eq.s32.totalorder %s26, 1
    %p338 = por %p336, %p337
    %p339 = scmp.ne.s32.totalorder %s330, %s331
    %p340 = scmp.eq.s32.totalorder %s26, 0
    %p341 = por %p339, %p340
    %p342 = scmp.ne.s32.totalorder %s330, %s331
    %p343 = scmp.eq.s32.totalorder %s27, 1
    %p344 = por %p342, %p343
    %p346 = scmp.ne.s32.totalorder %s331, %s345
    %p347 = scmp.eq.s32.totalorder %s27, 0
    %p348 = por %p346, %p347
    %s349 = ssub.s32 %s21, %s28
    %p350 = scmp.eq.s32.totalorder %s349, 0
    %s352 = sadd.s32 %s351, 1
    %s353 = scalar_select %p350, %s351, %s352
    %p356 = pneg %p350
    %p357 = scmp.eq.s32.totalorder %s21, 1
    %p358 = por %p356, %p357
    %p359 = scmp.ne.s32.totalorder %s351, %s354
    %p360 = scmp.eq.s32.totalorder %s21, 0
    %p361 = por %p359, %p360
    %p362 = scmp.ne.s32.totalorder %s351, %s354
    %p363 = scmp.eq.s32.totalorder %s26, 1
    %p364 = por %p362, %p363
    %p365 = scmp.ne.s32.totalorder %s354, %s355
    %p366 = scmp.eq.s32.totalorder %s26, 0
    %p367 = por %p365, %p366
    %p368 = scmp.ne.s32.totalorder %s354, %s355
    %p369 = scmp.eq.s32.totalorder %s27, 1
    %p370 = por %p368, %p369
    %p372 = scmp.ne.s32.totalorder %s355, %s371
    %p373 = scmp.eq.s32.totalorder %s27, 0
    %p374 = por %p372, %p373
    %p375 = scmp.le.s32.totalorder 1, %s21
    %p376 = scmp.lt.s32.totalorder %s21, 3
    %p377 = pnand %p375, %p376
    %p378 = pneg %p377
    // Predicated region
    $region9: #{transformer_forward.5} parent=5 // pred_check
      _
    $region10: #{transformer_forward.5} parent=5 // pred_check_branch
      %380 = sbr.rel (%p377) target = $region12
    $region11: #{transformer_forward.5} parent=5 // pred_region
      %s381 = ssub.s32 %s21, 1
      // Predicated region
      $region13: #{transformer_forward.5} parent=11 // pred_check
        %p382 = pneg %p68
      $region14: #{transformer_forward.5} parent=11 // pred_check_branch
        %384 = sbr.rel (%p382) target = $region16
      $region15: #{transformer_forward.5} parent=11 // pred_region
        _
      $region16: #{transformer_forward.5} parent=11 // pred_fallthru
        _
      // Predicated region
      $region17: #{transformer_forward.5} parent=11 // pred_check
        %p385 = pneg %p89
      $region18: #{transformer_forward.5} parent=11 // pred_check_branch
        %387 = sbr.rel (%p385) target = $region20
      $region19: #{transformer_forward.5} parent=11 // pred_region
        _
      $region20: #{transformer_forward.5} parent=11 // pred_fallthru
        _
      // Predicated region
      $region21: #{transformer_forward.5} parent=11 // pred_check
        %p388 = pneg %p110
      $region22: #{transformer_forward.5} parent=11 // pred_check_branch
        %390 = sbr.rel (%p388) target = $region24
      $region23: #{transformer_forward.5} parent=11 // pred_region
        _
      $region24: #{transformer_forward.5} parent=11 // pred_fallthru
        _
      // Predicated region
      $region25: #{transformer_forward.5} parent=11 // pred_check
        %p391 = pneg %p131
      $region26: #{transformer_forward.5} parent=11 // pred_check_branch
        %393 = sbr.rel (%p391) target = $region28
      $region27: #{transformer_forward.5} parent=11 // pred_region
        _
      $region28: #{transformer_forward.5} parent=11 // pred_fallthru
        _
      // Predicated region
      $region29: #{transformer_forward.5} parent=11 // pred_check
        %p394 = pneg %p152
      $region30: #{transformer_forward.5} parent=11 // pred_check_branch
        %396 = sbr.rel (%p394) target = $region32
      $region31: #{transformer_forward.5} parent=11 // pred_region
        _
      $region32: #{transformer_forward.5} parent=11 // pred_fallthru
        _
      // Predicated region
      $region33: #{transformer_forward.5} parent=11 // pred_check
        %p397 = pneg %p173
      $region34: #{transformer_forward.5} parent=11 // pred_check_branch
        %399 = sbr.rel (%p397) target = $region36
      $region35: #{transformer_forward.5} parent=11 // pred_region
        _
      $region36: #{transformer_forward.5} parent=11 // pred_fallthru
        _
      // Predicated region
      $region37: #{transformer_forward.5} parent=11 // pred_check
        %p400 = pneg %p194
      $region38: #{transformer_forward.5} parent=11 // pred_check_branch
        %402 = sbr.rel (%p400) target = $region40
      $region39: #{transformer_forward.5} parent=11 // pred_region
        _
      $region40: #{transformer_forward.5} parent=11 // pred_fallthru
        _
      // Predicated region
      $region41: #{transformer_forward.5} parent=11 // pred_check
        %p403 = pneg %p215
      $region42: #{transformer_forward.5} parent=11 // pred_check_branch
        %405 = sbr.rel (%p403) target = $region44
      $region43: #{transformer_forward.5} parent=11 // pred_region
        _
      $region44: #{transformer_forward.5} parent=11 // pred_fallthru
        _
      // Predicated region
      $region45: #{transformer_forward.5} parent=11 // pred_check
        %p406 = pneg %p236
      $region46: #{transformer_forward.5} parent=11 // pred_check_branch
        %408 = sbr.rel (%p406) target = $region48
      $region47: #{transformer_forward.5} parent=11 // pred_region
        _
      $region48: #{transformer_forward.5} parent=11 // pred_fallthru
        _
      // Predicated region
      $region49: #{transformer_forward.5} parent=11 // pred_check
        %p409 = pneg %p257
      $region50: #{transformer_forward.5} parent=11 // pred_check_branch
        %411 = sbr.rel (%p409) target = $region52
      $region51: #{transformer_forward.5} parent=11 // pred_region
        _
      $region52: #{transformer_forward.5} parent=11 // pred_fallthru
        _
      // Predicated region
      $region53: #{transformer_forward.5} parent=11 // pred_check
        %p412 = pneg %p278
      $region54: #{transformer_forward.5} parent=11 // pred_check_branch
        %414 = sbr.rel (%p412) target = $region56
      $region55: #{transformer_forward.5} parent=11 // pred_region
        _
      $region56: #{transformer_forward.5} parent=11 // pred_fallthru
        _
      // Predicated region
      $region57: #{transformer_forward.5} parent=11 // pred_check
        %p415 = pneg %p299
      $region58: #{transformer_forward.5} parent=11 // pred_check_branch
        %417 = sbr.rel (%p415) target = $region60
      $region59: #{transformer_forward.5} parent=11 // pred_region
        _
      $region60: #{transformer_forward.5} parent=11 // pred_fallthru
        _
      // Predicated region
      $region61: #{transformer_forward.5} parent=11 // pred_check
        %p418 = pneg %p320
      $region62: #{transformer_forward.5} parent=11 // pred_check_branch
        %420 = sbr.rel (%p418) target = $region64
      $region63: #{transformer_forward.5} parent=11 // pred_region
        _
      $region64: #{transformer_forward.5} parent=11 // pred_fallthru
        _
      // Predicated region
      $region65: #{transformer_forward.5} parent=11 // pred_check
        %p421 = pneg %p341
      $region66: #{transformer_forward.5} parent=11 // pred_check_branch
        %423 = sbr.rel (%p421) target = $region68
      $region67: #{transformer_forward.5} parent=11 // pred_region
        _
      $region68: #{transformer_forward.5} parent=11 // pred_fallthru
        _
    $region12: #{transformer_forward.5} parent=5 // pred_fallthru
      _
    %p424 = scmp.lt.s32.totalorder %s21, 2
    // Predicated region
    $region69: #{transformer_forward.5} parent=5 // pred_check
      %p425 = pneg %p424
    $region70: #{transformer_forward.5} parent=5 // pred_check_branch
      %427 = sbr.rel (%p425) target = $region72
    $region71: #{transformer_forward.5} parent=5 // pred_region
      // Predicated region
      $region73: #{transformer_forward.5} parent=71 // pred_check
        %p428 = pneg %p41
      $region74: #{transformer_forward.5} parent=71 // pred_check_branch
        %430 = sbr.rel (%p428) target = $region76
      $region75: #{transformer_forward.5} parent=71 // pred_region
        %p431 = scmp.lt.s32.totalorder %s21, 1
        %s432 = scalar_select %p431, %s21, 1
        %s433 = smul.addr %s432, 8
        %s434 = scalar_lea.vmem %s0, %s433
      $region76: #{transformer_forward.5} parent=71 // pred_fallthru
        _
    $region72: #{transformer_forward.5} parent=5 // pred_fallthru
      _
    %p435 = scmp.le.s32.totalorder 1, %s21
    %p436 = scmp.lt.s32.totalorder %s21, 3
    %p437 = pnand %p435, %p436
    %p438 = pneg %p437
    // Predicated region
    $region77: #{transformer_forward.5} parent=5 // pred_check
      _
    $region78: #{transformer_forward.5} parent=5 // pred_check_branch
      %440 = sbr.rel (%p437) target = $region80
    $region79: #{transformer_forward.5} parent=5 // pred_region
      %s441 = ssub.s32 %s21, 1
      %p442 = scmp.lt.s32.totalorder %s26, 1
      %s443 = scalar_select %p442, %s26, 1
      %s444 = smul.addr %s443, 8
      %s445 = scalar_lea.vmem %s0, %s444
      %p446 = pneg %p47
      %p447 = pneg %p44
      %p448 = pneg %p68
      %p449 = pneg %p65
      %p450 = pneg %p89
      %p451 = pneg %p86
      %p452 = pneg %p110
      %p453 = pneg %p107
      %p454 = pneg %p131
      %p455 = pneg %p128
      %p456 = pneg %p152
      %p457 = pneg %p149
      %p458 = pneg %p173
      %p459 = pneg %p170
      %p460 = pneg %p194
      %p461 = pneg %p191
      %p462 = pneg %p215
      %p463 = pneg %p212
      %p464 = pneg %p236
      %p465 = pneg %p233
      %p466 = pneg %p257
      %p467 = pneg %p254
      %p468 = pneg %p278
      %p469 = pneg %p275
      %p470 = pneg %p299
      %p471 = pneg %p296
      %p472 = pneg %p320
      %p473 = pneg %p317
      %p474 = pneg %p341
      %p475 = pneg %p338
      %p476 = pneg %p367
      %p477 = pneg %p364
      %p478 = scmp.lt.s32.totalorder %s26, 1
      %s479 = scalar_select %p478, %s26, 1
      %s480 = smul.addr %s479, 8
      %s481 = scalar_lea.vmem %s15, %s480
      %p482 = scmp.lt.s32.totalorder %s26, 1
      %s483 = scalar_select %p482, %s26, 1
      %s484 = smul.addr %s483, 8
      %s485 = scalar_lea.vmem %s0, %s484
      %p486 = scmp.lt.s32.totalorder %s26, 1
      %s487 = scalar_select %p486, %s26, 1
      %s488 = smul.addr %s487, 8
      %s489 = scalar_lea.vmem %s15, %s488
      %v491 = vld [vmem:[%s485] sm:$0xff]
      %v492 = vld [vmem:[%s1] sm:$0x1]
      %v493 = vld [vmem:[%s2] sm:$0x1]
      %vm494 = vcmask 261120
      %v495 = vsel %vm494, %v491, 0.0
      %496 = vadd.xlane.f32.xlu0 %v495
      %v497 = vpop.xlane.xlu0 %496
      %v498 = vrcp.pop 32.0
      %v499 = vmul.f32 %v497, %v498
      %v500 = vsub.f32 %v491, %v499
      %v501 = vmul.f32 %v500, %v500
      %v502 = vsel %vm494, %v501, 0.0
      %503 = vadd.xlane.f32.xlu0 %v502
      %v504 = vpop.xlane.xlu0 %503
      %v505 = vmul.f32 %v504, %v498
      %v506 = vadd.f32 %v505, 1e-05
      %v507 = vrsqrt.pop %v506
      %v508 = vmul.f32 %v500, %v507
      %v510 = vlaneseq
      %v511 = vshrl.u32 %v510, 7
      %v512 = vsub.s32 0, %v511
      %v513 = vrot.slane %v492, %v512
      %v515 = vmul.f32 %v508, %v513
      %v517 = vlaneseq
      %v518 = vshrl.u32 %v517, 7
      %v519 = vsub.s32 0, %v518
      %v520 = vrot.slane %v493, %v519
      %v522 = vadd.f32 %v515, %v520
      %v523 = vld [vmem:[%s3] sm:$0xf]
      %v524 = vld [vmem:[%s3 + $0x4] sm:$0xf]
      %v525 = vld [vmem:[%s3 + $0x8] sm:$0xf]
      %v526 = vld [vmem:[%s3 + $0xc] sm:$0xf]
      %v527 = vpack.c.bf16 %v522, %v522
      %v528 = vld [vmem:[%s4] sm:$0x1]
      %v530 = vlaneseq
      %v531 = vshrl.u32 %v530, 7
      %v532 = vsub.s32 0, %v531
      %v533 = vrot.slane %v528, %v532
      %v539 = vunpack.c.l.b16 %v523
      %v540 = vunpack.c.l.b16 %v524
      %v541 = vunpack.c.l.b16 %v525
      %v542 = vunpack.c.l.b16 %v526
      %v543 = vpack.c.b16 %v540, %v539
      %v544 = vpack.c.b16 %v542, %v541
      %v548 = vsel %vm494, %v527, 0
      %550 = vmatprep.subr.bf16.mxu0 0
      %551 = vmatpush1.bf16.msra.mxu0 %v543
      %552 = vmatprep.subr.bf16.mxu0 0
      %553 = vmatpush1.bf16.msra.mxu0 %v544
      %554 = vmatprep.subr.bf16.mxu0 0
      %555 = vmatpush1.bf16.msra.mxu0 0
      %556 = vmatprep.subr.bf16.mxu0 0
      %557 = vmatpush1.bf16.msra.mxu0 0
      %558 = vmatprep.subr.bf16.mxu0 0
      %559 = vmatpush1.bf16.msra.mxu0 0
      %560 = vmatprep.subr.bf16.mxu0 0
      %561 = vmatpush1.bf16.msra.mxu0 0
      %562 = vmatprep.subr.bf16.mxu0 0
      %563 = vmatpush1.bf16.msra.mxu0 0
      %564 = vmatprep.subr.bf16.mxu0 0
      %565 = vmatpush1.bf16.msra.mxu0 0
      %566 = vmatprep.subr.bf16.mxu0 0
      %567 = vmatpush1.bf16.msra.mxu0 0
      %568 = vmatprep.subr.bf16.mxu0 0
      %569 = vmatpush1.bf16.msra.mxu0 0
      %570 = vmatprep.subr.bf16.mxu0 0
      %571 = vmatpush1.bf16.msra.mxu0 0
      %572 = vmatprep.subr.bf16.mxu0 0
      %573 = vmatpush1.bf16.msra.mxu0 0
      %574 = vmatprep.subr.bf16.mxu0 0
      %575 = vmatpush1.bf16.msra.mxu0 0
      %576 = vmatprep.subr.bf16.mxu0 0
      %577 = vmatpush1.bf16.msra.mxu0 0
      %578 = vmatprep.subr.bf16.mxu0 0
      %579 = vmatpush1.bf16.msra.mxu0 0
      %580 = vmatprep.subr.bf16.mxu0 0
      %581 = vmatpush1.bf16.msra.mxu0 0
      %582 = vmatprep.mubr.bf16.mxu0 0
      %583 = vmatmul.mubr.bf16.gmra.mrb[0].mxu0 %v548
      %v584 = vpop.f32.mrb[0].mxu0
      %v585 = vadd.f32 %v533, %v584
      %v586 = vpop.f32.mrb[0].mxu0
      %v587 = vpop.f32.mrb[0].mxu0
      %v588 = vpop.f32.mrb[0].mxu0
      %589 = vdwg.mxu0
      %v590 = vmul.f32 %v585, 0.35355338
      %v591 = vpack.c.bf16 %v590, %v590
      %v592 = vpack.c.bf16 %v585, %v585
      %594 = vrot.lane.b32.xlu0 %v592, 96
      %v595 = vpop.permute.xlu0 %594
      %vm596 = vcmask 64512
      %v598 = vsel %vm596, %v591, 0
      %v601 = vsel %vm596, %v595, 0
      %603 = vmatprep.subr.bf16.mxu0 0
      %604 = vmatpush1.bf16.xpose.msra.mxu0 %v601
      %605 = vmatprep.subr.bf16.mxu0 0
      %606 = vmatpush1.bf16.xpose.msra.mxu0 0
      %607 = vmatprep.subr.bf16.mxu0 0
      %608 = vmatpush1.bf16.xpose.msra.mxu0 0
      %609 = vmatprep.subr.bf16.mxu0 0
      %610 = vmatpush1.bf16.xpose.msra.mxu0 0
      %611 = vmatprep.subr.bf16.mxu0 0
      %612 = vmatpush1.bf16.xpose.msra.mxu0 0
      %613 = vmatprep.subr.bf16.mxu0 0
      %614 = vmatpush1.bf16.xpose.msra.mxu0 0
      %615 = vmatprep.subr.bf16.mxu0 0
      %616 = vmatpush1.bf16.xpose.msra.mxu0 0
      %617 = vmatprep.subr.bf16.mxu0 0
      %618 = vmatpush1.bf16.xpose.msra.mxu0 0
      %619 = vmatprep.subr.bf16.mxu0 0
      %620 = vmatpush1.bf16.xpose.msra.mxu0 0
      %621 = vmatprep.subr.bf16.mxu0 0
      %622 = vmatpush1.bf16.xpose.msra.mxu0 0
      %623 = vmatprep.subr.bf16.mxu0 0
      %624 = vmatpush1.bf16.xpose.msra.mxu0 0
      %625 = vmatprep.subr.bf16.mxu0 0
      %626 = vmatpush1.bf16.xpose.msra.mxu0 0
      %627 = vmatprep.subr.bf16.mxu0 0
      %628 = vmatpush1.bf16.xpose.msra.mxu0 0
      %629 = vmatprep.subr.bf16.mxu0 0
      %630 = vmatpush1.bf16.xpose.msra.mxu0 0
      %631 = vmatprep.subr.bf16.mxu0 0
      %632 = vmatpush1.bf16.xpose.msra.mxu0 0
      %633 = vmatprep.subr.bf16.mxu0 0
      %634 = vmatpush1.bf16.xpose.msra.mxu0 0
      %635 = vmatprep.mubr.bf16.mxu0 0
      %636 = vmatmul.mubr.bf16.gmra.mrb[0].mxu0 %v598
      %v637 = vpop.f32.mrb[0].mxu0
      %v638 = vadd.f32 0.0, %v637
      %v639 = vpop.f32.mrb[0].mxu0
      %v640 = vpop.f32.mrb[0].mxu0
      %v641 = vpop.f32.mrb[0].mxu0
      %642 = vdwg.mxu0
      %v643 = vsel %vm596, %v638, -inf
      %644 = vmax.xlane.f32.xlu0 %v643
      %v645 = vpop.xlane.xlu0 %644
      %v646 = vsub.f32 %v638, %v645
      %v647 = vmul.f32 %v646, 1.442695
      %v648 = vpow.pop %v647
      %v649 = vsel %vm596, %v648, 0.0
      %650 = vadd.xlane.f32.xlu0 %v649
      %v651 = vpop.xlane.xlu0 %650
      %v652 = vrcp.pop %v651
      %v653 = vmul.f32 %v648, %v652
      %v654 = vpack.c.bf16 %v653, %v653
      %655 = vrot.lane.b32.xlu0 %v592, 64
      %v656 = vpop.permute.xlu0 %655
      %v658 = vsel %vm596, %v654, 0
      %vm660 = vcmask 1043456
      %v662 = vsel %vm660, %v656, 0
      %664 = vmatprep.subr.bf16.mxu0 0
      %665 = vmatpush1.bf16.msra.mxu0 %v662
      %666 = vmatprep.subr.bf16.mxu0 0
      %667 = vmatpush1.bf16.msra.mxu0 0
      %668 = vmatprep.subr.bf16.mxu0 0
      %669 = vmatpush1.bf16.msra.mxu0 0
      %670 = vmatprep.subr.bf16.mxu0 0
      %671 = vmatpush1.bf16.msra.mxu0 0
      %672 = vmatprep.subr.bf16.mxu0 0
      %673 = vmatpush1.bf16.msra.mxu0 0
      %674 = vmatprep.subr.bf16.mxu0 0
      %675 = vmatpush1.bf16.msra.mxu0 0
      %676 = vmatprep.subr.bf16.mxu0 0
      %677 = vmatpush1.bf16.msra.mxu0 0
      %678 = vmatprep.subr.bf16.mxu0 0
      %679 = vmatpush1.bf16.msra.mxu0 0
      %680 = vmatprep.subr.bf16.mxu0 0
      %681 = vmatpush1.bf16.msra.mxu0 0
      %682 = vmatprep.subr.bf16.mxu0 0
      %683 = vmatpush1.bf16.msra.mxu0 0
      %684 = vmatprep.subr.bf16.mxu0 0
      %685 = vmatpush1.bf16.msra.mxu0 0
      %686 = vmatprep.subr.bf16.mxu0 0
      %687 = vmatpush1.bf16.msra.mxu0 0
      %688 = vmatprep.subr.bf16.mxu0 0
      %689 = vmatpush1.bf16.msra.mxu0 0
      %690 = vmatprep.subr.bf16.mxu0 0
      %691 = vmatpush1.bf16.msra.mxu0 0
      %692 = vmatprep.subr.bf16.mxu0 0
      %693 = vmatpush1.bf16.msra.mxu0 0
      %694 = vmatprep.subr.bf16.mxu0 0
      %695 = vmatpush1.bf16.msra.mxu0 0
      %696 = vmatprep.mubr.bf16.mxu0 0
      %697 = vmatmul.mubr.bf16.gmra.mrb[0].mxu0 %v658
      %v698 = vpop.f32.mrb[0].mxu0
      %v699 = vadd.f32 0.0, %v698
      %v700 = vpop.f32.mrb[0].mxu0
      %v701 = vpop.f32.mrb[0].mxu0
      %v702 = vpop.f32.mrb[0].mxu0
      %703 = vdwg.mxu0
      %705 = vrot.lane.b32.xlu0 %v591, 120
      %v706 = vpop.permute.xlu0 %705
      %707 = vrot.lane.b32.xlu0 %v592, 88
      %v708 = vpop.permute.xlu0 %707
      %v710 = vsel %vm596, %v706, 0
      %v713 = vsel %vm596, %v708, 0
      %715 = vmatprep.subr.bf16.mxu0 0
      %716 = vmatpush1.bf16.xpose.msra.mxu0 %v713
      %717 = vmatprep.subr.bf16.mxu0 0
      %718 = vmatpush1.bf16.xpose.msra.mxu0 0
      %719 = vmatprep.subr.bf16.mxu0 0
      %720 = vmatpush1.bf16.xpose.msra.mxu0 0
      %721 = vmatprep.subr.bf16.mxu0 0
      %722 = vmatpush1.bf16.xpose.msra.mxu0 0
      %723 = vmatprep.subr.bf16.mxu0 0
      %724 = vmatpush1.bf16.xpose.msra.mxu0 0
      %725 = vmatprep.subr.bf16.mxu0 0
      %726 = vmatpush1.bf16.xpose.msra.mxu0 0
      %727 = vmatprep.subr.bf16.mxu0 0
      %728 = vmatpush1.bf16.xpose.msra.mxu0 0
      %729 = vmatprep.subr.bf16.mxu0 0
      %730 = vmatpush1.bf16.xpose.msra.mxu0 0
      %731 = vmatprep.subr.bf16.mxu0 0
      %732 = vmatpush1.bf16.xpose.msra.mxu0 0
      %733 = vmatprep.subr.bf16.mxu0 0
      %734 = vmatpush1.bf16.xpose.msra.mxu0 0
      %735 = vmatprep.subr.bf16.mxu0 0
      %736 = vmatpush1.bf16.xpose.msra.mxu0 0
      %737 = vmatprep.subr.bf16.mxu0 0
      %738 = vmatpush1.bf16.xpose.msra.mxu0 0
      %739 = vmatprep.subr.bf16.mxu0 0
      %740 = vmatpush1.bf16.xpose.msra.mxu0 0
      %741 = vmatprep.subr.bf16.mxu0 0
      %742 = vmatpush1.bf16.xpose.msra.mxu0 0
      %743 = vmatprep.subr.bf16.mxu0 0
      %744 = vmatpush1.bf16.xpose.msra.mxu0 0
      %745 = vmatprep.subr.bf16.mxu0 0
      %746 = vmatpush1.bf16.xpose.msra.mxu0 0
      %747 = vmatprep.mubr.bf16.mxu0 0
      %748 = vmatmul.mubr.bf16.gmra.mrb[0].mxu0 %v710
      %v749 = vpop.f32.mrb[0].mxu0
      %v750 = vadd.f32 0.0, %v749
      %v751 = vpop.f32.mrb[0].mxu0
      %v752 = vpop.f32.mrb[0].mxu0
      %v753 = vpop.f32.mrb[0].mxu0
      %754 = vdwg.mxu0
      %v755 = vsel %vm596, %v750, -inf
      %756 = vmax.xlane.f32.xlu0 %v755
      %v757 = vpop.xlane.xlu0 %756
      %v758 = vsub.f32 %v750, %v757
      %v759 = vmul.f32 %v758, 1.442695
      %v760 = vpow.pop %v759
      %v761 = vsel %vm596, %v760, 0.0
      %762 = vadd.xlane.f32.xlu0 %v761
      %v763 = vpop.xlane.xlu0 %762
      %v764 = vrcp.pop %v763
      %v765 = vmul.f32 %v760, %v764
      %v766 = vpack.c.bf16 %v765, %v765
      %767 = vrot.lane.b32.xlu0 %v592, 56
      %v768 = vpop.permute.xlu0 %767
      %v770 = vsel %vm596, %v766, 0
      %v773 = vsel %vm660, %v768, 0
      %775 = vmatprep.subr.bf16.mxu0 0
      %776 = vmatpush1.bf16.msra.mxu0 %v773
      %777 = vmatprep.subr.bf16.mxu0 0
      %778 = vmatpush1.bf16.msra.mxu0 0
      %779 = vmatprep.subr.bf16.mxu0 0
      %780 = vmatpush1.bf16.msra.mxu0 0
      %781 = vmatprep.subr.bf16.mxu0 0
      %782 = vmatpush1.bf16.msra.mxu0 0
      %783 = vmatprep.subr.bf16.mxu0 0
      %784 = vmatpush1.bf16.msra.mxu0 0
      %785 = vmatprep.subr.bf16.mxu0 0
      %786 = vmatpush1.bf16.msra.mxu0 0
      %787 = vmatprep.subr.bf16.mxu0 0
      %788 = vmatpush1.bf16.msra.mxu0 0
      %789 = vmatprep.subr.bf16.mxu0 0
      %790 = vmatpush1.bf16.msra.mxu0 0
      %791 = vmatprep.subr.bf16.mxu0 0
      %792 = vmatpush1.bf16.msra.mxu0 0
      %793 = vmatprep.subr.bf16.mxu0 0
      %794 = vmatpush1.bf16.msra.mxu0 0
      %795 = vmatprep.subr.bf16.mxu0 0
      %796 = vmatpush1.bf16.msra.mxu0 0
      %797 = vmatprep.subr.bf16.mxu0 0
      %798 = vmatpush1.bf16.msra.mxu0 0
      %799 = vmatprep.subr.bf16.mxu0 0
      %800 = vmatpush1.bf16.msra.mxu0 0
      %801 = vmatprep.subr.bf16.mxu0 0
      %802 = vmatpush1.bf16.msra.mxu0 0
      %803 = vmatprep.subr.bf16.mxu0 0
      %804 = vmatpush1.bf16.msra.mxu0 0
      %805 = vmatprep.subr.bf16.mxu0 0
      %806 = vmatpush1.bf16.msra.mxu0 0
      %807 = vmatprep.mubr.bf16.mxu0 0
      %808 = vmatmul.mubr.bf16.gmra.mrb[0].mxu0 %v770
      %v809 = vpop.f32.mrb[0].mxu0
      %v810 = vadd.f32 0.0, %v809
      %v811 = vpop.f32.mrb[0].mxu0
      %v812 = vpop.f32.mrb[0].mxu0
      %v813 = vpop.f32.mrb[0].mxu0
      %814 = vdwg.mxu0
      %815 = vrot.lane.b32.xlu0 %v591, 112
      %v816 = vpop.permute.xlu0 %815
      %817 = vrot.lane.b32.xlu0 %v592, 80
      %v818 = vpop.permute.xlu0 %817
      %v820 = vsel %vm596, %v816, 0
      %v823 = vsel %vm596, %v818, 0
      %825 = vmatprep.subr.bf16.mxu0 0
      %826 = vmatpush1.bf16.xpose.msra.mxu0 %v823
      %827 = vmatprep.subr.bf16.mxu0 0
      %828 = vmatpush1.bf16.xpose.msra.mxu0 0
      %829 = vmatprep.subr.bf16.mxu0 0
      %830 = vmatpush1.bf16.xpose.msra.mxu0 0
      %831 = vmatprep.subr.bf16.mxu0 0
      %832 = vmatpush1.bf16.xpose.msra.mxu0 0
      %833 = vmatprep.subr.bf16.mxu0 0
      %834 = vmatpush1.bf16.xpose.msra.mxu0 0
      %835 = vmatprep.subr.bf16.mxu0 0
      %836 = vmatpush1.bf16.xpose.msra.mxu0 0
      %837 = vmatprep.subr.bf16.mxu0 0
      %838 = vmatpush1.bf16.xpose.msra.mxu0 0
      %839 = vmatprep.subr.bf16.mxu0 0
      %840 = vmatpush1.bf16.xpose.msra.mxu0 0
      %841 = vmatprep.subr.bf16.mxu0 0
      %842 = vmatpush1.bf16.xpose.msra.mxu0 0
      %843 = vmatprep.subr.bf16.mxu0 0
      %844 = vmatpush1.bf16.xpose.msra.mxu0 0
      %845 = vmatprep.subr.bf16.mxu0 0
      %846 = vmatpush1.bf16.xpose.msra.mxu0 0
      %847 = vmatprep.subr.bf16.mxu0 0
      %848 = vmatpush1.bf16.xpose.msra.mxu0 0
      %849 = vmatprep.subr.bf16.mxu0 0
      %850 = vmatpush1.bf16.xpose.msra.mxu0 0
      %851 = vmatprep.subr.bf16.mxu0 0
      %852 = vmatpush1.bf16.xpose.msra.mxu0 0
      %853 = vmatprep.subr.bf16.mxu0 0
      %854 = vmatpush1.bf16.xpose.msra.mxu0 0
      %855 = vmatprep.subr.bf16.mxu0 0
      %856 = vmatpush1.bf16.xpose.msra.mxu0 0
      %857 = vmatprep.mubr.bf16.mxu0 0
      %858 = vmatmul.mubr.bf16.gmra.mrb[0].mxu0 %v820
      %v859 = vpop.f32.mrb[0].mxu0
      %v860 = vadd.f32 0.0, %v859
      %v861 = vpop.f32.mrb[0].mxu0
      %v862 = vpop.f32.mrb[0].mxu0
      %v863 = vpop.f32.mrb[0].mxu0
      %864 = vdwg.mxu0
      %v865 = vsel %vm596, %v860, -inf
      %866 = vmax.xlane.f32.xlu0 %v865
      %v867 = vpop.xlane.xlu0 %866
      %v868 = vsub.f32 %v860, %v867
      %v869 = vmul.f32 %v868, 1.442695
      %v870 = vpow.pop %v869
      %v871 = vsel %vm596, %v870, 0.0
      %872 = vadd.xlane.f32.xlu0 %v871
      %v873 = vpop.xlane.xlu0 %872
      %v874 = vrcp.pop %v873
      %v875 = vmul.f32 %v870, %v874
      %v876 = vpack.c.bf16 %v875, %v875
      %877 = vrot.lane.b32.xlu0 %v592, 48
      %v878 = vpop.permute.xlu0 %877
      %v880 = vsel %vm596, %v876, 0
      %v883 = vsel %vm660, %v878, 0
      %885 = vmatprep.subr.bf16.mxu0 0
      %886 = vmatpush1.bf16.msra.mxu0 %v883
      %887 = vmatprep.subr.bf16.mxu0 0
      %888 = vmatpush1.bf16.msra.mxu0 0
      %889 = vmatprep.subr.bf16.mxu0 0
      %890 = vmatpush1.bf16.msra.mxu0 0
      %891 = vmatprep.subr.bf16.mxu0 0
      %892 = vmatpush1.bf16.msra.mxu0 0
      %893 = vmatprep.subr.bf16.mxu0 0
      %894 = vmatpush1.bf16.msra.mxu0 0
      %895 = vmatprep.subr.bf16.mxu0 0
      %896 = vmatpush1.bf16.msra.mxu0 0
      %897 = vmatprep.subr.bf16.mxu0 0
      %898 = vmatpush1.bf16.msra.mxu0 0
      %899 = vmatprep.subr.bf16.mxu0 0
      %900 = vmatpush1.bf16.msra.mxu0 0
      %901 = vmatprep.subr.bf16.mxu0 0
      %902 = vmatpush1.bf16.msra.mxu0 0
      %903 = vmatprep.subr.bf16.mxu0 0
      %904 = vmatpush1.bf16.msra.mxu0 0
      %905 = vmatprep.subr.bf16.mxu0 0
      %906 = vmatpush1.bf16.msra.mxu0 0
      %907 = vmatprep.subr.bf16.mxu0 0
      %908 = vmatpush1.bf16.msra.mxu0 0
      %909 = vmatprep.subr.bf16.mxu0 0
      %910 = vmatpush1.bf16.msra.mxu0 0
      %911 = vmatprep.subr.bf16.mxu0 0
      %912 = vmatpush1.bf16.msra.mxu0 0
      %913 = vmatprep.subr.bf16.mxu0 0
      %914 = vmatpush1.bf16.msra.mxu0 0
      %915 = vmatprep.subr.bf16.mxu0 0
      %916 = vmatpush1.bf16.msra.mxu0 0
      %917 = vmatprep.mubr.bf16.mxu0 0
      %918 = vmatmul.mubr.bf16.gmra.mrb[0].mxu0 %v880
      %v919 = vpop.f32.mrb[0].mxu0
      %v920 = vadd.f32 0.0, %v919
      %v921 = vpop.f32.mrb[0].mxu0
      %v922 = vpop.f32.mrb[0].mxu0
      %v923 = vpop.f32.mrb[0].mxu0
      %924 = vdwg.mxu0
      %925 = vrot.lane.b32.xlu0 %v591, 104
      %v926 = vpop.permute.xlu0 %925
      %927 = vrot.lane.b32.xlu0 %v592, 72
      %v928 = vpop.permute.xlu0 %927
      %v930 = vsel %vm596, %v926, 0
      %v933 = vsel %vm596, %v928, 0
      %935 = vmatprep.subr.bf16.mxu0 0
      %936 = vmatpush1.bf16.xpose.msra.mxu0 %v933
      %937 = vmatprep.subr.bf16.mxu0 0
      %938 = vmatpush1.bf16.xpose.msra.mxu0 0
      %939 = vmatprep.subr.bf16.mxu0 0
      %940 = vmatpush1.bf16.xpose.msra.mxu0 0
      %941 = vmatprep.subr.bf16.mxu0 0
      %942 = vmatpush1.bf16.xpose.msra.mxu0 0
      %943 = vmatprep.subr.bf16.mxu0 0
      %944 = vmatpush1.bf16.xpose.msra.mxu0 0
      %945 = vmatprep.subr.bf16.mxu0 0
      %946 = vmatpush1.bf16.xpose.msra.mxu0 0
      %947 = vmatprep.subr.bf16.mxu0 0
      %948 = vmatpush1.bf16.xpose.msra.mxu0 0
      %949 = vmatprep.subr.bf16.mxu0 0
      %950 = vmatpush1.bf16.xpose.msra.mxu0 0
      %951 = vmatprep.subr.bf16.mxu0 0
      %952 = vmatpush1.bf16.xpose.msra.mxu0 0
      %953 = vmatprep.subr.bf16.mxu0 0
      %954 = vmatpush1.bf16.xpose.msra.mxu0 0
      %955 = vmatprep.subr.bf16.mxu0 0
      %956 = vmatpush1.bf16.xpose.msra.mxu0 0
      %957 = vmatprep.subr.bf16.mxu0 0
      %958 = vmatpush1.bf16.xpose.msra.mxu0 0
      %959 = vmatprep.subr.bf16.mxu0 0
      %960 = vmatpush1.bf16.xpose.msra.mxu0 0
      %961 = vmatprep.subr.bf16.mxu0 0
      %962 = vmatpush1.bf16.xpose.msra.mxu0 0
      %963 = vmatprep.subr.bf16.mxu0 0
      %964 = vmatpush1.bf16.xpose.msra.mxu0 0
      %965 = vmatprep.subr.bf16.mxu0 0
      %966 = vmatpush1.bf16.xpose.msra.mxu0 0
      %967 = vmatprep.mubr.bf16.mxu0 0
      %968 = vmatmul.mubr.bf16.gmra.mrb[0].mxu0 %v930
      %v969 = vpop.f32.mrb[0].mxu0
      %v970 = vadd.f32 0.0, %v969
      %v971 = vpop.f32.mrb[0].mxu0
      %v972 = vpop.f32.mrb[0].mxu0
      %v973 = vpop.f32.mrb[0].mxu0
      %974 = vdwg.mxu0
      %v975 = vsel %vm596, %v970, -inf
      %976 = vmax.xlane.f32.xlu0 %v975
      %v977 = vpop.xlane.xlu0 %976
      %v978 = vsub.f32 %v970, %v977
      %v979 = vmul.f32 %v978, 1.442695
      %v980 = vpow.pop %v979
      %v981 = vsel %vm596, %v980, 0.0
      %982 = vadd.xlane.f32.xlu0 %v981
      %v983 = vpop.xlane.xlu0 %982
      %v984 = vrcp.pop %v983
      %v985 = vmul.f32 %v980, %v984
      %v986 = vpack.c.bf16 %v985, %v985
      %987 = vrot.lane.b32.xlu0 %v592, 40
      %v988 = vpop.permute.xlu0 %987
      %v990 = vsel %vm596, %v986, 0
      %v993 = vsel %vm660, %v988, 0
      %995 = vmatprep.subr.bf16.mxu0 0
      %996 = vmatpush1.bf16.msra.mxu0 %v993
      %997 = vmatprep.subr.bf16.mxu0 0
      %998 = vmatpush1.bf16.msra.mxu0 0
      %999 = vmatprep.subr.bf16.mxu0 0
      %1000 = vmatpush1.bf16.msra.mxu0 0
      %1001 = vmatprep.subr.bf16.mxu0 0
      %1002 = vmatpush1.bf16.msra.mxu0 0
      %1003 = vmatprep.subr.bf16.mxu0 0
      %1004 = vmatpush1.bf16.msra.mxu0 0
      %1005 = vmatprep.subr.bf16.mxu0 0
      %1006 = vmatpush1.bf16.msra.mxu0 0
      %1007 = vmatprep.subr.bf16.mxu0 0
      %1008 = vmatpush1.bf16.msra.mxu0 0
      %1009 = vmatprep.subr.bf16.mxu0 0
      %1010 = vmatpush1.bf16.msra.mxu0 0
      %1011 = vmatprep.subr.bf16.mxu0 0
      %1012 = vmatpush1.bf16.msra.mxu0 0
      %1013 = vmatprep.subr.bf16.mxu0 0
      %1014 = vmatpush1.bf16.msra.mxu0 0
      %1015 = vmatprep.subr.bf16.mxu0 0
      %1016 = vmatpush1.bf16.msra.mxu0 0
      %1017 = vmatprep.subr.bf16.mxu0 0
      %1018 = vmatpush1.bf16.msra.mxu0 0
      %1019 = vmatprep.subr.bf16.mxu0 0
      %1020 = vmatpush1.bf16.msra.mxu0 0
      %1021 = vmatprep.subr.bf16.mxu0 0
      %1022 = vmatpush1.bf16.msra.mxu0 0
      %1023 = vmatprep.subr.bf16.mxu0 0
      %1024 = vmatpush1.bf16.msra.mxu0 0
      %1025 = vmatprep.subr.bf16.mxu0 0
      %1026 = vmatpush1.bf16.msra.mxu0 0
      %1027 = vmatprep.mubr.bf16.mxu0 0
      %1028 = vmatmul.mubr.bf16.gmra.mrb[0].mxu0 %v990
      %v1029 = vpop.f32.mrb[0].mxu0
      %v1030 = vadd.f32 0.0, %v1029
      %v1031 = vpop.f32.mrb[0].mxu0
      %v1032 = vpop.f32.mrb[0].mxu0
      %v1033 = vpop.f32.mrb[0].mxu0
      %1034 = vdwg.mxu0
      %1036 = vrot.lane.b32.xlu0 %v810, 8
      %v1037 = vpop.permute.xlu0 %1036
      %1040 = vrot.lane.b32.xlu0 %v920, 16
      %v1041 = vpop.permute.xlu0 %1040
      %1044 = vrot.lane.b32.xlu0 %v1030, 24
      %v1045 = vpop.permute.xlu0 %1044
      %v1047 = vsel %vm596, %v699, %v1037
      %vm1048 = vcmask 130048
      %v1049 = vsel %vm1048, %v1047, %v1041
      %vm1050 = vcmask 195584
      %v1051 = vsel %vm1050, %v1049, %v1045
      %v1052 = vld [vmem:[%s5] sm:$0xf]
      %v1053 = vld [vmem:[%s5 + $0x4] sm:$0xf]
      %v1054 = vld [vmem:[%s5 + $0x8] sm:$0xf]
      %v1055 = vld [vmem:[%s5 + $0xc] sm:$0xf]
      %v1056 = vpack.c.bf16 %v1051, %v1051
      %v1061 = vunpack.c.l.b16 %v1052
      %v1062 = vunpack.c.l.b16 %v1053
      %v1063 = vunpack.c.l.b16 %v1054
      %v1064 = vunpack.c.l.b16 %v1055
      %v1065 = vpack.c.b16 %v1062, %v1061
      %v1066 = vpack.c.b16 %v1064, %v1063
      %v1070 = vsel %vm494, %v1056, 0
      %1072 = vmatprep.subr.bf16.mxu0 0
      %1073 = vmatpush1.bf16.msra.mxu0 %v1065
      %1074 = vmatprep.subr.bf16.mxu0 0
      %1075 = vmatpush1.bf16.msra.mxu0 %v1066
      %1076 = vmatprep.subr.bf16.mxu0 0
      %1077 = vmatpush1.bf16.msra.mxu0 0
      %1078 = vmatprep.subr.bf16.mxu0 0
      %1079 = vmatpush1.bf16.msra.mxu0 0
      %1080 = vmatprep.subr.bf16.mxu0 0
      %1081 = vmatpush1.bf16.msra.mxu0 0
      %1082 = vmatprep.subr.bf16.mxu0 0
      %1083 = vmatpush1.bf16.msra.mxu0 0
      %1084 = vmatprep.subr.bf16.mxu0 0
      %1085 = vmatpush1.bf16.msra.mxu0 0
      %1086 = vmatprep.subr.bf16.mxu0 0
      %1087 = vmatpush1.bf16.msra.mxu0 0
      %1088 = vmatprep.subr.bf16.mxu0 0
      %1089 = vmatpush1.bf16.msra.mxu0 0
      %1090 = vmatprep.subr.bf16.mxu0 0
      %1091 = vmatpush1.bf16.msra.mxu0 0
      %1092 = vmatprep.subr.bf16.mxu0 0
      %1093 = vmatpush1.bf16.msra.mxu0 0
      %1094 = vmatprep.subr.bf16.mxu0 0
      %1095 = vmatpush1.bf16.msra.mxu0 0
      %1096 = vmatprep.subr.bf16.mxu0 0
      %1097 = vmatpush1.bf16.msra.mxu0 0
      %1098 = vmatprep.subr.bf16.mxu0 0
      %1099 = vmatpush1.bf16.msra.mxu0 0
      %1100 = vmatprep.subr.bf16.mxu0 0
      %1101 = vmatpush1.bf16.msra.mxu0 0
      %1102 = vmatprep.subr.bf16.mxu0 0
      %1103 = vmatpush1.bf16.msra.mxu0 0
      %1104 = vmatprep.mubr.bf16.mxu0 0
      %1105 = vmatmul.mubr.bf16.gmra.mrb[0].mxu0 %v1070
      %v1106 = vpop.f32.mrb[0].mxu0
      %v1107 = vadd.f32 0.0, %v1106
      %v1108 = vpop.f32.mrb[0].mxu0
      %v1109 = vpop.f32.mrb[0].mxu0
      %v1110 = vpop.f32.mrb[0].mxu0
      %1111 = vdwg.mxu0
      %v1112 = vadd.f32 %v491, %v1107
      %v1113 = vld [vmem:[%s6] sm:$0x1]
      %v1115 = vlaneseq
      %v1116 = vshrl.u32 %v1115, 7
      %v1117 = vsub.s32 0, %v1116
      %v1118 = vrot.slane %v1113, %v1117
      %v1120 = vadd.f32 %v1112, %v1118
      %v1121 = vld [vmem:[%s7] sm:$0x1]
      %v1122 = vld [vmem:[%s8] sm:$0x1]
      %v1123 = vsel %vm494, %v1120, 0.0
      %1124 = vadd.xlane.f32.xlu0 %v1123
      %v1125 = vpop.xlane.xlu0 %1124
      %v1126 = vmul.f32 %v1125, %v498
      %v1127 = vsub.f32 %v1120, %v1126
      %v1128 = vmul.f32 %v1127, %v1127
      %v1129 = vsel %vm494, %v1128, 0.0
      %1130 = vadd.xlane.f32.xlu0 %v1129
      %v1131 = vpop.xlane.xlu0 %1130
      %v1132 = vmul.f32 %v1131, %v498
      %v1133 = vadd.f32 %v1132, 1e-05
      %v1134 = vrsqrt.pop %v1133
      %v1135 = vmul.f32 %v1127, %v1134
      %v1137 = vlaneseq
      %v1138 = vshrl.u32 %v1137, 7
      %v1139 = vsub.s32 0, %v1138
      %v1140 = vrot.slane %v1121, %v1139
      %v1142 = vmul.f32 %v1135, %v1140
      %v1144 = vlaneseq
      %v1145 = vshrl.u32 %v1144, 7
      %v1146 = vsub.s32 0, %v1145
      %v1147 = vrot.slane %v1122, %v1146
      %v1149 = vadd.f32 %v1142, %v1147
      %v1150 = vld [vmem:[%s9] sm:$0xf]
      %v1151 = vld [vmem:[%s9 + $0x4] sm:$0xf]
      %v1152 = vld [vmem:[%s9 + $0x8] sm:$0xf]
      %v1153 = vld [vmem:[%s9 + $0xc] sm:$0xf]
      %v1154 = vpack.c.bf16 %v1149, %v1149
      %v1155 = vld [vmem:[%s10] sm:$0x1]
      %v1157 = vlaneseq
      %v1158 = vshrl.u32 %v1157, 7
      %v1159 = vsub.s32 0, %v1158
      %v1160 = vrot.slane %v1155, %v1159
      %v1166 = vunpack.c.l.b16 %v1150
      %v1167 = vunpack.c.l.b16 %v1151
      %v1168 = vunpack.c.l.b16 %v1152
      %v1169 = vunpack.c.l.b16 %v1153
      %v1170 = vpack.c.b16 %v1167, %v1166
      %v1171 = vpack.c.b16 %v1169, %v1168
      %v1175 = vsel %vm494, %v1154, 0
      %1177 = vmatprep.subr.bf16.mxu0 0
      %1178 = vmatpush1.bf16.msra.mxu0 %v1170
      %1179 = vmatprep.subr.bf16.mxu0 0
      %1180 = vmatpush1.bf16.msra.mxu0 %v1171
      %1181 = vmatprep.subr.bf16.mxu0 0
      %1182 = vmatpush1.bf16.msra.mxu0 0
      %1183 = vmatprep.subr.bf16.mxu0 0
      %1184 = vmatpush1.bf16.msra.mxu0 0
      %1185 = vmatprep.subr.bf16.mxu0 0
      %1186 = vmatpush1.bf16.msra.mxu0 0
      %1187 = vmatprep.subr.bf16.mxu0 0
      %1188 = vmatpush1.bf16.msra.mxu0 0
      %1189 = vmatprep.subr.bf16.mxu0 0
      %1190 = vmatpush1.bf16.msra.mxu0 0
      %1191 = vmatprep.subr.bf16.mxu0 0
      %1192 = vmatpush1.bf16.msra.mxu0 0
      %1193 = vmatprep.subr.bf16.mxu0 0
      %1194 = vmatpush1.bf16.msra.mxu0 0
      %1195 = vmatprep.subr.bf16.mxu0 0
      %1196 = vmatpush1.bf16.msra.mxu0 0
      %1197 = vmatprep.subr.bf16.mxu0 0
      %1198 = vmatpush1.bf16.msra.mxu0 0
      %1199 = vmatprep.subr.bf16.mxu0 0
      %1200 = vmatpush1.bf16.msra.mxu0 0
      %1201 = vmatprep.subr.bf16.mxu0 0
      %1202 = vmatpush1.bf16.msra.mxu0 0
      %1203 = vmatprep.subr.bf16.mxu0 0
      %1204 = vmatpush1.bf16.msra.mxu0 0
      %1205 = vmatprep.subr.bf16.mxu0 0
      %1206 = vmatpush1.bf16.msra.mxu0 0
      %1207 = vmatprep.subr.bf16.mxu0 0
      %1208 = vmatpush1.bf16.msra.mxu0 0
      %1209 = vmatprep.mubr.bf16.mxu0 0
      %1210 = vmatmul.mubr.bf16.gmra.mrb[0].mxu0 %v1175
      %v1211 = vpop.f32.mrb[0].mxu0
      %v1212 = vadd.f32 %v1160, %v1211
      %v1213 = vpop.f32.mrb[0].mxu0
      %v1214 = vpop.f32.mrb[0].mxu0
      %v1215 = vpop.f32.mrb[0].mxu0
      %1216 = vdwg.mxu0
      %v1217 = vmax.f32 %v1212, 0.0
      %v1218 = vld [vmem:[%s11] sm:$0xf]
      %v1219 = vld [vmem:[%s11 + $0x4] sm:$0xf]
      %v1220 = vld [vmem:[%s11 + $0x8] sm:$0xf]
      %v1221 = vld [vmem:[%s11 + $0xc] sm:$0xf]
      %v1222 = vld [vmem:[%s11 + $0x10] sm:$0xf]
      %v1223 = vld [vmem:[%s11 + $0x14] sm:$0xf]
      %v1224 = vld [vmem:[%s11 + $0x18] sm:$0xf]
      %v1225 = vld [vmem:[%s11 + $0x1c] sm:$0xf]
      %v1226 = vpack.c.bf16 %v1217, %v1217
      %v1235 = vunpack.c.l.b16 %v1218
      %v1236 = vunpack.c.l.b16 %v1219
      %v1237 = vunpack.c.l.b16 %v1220
      %v1238 = vunpack.c.l.b16 %v1221
      %v1239 = vunpack.c.l.b16 %v1222
      %v1240 = vunpack.c.l.b16 %v1223
      %v1241 = vunpack.c.l.b16 %v1224
      %v1242 = vunpack.c.l.b16 %v1225
      %v1243 = vpack.c.b16 %v1236, %v1235
      %v1244 = vpack.c.b16 %v1238, %v1237
      %v1245 = vpack.c.b16 %v1240, %v1239
      %v1246 = vpack.c.b16 %v1242, %v1241
      %vm1251 = vcmask 523264
      %v1253 = vsel %vm1251, %v1226, 0
      %1255 = vmatprep.subr.bf16.mxu0 0
      %1256 = vmatpush1.bf16.msra.mxu0 %v1243
      %1257 = vmatprep.subr.bf16.mxu0 0
      %1258 = vmatpush1.bf16.msra.mxu0 %v1244
      %1259 = vmatprep.subr.bf16.mxu0 0
      %1260 = vmatpush1.bf16.msra.mxu0 %v1245
      %1261 = vmatprep.subr.bf16.mxu0 0
      %1262 = vmatpush1.bf16.msra.mxu0 %v1246
      %1263 = vmatprep.subr.bf16.mxu0 0
      %1264 = vmatpush1.bf16.msra.mxu0 0
      %1265 = vmatprep.subr.bf16.mxu0 0
      %1266 = vmatpush1.bf16.msra.mxu0 0
      %1267 = vmatprep.subr.bf16.mxu0 0
      %1268 = vmatpush1.bf16.msra.mxu0 0
      %1269 = vmatprep.subr.bf16.mxu0 0
      %1270 = vmatpush1.bf16.msra.mxu0 0
      %1271 = vmatprep.subr.bf16.mxu0 0
      %1272 = vmatpush1.bf16.msra.mxu0 0
      %1273 = vmatprep.subr.bf16.mxu0 0
      %1274 = vmatpush1.bf16.msra.mxu0 0
      %1275 = vmatprep.subr.bf16.mxu0 0
      %1276 = vmatpush1.bf16.msra.mxu0 0
      %1277 = vmatprep.subr.bf16.mxu0 0
      %1278 = vmatpush1.bf16.msra.mxu0 0
      %1279 = vmatprep.subr.bf16.mxu0 0
      %1280 = vmatpush1.bf16.msra.mxu0 0
      %1281 = vmatprep.subr.bf16.mxu0 0
      %1282 = vmatpush1.bf16.msra.mxu0 0
      %1283 = vmatprep.subr.bf16.mxu0 0
      %1284 = vmatpush1.bf16.msra.mxu0 0
      %1285 = vmatprep.subr.bf16.mxu0 0
      %1286 = vmatpush1.bf16.msra.mxu0 0
      %1287 = vmatprep.mubr.bf16.mxu0 0
      %1288 = vmatmul.mubr.bf16.gmra.mrb[0].mxu0 %v1253
      %v1289 = vpop.f32.mrb[0].mxu0
      %v1290 = vadd.f32 0.0, %v1289
      %v1291 = vpop.f32.mrb[0].mxu0
      %v1292 = vpop.f32.mrb[0].mxu0
      %v1293 = vpop.f32.mrb[0].mxu0
      %1294 = vdwg.mxu0
      %v1295 = vadd.f32 %v1120, %v1290
      %v1296 = vld [vmem:[%s12] sm:$0x1]
      %v1298 = vlaneseq
      %v1299 = vshrl.u32 %v1298, 7
      %v1300 = vsub.s32 0, %v1299
      %v1301 = vrot.slane %v1296, %v1300
      %v1303 = vadd.f32 %v1295, %v1301
      %v1304 = vld [vmem:[%s13] sm:$0x1]
      %v1305 = vld [vmem:[%s14] sm:$0x1]
      %v1306 = vsel %vm494, %v1303, 0.0
      %1307 = vadd.xlane.f32.xlu0 %v1306
      %v1308 = vpop.xlane.xlu0 %1307
      %v1309 = vmul.f32 %v1308, %v498
      %v1310 = vsub.f32 %v1303, %v1309
      %v1311 = vmul.f32 %v1310, %v1310
      %v1312 = vsel %vm494, %v1311, 0.0
      %1313 = vadd.xlane.f32.xlu0 %v1312
      %v1314 = vpop.xlane.xlu0 %1313
      %v1315 = vmul.f32 %v1314, %v498
      %v1316 = vadd.f32 %v1315, 1e-05
      %v1317 = vrsqrt.pop %v1316
      %v1318 = vmul.f32 %v1310, %v1317
      %v1320 = vlaneseq
      %v1321 = vshrl.u32 %v1320, 7
      %v1322 = vsub.s32 0, %v1321
      %v1323 = vrot.slane %v1304, %v1322
      %v1325 = vmul.f32 %v1318, %v1323
      %v1327 = vlaneseq
      %v1328 = vshrl.u32 %v1327, 7
      %v1329 = vsub.s32 0, %v1328
      %v1330 = vrot.slane %v1305, %v1329
      %v1332 = vadd.f32 %v1325, %v1330
      %1333 = vst.msk [vmem:[%s489] sm:$0xff] %vm494, %v1332
      %p1334 = scmp.lt.s32.totalorder %s26, 1
      %s1335 = scalar_select %p1334, %s26, 1
      %s1336 = smul.addr %s1335, 8
      %s1337 = scalar_lea.vmem %s15, %s1336
      // Predicated region
      $region81: #{transformer_forward.5} parent=79 // pred_check
        %p1338 = pneg %p364
      $region82: #{transformer_forward.5} parent=79 // pred_check_branch
        %1340 = sbr.rel (%p1338) target = $region84
      $region83: #{transformer_forward.5} parent=79 // pred_region
        _
      $region84: #{transformer_forward.5} parent=79 // pred_fallthru
        _
    $region80: #{transformer_forward.5} parent=5 // pred_fallthru
      _
    %p1341 = scmp.le.s32.totalorder 2, %s21
    // Predicated region
    $region85: #{transformer_forward.5} parent=5 // pred_check
      %p1342 = pneg %p1341
    $region86: #{transformer_forward.5} parent=5 // pred_check_branch
      %1344 = sbr.rel (%p1342) target = $region88
    $region87: #{transformer_forward.5} parent=5 // pred_region
      %s1345 = ssub.s32 %s21, 2
      // Predicated region
      $region89: #{transformer_forward.5} parent=87 // pred_check
        %p1346 = pneg %p370
      $region90: #{transformer_forward.5} parent=87 // pred_check_branch
        %1348 = sbr.rel (%p1346) target = $region92
      $region91: #{transformer_forward.5} parent=87 // pred_region
        %p1349 = scmp.lt.s32.totalorder %s27, 1
        %s1350 = scalar_select %p1349, %s27, 1
        %s1351 = smul.addr %s1350, 8
        %s1352 = scalar_lea.vmem %s15, %s1351
      $region92: #{transformer_forward.5} parent=87 // pred_fallthru
        _
    $region88: #{transformer_forward.5} parent=5 // pred_fallthru
      _
  $region6: #{transformer_forward.5} parent=0 // loop_footer
    %s25 = sadd.s32 1, %s21
  $region7: #{transformer_forward.5} parent=0 // loop_footer_branch
    %20 = sbr.rel target = $region3
  $region8: #{transformer_forward.5} parent=0 // loop_exit
    _

// kernel: transformer_forward.4
$region0: #{transformer_forward.4}
  #allocation0 [shape = 'u32[]', space=smem, size = 0x4, offset = 0x4, fixed_abs, tag = 'smem constant byte address 0x4 - core index']
  #allocation1 [shape = 'u32[144,128]{1,0:T(1,128)}', space=vmem, size = 0x12000, scoped, tag = 'internal scratch']
  %s0 = inlined_call_operand.vmem [shape: f32[2,8,32], index: 0, kind: input, shape index: {}]
  %s1 = inlined_call_operand.vmem [shape: f32[1,32], index: 1, kind: input, shape index: {}]
  %s2 = inlined_call_operand.vmem [shape: f32[1,32], index: 2, kind: input, shape index: {}]
  %s3 = inlined_call_operand.vmem [shape: bf16[32,96], index: 3, kind: input, shape index: {}]
  %s4 = inlined_call_operand.vmem [shape: f32[1,96], index: 4, kind: input, shape index: {}]
  %s5 = inlined_call_operand.vmem [shape: bf16[32,32], index: 5, kind: input, shape index: {}]
  %s6 = inlined_call_operand.vmem [shape: f32[1,32], index: 6, kind: input, shape index: {}]
  %s7 = inlined_call_operand.vmem [shape: f32[1,32], index: 7, kind: input, shape index: {}]
  %s8 = inlined_call_operand.vmem [shape: f32[1,32], index: 8, kind: input, shape index: {}]
  %s9 = inlined_call_operand.vmem [shape: bf16[32,64], index: 9, kind: input, shape index: {}]
  %s10 = inlined_call_operand.vmem [shape: f32[1,64], index: 10, kind: input, shape index: {}]
  %s11 = inlined_call_operand.vmem [shape: bf16[64,32], index: 11, kind: input, shape index: {}]
  %s12 = inlined_call_operand.vmem [shape: f32[1,32], index: 12, kind: input, shape index: {}]
  %s13 = inlined_call_operand.vmem [shape: f32[1,32], index: 13, kind: input, shape index: {}]
  %s14 = inlined_call_operand.vmem [shape: f32[1,32], index: 14, kind: input, shape index: {}]
  %s15 = inlined_call_operand.vmem [shape: f32[2,8,32], index: 15, kind: output, shape index: {}]
  %s16 = sld [smem:[#allocation0]]
  $region93: #{transformer_forward.4} parent=0
    _
  %s18 = ssub.s32 1, %s16
  %s19 = scalar_select 0, %s18, %s16
  loop: start=0, step=1, limit=4
  $region2: #{transformer_forward.4} parent=0 // loop_pre_header
    _
  $region3: #{transformer_forward.4} parent=0 // loop_header
    %s21 = sphi 0, %s25
    %p22 = scmp.ge.s32.totalorder %s21, 4
    %s31 = sphi 0, %s33
    %s34 = sphi 0, %s31
    %s35 = sphi 0, %s34
    %s51 = sphi 0, %s35
    %s55 = sphi 0, %s55
    %s57 = sphi 0, %s55
    %s58 = sphi 0, %s57
    %s72 = sphi 0, %s58
    %s76 = sphi 0, %s76
    %s78 = sphi 0, %s76
    %s79 = sphi 0, %s78
    %s93 = sphi 0, %s79
    %s97 = sphi 0, %s97
    %s99 = sphi 0, %s97
    %s100 = sphi 0, %s99
    %s114 = sphi 0, %s100
    %s118 = sphi 0, %s118
    %s120 = sphi 0, %s118
    %s121 = sphi 0, %s120
    %s135 = sphi 0, %s121
    %s139 = sphi 0, %s139
    %s141 = sphi 0, %s139
    %s142 = sphi 0, %s141
    %s156 = sphi 0, %s142
    %s160 = sphi 0, %s160
    %s162 = sphi 0, %s160
    %s163 = sphi 0, %s162
    %s177 = sphi 0, %s163
    %s181 = sphi 0, %s181
    %s183 = sphi 0, %s181
    %s184 = sphi 0, %s183
    %s198 = sphi 0, %s184
    %s202 = sphi 0, %s202
    %s204 = sphi 0, %s202
    %s205 = sphi 0, %s204
    %s219 = sphi 0, %s205
    %s223 = sphi 0, %s223
    %s225 = sphi 0, %s223
    %s226 = sphi 0, %s225
    %s240 = sphi 0, %s226
    %s244 = sphi 0, %s244
    %s246 = sphi 0, %s244
    %s247 = sphi 0, %s246
    %s261 = sphi 0, %s247
    %s265 = sphi 0, %s265
    %s267 = sphi 0, %s265
    %s268 = sphi 0, %s267
    %s282 = sphi 0, %s268
    %s286 = sphi 0, %s286
    %s288 = sphi 0, %s286
    %s289 = sphi 0, %s288
    %s303 = sphi 0, %s289
    %s307 = sphi 0, %s307
    %s309 = sphi 0, %s307
    %s310 = sphi 0, %s309
    %s324 = sphi 0, %s310
    %s328 = sphi 0, %s328
    %s330 = sphi 0, %s328
    %s331 = sphi 0, %s330
    %s345 = sphi 0, %s331
    %s351 = sphi 0, %s353
    %s354 = sphi 0, %s351
    %s355 = sphi 0, %s354
    %s371 = sphi 0, %s355
  $region4: #{transformer_forward.4} parent=0 // loop_header_branch
    %24 = sbr.rel (%p22) target = $region8
  $region5: #{transformer_forward.4} parent=0 // loop_body
    %s26 = ssub.s32 %s21, 1
    %s27 = ssub.s32 %s21, 2
    %s28 = sadd.s32 %s21, 1
    %s29 = ssub.s32 %s21, %s28
    %p30 = scmp.eq.s32.totalorder %s29, 0
    %s32 = sadd.s32 %s31, 1
    %s33 = scalar_select %p30, %s31, %s32
    %p36 = pneg %p30
    %p37 = scmp.eq.s32.totalorder %s21, 1
    %p38 = por %p36, %p37
    %p39 = scmp.ne.s32.totalorder %s31, %s34
    %p40 = scmp.eq.s32.totalorder %s21, 0
    %p41 = por %p39, %p40
    %p42 = scmp.ne.s32.totalorder %s31, %s34
    %p43 = scmp.eq.s32.totalorder %s26, 1
    %p44 = por %p42, %p43
    %p45 = scmp.ne.s32.totalorder %s34, %s35
    %p46 = scmp.eq.s32.totalorder %s26, 0
    %p47 = por %p45, %p46
    %p48 = scmp.ne.s32.totalorder %s34, %s35
    %p49 = scmp.eq.s32.totalorder %s27, 1
    %p50 = por %p48, %p49
    %p52 = scmp.ne.s32.totalorder %s35, %s51
    %p53 = scmp.eq.s32.totalorder %s27, 0
    %p54 = por %p52, %p53
    %s56 = sadd.s32 %s55, 1
    %p59 = scmp.eq.s32.totalorder %s21, 1
    %p60 = scmp.ne.s32.totalorder %s55, %s57
    %p61 = scmp.eq.s32.totalorder %s21, 0
    %p62 = por %p60, %p61
    %p63 = scmp.ne.s32.totalorder %s55, %s57
    %p64 = scmp.eq.s32.totalorder %s26, 1
    %p65 = por %p63, %p64
    %p66 = scmp.ne.s32.totalorder %s57, %s58
    %p67 = scmp.eq.s32.totalorder %s26, 0
    %p68 = por %p66, %p67
    %p69 = scmp.ne.s32.totalorder %s57, %s58
    %p70 = scmp.eq.s32.totalorder %s27, 1
    %p71 = por %p69, %p70
    %p73 = scmp.ne.s32.totalorder %s58, %s72
    %p74 = scmp.eq.s32.totalorder %s27, 0
    %p75 = por %p73, %p74
    %s77 = sadd.s32 %s76, 1
    %p80 = scmp.eq.s32.totalorder %s21, 1
    %p81 = scmp.ne.s32.totalorder %s76, %s78
    %p82 = scmp.eq.s32.totalorder %s21, 0
    %p83 = por %p81, %p82
    %p84 = scmp.ne.s32.totalorder %s76, %s78
    %p85 = scmp.eq.s32.totalorder %s26, 1
    %p86 = por %p84, %p85
    %p87 = scmp.ne.s32.totalorder %s78, %s79
    %p88 = scmp.eq.s32.totalorder %s26, 0
    %p89 = por %p87, %p88
    %p90 = scmp.ne.s32.totalorder %s78, %s79
    %p91 = scmp.eq.s32.totalorder %s27, 1
    %p92 = por %p90, %p91
    %p94 = scmp.ne.s32.totalorder %s79, %s93
    %p95 = scmp.eq.s32.totalorder %s27, 0
    %p96 = por %p94, %p95
    %s98 = sadd.s32 %s97, 1
    %p101 = scmp.eq.s32.totalorder %s21, 1
    %p102 = scmp.ne.s32.totalorder %s97, %s99
    %p103 = scmp.eq.s32.totalorder %s21, 0
    %p104 = por %p102, %p103
    %p105 = scmp.ne.s32.totalorder %s97, %s99
    %p106 = scmp.eq.s32.totalorder %s26, 1
    %p107 = por %p105, %p106
    %p108 = scmp.ne.s32.totalorder %s99, %s100
    %p109 = scmp.eq.s32.totalorder %s26, 0
    %p110 = por %p108, %p109
    %p111 = scmp.ne.s32.totalorder %s99, %s100
    %p112 = scmp.eq.s32.totalorder %s27, 1
    %p113 = por %p111, %p112
    %p115 = scmp.ne.s32.totalorder %s100, %s114
    %p116 = scmp.eq.s32.totalorder %s27, 0
    %p117 = por %p115, %p116
    %s119 = sadd.s32 %s118, 1
    %p122 = scmp.eq.s32.totalorder %s21, 1
    %p123 = scmp.ne.s32.totalorder %s118, %s120
    %p124 = scmp.eq.s32.totalorder %s21, 0
    %p125 = por %p123, %p124
    %p126 = scmp.ne.s32.totalorder %s118, %s120
    %p127 = scmp.eq.s32.totalorder %s26, 1
    %p128 = por %p126, %p127
    %p129 = scmp.ne.s32.totalorder %s120, %s121
    %p130 = scmp.eq.s32.totalorder %s26, 0
    %p131 = por %p129, %p130
    %p132 = scmp.ne.s32.totalorder %s120, %s121
    %p133 = scmp.eq.s32.totalorder %s27, 1
    %p134 = por %p132, %p133
    %p136 = scmp.ne.s32.totalorder %s121, %s135
    %p137 = scmp.eq.s32.totalorder %s27, 0
    %p138 = por %p136, %p137
    %s140 = sadd.s32 %s139, 1
    %p143 = scmp.eq.s32.totalorder %s21, 1
    %p144 = scmp.ne.s32.totalorder %s139, %s141
    %p145 = scmp.eq.s32.totalorder %s21, 0
    %p146 = por %p144, %p145
    %p147 = scmp.ne.s32.totalorder %s139, %s141
    %p148 = scmp.eq.s32.totalorder %s26, 1
    %p149 = por %p147, %p148
    %p150 = scmp.ne.s32.totalorder %s141, %s142
    %p151 = scmp.eq.s32.totalorder %s26, 0
    %p152 = por %p150, %p151
    %p153 = scmp.ne.s32.totalorder %s141, %s142
    %p154 = scmp.eq.s32.totalorder %s27, 1
    %p155 = por %p153, %p154
    %p157 = scmp.ne.s32.totalorder %s142, %s156
    %p158 = scmp.eq.s32.totalorder %s27, 0
    %p159 = por %p157, %p158
    %s161 = sadd.s32 %s160, 1
    %p164 = scmp.eq.s32.totalorder %s21, 1
    %p165 = scmp.ne.s32.totalorder %s160, %s162
    %p166 = scmp.eq.s32.totalorder %s21, 0
    %p167 = por %p165, %p166
    %p168 = scmp.ne.s32.totalorder %s160, %s162
    %p169 = scmp.eq.s32.totalorder %s26, 1
    %p170 = por %p168, %p169
    %p171 = scmp.ne.s32.totalorder %s162, %s163
    %p172 = scmp.eq.s32.totalorder %s26, 0
    %p173 = por %p171, %p172
    %p174 = scmp.ne.s32.totalorder %s162, %s163
    %p175 = scmp.eq.s32.totalorder %s27, 1
    %p176 = por %p174, %p175
    %p178 = scmp.ne.s32.totalorder %s163, %s177
    %p179 = scmp.eq.s32.totalorder %s27, 0
    %p180 = por %p178, %p179
    %s182 = sadd.s32 %s181, 1
    %p185 = scmp.eq.s32.totalorder %s21, 1
    %p186 = scmp.ne.s32.totalorder %s181, %s183
    %p187 = scmp.eq.s32.totalorder %s21, 0
    %p188 = por %p186, %p187
    %p189 = scmp.ne.s32.totalorder %s181, %s183
    %p190 = scmp.eq.s32.totalorder %s26, 1
    %p191 = por %p189, %p190
    %p192 = scmp.ne.s32.totalorder %s183, %s184
    %p193 = scmp.eq.s32.totalorder %s26, 0
    %p194 = por %p192, %p193
    %p195 = scmp.ne.s32.totalorder %s183, %s184
    %p196 = scmp.eq.s32.totalorder %s27, 1
    %p197 = por %p195, %p196
    %p199 = scmp.ne.s32.totalorder %s184, %s198
    %p200 = scmp.eq.s32.totalorder %s27, 0
    %p201 = por %p199, %p200
    %s203 = sadd.s32 %s202, 1
    %p206 = scmp.eq.s32.totalorder %s21, 1
    %p207 = scmp.ne.s32.totalorder %s202, %s204
    %p208 = scmp.eq.s32.totalorder %s21, 0
    %p209 = por %p207, %p208
    %p210 = scmp.ne.s32.totalorder %s202, %s204
    %p211 = scmp.eq.s32.totalorder %s26, 1
    %p212 = por %p210, %p211
    %p213 = scmp.ne.s32.totalorder %s204, %s205
    %p214 = scmp.eq.s32.totalorder %s26, 0
    %p215 = por %p213, %p214
    %p216 = scmp.ne.s32.totalorder %s204, %s205
    %p217 = scmp.eq.s32.totalorder %s27, 1
    %p218 = por %p216, %p217
    %p220 = scmp.ne.s32.totalorder %s205, %s219
    %p221 = scmp.eq.s32.totalorder %s27, 0
    %p222 = por %p220, %p221
    %s224 = sadd.s32 %s223, 1
    %p227 = scmp.eq.s32.totalorder %s21, 1
    %p228 = scmp.ne.s32.totalorder %s223, %s225
    %p229 = scmp.eq.s32.totalorder %s21, 0
    %p230 = por %p228, %p229
    %p231 = scmp.ne.s32.totalorder %s223, %s225
    %p232 = scmp.eq.s32.totalorder %s26, 1
    %p233 = por %p231, %p232
    %p234 = scmp.ne.s32.totalorder %s225, %s226
    %p235 = scmp.eq.s32.totalorder %s26, 0
    %p236 = por %p234, %p235
    %p237 = scmp.ne.s32.totalorder %s225, %s226
    %p238 = scmp.eq.s32.totalorder %s27, 1
    %p239 = por %p237, %p238
    %p241 = scmp.ne.s32.totalorder %s226, %s240
    %p242 = scmp.eq.s32.totalorder %s27, 0
    %p243 = por %p241, %p242
    %s245 = sadd.s32 %s244, 1
    %p248 = scmp.eq.s32.totalorder %s21, 1
    %p249 = scmp.ne.s32.totalorder %s244, %s246
    %p250 = scmp.eq.s32.totalorder %s21, 0
    %p251 = por %p249, %p250
    %p252 = scmp.ne.s32.totalorder %s244, %s246
    %p253 = scmp.eq.s32.totalorder %s26, 1
    %p254 = por %p252, %p253
    %p255 = scmp.ne.s32.totalorder %s246, %s247
    %p256 = scmp.eq.s32.totalorder %s26, 0
    %p257 = por %p255, %p256
    %p258 = scmp.ne.s32.totalorder %s246, %s247
    %p259 = scmp.eq.s32.totalorder %s27, 1
    %p260 = por %p258, %p259
    %p262 = scmp.ne.s32.totalorder %s247, %s261
    %p263 = scmp.eq.s32.totalorder %s27, 0
    %p264 = por %p262, %p263
    %s266 = sadd.s32 %s265, 1
    %p269 = scmp.eq.s32.totalorder %s21, 1
    %p270 = scmp.ne.s32.totalorder %s265, %s267
    %p271 = scmp.eq.s32.totalorder %s21, 0
    %p272 = por %p270, %p271
    %p273 = scmp.ne.s32.totalorder %s265, %s267
    %p274 = scmp.eq.s32.totalorder %s26, 1
    %p275 = por %p273, %p274
    %p276 = scmp.ne.s32.totalorder %s267, %s268
    %p277 = scmp.eq.s32.totalorder %s26, 0
    %p278 = por %p276, %p277
    %p279 = scmp.ne.s32.totalorder %s267, %s268
    %p280 = scmp.eq.s32.totalorder %s27, 1
    %p281 = por %p279, %p280
    %p283 = scmp.ne.s32.totalorder %s268, %s282
    %p284 = scmp.eq.s32.totalorder %s27, 0
    %p285 = por %p283, %p284
    %s287 = sadd.s32 %s286, 1
    %p290 = scmp.eq.s32.totalorder %s21, 1
    %p291 = scmp.ne.s32.totalorder %s286, %s288
    %p292 = scmp.eq.s32.totalorder %s21, 0
    %p293 = por %p291, %p292
    %p294 = scmp.ne.s32.totalorder %s286, %s288
    %p295 = scmp.eq.s32.totalorder %s26, 1
    %p296 = por %p294, %p295
    %p297 = scmp.ne.s32.totalorder %s288, %s289
    %p298 = scmp.eq.s32.totalorder %s26, 0
    %p299 = por %p297, %p298
    %p300 = scmp.ne.s32.totalorder %s288, %s289
    %p301 = scmp.eq.s32.totalorder %s27, 1
    %p302 = por %p300, %p301
    %p304 = scmp.ne.s32.totalorder %s289, %s303
    %p305 = scmp.eq.s32.totalorder %s27, 0
    %p306 = por %p304, %p305
    %s308 = sadd.s32 %s307, 1
    %p311 = scmp.eq.s32.totalorder %s21, 1
    %p312 = scmp.ne.s32.totalorder %s307, %s309
    %p313 = scmp.eq.s32.totalorder %s21, 0
    %p314 = por %p312, %p313
    %p315 = scmp.ne.s32.totalorder %s307, %s309
    %p316 = scmp.eq.s32.totalorder %s26, 1
    %p317 = por %p315, %p316
    %p318 = scmp.ne.s32.totalorder %s309, %s310
    %p319 = scmp.eq.s32.totalorder %s26, 0
    %p320 = por %p318, %p319
    %p321 = scmp.ne.s32.totalorder %s309, %s310
    %p322 = scmp.eq.s32.totalorder %s27, 1
    %p323 = por %p321, %p322
    %p325 = scmp.ne.s32.totalorder %s310, %s324
    %p326 = scmp.eq.s32.totalorder %s27, 0
    %p327 = por %p325, %p326
    %s329 = sadd.s32 %s328, 1
    %p332 = scmp.eq.s32.totalorder %s21, 1
    %p333 = scmp.ne.s32.totalorder %s328, %s330
    %p334 = scmp.eq.s32.totalorder %s21, 0
    %p335 = por %p333, %p334
    %p336 = scmp.ne.s32.totalorder %s328, %s330
    %p337 = scmp.eq.s32.totalorder %s26, 1
    %p338 = por %p336, %p337
    %p339 = scmp.ne.s32.totalorder %s330, %s331
    %p340 = scmp.eq.s32.totalorder %s26, 0
    %p341 = por %p339, %p340
    %p342 = scmp.ne.s32.totalorder %s330, %s331
    %p343 = scmp.eq.s32.totalorder %s27, 1
    %p344 = por %p342, %p343
    %p346 = scmp.ne.s32.totalorder %s331, %s345
    %p347 = scmp.eq.s32.totalorder %s27, 0
    %p348 = por %p346, %p347
    %s349 = ssub.s32 %s21, %s28
    %p350 = scmp.eq.s32.totalorder %s349, 0
    %s352 = sadd.s32 %s351, 1
    %s353 = scalar_select %p350, %s351, %s352
    %p356 = pneg %p350
    %p357 = scmp.eq.s32.totalorder %s21, 1
    %p358 = por %p356, %p357
    %p359 = scmp.ne.s32.totalorder %s351, %s354
    %p360 = scmp.eq.s32.totalorder %s21, 0
    %p361 = por %p359, %p360
    %p362 = scmp.ne.s32.totalorder %s351, %s354
    %p363 = scmp.eq.s32.totalorder %s26, 1
    %p364 = por %p362, %p363
    %p365 = scmp.ne.s32.totalorder %s354, %s355
    %p366 = scmp.eq.s32.totalorder %s26, 0
    %p367 = por %p365, %p366
    %p368 = scmp.ne.s32.totalorder %s354, %s355
    %p369 = scmp.eq.s32.totalorder %s27, 1
    %p370 = por %p368, %p369
    %p372 = scmp.ne.s32.totalorder %s355, %s371
    %p373 = scmp.eq.s32.totalorder %s27, 0
    %p374 = por %p372, %p373
    %p375 = scmp.le.s32.totalorder 1, %s21
    %p376 = scmp.lt.s32.totalorder %s21, 3
    %p377 = pnand %p375, %p376
    %p378 = pneg %p377
    // Predicated region
    $region9: #{transformer_forward.4} parent=5 // pred_check
      _
    $region10: #{transformer_forward.4} parent=5 // pred_check_branch
      %380 = sbr.rel (%p377) target = $region12
    $region11: #{transformer_forward.4} parent=5 // pred_region
      %s381 = ssub.s32 %s21, 1
      // Predicated region
      $region13: #{transformer_forward.4} parent=11 // pred_check
        %p382 = pneg %p68
      $region14: #{transformer_forward.4} parent=11 // pred_check_branch
        %384 = sbr.rel (%p382) target = $region16
      $region15: #{transformer_forward.4} parent=11 // pred_region
        _
      $region16: #{transformer_forward.4} parent=11 // pred_fallthru
        _
      // Predicated region
      $region17: #{transformer_forward.4} parent=11 // pred_check
        %p385 = pneg %p89
      $region18: #{transformer_forward.4} parent=11 // pred_check_branch
        %387 = sbr.rel (%p385) target = $region20
      $region19: #{transformer_forward.4} parent=11 // pred_region
        _
      $region20: #{transformer_forward.4} parent=11 // pred_fallthru
        _
      // Predicated region
      $region21: #{transformer_forward.4} parent=11 // pred_check
        %p388 = pneg %p110
      $region22: #{transformer_forward.4} parent=11 // pred_check_branch
        %390 = sbr.rel (%p388) target = $region24
      $region23: #{transformer_forward.4} parent=11 // pred_region
        _
      $region24: #{transformer_forward.4} parent=11 // pred_fallthru
        _
      // Predicated region
      $region25: #{transformer_forward.4} parent=11 // pred_check
        %p391 = pneg %p131
      $region26: #{transformer_forward.4} parent=11 // pred_check_branch
        %393 = sbr.rel (%p391) target = $region28
      $region27: #{transformer_forward.4} parent=11 // pred_region
        _
      $region28: #{transformer_forward.4} parent=11 // pred_fallthru
        _
      // Predicated region
      $region29: #{transformer_forward.4} parent=11 // pred_check
        %p394 = pneg %p152
      $region30: #{transformer_forward.4} parent=11 // pred_check_branch
        %396 = sbr.rel (%p394) target = $region32
      $region31: #{transformer_forward.4} parent=11 // pred_region
        _
      $region32: #{transformer_forward.4} parent=11 // pred_fallthru
        _
      // Predicated region
      $region33: #{transformer_forward.4} parent=11 // pred_check
        %p397 = pneg %p173
      $region34: #{transformer_forward.4} parent=11 // pred_check_branch
        %399 = sbr.rel (%p397) target = $region36
      $region35: #{transformer_forward.4} parent=11 // pred_region
        _
      $region36: #{transformer_forward.4} parent=11 // pred_fallthru
        _
      // Predicated region
      $region37: #{transformer_forward.4} parent=11 // pred_check
        %p400 = pneg %p194
      $region38: #{transformer_forward.4} parent=11 // pred_check_branch
        %402 = sbr.rel (%p400) target = $region40
      $region39: #{transformer_forward.4} parent=11 // pred_region
        _
      $region40: #{transformer_forward.4} parent=11 // pred_fallthru
        _
      // Predicated region
      $region41: #{transformer_forward.4} parent=11 // pred_check
        %p403 = pneg %p215
      $region42: #{transformer_forward.4} parent=11 // pred_check_branch
        %405 = sbr.rel (%p403) target = $region44
      $region43: #{transformer_forward.4} parent=11 // pred_region
        _
      $region44: #{transformer_forward.4} parent=11 // pred_fallthru
        _
      // Predicated region
      $region45: #{transformer_forward.4} parent=11 // pred_check
        %p406 = pneg %p236
      $region46: #{transformer_forward.4} parent=11 // pred_check_branch
        %408 = sbr.rel (%p406) target = $region48
      $region47: #{transformer_forward.4} parent=11 // pred_region
        _
      $region48: #{transformer_forward.4} parent=11 // pred_fallthru
        _
      // Predicated region
      $region49: #{transformer_forward.4} parent=11 // pred_check
        %p409 = pneg %p257
      $region50: #{transformer_forward.4} parent=11 // pred_check_branch
        %411 = sbr.rel (%p409) target = $region52
      $region51: #{transformer_forward.4} parent=11 // pred_region
        _
      $region52: #{transformer_forward.4} parent=11 // pred_fallthru
        _
      // Predicated region
      $region53: #{transformer_forward.4} parent=11 // pred_check
        %p412 = pneg %p278
      $region54: #{transformer_forward.4} parent=11 // pred_check_branch
        %414 = sbr.rel (%p412) target = $region56
      $region55: #{transformer_forward.4} parent=11 // pred_region
        _
      $region56: #{transformer_forward.4} parent=11 // pred_fallthru
        _
      // Predicated region
      $region57: #{transformer_forward.4} parent=11 // pred_check
        %p415 = pneg %p299
      $region58: #{transformer_forward.4} parent=11 // pred_check_branch
        %417 = sbr.rel (%p415) target = $region60
      $region59: #{transformer_forward.4} parent=11 // pred_region
        _
      $region60: #{transformer_forward.4} parent=11 // pred_fallthru
        _
      // Predicated region
      $region61: #{transformer_forward.4} parent=11 // pred_check
        %p418 = pneg %p320
      $region62: #{transformer_forward.4} parent=11 // pred_check_branch
        %420 = sbr.rel (%p418) target = $region64
      $region63: #{transformer_forward.4} parent=11 // pred_region
        _
      $region64: #{transformer_forward.4} parent=11 // pred_fallthru
        _
      // Predicated region
      $region65: #{transformer_forward.4} parent=11 // pred_check
        %p421 = pneg %p341
      $region66: #{transformer_forward.4} parent=11 // pred_check_branch
        %423 = sbr.rel (%p421) target = $region68
      $region67: #{transformer_forward.4} parent=11 // pred_region
        _
      $region68: #{transformer_forward.4} parent=11 // pred_fallthru
        _
    $region12: #{transformer_forward.4} parent=5 // pred_fallthru
      _
    %p424 = scmp.lt.s32.totalorder %s21, 2
    // Predicated region
    $region69: #{transformer_forward.4} parent=5 // pred_check
      %p425 = pneg %p424
    $region70: #{transformer_forward.4} parent=5 // pred_check_branch
      %427 = sbr.rel (%p425) target = $region72
    $region71: #{transformer_forward.4} parent=5 // pred_region
      // Predicated region
      $region73: #{transformer_forward.4} parent=71 // pred_check
        %p428 = pneg %p41
      $region74: #{transformer_forward.4} parent=71 // pred_check_branch
        %430 = sbr.rel (%p428) target = $region76
      $region75: #{transformer_forward.4} parent=71 // pred_region
        %p431 = scmp.lt.s32.totalorder %s21, 1
        %s432 = scalar_select %p431, %s21, 1
        %s433 = smul.addr %s432, 8
        %s434 = scalar_lea.vmem %s0, %s433
      $region76: #{transformer_forward.4} parent=71 // pred_fallthru
        _
    $region72: #{transformer_forward.4} parent=5 // pred_fallthru
      _
    %p435 = scmp.le.s32.totalorder 1, %s21
    %p436 = scmp.lt.s32.totalorder %s21, 3
    %p437 = pnand %p435, %p436
    %p438 = pneg %p437
    // Predicated region
    $region77: #{transformer_forward.4} parent=5 // pred_check
      _
    $region78: #{transformer_forward.4} parent=5 // pred_check_branch
      %440 = sbr.rel (%p437) target = $region80
    $region79: #{transformer_forward.4} parent=5 // pred_region
      %s441 = ssub.s32 %s21, 1
      %p442 = scmp.lt.s32.totalorder %s26, 1
      %s443 = scalar_select %p442, %s26, 1
      %s444 = smul.addr %s443, 8
      %s445 = scalar_lea.vmem %s0, %s444
      %p446 = pneg %p47
      %p447 = pneg %p44
      %p448 = pneg %p68
      %p449 = pneg %p65
      %p450 = pneg %p89
      %p451 = pneg %p86
      %p452 = pneg %p110
      %p453 = pneg %p107
      %p454 = pneg %p131
      %p455 = pneg %p128
      %p456 = pneg %p152
      %p457 = pneg %p149
      %p458 = pneg %p173
      %p459 = pneg %p170
      %p460 = pneg %p194
      %p461 = pneg %p191
      %p462 = pneg %p215
      %p463 = pneg %p212
      %p464 = pneg %p236
      %p465 = pneg %p233
      %p466 = pneg %p257
      %p467 = pneg %p254
      %p468 = pneg %p278
      %p469 = pneg %p275
      %p470 = pneg %p299
      %p471 = pneg %p296
      %p472 = pneg %p320
      %p473 = pneg %p317
      %p474 = pneg %p341
      %p475 = pneg %p338
      %p476 = pneg %p367
      %p477 = pneg %p364
      %p478 = scmp.lt.s32.totalorder %s26, 1
      %s479 = scalar_select %p478, %s26, 1
      %s480 = smul.addr %s479, 8
      %s481 = scalar_lea.vmem %s15, %s480
      %p482 = scmp.lt.s32.totalorder %s26, 1
      %s483 = scalar_select %p482, %s26, 1
      %s484 = smul.addr %s483, 8
      %s485 = scalar_lea.vmem %s0, %s484
      %p486 = scmp.lt.s32.totalorder %s26, 1
      %s487 = scalar_select %p486, %s26, 1
      %s488 = smul.addr %s487, 8
      %s489 = scalar_lea.vmem %s15, %s488
      %v491 = vld [vmem:[%s485] sm:$0xff]
      %v492 = vld [vmem:[%s1] sm:$0x1]
      %v493 = vld [vmem:[%s2] sm:$0x1]
      %vm494 = vcmask 261120
      %v495 = vsel %vm494, %v491, 0.0
      %496 = vadd.xlane.f32.xlu0 %v495
      %v497 = vpop.xlane.xlu0 %496
      %v498 = vrcp.pop 32.0
      %v499 = vmul.f32 %v497, %v498
      %v500 = vsub.f32 %v491, %v499
      %v501 = vmul.f32 %v500, %v500
      %v502 = vsel %vm494, %v501, 0.0
      %503 = vadd.xlane.f32.xlu0 %v502
      %v504 = vpop.xlane.xlu0 %503
      %v505 = vmul.f32 %v504, %v498
      %v506 = vadd.f32 %v505, 1e-05
      %v507 = vrsqrt.pop %v506
      %v508 = vmul.f32 %v500, %v507
      %v510 = vlaneseq
      %v511 = vshrl.u32 %v510, 7
      %v512 = vsub.s32 0, %v511
      %v513 = vrot.slane %v492, %v512
      %v515 = vmul.f32 %v508, %v513
      %v517 = vlaneseq
      %v518 = vshrl.u32 %v517, 7
      %v519 = vsub.s32 0, %v518
      %v520 = vrot.slane %v493, %v519
      %v522 = vadd.f32 %v515, %v520
      %v523 = vld [vmem:[%s3] sm:$0xf]
      %v524 = vld [vmem:[%s3 + $0x4] sm:$0xf]
      %v525 = vld [vmem:[%s3 + $0x8] sm:$0xf]
      %v526 = vld [vmem:[%s3 + $0xc] sm:$0xf]
      %v527 = vpack.c.bf16 %v522, %v522
      %v528 = vld [vmem:[%s4] sm:$0x1]
      %v530 = vlaneseq
      %v531 = vshrl.u32 %v530, 7
      %v532 = vsub.s32 0, %v531
      %v533 = vrot.slane %v528, %v532
      %v539 = vunpack.c.l.b16 %v523
      %v540 = vunpack.c.l.b16 %v524
      %v541 = vunpack.c.l.b16 %v525
      %v542 = vunpack.c.l.b16 %v526
      %v543 = vpack.c.b16 %v540, %v539
      %v544 = vpack.c.b16 %v542, %v541
      %v548 = vsel %vm494, %v527, 0
      %550 = vmatprep.subr.bf16.mxu0 0
      %551 = vmatpush1.bf16.msra.mxu0 %v543
      %552 = vmatprep.subr.bf16.mxu0 0
      %553 = vmatpush1.bf16.msra.mxu0 %v544
      %554 = vmatprep.subr.bf16.mxu0 0
      %555 = vmatpush1.bf16.msra.mxu0 0
      %556 = vmatprep.subr.bf16.mxu0 0
      %557 = vmatpush1.bf16.msra.mxu0 0
      %558 = vmatprep.subr.bf16.mxu0 0
      %559 = vmatpush1.bf16.msra.mxu0 0
      %560 = vmatprep.subr.bf16.mxu0 0
      %561 = vmatpush1.bf16.msra.mxu0 0
      %562 = vmatprep.subr.bf16.mxu0 0
      %563 = vmatpush1.bf16.msra.mxu0 0
      %564 = vmatprep.subr.bf16.mxu0 0
      %565 = vmatpush1.bf16.msra.mxu0 0
      %566 = vmatprep.subr.bf16.mxu0 0
      %567 = vmatpush1.bf16.msra.mxu0 0
      %568 = vmatprep.subr.bf16.mxu0 0
      %569 = vmatpush1.bf16.msra.mxu0 0
      %570 = vmatprep.subr.bf16.mxu0 0
      %571 = vmatpush1.bf16.msra.mxu0 0
      %572 = vmatprep.subr.bf16.mxu0 0
      %573 = vmatpush1.bf16.msra.mxu0 0
      %574 = vmatprep.subr.bf16.mxu0 0
      %575 = vmatpush1.bf16.msra.mxu0 0
      %576 = vmatprep.subr.bf16.mxu0 0
      %577 = vmatpush1.bf16.msra.mxu0 0
      %578 = vmatprep.subr.bf16.mxu0 0
      %579 = vmatpush1.bf16.msra.mxu0 0
      %580 = vmatprep.subr.bf16.mxu0 0
      %581 = vmatpush1.bf16.msra.mxu0 0
      %582 = vmatprep.mubr.bf16.mxu0 0
      %583 = vmatmul.mubr.bf16.gmra.mrb[0].mxu0 %v548
      %v584 = vpop.f32.mrb[0].mxu0
      %v585 = vadd.f32 %v533, %v584
      %v586 = vpop.f32.mrb[0].mxu0
      %v587 = vpop.f32.mrb[0].mxu0
      %v588 = vpop.f32.mrb[0].mxu0
      %589 = vdwg.mxu0
      %v590 = vmul.f32 %v585, 0.35355338
      %v591 = vpack.c.bf16 %v590, %v590
      %v592 = vpack.c.bf16 %v585, %v585
      %594 = vrot.lane.b32.xlu0 %v592, 96
      %v595 = vpop.permute.xlu0 %594
      %vm596 = vcmask 64512
      %v598 = vsel %vm596, %v591, 0
      %v601 = vsel %vm596, %v595, 0
      %603 = vmatprep.subr.bf16.mxu0 0
      %604 = vmatpush1.bf16.xpose.msra.mxu0 %v601
      %605 = vmatprep.subr.bf16.mxu0 0
      %606 = vmatpush1.bf16.xpose.msra.mxu0 0
      %607 = vmatprep.subr.bf16.mxu0 0
      %608 = vmatpush1.bf16.xpose.msra.mxu0 0
      %609 = vmatprep.subr.bf16.mxu0 0
      %610 = vmatpush1.bf16.xpose.msra.mxu0 0
      %611 = vmatprep.subr.bf16.mxu0 0
      %612 = vmatpush1.bf16.xpose.msra.mxu0 0
      %613 = vmatprep.subr.bf16.mxu0 0
      %614 = vmatpush1.bf16.xpose.msra.mxu0 0
      %615 = vmatprep.subr.bf16.mxu0 0
      %616 = vmatpush1.bf16.xpose.msra.mxu0 0
      %617 = vmatprep.subr.bf16.mxu0 0
      %618 = vmatpush1.bf16.xpose.msra.mxu0 0
      %619 = vmatprep.subr.bf16.mxu0 0
      %620 = vmatpush1.bf16.xpose.msra.mxu0 0
      %621 = vmatprep.subr.bf16.mxu0 0
      %622 = vmatpush1.bf16.xpose.msra.mxu0 0
      %623 = vmatprep.subr.bf16.mxu0 0
      %624 = vmatpush1.bf16.xpose.msra.mxu0 0
      %625 = vmatprep.subr.bf16.mxu0 0
      %626 = vmatpush1.bf16.xpose.msra.mxu0 0
      %627 = vmatprep.subr.bf16.mxu0 0
      %628 = vmatpush1.bf16.xpose.msra.mxu0 0
      %629 = vmatprep.subr.bf16.mxu0 0
      %630 = vmatpush1.bf16.xpose.msra.mxu0 0
      %631 = vmatprep.subr.bf16.mxu0 0
      %632 = vmatpush1.bf16.xpose.msra.mxu0 0
      %633 = vmatprep.subr.bf16.mxu0 0
      %634 = vmatpush1.bf16.xpose.msra.mxu0 0
      %635 = vmatprep.mubr.bf16.mxu0 0
      %636 = vmatmul.mubr.bf16.gmra.mrb[0].mxu0 %v598
      %v637 = vpop.f32.mrb[0].mxu0
      %v638 = vadd.f32 0.0, %v637
      %v639 = vpop.f32.mrb[0].mxu0
      %v640 = vpop.f32.mrb[0].mxu0
      %v641 = vpop.f32.mrb[0].mxu0
      %642 = vdwg.mxu0
      %v643 = vsel %vm596, %v638, -inf
      %644 = vmax.xlane.f32.xlu0 %v643
      %v645 = vpop.xlane.xlu0 %644
      %v646 = vsub.f32 %v638, %v645
      %v647 = vmul.f32 %v646, 1.442695
      %v648 = vpow.pop %v647
      %v649 = vsel %vm596, %v648, 0.0
      %650 = vadd.xlane.f32.xlu0 %v649
      %v651 = vpop.xlane.xlu0 %650
      %v652 = vrcp.pop %v651
      %v653 = vmul.f32 %v648, %v652
      %v654 = vpack.c.bf16 %v653, %v653
      %655 = vrot.lane.b32.xlu0 %v592, 64
      %v656 = vpop.permute.xlu0 %655
      %v658 = vsel %vm596, %v654, 0
      %vm660 = vcmask 1043456
      %v662 = vsel %vm660, %v656, 0
      %664 = vmatprep.subr.bf16.mxu0 0
      %665 = vmatpush1.bf16.msra.mxu0 %v662
      %666 = vmatprep.subr.bf16.mxu0 0
      %667 = vmatpush1.bf16.msra.mxu0 0
      %668 = vmatprep.subr.bf16.mxu0 0
      %669 = vmatpush1.bf16.msra.mxu0 0
      %670 = vmatprep.subr.bf16.mxu0 0
      %671 = vmatpush1.bf16.msra.mxu0 0
      %672 = vmatprep.subr.bf16.mxu0 0
      %673 = vmatpush1.bf16.msra.mxu0 0
      %674 = vmatprep.subr.bf16.mxu0 0
      %675 = vmatpush1.bf16.msra.mxu0 0
      %676 = vmatprep.subr.bf16.mxu0 0
      %677 = vmatpush1.bf16.msra.mxu0 0
      %678 = vmatprep.subr.bf16.mxu0 0
      %679 = vmatpush1.bf16.msra.mxu0 0
      %680 = vmatprep.subr.bf16.mxu0 0
      %681 = vmatpush1.bf16.msra.mxu0 0
      %682 = vmatprep.subr.bf16.mxu0 0
      %683 = vmatpush1.bf16.msra.mxu0 0
      %684 = vmatprep.subr.bf16.mxu0 0
      %685 = vmatpush1.bf16.msra.mxu0 0
      %686 = vmatprep.subr.bf16.mxu0 0
      %687 = vmatpush1.bf16.msra.mxu0 0
      %688 = vmatprep.subr.bf16.mxu0 0
      %689 = vmatpush1.bf16.msra.mxu0 0
      %690 = vmatprep.subr.bf16.mxu0 0
      %691 = vmatpush1.bf16.msra.mxu0 0
      %692 = vmatprep.subr.bf16.mxu0 0
      %693 = vmatpush1.bf16.msra.mxu0 0
      %694 = vmatprep.subr.bf16.mxu0 0
      %695 = vmatpush1.bf16.msra.mxu0 0
      %696 = vmatprep.mubr.bf16.mxu0 0
      %697 = vmatmul.mubr.bf16.gmra.mrb[0].mxu0 %v658
      %v698 = vpop.f32.mrb[0].mxu0
      %v699 = vadd.f32 0.0, %v698
      %v700 = vpop.f32.mrb[0].mxu0
      %v701 = vpop.f32.mrb[0].mxu0
      %v702 = vpop.f32.mrb[0].mxu0
      %703 = vdwg.mxu0
      %705 = vrot.lane.b32.xlu0 %v591, 120
      %v706 = vpop.permute.xlu0 %705
      %707 = vrot.lane.b32.xlu0 %v592, 88
      %v708 = vpop.permute.xlu0 %707
      %v710 = vsel %vm596, %v706, 0
      %v713 = vsel %vm596, %v708, 0
      %715 = vmatprep.subr.bf16.mxu0 0
      %716 = vmatpush1.bf16.xpose.msra.mxu0 %v713
      %717 = vmatprep.subr.bf16.mxu0 0
      %718 = vmatpush1.bf16.xpose.msra.mxu0 0
      %719 = vmatprep.subr.bf16.mxu0 0
      %720 = vmatpush1.bf16.xpose.msra.mxu0 0
      %721 = vmatprep.subr.bf16.mxu0 0
      %722 = vmatpush1.bf16.xpose.msra.mxu0 0
      %723 = vmatprep.subr.bf16.mxu0 0
      %724 = vmatpush1.bf16.xpose.msra.mxu0 0
      %725 = vmatprep.subr.bf16.mxu0 0
      %726 = vmatpush1.bf16.xpose.msra.mxu0 0
      %727 = vmatprep.subr.bf16.mxu0 0
      %728 = vmatpush1.bf16.xpose.msra.mxu0 0
      %729 = vmatprep.subr.bf16.mxu0 0
      %730 = vmatpush1.bf16.xpose.msra.mxu0 0
      %731 = vmatprep.subr.bf16.mxu0 0
      %732 = vmatpush1.bf16.xpose.msra.mxu0 0
      %733 = vmatprep.subr.bf16.mxu0 0
      %734 = vmatpush1.bf16.xpose.msra.mxu0 0
      %735 = vmatprep.subr.bf16.mxu0 0
      %736 = vmatpush1.bf16.xpose.msra.mxu0 0
      %737 = vmatprep.subr.bf16.mxu0 0
      %738 = vmatpush1.bf16.xpose.msra.mxu0 0
      %739 = vmatprep.subr.bf16.mxu0 0
      %740 = vmatpush1.bf16.xpose.msra.mxu0 0
      %741 = vmatprep.subr.bf16.mxu0 0
      %742 = vmatpush1.bf16.xpose.msra.mxu0 0
      %743 = vmatprep.subr.bf16.mxu0 0
      %744 = vmatpush1.bf16.xpose.msra.mxu0 0
      %745 = vmatprep.subr.bf16.mxu0 0
      %746 = vmatpush1.bf16.xpose.msra.mxu0 0
      %747 = vmatprep.mubr.bf16.mxu0 0
      %748 = vmatmul.mubr.bf16.gmra.mrb[0].mxu0 %v710
      %v749 = vpop.f32.mrb[0].mxu0
      %v750 = vadd.f32 0.0, %v749
      %v751 = vpop.f32.mrb[0].mxu0
      %v752 = vpop.f32.mrb[0].mxu0
      %v753 = vpop.f32.mrb[0].mxu0
      %754 = vdwg.mxu0
      %v755 = vsel %vm596, %v750, -inf
      %756 = vmax.xlane.f32.xlu0 %v755
      %v757 = vpop.xlane.xlu0 %756
      %v758 = vsub.f32 %v750, %v757
      %v759 = vmul.f32 %v758, 1.442695
      %v760 = vpow.pop %v759
      %v761 = vsel %vm596, %v760, 0.0
      %762 = vadd.xlane.f32.xlu0 %v761
      %v763 = vpop.xlane.xlu0 %762
      %v764 = vrcp.pop %v763
      %v765 = vmul.f32 %v760, %v764
      %v766 = vpack.c.bf16 %v765, %v765
      %767 = vrot.lane.b32.xlu0 %v592, 56
      %v768 = vpop.permute.xlu0 %767
      %v770 = vsel %vm596, %v766, 0
      %v773 = vsel %vm660, %v768, 0
      %775 = vmatprep.subr.bf16.mxu0 0
      %776 = vmatpush1.bf16.msra.mxu0 %v773
      %777 = vmatprep.subr.bf16.mxu0 0
      %778 = vmatpush1.bf16.msra.mxu0 0
      %779 = vmatprep.subr.bf16.mxu0 0
      %780 = vmatpush1.bf16.msra.mxu0 0
      %781 = vmatprep.subr.bf16.mxu0 0
      %782 = vmatpush1.bf16.msra.mxu0 0
      %783 = vmatprep.subr.bf16.mxu0 0
      %784 = vmatpush1.bf16.msra.mxu0 0
      %785 = vmatprep.subr.bf16.mxu0 0
      %786 = vmatpush1.bf16.msra.mxu0 0
      %787 = vmatprep.subr.bf16.mxu0 0
      %788 = vmatpush1.bf16.msra.mxu0 0
      %789 = vmatprep.subr.bf16.mxu0 0
      %790 = vmatpush1.bf16.msra.mxu0 0
      %791 = vmatprep.subr.bf16.mxu0 0
      %792 = vmatpush1.bf16.msra.mxu0 0
      %793 = vmatprep.subr.bf16.mxu0 0
      %794 = vmatpush1.bf16.msra.mxu0 0
      %795 = vmatprep.subr.bf16.mxu0 0
      %796 = vmatpush1.bf16.msra.mxu0 0
      %797 = vmatprep.subr.bf16.mxu0 0
      %798 = vmatpush1.bf16.msra.mxu0 0
      %799 = vmatprep.subr.bf16.mxu0 0
      %800 = vmatpush1.bf16.msra.mxu0 0
      %801 = vmatprep.subr.bf16.mxu0 0
      %802 = vmatpush1.bf16.msra.mxu0 0
      %803 = vmatprep.subr.bf16.mxu0 0
      %804 = vmatpush1.bf16.msra.mxu0 0
      %805 = vmatprep.subr.bf16.mxu0 0
      %806 = vmatpush1.bf16.msra.mxu0 0
      %807 = vmatprep.mubr.bf16.mxu0 0
      %808 = vmatmul.mubr.bf16.gmra.mrb[0].mxu0 %v770
      %v809 = vpop.f32.mrb[0].mxu0
      %v810 = vadd.f32 0.0, %v809
      %v811 = vpop.f32.mrb[0].mxu0
      %v812 = vpop.f32.mrb[0].mxu0
      %v813 = vpop.f32.mrb[0].mxu0
      %814 = vdwg.mxu0
      %815 = vrot.lane.b32.xlu0 %v591, 112
      %v816 = vpop.permute.xlu0 %815
      %817 = vrot.lane.b32.xlu0 %v592, 80
      %v818 = vpop.permute.xlu0 %817
      %v820 = vsel %vm596, %v816, 0
      %v823 = vsel %vm596, %v818, 0
      %825 = vmatprep.subr.bf16.mxu0 0
      %826 = vmatpush1.bf16.xpose.msra.mxu0 %v823
      %827 = vmatprep.subr.bf16.mxu0 0
      %828 = vmatpush1.bf16.xpose.msra.mxu0 0
      %829 = vmatprep.subr.bf16.mxu0 0
      %830 = vmatpush1.bf16.xpose.msra.mxu0 0
      %831 = vmatprep.subr.bf16.mxu0 0
      %832 = vmatpush1.bf16.xpose.msra.mxu0 0
      %833 = vmatprep.subr.bf16.mxu0 0
      %834 = vmatpush1.bf16.xpose.msra.mxu0 0
      %835 = vmatprep.subr.bf16.mxu0 0
      %836 = vmatpush1.bf16.xpose.msra.mxu0 0
      %837 = vmatprep.subr.bf16.mxu0 0
      %838 = vmatpush1.bf16.xpose.msra.mxu0 0
      %839 = vmatprep.subr.bf16.mxu0 0
      %840 = vmatpush1.bf16.xpose.msra.mxu0 0
      %841 = vmatprep.subr.bf16.mxu0 0
      %842 = vmatpush1.bf16.xpose.msra.mxu0 0
      %843 = vmatprep.subr.bf16.mxu0 0
      %844 = vmatpush1.bf16.xpose.msra.mxu0 0
      %845 = vmatprep.subr.bf16.mxu0 0
      %846 = vmatpush1.bf16.xpose.msra.mxu0 0
      %847 = vmatprep.subr.bf16.mxu0 0
      %848 = vmatpush1.bf16.xpose.msra.mxu0 0
      %849 = vmatprep.subr.bf16.mxu0 0
      %850 = vmatpush1.bf16.xpose.msra.mxu0 0
      %851 = vmatprep.subr.bf16.mxu0 0
      %852 = vmatpush1.bf16.xpose.msra.mxu0 0
      %853 = vmatprep.subr.bf16.mxu0 0
      %854 = vmatpush1.bf16.xpose.msra.mxu0 0
      %855 = vmatprep.subr.bf16.mxu0 0
      %856 = vmatpush1.bf16.xpose.msra.mxu0 0
      %857 = vmatprep.mubr.bf16.mxu0 0
      %858 = vmatmul.mubr.bf16.gmra.mrb[0].mxu0 %v820
      %v859 = vpop.f32.mrb[0].mxu0
      %v860 = vadd.f32 0.0, %v859
      %v861 = vpop.f32.mrb[0].mxu0
      %v862 = vpop.f32.mrb[0].mxu0
      %v863 = vpop.f32.mrb[0].mxu0
      %864 = vdwg.mxu0
      %v865 = vsel %vm596, %v860, -inf
      %866 = vmax.xlane.f32.xlu0 %v865
      %v867 = vpop.xlane.xlu0 %866
      %v868 = vsub.f32 %v860, %v867
      %v869 = vmul.f32 %v868, 1.442695
      %v870 = vpow.pop %v869
      %v871 = vsel %vm596, %v870, 0.0
      %872 = vadd.xlane.f32.xlu0 %v871
      %v873 = vpop.xlane.xlu0 %872
      %v874 = vrcp.pop %v873
      %v875 = vmul.f32 %v870, %v874
      %v876 = vpack.c.bf16 %v875, %v875
      %877 = vrot.lane.b32.xlu0 %v592, 48
      %v878 = vpop.permute.xlu0 %877
      %v880 = vsel %vm596, %v876, 0
      %v883 = vsel %vm660, %v878, 0
      %885 = vmatprep.subr.bf16.mxu0 0
      %886 = vmatpush1.bf16.msra.mxu0 %v883
      %887 = vmatprep.subr.bf16.mxu0 0
      %888 = vmatpush1.bf16.msra.mxu0 0
      %889 = vmatprep.subr.bf16.mxu0 0
      %890 = vmatpush1.bf16.msra.mxu0 0
      %891 = vmatprep.subr.bf16.mxu0 0
      %892 = vmatpush1.bf16.msra.mxu0 0
      %893 = vmatprep.subr.bf16.mxu0 0
      %894 = vmatpush1.bf16.msra.mxu0 0
      %895 = vmatprep.subr.bf16.mxu0 0
      %896 = vmatpush1.bf16.msra.mxu0 0
      %897 = vmatprep.subr.bf16.mxu0 0
      %898 = vmatpush1.bf16.msra.mxu0 0
      %899 = vmatprep.subr.bf16.mxu0 0
      %900 = vmatpush1.bf16.msra.mxu0 0
      %901 = vmatprep.subr.bf16.mxu0 0
      %902 = vmatpush1.bf16.msra.mxu0 0
      %903 = vmatprep.subr.bf16.mxu0 0
      %904 = vmatpush1.bf16.msra.mxu0 0
      %905 = vmatprep.subr.bf16.mxu0 0
      %906 = vmatpush1.bf16.msra.mxu0 0
      %907 = vmatprep.subr.bf16.mxu0 0
      %908 = vmatpush1.bf16.msra.mxu0 0
      %909 = vmatprep.subr.bf16.mxu0 0
      %910 = vmatpush1.bf16.msra.mxu0 0
      %911 = vmatprep.subr.bf16.mxu0 0
      %912 = vmatpush1.bf16.msra.mxu0 0
      %913 = vmatprep.subr.bf16.mxu0 0
      %914 = vmatpush1.bf16.msra.mxu0 0
      %915 = vmatprep.subr.bf16.mxu0 0
      %916 = vmatpush1.bf16.msra.mxu0 0
      %917 = vmatprep.mubr.bf16.mxu0 0
      %918 = vmatmul.mubr.bf16.gmra.mrb[0].mxu0 %v880
      %v919 = vpop.f32.mrb[0].mxu0
      %v920 = vadd.f32 0.0, %v919
      %v921 = vpop.f32.mrb[0].mxu0
      %v922 = vpop.f32.mrb[0].mxu0
      %v923 = vpop.f32.mrb[0].mxu0
      %924 = vdwg.mxu0
      %925 = vrot.lane.b32.xlu0 %v591, 104
      %v926 = vpop.permute.xlu0 %925
      %927 = vrot.lane.b32.xlu0 %v592, 72
      %v928 = vpop.permute.xlu0 %927
      %v930 = vsel %vm596, %v926, 0
      %v933 = vsel %vm596, %v928, 0
      %935 = vmatprep.subr.bf16.mxu0 0
      %936 = vmatpush1.bf16.xpose.msra.mxu0 %v933
      %937 = vmatprep.subr.bf16.mxu0 0
      %938 = vmatpush1.bf16.xpose.msra.mxu0 0
      %939 = vmatprep.subr.bf16.mxu0 0
      %940 = vmatpush1.bf16.xpose.msra.mxu0 0
      %941 = vmatprep.subr.bf16.mxu0 0
      %942 = vmatpush1.bf16.xpose.msra.mxu0 0
      %943 = vmatprep.subr.bf16.mxu0 0
      %944 = vmatpush1.bf16.xpose.msra.mxu0 0
      %945 = vmatprep.subr.bf16.mxu0 0
      %946 = vmatpush1.bf16.xpose.msra.mxu0 0
      %947 = vmatprep.subr.bf16.mxu0 0
      %948 = vmatpush1.bf16.xpose.msra.mxu0 0
      %949 = vmatprep.subr.bf16.mxu0 0
      %950 = vmatpush1.bf16.xpose.msra.mxu0 0
      %951 = vmatprep.subr.bf16.mxu0 0
      %952 = vmatpush1.bf16.xpose.msra.mxu0 0
      %953 = vmatprep.subr.bf16.mxu0 0
      %954 = vmatpush1.bf16.xpose.msra.mxu0 0
      %955 = vmatprep.subr.bf16.mxu0 0
      %956 = vmatpush1.bf16.xpose.msra.mxu0 0
      %957 = vmatprep.subr.bf16.mxu0 0
      %958 = vmatpush1.bf16.xpose.msra.mxu0 0
      %959 = vmatprep.subr.bf16.mxu0 0
      %960 = vmatpush1.bf16.xpose.msra.mxu0 0
      %961 = vmatprep.subr.bf16.mxu0 0
      %962 = vmatpush1.bf16.xpose.msra.mxu0 0
      %963 = vmatprep.subr.bf16.mxu0 0
      %964 = vmatpush1.bf16.xpose.msra.mxu0 0
      %965 = vmatprep.subr.bf16.mxu0 0
      %966 = vmatpush1.bf16.xpose.msra.mxu0 0
      %967 = vmatprep.mubr.bf16.mxu0 0
      %968 = vmatmul.mubr.bf16.gmra.mrb[0].mxu0 %v930
      %v969 = vpop.f32.mrb[0].mxu0
      %v970 = vadd.f32 0.0, %v969
      %v971 = vpop.f32.mrb[0].mxu0
      %v972 = vpop.f32.mrb[0].mxu0
      %v973 = vpop.f32.mrb[0].mxu0
      %974 = vdwg.mxu0
      %v975 = vsel %vm596, %v970, -inf
      %976 = vmax.xlane.f32.xlu0 %v975
      %v977 = vpop.xlane.xlu0 %976
      %v978 = vsub.f32 %v970, %v977
      %v979 = vmul.f32 %v978, 1.442695
      %v980 = vpow.pop %v979
      %v981 = vsel %vm596, %v980, 0.0
      %982 = vadd.xlane.f32.xlu0 %v981
      %v983 = vpop.xlane.xlu0 %982
      %v984 = vrcp.pop %v983
      %v985 = vmul.f32 %v980, %v984
      %v986 = vpack.c.bf16 %v985, %v985
      %987 = vrot.lane.b32.xlu0 %v592, 40
      %v988 = vpop.permute.xlu0 %987
      %v990 = vsel %vm596, %v986, 0
      %v993 = vsel %vm660, %v988, 0
      %995 = vmatprep.subr.bf16.mxu0 0
      %996 = vmatpush1.bf16.msra.mxu0 %v993
      %997 = vmatprep.subr.bf16.mxu0 0
      %998 = vmatpush1.bf16.msra.mxu0 0
      %999 = vmatprep.subr.bf16.mxu0 0
      %1000 = vmatpush1.bf16.msra.mxu0 0
      %1001 = vmatprep.subr.bf16.mxu0 0
      %1002 = vmatpush1.bf16.msra.mxu0 0
      %1003 = vmatprep.subr.bf16.mxu0 0
      %1004 = vmatpush1.bf16.msra.mxu0 0
      %1005 = vmatprep.subr.bf16.mxu0 0
      %1006 = vmatpush1.bf16.msra.mxu0 0
      %1007 = vmatprep.subr.bf16.mxu0 0
      %1008 = vmatpush1.bf16.msra.mxu0 0
      %1009 = vmatprep.subr.bf16.mxu0 0
      %1010 = vmatpush1.bf16.msra.mxu0 0
      %1011 = vmatprep.subr.bf16.mxu0 0
      %1012 = vmatpush1.bf16.msra.mxu0 0
      %1013 = vmatprep.subr.bf16.mxu0 0
      %1014 = vmatpush1.bf16.msra.mxu0 0
      %1015 = vmatprep.subr.bf16.mxu0 0
      %1016 = vmatpush1.bf16.msra.mxu0 0
      %1017 = vmatprep.subr.bf16.mxu0 0
      %1018 = vmatpush1.bf16.msra.mxu0 0
      %1019 = vmatprep.subr.bf16.mxu0 0
      %1020 = vmatpush1.bf16.msra.mxu0 0
      %1021 = vmatprep.subr.bf16.mxu0 0
      %1022 = vmatpush1.bf16.msra.mxu0 0
      %1023 = vmatprep.subr.bf16.mxu0 0
      %1024 = vmatpush1.bf16.msra.mxu0 0
      %1025 = vmatprep.subr.bf16.mxu0 0
      %1026 = vmatpush1.bf16.msra.mxu0 0
      %1027 = vmatprep.mubr.bf16.mxu0 0
      %1028 = vmatmul.mubr.bf16.gmra.mrb[0].mxu0 %v990
      %v1029 = vpop.f32.mrb[0].mxu0
      %v1030 = vadd.f32 0.0, %v1029
      %v1031 = vpop.f32.mrb[0].mxu0
      %v1032 = vpop.f32.mrb[0].mxu0
      %v1033 = vpop.f32.mrb[0].mxu0
      %1034 = vdwg.mxu0
      %1036 = vrot.lane.b32.xlu0 %v810, 8
      %v1037 = vpop.permute.xlu0 %1036
      %1040 = vrot.lane.b32.xlu0 %v920, 16
      %v1041 = vpop.permute.xlu0 %1040
      %1044 = vrot.lane.b32.xlu0 %v1030, 24
      %v1045 = vpop.permute.xlu0 %1044
      %v1047 = vsel %vm596, %v699, %v1037
      %vm1048 = vcmask 130048
      %v1049 = vsel %vm1048, %v1047, %v1041
      %vm1050 = vcmask 195584
      %v1051 = vsel %vm1050, %v1049, %v1045
      %v1052 = vld [vmem:[%s5] sm:$0xf]
      %v1053 = vld [vmem:[%s5 + $0x4] sm:$0xf]
      %v1054 = vld [vmem:[%s5 + $0x8] sm:$0xf]
      %v1055 = vld [vmem:[%s5 + $0xc] sm:$0xf]
      %v1056 = vpack.c.bf16 %v1051, %v1051
      %v1061 = vunpack.c.l.b16 %v1052
      %v1062 = vunpack.c.l.b16 %v1053
      %v1063 = vunpack.c.l.b16 %v1054
      %v1064 = vunpack.c.l.b16 %v1055
      %v1065 = vpack.c.b16 %v1062, %v1061
      %v1066 = vpack.c.b16 %v1064, %v1063
      %v1070 = vsel %vm494, %v1056, 0
      %1072 = vmatprep.subr.bf16.mxu0 0
      %1073 = vmatpush1.bf16.msra.mxu0 %v1065
      %1074 = vmatprep.subr.bf16.mxu0 0
      %1075 = vmatpush1.bf16.msra.mxu0 %v1066
      %1076 = vmatprep.subr.bf16.mxu0 0
      %1077 = vmatpush1.bf16.msra.mxu0 0
      %1078 = vmatprep.subr.bf16.mxu0 0
      %1079 = vmatpush1.bf16.msra.mxu0 0
      %1080 = vmatprep.subr.bf16.mxu0 0
      %1081 = vmatpush1.bf16.msra.mxu0 0
      %1082 = vmatprep.subr.bf16.mxu0 0
      %1083 = vmatpush1.bf16.msra.mxu0 0
      %1084 = vmatprep.subr.bf16.mxu0 0
      %1085 = vmatpush1.bf16.msra.mxu0 0
      %1086 = vmatprep.subr.bf16.mxu0 0
      %1087 = vmatpush1.bf16.msra.mxu0 0
      %1088 = vmatprep.subr.bf16.mxu0 0
      %1089 = vmatpush1.bf16.msra.mxu0 0
      %1090 = vmatprep.subr.bf16.mxu0 0
      %1091 = vmatpush1.bf16.msra.mxu0 0
      %1092 = vmatprep.subr.bf16.mxu0 0
      %1093 = vmatpush1.bf16.msra.mxu0 0
      %1094 = vmatprep.subr.bf16.mxu0 0
      %1095 = vmatpush1.bf16.msra.mxu0 0
      %1096 = vmatprep.subr.bf16.mxu0 0
      %1097 = vmatpush1.bf16.msra.mxu0 0
      %1098 = vmatprep.subr.bf16.mxu0 0
      %1099 = vmatpush1.bf16.msra.mxu0 0
      %1100 = vmatprep.subr.bf16.mxu0 0
      %1101 = vmatpush1.bf16.msra.mxu0 0
      %1102 = vmatprep.subr.bf16.mxu0 0
      %1103 = vmatpush1.bf16.msra.mxu0 0
      %1104 = vmatprep.mubr.bf16.mxu0 0
      %1105 = vmatmul.mubr.bf16.gmra.mrb[0].mxu0 %v1070
      %v1106 = vpop.f32.mrb[0].mxu0
      %v1107 = vadd.f32 0.0, %v1106
      %v1108 = vpop.f32.mrb[0].mxu0
      %v1109 = vpop.f32.mrb[0].mxu0
      %v1110 = vpop.f32.mrb[0].mxu0
      %1111 = vdwg.mxu0
      %v1112 = vadd.f32 %v491, %v1107
      %v1113 = vld [vmem:[%s6] sm:$0x1]
      %v1115 = vlaneseq
      %v1116 = vshrl.u32 %v1115, 7
      %v1117 = vsub.s32 0, %v1116
      %v1118 = vrot.slane %v1113, %v1117
      %v1120 = vadd.f32 %v1112, %v1118
      %v1121 = vld [vmem:[%s7] sm:$0x1]
      %v1122 = vld [vmem:[%s8] sm:$0x1]
      %v1123 = vsel %vm494, %v1120, 0.0
      %1124 = vadd.xlane.f32.xlu0 %v1123
      %v1125 = vpop.xlane.xlu0 %1124
      %v1126 = vmul.f32 %v1125, %v498
      %v1127 = vsub.f32 %v1120, %v1126
      %v1128 = vmul.f32 %v1127, %v1127
      %v1129 = vsel %vm494, %v1128, 0.0
      %1130 = vadd.xlane.f32.xlu0 %v1129
      %v1131 = vpop.xlane.xlu0 %1130
      %v1132 = vmul.f32 %v1131, %v498
      %v1133 = vadd.f32 %v1132, 1e-05
      %v1134 = vrsqrt.pop %v1133
      %v1135 = vmul.f32 %v1127, %v1134
      %v1137 = vlaneseq
      %v1138 = vshrl.u32 %v1137, 7
      %v1139 = vsub.s32 0, %v1138
      %v1140 = vrot.slane %v1121, %v1139
      %v1142 = vmul.f32 %v1135, %v1140
      %v1144 = vlaneseq
      %v1145 = vshrl.u32 %v1144, 7
      %v1146 = vsub.s32 0, %v1145
      %v1147 = vrot.slane %v1122, %v1146
      %v1149 = vadd.f32 %v1142, %v1147
      %v1150 = vld [vmem:[%s9] sm:$0xf]
      %v1151 = vld [vmem:[%s9 + $0x4] sm:$0xf]
      %v1152 = vld [vmem:[%s9 + $0x8] sm:$0xf]
      %v1153 = vld [vmem:[%s9 + $0xc] sm:$0xf]
      %v1154 = vpack.c.bf16 %v1149, %v1149
      %v1155 = vld [vmem:[%s10] sm:$0x1]
      %v1157 = vlaneseq
      %v1158 = vshrl.u32 %v1157, 7
      %v1159 = vsub.s32 0, %v1158
      %v1160 = vrot.slane %v1155, %v1159
      %v1166 = vunpack.c.l.b16 %v1150
      %v1167 = vunpack.c.l.b16 %v1151
      %v1168 = vunpack.c.l.b16 %v1152
      %v1169 = vunpack.c.l.b16 %v1153
      %v1170 = vpack.c.b16 %v1167, %v1166
      %v1171 = vpack.c.b16 %v1169, %v1168
      %v1175 = vsel %vm494, %v1154, 0
      %1177 = vmatprep.subr.bf16.mxu0 0
      %1178 = vmatpush1.bf16.msra.mxu0 %v1170
      %1179 = vmatprep.subr.bf16.mxu0 0
      %1180 = vmatpush1.bf16.msra.mxu0 %v1171
      %1181 = vmatprep.subr.bf16.mxu0 0
      %1182 = vmatpush1.bf16.msra.mxu0 0
      %1183 = vmatprep.subr.bf16.mxu0 0
      %1184 = vmatpush1.bf16.msra.mxu0 0
      %1185 = vmatprep.subr.bf16.mxu0 0
      %1186 = vmatpush1.bf16.msra.mxu0 0
      %1187 = vmatprep.subr.bf16.mxu0 0
      %1188 = vmatpush1.bf16.msra.mxu0 0
      %1189 = vmatprep.subr.bf16.mxu0 0
      %1190 = vmatpush1.bf16.msra.mxu0 0
      %1191 = vmatprep.subr.bf16.mxu0 0
      %1192 = vmatpush1.bf16.msra.mxu0 0
      %1193 = vmatprep.subr.bf16.mxu0 0
      %1194 = vmatpush1.bf16.msra.mxu0 0
      %1195 = vmatprep.subr.bf16.mxu0 0
      %1196 = vmatpush1.bf16.msra.mxu0 0
      %1197 = vmatprep.subr.bf16.mxu0 0
      %1198 = vmatpush1.bf16.msra.mxu0 0
      %1199 = vmatprep.subr.bf16.mxu0 0
      %1200 = vmatpush1.bf16.msra.mxu0 0
      %1201 = vmatprep.subr.bf16.mxu0 0
      %1202 = vmatpush1.bf16.msra.mxu0 0
      %1203 = vmatprep.subr.bf16.mxu0 0
      %1204 = vmatpush1.bf16.msra.mxu0 0
      %1205 = vmatprep.subr.bf16.mxu0 0
      %1206 = vmatpush1.bf16.msra.mxu0 0
      %1207 = vmatprep.subr.bf16.mxu0 0
      %1208 = vmatpush1.bf16.msra.mxu0 0
      %1209 = vmatprep.mubr.bf16.mxu0 0
      %1210 = vmatmul.mubr.bf16.gmra.mrb[0].mxu0 %v1175
      %v1211 = vpop.f32.mrb[0].mxu0
      %v1212 = vadd.f32 %v1160, %v1211
      %v1213 = vpop.f32.mrb[0].mxu0
      %v1214 = vpop.f32.mrb[0].mxu0
      %v1215 = vpop.f32.mrb[0].mxu0
      %1216 = vdwg.mxu0
      %v1217 = vmax.f32 %v1212, 0.0
      %v1218 = vld [vmem:[%s11] sm:$0xf]
      %v1219 = vld [vmem:[%s11 + $0x4] sm:$0xf]
      %v1220 = vld [vmem:[%s11 + $0x8] sm:$0xf]
      %v1221 = vld [vmem:[%s11 + $0xc] sm:$0xf]
      %v1222 = vld [vmem:[%s11 + $0x10] sm:$0xf]
      %v1223 = vld [vmem:[%s11 + $0x14] sm:$0xf]
      %v1224 = vld [vmem:[%s11 + $0x18] sm:$0xf]
      %v1225 = vld [vmem:[%s11 + $0x1c] sm:$0xf]
      %v1226 = vpack.c.bf16 %v1217, %v1217
      %v1235 = vunpack.c.l.b16 %v1218
      %v1236 = vunpack.c.l.b16 %v1219
      %v1237 = vunpack.c.l.b16 %v1220
      %v1238 = vunpack.c.l.b16 %v1221
      %v1239 = vunpack.c.l.b16 %v1222
      %v1240 = vunpack.c.l.b16 %v1223
      %v1241 = vunpack.c.l.b16 %v1224
      %v1242 = vunpack.c.l.b16 %v1225
      %v1243 = vpack.c.b16 %v1236, %v1235
      %v1244 = vpack.c.b16 %v1238, %v1237
      %v1245 = vpack.c.b16 %v1240, %v1239
      %v1246 = vpack.c.b16 %v1242, %v1241
      %vm1251 = vcmask 523264
      %v1253 = vsel %vm1251, %v1226, 0
      %1255 = vmatprep.subr.bf16.mxu0 0
      %1256 = vmatpush1.bf16.msra.mxu0 %v1243
      %1257 = vmatprep.subr.bf16.mxu0 0
      %1258 = vmatpush1.bf16.msra.mxu0 %v1244
      %1259 = vmatprep.subr.bf16.mxu0 0
      %1260 = vmatpush1.bf16.msra.mxu0 %v1245
      %1261 = vmatprep.subr.bf16.mxu0 0
      %1262 = vmatpush1.bf16.msra.mxu0 %v1246
      %1263 = vmatprep.subr.bf16.mxu0 0
      %1264 = vmatpush1.bf16.msra.mxu0 0
      %1265 = vmatprep.subr.bf16.mxu0 0
      %1266 = vmatpush1.bf16.msra.mxu0 0
      %1267 = vmatprep.subr.bf16.mxu0 0
      %1268 = vmatpush1.bf16.msra.mxu0 0
      %1269 = vmatprep.subr.bf16.mxu0 0
      %1270 = vmatpush1.bf16.msra.mxu0 0
      %1271 = vmatprep.subr.bf16.mxu0 0
      %1272 = vmatpush1.bf16.msra.mxu0 0
      %1273 = vmatprep.subr.bf16.mxu0 0
      %1274 = vmatpush1.bf16.msra.mxu0 0
      %1275 = vmatprep.subr.bf16.mxu0 0
      %1276 = vmatpush1.bf16.msra.mxu0 0
      %1277 = vmatprep.subr.bf16.mxu0 0
      %1278 = vmatpush1.bf16.msra.mxu0 0
      %1279 = vmatprep.subr.bf16.mxu0 0
      %1280 = vmatpush1.bf16.msra.mxu0 0
      %1281 = vmatprep.subr.bf16.mxu0 0
      %1282 = vmatpush1.bf16.msra.mxu0 0
      %1283 = vmatprep.subr.bf16.mxu0 0
      %1284 = vmatpush1.bf16.msra.mxu0 0
      %1285 = vmatprep.subr.bf16.mxu0 0
      %1286 = vmatpush1.bf16.msra.mxu0 0
      %1287 = vmatprep.mubr.bf16.mxu0 0
      %1288 = vmatmul.mubr.bf16.gmra.mrb[0].mxu0 %v1253
      %v1289 = vpop.f32.mrb[0].mxu0
      %v1290 = vadd.f32 0.0, %v1289
      %v1291 = vpop.f32.mrb[0].mxu0
      %v1292 = vpop.f32.mrb[0].mxu0
      %v1293 = vpop.f32.mrb[0].mxu0
      %1294 = vdwg.mxu0
      %v1295 = vadd.f32 %v1120, %v1290
      %v1296 = vld [vmem:[%s12] sm:$0x1]
      %v1298 = vlaneseq
      %v1299 = vshrl.u32 %v1298, 7
      %v1300 = vsub.s32 0, %v1299
      %v1301 = vrot.slane %v1296, %v1300
      %v1303 = vadd.f32 %v1295, %v1301
      %1304 = vst.msk [vmem:[%s489] sm:$0xff] %vm494, %v1303
      %p1305 = scmp.lt.s32.totalorder %s26, 1
      %s1306 = scalar_select %p1305, %s26, 1
      %s1307 = smul.addr %s1306, 8
      %s1308 = scalar_lea.vmem %s15, %s1307
      // Predicated region
      $region81: #{transformer_forward.4} parent=79 // pred_check
        %p1309 = pneg %p364
      $region82: #{transformer_forward.4} parent=79 // pred_check_branch
        %1311 = sbr.rel (%p1309) target = $region84
      $region83: #{transformer_forward.4} parent=79 // pred_region
        _
      $region84: #{transformer_forward.4} parent=79 // pred_fallthru
        _
    $region80: #{transformer_forward.4} parent=5 // pred_fallthru
      _
    %p1312 = scmp.le.s32.totalorder 2, %s21
    // Predicated region
    $region85: #{transformer_forward.4} parent=5 // pred_check
      %p1313 = pneg %p1312
    $region86: #{transformer_forward.4} parent=5 // pred_check_branch
      %1315 = sbr.rel (%p1313) target = $region88
    $region87: #{transformer_forward.4} parent=5 // pred_region
      %s1316 = ssub.s32 %s21, 2
      // Predicated region
      $region89: #{transformer_forward.4} parent=87 // pred_check
        %p1317 = pneg %p370
      $region90: #{transformer_forward.4} parent=87 // pred_check_branch
        %1319 = sbr.rel (%p1317) target = $region92
      $region91: #{transformer_forward.4} parent=87 // pred_region
        %p1320 = scmp.lt.s32.totalorder %s27, 1
        %s1321 = scalar_select %p1320, %s27, 1
        %s1322 = smul.addr %s1321, 8
        %s1323 = scalar_lea.vmem %s15, %s1322
      $region92: #{transformer_forward.4} parent=87 // pred_fallthru
        _
    $region88: #{transformer_forward.4} parent=5 // pred_fallthru
      _
  $region6: #{transformer_forward.4} parent=0 // loop_footer
    %s25 = sadd.s32 1, %s21
  $region7: #{transformer_forward.4} parent=0 // loop_footer_branch
    %20 = sbr.rel target = $region3
  $region8: #{transformer_forward.4} parent=0 // loop_exit
    _

// kernel: transformer_forward.6
$region0: #{transformer_forward.6}
  #allocation0 [shape = 'u32[]', space=smem, size = 0x4, offset = 0x4, fixed_abs, tag = 'smem constant byte address 0x4 - core index']
  #allocation1 [shape = 'u32[144,128]{1,0:T(1,128)}', space=vmem, size = 0x12000, scoped, tag = 'internal scratch']
  %s0 = inlined_call_operand.vmem [shape: f32[2,8,32], index: 0, kind: input, shape index: {}]
  %s1 = inlined_call_operand.vmem [shape: f32[2,8,32], index: 1, kind: input, shape index: {}]
  %s2 = inlined_call_operand.vmem [shape: f32[1,32], index: 2, kind: input, shape index: {}]
  %s3 = inlined_call_operand.vmem [shape: f32[1,32], index: 3, kind: input, shape index: {}]
  %s4 = inlined_call_operand.vmem [shape: bf16[32,96], index: 4, kind: input, shape index: {}]
  %s5 = inlined_call_operand.vmem [shape: f32[1,96], index: 5, kind: input, shape index: {}]
  %s6 = inlined_call_operand.vmem [shape: bf16[32,32], index: 6, kind: input, shape index: {}]
  %s7 = inlined_call_operand.vmem [shape: f32[1,32], index: 7, kind: input, shape index: {}]
  %s8 = inlined_call_operand.vmem [shape: f32[1,32], index: 8, kind: input, shape index: {}]
  %s9 = inlined_call_operand.vmem [shape: f32[1,32], index: 9, kind: input, shape index: {}]
  %s10 = inlined_call_operand.vmem [shape: bf16[32,32], index: 10, kind: input, shape index: {}]
  %s11 = inlined_call_operand.vmem [shape: f32[1,32], index: 11, kind: input, shape index: {}]
  %s12 = inlined_call_operand.vmem [shape: bf16[32,64], index: 12, kind: input, shape index: {}]
  %s13 = inlined_call_operand.vmem [shape: f32[1,64], index: 13, kind: input, shape index: {}]
  %s14 = inlined_call_operand.vmem [shape: bf16[32,32], index: 14, kind: input, shape index: {}]
  %s15 = inlined_call_operand.vmem [shape: f32[1,32], index: 15, kind: input, shape index: {}]
  %s16 = inlined_call_operand.vmem [shape: f32[1,32], index: 16, kind: input, shape index: {}]
  %s17 = inlined_call_operand.vmem [shape: f32[1,32], index: 17, kind: input, shape index: {}]
  %s18 = inlined_call_operand.vmem [shape: bf16[32,64], index: 18, kind: input, shape index: {}]
  %s19 = inlined_call_operand.vmem [shape: f32[1,64], index: 19, kind: input, shape index: {}]
  %s20 = inlined_call_operand.vmem [shape: bf16[64,32], index: 20, kind: input, shape index: {}]
  %s21 = inlined_call_operand.vmem [shape: f32[1,32], index: 21, kind: input, shape index: {}]
  %s22 = inlined_call_operand.vmem [shape: f32[1,32], index: 22, kind: input, shape index: {}]
  %s23 = inlined_call_operand.vmem [shape: f32[1,32], index: 23, kind: input, shape index: {}]
  %s24 = inlined_call_operand.vmem [shape: f32[2,8,32], index: 24, kind: output, shape index: {}]
  %s25 = sld [smem:[#allocation0]]
  $region129: #{transformer_forward.6} parent=0
    _
  %s27 = ssub.s32 1, %s25
  %s28 = scalar_select 0, %s27, %s25
  loop: start=0, step=1, limit=4
  $region2: #{transformer_forward.6} parent=0 // loop_pre_header
    _
  $region3: #{transformer_forward.6} parent=0 // loop_header
    %s30 = sphi 0, %s34
    %p31 = scmp.ge.s32.totalorder %s30, 4
    %s40 = sphi 0, %s42
    %s43 = sphi 0, %s40
    %s44 = sphi 0, %s43
    %s60 = sphi 0, %s44
    %s66 = sphi 0, %s68
    %s69 = sphi 0, %s66
    %s70 = sphi 0, %s69
    %s86 = sphi 0, %s70
    %s90 = sphi 0, %s90
    %s92 = sphi 0, %s90
    %s93 = sphi 0, %s92
    %s107 = sphi 0, %s93
    %s111 = sphi 0, %s111
    %s113 = sphi 0, %s111
    %s114 = sphi 0, %s113
    %s128 = sphi 0, %s114
    %s132 = sphi 0, %s132
    %s134 = sphi 0, %s132
    %s135 = sphi 0, %s134
    %s149 = sphi 0, %s135
    %s153 = sphi 0, %s153
    %s155 = sphi 0, %s153
    %s156 = sphi 0, %s155
    %s170 = sphi 0, %s156
    %s174 = sphi 0, %s174
    %s176 = sphi 0, %s174
    %s177 = sphi 0, %s176
    %s191 = sphi 0, %s177
    %s195 = sphi 0, %s195
    %s197 = sphi 0, %s195
    %s198 = sphi 0, %s197
    %s212 = sphi 0, %s198
    %s216 = sphi 0, %s216
    %s218 = sphi 0, %s216
    %s219 = sphi 0, %s218
    %s233 = sphi 0, %s219
    %s237 = sphi 0, %s237
    %s239 = sphi 0, %s237
    %s240 = sphi 0, %s239
    %s254 = sphi 0, %s240
    %s258 = sphi 0, %s258
    %s260 = sphi 0, %s258
    %s261 = sphi 0, %s260
    %s275 = sphi 0, %s261
    %s279 = sphi 0, %s279
    %s281 = sphi 0, %s279
    %s282 = sphi 0, %s281
    %s296 = sphi 0, %s282
    %s300 = sphi 0, %s300
    %s302 = sphi 0, %s300
    %s303 = sphi 0, %s302
    %s317 = sphi 0, %s303
    %s321 = sphi 0, %s321
    %s323 = sphi 0, %s321
    %s324 = sphi 0, %s323
    %s338 = sphi 0, %s324
    %s342 = sphi 0, %s342
    %s344 = sphi 0, %s342
    %s345 = sphi 0, %s344
    %s359 = sphi 0, %s345
    %s363 = sphi 0, %s363
    %s365 = sphi 0, %s363
    %s366 = sphi 0, %s365
    %s380 = sphi 0, %s366
    %s384 = sphi 0, %s384
    %s386 = sphi 0, %s384
    %s387 = sphi 0, %s386
    %s401 = sphi 0, %s387
    %s405 = sphi 0, %s405
    %s407 = sphi 0, %s405
    %s408 = sphi 0, %s407
    %s422 = sphi 0, %s408
    %s426 = sphi 0, %s426
    %s428 = sphi 0, %s426
    %s429 = sphi 0, %s428
    %s443 = sphi 0, %s429
    %s447 = sphi 0, %s447
    %s449 = sphi 0, %s447
    %s450 = sphi 0, %s449
    %s464 = sphi 0, %s450
    %s468 = sphi 0, %s468
    %s470 = sphi 0, %s468
    %s471 = sphi 0, %s470
    %s485 = sphi 0, %s471
    %s489 = sphi 0, %s489
    %s491 = sphi 0, %s489
    %s492 = sphi 0, %s491
    %s506 = sphi 0, %s492
    %s510 = sphi 0, %s510
    %s512 = sphi 0, %s510
    %s513 = sphi 0, %s512
    %s527 = sphi 0, %s513
    %s531 = sphi 0, %s531
    %s533 = sphi 0, %s531
    %s534 = sphi 0, %s533
    %s548 = sphi 0, %s534
    %s554 = sphi 0, %s556
    %s557 = sphi 0, %s554
    %s558 = sphi 0, %s557
    %s574 = sphi 0, %s558
  $region4: #{transformer_forward.6} parent=0 // loop_header_branch
    %33 = sbr.rel (%p31) target = $region8
  $region5: #{transformer_forward.6} parent=0 // loop_body
    %s35 = ssub.s32 %s30, 1
    %s36 = ssub.s32 %s30, 2
    %s37 = sadd.s32 %s30, 1
    %s38 = ssub.s32 %s30, %s37
    %p39 = scmp.eq.s32.totalorder %s38, 0
    %s41 = sadd.s32 %s40, 1
    %s42 = scalar_select %p39, %s40, %s41
    %p45 = pneg %p39
    %p46 = scmp.eq.s32.totalorder %s30, 1
    %p47 = por %p45, %p46
    %p48 = scmp.ne.s32.totalorder %s40, %s43
    %p49 = scmp.eq.s32.totalorder %s30, 0
    %p50 = por %p48, %p49
    %p51 = scmp.ne.s32.totalorder %s40, %s43
    %p52 = scmp.eq.s32.totalorder %s35, 1
    %p53 = por %p51, %p52
    %p54 = scmp.ne.s32.totalorder %s43, %s44
    %p55 = scmp.eq.s32.totalorder %s35, 0
    %p56 = por %p54, %p55
    %p57 = scmp.ne.s32.totalorder %s43, %s44
    %p58 = scmp.eq.s32.totalorder %s36, 1
    %p59 = por %p57, %p58
    %p61 = scmp.ne.s32.totalorder %s44, %s60
    %p62 = scmp.eq.s32.totalorder %s36, 0
    %p63 = por %p61, %p62
    %s64 = ssub.s32 %s30, %s37
    %p65 = scmp.eq.s32.totalorder %s64, 0
    %s67 = sadd.s32 %s66, 1
    %s68 = scalar_select %p65, %s66, %s67
    %p71 = pneg %p65
    %p72 = scmp.eq.s32.totalorder %s30, 1
    %p73 = por %p71, %p72
    %p74 = scmp.ne.s32.totalorder %s66, %s69
    %p75 = scmp.eq.s32.totalorder %s30, 0
    %p76 = por %p74, %p75
    %p77 = scmp.ne.s32.totalorder %s66, %s69
    %p78 = scmp.eq.s32.totalorder %s35, 1
    %p79 = por %p77, %p78
    %p80 = scmp.ne.s32.totalorder %s69, %s70
    %p81 = scmp.eq.s32.totalorder %s35, 0
    %p82 = por %p80, %p81
    %p83 = scmp.ne.s32.totalorder %s69, %s70
    %p84 = scmp.eq.s32.totalorder %s36, 1
    %p85 = por %p83, %p84
    %p87 = scmp.ne.s32.totalorder %s70, %s86
    %p88 = scmp.eq.s32.totalorder %s36, 0
    %p89 = por %p87, %p88
    %s91 = sadd.s32 %s90, 1
    %p94 = scmp.eq.s32.totalorder %s30, 1
    %p95 = scmp.ne.s32.totalorder %s90, %s92
    %p96 = scmp.eq.s32.totalorder %s30, 0
    %p97 = por %p95, %p96
    %p98 = scmp.ne.s32.totalorder %s90, %s92
    %p99 = scmp.eq.s32.totalorder %s35, 1
    %p100 = por %p98, %p99
    %p101 = scmp.ne.s32.totalorder %s92, %s93
    %p102 = scmp.eq.s32.totalorder %s35, 0
    %p103 = por %p101, %p102
    %p104 = scmp.ne.s32.totalorder %s92, %s93
    %p105 = scmp.eq.s32.totalorder %s36, 1
    %p106 = por %p104, %p105
    %p108 = scmp.ne.s32.totalorder %s93, %s107
    %p109 = scmp.eq.s32.totalorder %s36, 0
    %p110 = por %p108, %p109
    %s112 = sadd.s32 %s111, 1
    %p115 = scmp.eq.s32.totalorder %s30, 1
    %p116 = scmp.ne.s32.totalorder %s111, %s113
    %p117 = scmp.eq.s32.totalorder %s30, 0
    %p118 = por %p116, %p117
    %p119 = scmp.ne.s32.totalorder %s111, %s113
    %p120 = scmp.eq.s32.totalorder %s35, 1
    %p121 = por %p119, %p120
    %p122 = scmp.ne.s32.totalorder %s113, %s114
    %p123 = scmp.eq.s32.totalorder %s35, 0
    %p124 = por %p122, %p123
    %p125 = scmp.ne.s32.totalorder %s113, %s114
    %p126 = scmp.eq.s32.totalorder %s36, 1
    %p127 = por %p125, %p126
    %p129 = scmp.ne.s32.totalorder %s114, %s128
    %p130 = scmp.eq.s32.totalorder %s36, 0
    %p131 = por %p129, %p130
    %s133 = sadd.s32 %s132, 1
    %p136 = scmp.eq.s32.totalorder %s30, 1
    %p137 = scmp.ne.s32.totalorder %s132, %s134
    %p138 = scmp.eq.s32.totalorder %s30, 0
    %p139 = por %p137, %p138
    %p140 = scmp.ne.s32.totalorder %s132, %s134
    %p141 = scmp.eq.s32.totalorder %s35, 1
    %p142 = por %p140, %p141
    %p143 = scmp.ne.s32.totalorder %s134, %s135
    %p144 = scmp.eq.s32.totalorder %s35, 0
    %p145 = por %p143, %p144
    %p146 = scmp.ne.s32.totalorder %s134, %s135
    %p147 = scmp.eq.s32.totalorder %s36, 1
    %p148 = por %p146, %p147
    %p150 = scmp.ne.s32.totalorder %s135, %s149
    %p151 = scmp.eq.s32.totalorder %s36, 0
    %p152 = por %p150, %p151
    %s154 = sadd.s32 %s153, 1
    %p157 = scmp.eq.s32.totalorder %s30, 1
    %p158 = scmp.ne.s32.totalorder %s153, %s155
    %p159 = scmp.eq.s32.totalorder %s30, 0
    %p160 = por %p158, %p159
    %p161 = scmp.ne.s32.totalorder %s153, %s155
    %p162 = scmp.eq.s32.totalorder %s35, 1
    %p163 = por %p161, %p162
    %p164 = scmp.ne.s32.totalorder %s155, %s156
    %p165 = scmp.eq.s32.totalorder %s35, 0
    %p166 = por %p164, %p165
    %p167 = scmp.ne.s32.totalorder %s155, %s156
    %p168 = scmp.eq.s32.totalorder %s36, 1
    %p169 = por %p167, %p168
    %p171 = scmp.ne.s32.totalorder %s156, %s170
    %p172 = scmp.eq.s32.totalorder %s36, 0
    %p173 = por %p171, %p172
    %s175 = sadd.s32 %s174, 1
    %p178 = scmp.eq.s32.totalorder %s30, 1
    %p179 = scmp.ne.s32.totalorder %s174, %s176
    %p180 = scmp.eq.s32.totalorder %s30, 0
    %p181 = por %p179, %p180
    %p182 = scmp.ne.s32.totalorder %s174, %s176
    %p183 = scmp.eq.s32.totalorder %s35, 1
    %p184 = por %p182, %p183
    %p185 = scmp.ne.s32.totalorder %s176, %s177
    %p186 = scmp.eq.s32.totalorder %s35, 0
    %p187 = por %p185, %p186
    %p188 = scmp.ne.s32.totalorder %s176, %s177
    %p189 = scmp.eq.s32.totalorder %s36, 1
    %p190 = por %p188, %p189
    %p192 = scmp.ne.s32.totalorder %s177, %s191
    %p193 = scmp.eq.s32.totalorder %s36, 0
    %p194 = por %p192, %p193
    %s196 = sadd.s32 %s195, 1
    %p199 = scmp.eq.s32.totalorder %s30, 1
    %p200 = scmp.ne.s32.totalorder %s195, %s197
    %p201 = scmp.eq.s32.totalorder %s30, 0
    %p202 = por %p200, %p201
    %p203 = scmp.ne.s32.totalorder %s195, %s197
    %p204 = scmp.eq.s32.totalorder %s35, 1
    %p205 = por %p203, %p204
    %p206 = scmp.ne.s32.totalorder %s197, %s198
    %p207 = scmp.eq.s32.totalorder %s35, 0
    %p208 = por %p206, %p207
    %p209 = scmp.ne.s32.totalorder %s197, %s198
    %p210 = scmp.eq.s32.totalorder %s36, 1
    %p211 = por %p209, %p210
    %p213 = scmp.ne.s32.totalorder %s198, %s212
    %p214 = scmp.eq.s32.totalorder %s36, 0
    %p215 = por %p213, %p214
    %s217 = sadd.s32 %s216, 1
    %p220 = scmp.eq.s32.totalorder %s30, 1
    %p221 = scmp.ne.s32.totalorder %s216, %s218
    %p222 = scmp.eq.s32.totalorder %s30, 0
    %p223 = por %p221, %p222
    %p224 = scmp.ne.s32.totalorder %s216, %s218
    %p225 = scmp.eq.s32.totalorder %s35, 1
    %p226 = por %p224, %p225
    %p227 = scmp.ne.s32.totalorder %s218, %s219
    %p228 = scmp.eq.s32.totalorder %s35, 0
    %p229 = por %p227, %p228
    %p230 = scmp.ne.s32.totalorder %s218, %s219
    %p231 = scmp.eq.s32.totalorder %s36, 1
    %p232 = por %p230, %p231
    %p234 = scmp.ne.s32.totalorder %s219, %s233
    %p235 = scmp.eq.s32.totalorder %s36, 0
    %p236 = por %p234, %p235
    %s238 = sadd.s32 %s237, 1
    %p241 = scmp.eq.s32.totalorder %s30, 1
    %p242 = scmp.ne.s32.totalorder %s237, %s239
    %p243 = scmp.eq.s32.totalorder %s30, 0
    %p244 = por %p242, %p243
    %p245 = scmp.ne.s32.totalorder %s237, %s239
    %p246 = scmp.eq.s32.totalorder %s35, 1
    %p247 = por %p245, %p246
    %p248 = scmp.ne.s32.totalorder %s239, %s240
    %p249 = scmp.eq.s32.totalorder %s35, 0
    %p250 = por %p248, %p249
    %p251 = scmp.ne.s32.totalorder %s239, %s240
    %p252 = scmp.eq.s32.totalorder %s36, 1
    %p253 = por %p251, %p252
    %p255 = scmp.ne.s32.totalorder %s240, %s254
    %p256 = scmp.eq.s32.totalorder %s36, 0
    %p257 = por %p255, %p256
    %s259 = sadd.s32 %s258, 1
    %p262 = scmp.eq.s32.totalorder %s30, 1
    %p263 = scmp.ne.s32.totalorder %s258, %s260
    %p264 = scmp.eq.s32.totalorder %s30, 0
    %p265 = por %p263, %p264
    %p266 = scmp.ne.s32.totalorder %s258, %s260
    %p267 = scmp.eq.s32.totalorder %s35, 1
    %p268 = por %p266, %p267
    %p269 = scmp.ne.s32.totalorder %s260, %s261
    %p270 = scmp.eq.s32.totalorder %s35, 0
    %p271 = por %p269, %p270
    %p272 = scmp.ne.s32.totalorder %s260, %s261
    %p273 = scmp.eq.s32.totalorder %s36, 1
    %p274 = por %p272, %p273
    %p276 = scmp.ne.s32.totalorder %s261, %s275
    %p277 = scmp.eq.s32.totalorder %s36, 0
    %p278 = por %p276, %p277
    %s280 = sadd.s32 %s279, 1
    %p283 = scmp.eq.s32.totalorder %s30, 1
    %p284 = scmp.ne.s32.totalorder %s279, %s281
    %p285 = scmp.eq.s32.totalorder %s30, 0
    %p286 = por %p284, %p285
    %p287 = scmp.ne.s32.totalorder %s279, %s281
    %p288 = scmp.eq.s32.totalorder %s35, 1
    %p289 = por %p287, %p288
    %p290 = scmp.ne.s32.totalorder %s281, %s282
    %p291 = scmp.eq.s32.totalorder %s35, 0
    %p292 = por %p290, %p291
    %p293 = scmp.ne.s32.totalorder %s281, %s282
    %p294 = scmp.eq.s32.totalorder %s36, 1
    %p295 = por %p293, %p294
    %p297 = scmp.ne.s32.totalorder %s282, %s296
    %p298 = scmp.eq.s32.totalorder %s36, 0
    %p299 = por %p297, %p298
    %s301 = sadd.s32 %s300, 1
    %p304 = scmp.eq.s32.totalorder %s30, 1
    %p305 = scmp.ne.s32.totalorder %s300, %s302
    %p306 = scmp.eq.s32.totalorder %s30, 0
    %p307 = por %p305, %p306
    %p308 = scmp.ne.s32.totalorder %s300, %s302
    %p309 = scmp.eq.s32.totalorder %s35, 1
    %p310 = por %p308, %p309
    %p311 = scmp.ne.s32.totalorder %s302, %s303
    %p312 = scmp.eq.s32.totalorder %s35, 0
    %p313 = por %p311, %p312
    %p314 = scmp.ne.s32.totalorder %s302, %s303
    %p315 = scmp.eq.s32.totalorder %s36, 1
    %p316 = por %p314, %p315
    %p318 = scmp.ne.s32.totalorder %s303, %s317
    %p319 = scmp.eq.s32.totalorder %s36, 0
    %p320 = por %p318, %p319
    %s322 = sadd.s32 %s321, 1
    %p325 = scmp.eq.s32.totalorder %s30, 1
    %p326 = scmp.ne.s32.totalorder %s321, %s323
    %p327 = scmp.eq.s32.totalorder %s30, 0
    %p328 = por %p326, %p327
    %p329 = scmp.ne.s32.totalorder %s321, %s323
    %p330 = scmp.eq.s32.totalorder %s35, 1
    %p331 = por %p329, %p330
    %p332 = scmp.ne.s32.totalorder %s323, %s324
    %p333 = scmp.eq.s32.totalorder %s35, 0
    %p334 = por %p332, %p333
    %p335 = scmp.ne.s32.totalorder %s323, %s324
    %p336 = scmp.eq.s32.totalorder %s36, 1
    %p337 = por %p335, %p336
    %p339 = scmp.ne.s32.totalorder %s324, %s338
    %p340 = scmp.eq.s32.totalorder %s36, 0
    %p341 = por %p339, %p340
    %s343 = sadd.s32 %s342, 1
    %p346 = scmp.eq.s32.totalorder %s30, 1
    %p347 = scmp.ne.s32.totalorder %s342, %s344
    %p348 = scmp.eq.s32.totalorder %s30, 0
    %p349 = por %p347, %p348
    %p350 = scmp.ne.s32.totalorder %s342, %s344
    %p351 = scmp.eq.s32.totalorder %s35, 1
    %p352 = por %p350, %p351
    %p353 = scmp.ne.s32.totalorder %s344, %s345
    %p354 = scmp.eq.s32.totalorder %s35, 0
    %p355 = por %p353, %p354
    %p356 = scmp.ne.s32.totalorder %s344, %s345
    %p357 = scmp.eq.s32.totalorder %s36, 1
    %p358 = por %p356, %p357
    %p360 = scmp.ne.s32.totalorder %s345, %s359
    %p361 = scmp.eq.s32.totalorder %s36, 0
    %p362 = por %p360, %p361
    %s364 = sadd.s32 %s363, 1
    %p367 = scmp.eq.s32.totalorder %s30, 1
    %p368 = scmp.ne.s32.totalorder %s363, %s365
    %p369 = scmp.eq.s32.totalorder %s30, 0
    %p370 = por %p368, %p369
    %p371 = scmp.ne.s32.totalorder %s363, %s365
    %p372 = scmp.eq.s32.totalorder %s35, 1
    %p373 = por %p371, %p372
    %p374 = scmp.ne.s32.totalorder %s365, %s366
    %p375 = scmp.eq.s32.totalorder %s35, 0
    %p376 = por %p374, %p375
    %p377 = scmp.ne.s32.totalorder %s365, %s366
    %p378 = scmp.eq.s32.totalorder %s36, 1
    %p379 = por %p377, %p378
    %p381 = scmp.ne.s32.totalorder %s366, %s380
    %p382 = scmp.eq.s32.totalorder %s36, 0
    %p383 = por %p381, %p382
    %s385 = sadd.s32 %s384, 1
    %p388 = scmp.eq.s32.totalorder %s30, 1
    %p389 = scmp.ne.s32.totalorder %s384, %s386
    %p390 = scmp.eq.s32.totalorder %s30, 0
    %p391 = por %p389, %p390
    %p392 = scmp.ne.s32.totalorder %s384, %s386
    %p393 = scmp.eq.s32.totalorder %s35, 1
    %p394 = por %p392, %p393
    %p395 = scmp.ne.s32.totalorder %s386, %s387
    %p396 = scmp.eq.s32.totalorder %s35, 0
    %p397 = por %p395, %p396
    %p398 = scmp.ne.s32.totalorder %s386, %s387
    %p399 = scmp.eq.s32.totalorder %s36, 1
    %p400 = por %p398, %p399
    %p402 = scmp.ne.s32.totalorder %s387, %s401
    %p403 = scmp.eq.s32.totalorder %s36, 0
    %p404 = por %p402, %p403
    %s406 = sadd.s32 %s405, 1
    %p409 = scmp.eq.s32.totalorder %s30, 1
    %p410 = scmp.ne.s32.totalorder %s405, %s407
    %p411 = scmp.eq.s32.totalorder %s30, 0
    %p412 = por %p410, %p411
    %p413 = scmp.ne.s32.totalorder %s405, %s407
    %p414 = scmp.eq.s32.totalorder %s35, 1
    %p415 = por %p413, %p414
    %p416 = scmp.ne.s32.totalorder %s407, %s408
    %p417 = scmp.eq.s32.totalorder %s35, 0
    %p418 = por %p416, %p417
    %p419 = scmp.ne.s32.totalorder %s407, %s408
    %p420 = scmp.eq.s32.totalorder %s36, 1
    %p421 = por %p419, %p420
    %p423 = scmp.ne.s32.totalorder %s408, %s422
    %p424 = scmp.eq.s32.totalorder %s36, 0
    %p425 = por %p423, %p424
    %s427 = sadd.s32 %s426, 1
    %p430 = scmp.eq.s32.totalorder %s30, 1
    %p431 = scmp.ne.s32.totalorder %s426, %s428
    %p432 = scmp.eq.s32.totalorder %s30, 0
    %p433 = por %p431, %p432
    %p434 = scmp.ne.s32.totalorder %s426, %s428
    %p435 = scmp.eq.s32.totalorder %s35, 1
    %p436 = por %p434, %p435
    %p437 = scmp.ne.s32.totalorder %s428, %s429
    %p438 = scmp.eq.s32.totalorder %s35, 0
    %p439 = por %p437, %p438
    %p440 = scmp.ne.s32.totalorder %s428, %s429
    %p441 = scmp.eq.s32.totalorder %s36, 1
    %p442 = por %p440, %p441
    %p444 = scmp.ne.s32.totalorder %s429, %s443
    %p445 = scmp.eq.s32.totalorder %s36, 0
    %p446 = por %p444, %p445
    %s448 = sadd.s32 %s447, 1
    %p451 = scmp.eq.s32.totalorder %s30, 1
    %p452 = scmp.ne.s32.totalorder %s447, %s449
    %p453 = scmp.eq.s32.totalorder %s30, 0
    %p454 = por %p452, %p453
    %p455 = scmp.ne.s32.totalorder %s447, %s449
    %p456 = scmp.eq.s32.totalorder %s35, 1
    %p457 = por %p455, %p456
    %p458 = scmp.ne.s32.totalorder %s449, %s450
    %p459 = scmp.eq.s32.totalorder %s35, 0
    %p460 = por %p458, %p459
    %p461 = scmp.ne.s32.totalorder %s449, %s450
    %p462 = scmp.eq.s32.totalorder %s36, 1
    %p463 = por %p461, %p462
    %p465 = scmp.ne.s32.totalorder %s450, %s464
    %p466 = scmp.eq.s32.totalorder %s36, 0
    %p467 = por %p465, %p466
    %s469 = sadd.s32 %s468, 1
    %p472 = scmp.eq.s32.totalorder %s30, 1
    %p473 = scmp.ne.s32.totalorder %s468, %s470
    %p474 = scmp.eq.s32.totalorder %s30, 0
    %p475 = por %p473, %p474
    %p476 = scmp.ne.s32.totalorder %s468, %s470
    %p477 = scmp.eq.s32.totalorder %s35, 1
    %p478 = por %p476, %p477
    %p479 = scmp.ne.s32.totalorder %s470, %s471
    %p480 = scmp.eq.s32.totalorder %s35, 0
    %p481 = por %p479, %p480
    %p482 = scmp.ne.s32.totalorder %s470, %s471
    %p483 = scmp.eq.s32.totalorder %s36, 1
    %p484 = por %p482, %p483
    %p486 = scmp.ne.s32.totalorder %s471, %s485
    %p487 = scmp.eq.s32.totalorder %s36, 0
    %p488 = por %p486, %p487
    %s490 = sadd.s32 %s489, 1
    %p493 = scmp.eq.s32.totalorder %s30, 1
    %p494 = scmp.ne.s32.totalorder %s489, %s491
    %p495 = scmp.eq.s32.totalorder %s30, 0
    %p496 = por %p494, %p495
    %p497 = scmp.ne.s32.totalorder %s489, %s491
    %p498 = scmp.eq.s32.totalorder %s35, 1
    %p499 = por %p497, %p498
    %p500 = scmp.ne.s32.totalorder %s491, %s492
    %p501 = scmp.eq.s32.totalorder %s35, 0
    %p502 = por %p500, %p501
    %p503 = scmp.ne.s32.totalorder %s491, %s492
    %p504 = scmp.eq.s32.totalorder %s36, 1
    %p505 = por %p503, %p504
    %p507 = scmp.ne.s32.totalorder %s492, %s506
    %p508 = scmp.eq.s32.totalorder %s36, 0
    %p509 = por %p507, %p508
    %s511 = sadd.s32 %s510, 1
    %p514 = scmp.eq.s32.totalorder %s30, 1
    %p515 = scmp.ne.s32.totalorder %s510, %s512
    %p516 = scmp.eq.s32.totalorder %s30, 0
    %p517 = por %p515, %p516
    %p518 = scmp.ne.s32.totalorder %s510, %s512
    %p519 = scmp.eq.s32.totalorder %s35, 1
    %p520 = por %p518, %p519
    %p521 = scmp.ne.s32.totalorder %s512, %s513
    %p522 = scmp.eq.s32.totalorder %s35, 0
    %p523 = por %p521, %p522
    %p524 = scmp.ne.s32.totalorder %s512, %s513
    %p525 = scmp.eq.s32.totalorder %s36, 1
    %p526 = por %p524, %p525
    %p528 = scmp.ne.s32.totalorder %s513, %s527
    %p529 = scmp.eq.s32.totalorder %s36, 0
    %p530 = por %p528, %p529
    %s532 = sadd.s32 %s531, 1
    %p535 = scmp.eq.s32.totalorder %s30, 1
    %p536 = scmp.ne.s32.totalorder %s531, %s533
    %p537 = scmp.eq.s32.totalorder %s30, 0
    %p538 = por %p536, %p537
    %p539 = scmp.ne.s32.totalorder %s531, %s533
    %p540 = scmp.eq.s32.totalorder %s35, 1
    %p541 = por %p539, %p540
    %p542 = scmp.ne.s32.totalorder %s533, %s534
    %p543 = scmp.eq.s32.totalorder %s35, 0
    %p544 = por %p542, %p543
    %p545 = scmp.ne.s32.totalorder %s533, %s534
    %p546 = scmp.eq.s32.totalorder %s36, 1
    %p547 = por %p545, %p546
    %p549 = scmp.ne.s32.totalorder %s534, %s548
    %p550 = scmp.eq.s32.totalorder %s36, 0
    %p551 = por %p549, %p550
    %s552 = ssub.s32 %s30, %s37
    %p553 = scmp.eq.s32.totalorder %s552, 0
    %s555 = sadd.s32 %s554, 1
    %s556 = scalar_select %p553, %s554, %s555
    %p559 = pneg %p553
    %p560 = scmp.eq.s32.totalorder %s30, 1
    %p561 = por %p559, %p560
    %p562 = scmp.ne.s32.totalorder %s554, %s557
    %p563 = scmp.eq.s32.totalorder %s30, 0
    %p564 = por %p562, %p563
    %p565 = scmp.ne.s32.totalorder %s554, %s557
    %p566 = scmp.eq.s32.totalorder %s35, 1
    %p567 = por %p565, %p566
    %p568 = scmp.ne.s32.totalorder %s557, %s558
    %p569 = scmp.eq.s32.totalorder %s35, 0
    %p570 = por %p568, %p569
    %p571 = scmp.ne.s32.totalorder %s557, %s558
    %p572 = scmp.eq.s32.totalorder %s36, 1
    %p573 = por %p571, %p572
    %p575 = scmp.ne.s32.totalorder %s558, %s574
    %p576 = scmp.eq.s32.totalorder %s36, 0
    %p577 = por %p575, %p576
    %p578 = scmp.le.s32.totalorder 1, %s30
    %p579 = scmp.lt.s32.totalorder %s30, 3
    %p580 = pnand %p578, %p579
    %p581 = pneg %p580
    // Predicated region
    $region9: #{transformer_forward.6} parent=5 // pred_check
      _
    $region10: #{transformer_forward.6} parent=5 // pred_check_branch
      %583 = sbr.rel (%p580) target = $region12
    $region11: #{transformer_forward.6} parent=5 // pred_region
      %s584 = ssub.s32 %s30, 1
      // Predicated region
      $region13: #{transformer_forward.6} parent=11 // pred_check
        %p585 = pneg %p103
      $region14: #{transformer_forward.6} parent=11 // pred_check_branch
        %587 = sbr.rel (%p585) target = $region16
      $region15: #{transformer_forward.6} parent=11 // pred_region
        _
      $region16: #{transformer_forward.6} parent=11 // pred_fallthru
        _
      // Predicated region
      $region17: #{transformer_forward.6} parent=11 // pred_check
        %p588 = pneg %p124
      $region18: #{transformer_forward.6} parent=11 // pred_check_branch
        %590 = sbr.rel (%p588) target = $region20
      $region19: #{transformer_forward.6} parent=11 // pred_region
        _
      $region20: #{transformer_forward.6} parent=11 // pred_fallthru
        _
      // Predicated region
      $region21: #{transformer_forward.6} parent=11 // pred_check
        %p591 = pneg %p145
      $region22: #{transformer_forward.6} parent=11 // pred_check_branch
        %593 = sbr.rel (%p591) target = $region24
      $region23: #{transformer_forward.6} parent=11 // pred_region
        _
      $region24: #{transformer_forward.6} parent=11 // pred_fallthru
        _
      // Predicated region
      $region25: #{transformer_forward.6} parent=11 // pred_check
        %p594 = pneg %p166
      $region26: #{transformer_forward.6} parent=11 // pred_check_branch
        %596 = sbr.rel (%p594) target = $region28
      $region27: #{transformer_forward.6} parent=11 // pred_region
        _
      $region28: #{transformer_forward.6} parent=11 // pred_fallthru
        _
      // Predicated region
      $region29: #{transformer_forward.6} parent=11 // pred_check
        %p597 = pneg %p187
      $region30: #{transformer_forward.6} parent=11 // pred_check_branch
        %599 = sbr.rel (%p597) target = $region32
      $region31: #{transformer_forward.6} parent=11 // pred_region
        _
      $region32: #{transformer_forward.6} parent=11 // pred_fallthru
        _
      // Predicated region
      $region33: #{transformer_forward.6} parent=11 // pred_check
        %p600 = pneg %p208
      $region34: #{transformer_forward.6} parent=11 // pred_check_branch
        %602 = sbr.rel (%p600) target = $region36
      $region35: #{transformer_forward.6} parent=11 // pred_region
        _
      $region36: #{transformer_forward.6} parent=11 // pred_fallthru
        _
      // Predicated region
      $region37: #{transformer_forward.6} parent=11 // pred_check
        %p603 = pneg %p229
      $region38: #{transformer_forward.6} parent=11 // pred_check_branch
        %605 = sbr.rel (%p603) target = $region40
      $region39: #{transformer_forward.6} parent=11 // pred_region
        _
      $region40: #{transformer_forward.6} parent=11 // pred_fallthru
        _
      // Predicated region
      $region41: #{transformer_forward.6} parent=11 // pred_check
        %p606 = pneg %p250
      $region42: #{transformer_forward.6} parent=11 // pred_check_branch
        %608 = sbr.rel (%p606) target = $region44
      $region43: #{transformer_forward.6} parent=11 // pred_region
        _
      $region44: #{transformer_forward.6} parent=11 // pred_fallthru
        _
      // Predicated region
      $region45: #{transformer_forward.6} parent=11 // pred_check
        %p609 = pneg %p271
      $region46: #{transformer_forward.6} parent=11 // pred_check_branch
        %611 = sbr.rel (%p609) target = $region48
      $region47: #{transformer_forward.6} parent=11 // pred_region
        _
      $region48: #{transformer_forward.6} parent=11 // pred_fallthru
        _
      // Predicated region
      $region49: #{transformer_forward.6} parent=11 // pred_check
        %p612 = pneg %p292
      $region50: #{transformer_forward.6} parent=11 // pred_check_branch
        %614 = sbr.rel (%p612) target = $region52
      $region51: #{transformer_forward.6} parent=11 // pred_region
        _
      $region52: #{transformer_forward.6} parent=11 // pred_fallthru
        _
      // Predicated region
      $region53: #{transformer_forward.6} parent=11 // pred_check
        %p615 = pneg %p313
      $region54: #{transformer_forward.6} parent=11 // pred_check_branch
        %617 = sbr.rel (%p615) target = $region56
      $region55: #{transformer_forward.6} parent=11 // pred_region
        _
      $region56: #{transformer_forward.6} parent=11 // pred_fallthru
        _
      // Predicated region
      $region57: #{transformer_forward.6} parent=11 // pred_check
        %p618 = pneg %p334
      $region58: #{transformer_forward.6} parent=11 // pred_check_branch
        %620 = sbr.rel (%p618) target = $region60
      $region59: #{transformer_forward.6} parent=11 // pred_region
        _
      $region60: #{transformer_forward.6} parent=11 // pred_fallthru
        _
      // Predicated region
      $region61: #{transformer_forward.6} parent=11 // pred_check
        %p621 = pneg %p355
      $region62: #{transformer_forward.6} parent=11 // pred_check_branch
        %623 = sbr.rel (%p621) target = $region64
      $region63: #{transformer_forward.6} parent=11 // pred_region
        _
      $region64: #{transformer_forward.6} parent=11 // pred_fallthru
        _
      // Predicated region
      $region65: #{transformer_forward.6} parent=11 // pred_check
        %p624 = pneg %p376
      $region66: #{transformer_forward.6} parent=11 // pred_check_branch
        %626 = sbr.rel (%p624) target = $region68
      $region67: #{transformer_forward.6} parent=11 // pred_region
        _
      $region68: #{transformer_forward.6} parent=11 // pred_fallthru
        _
      // Predicated region
      $region69: #{transformer_forward.6} parent=11 // pred_check
        %p627 = pneg %p397
      $region70: #{transformer_forward.6} parent=11 // pred_check_branch
        %629 = sbr.rel (%p627) target = $region72
      $region71: #{transformer_forward.6} parent=11 // pred_region
        _
      $region72: #{transformer_forward.6} parent=11 // pred_fallthru
        _
      // Predicated region
      $region73: #{transformer_forward.6} parent=11 // pred_check
        %p630 = pneg %p418
      $region74: #{transformer_forward.6} parent=11 // pred_check_branch
        %632 = sbr.rel (%p630) target = $region76
      $region75: #{transformer_forward.6} parent=11 // pred_region
        _
      $region76: #{transformer_forward.6} parent=11 // pred_fallthru
        _
      // Predicated region
      $region77: #{transformer_forward.6} parent=11 // pred_check
        %p633 = pneg %p439
      $region78: #{transformer_forward.6} parent=11 // pred_check_branch
        %635 = sbr.rel (%p633) target = $region80
      $region79: #{transformer_forward.6} parent=11 // pred_region
        _
      $region80: #{transformer_forward.6} parent=11 // pred_fallthru
        _
      // Predicated region
      $region81: #{transformer_forward.6} parent=11 // pred_check
        %p636 = pneg %p460
      $region82: #{transformer_forward.6} parent=11 // pred_check_branch
        %638 = sbr.rel (%p636) target = $region84
      $region83: #{transformer_forward.6} parent=11 // pred_region
        _
      $region84: #{transformer_forward.6} parent=11 // pred_fallthru
        _
      // Predicated region
      $region85: #{transformer_forward.6} parent=11 // pred_check
        %p639 = pneg %p481
      $region86: #{transformer_forward.6} parent=11 // pred_check_branch
        %641 = sbr.rel (%p639) target = $region88
      $region87: #{transformer_forward.6} parent=11 // pred_region
        _
      $region88: #{transformer_forward.6} parent=11 // pred_fallthru
        _
      // Predicated region
      $region89: #{transformer_forward.6} parent=11 // pred_check
        %p642 = pneg %p502
      $region90: #{transformer_forward.6} parent=11 // pred_check_branch
        %644 = sbr.rel (%p642) target = $region92
      $region91: #{transformer_forward.6} parent=11 // pred_region
        _
      $region92: #{transformer_forward.6} parent=11 // pred_fallthru
        _
      // Predicated region
      $region93: #{transformer_forward.6} parent=11 // pred_check
        %p645 = pneg %p523
      $region94: #{transformer_forward.6} parent=11 // pred_check_branch
        %647 = sbr.rel (%p645) target = $region96
      $region95: #{transformer_forward.6} parent=11 // pred_region
        _
      $region96: #{transformer_forward.6} parent=11 // pred_fallthru
        _
      // Predicated region
      $region97: #{transformer_forward.6} parent=11 // pred_check
        %p648 = pneg %p544
      $region98: #{transformer_forward.6} parent=11 // pred_check_branch
        %650 = sbr.rel (%p648) target = $region100
      $region99: #{transformer_forward.6} parent=11 // pred_region
        _
      $region100: #{transformer_forward.6} parent=11 // pred_fallthru
        _
    $region12: #{transformer_forward.6} parent=5 // pred_fallthru
      _
    %p651 = scmp.lt.s32.totalorder %s30, 2
    // Predicated region
    $region101: #{transformer_forward.6} parent=5 // pred_check
      %p652 = pneg %p651
    $region102: #{transformer_forward.6} parent=5 // pred_check_branch
      %654 = sbr.rel (%p652) target = $region104
    $region103: #{transformer_forward.6} parent=5 // pred_region
      // Predicated region
      $region105: #{transformer_forward.6} parent=103 // pred_check
        %p655 = pneg %p50
      $region106: #{transformer_forward.6} parent=103 // pred_check_branch
        %657 = sbr.rel (%p655) target = $region108
      $region107: #{transformer_forward.6} parent=103 // pred_region
        %p658 = scmp.lt.s32.totalorder %s30, 1
        %s659 = scalar_select %p658, %s30, 1
        %s660 = smul.addr %s659, 8
        %s661 = scalar_lea.vmem %s0, %s660
      $region108: #{transformer_forward.6} parent=103 // pred_fallthru
        _
      // Predicated region
      $region109: #{transformer_forward.6} parent=103 // pred_check
        %p662 = pneg %p76
      $region110: #{transformer_forward.6} parent=103 // pred_check_branch
        %664 = sbr.rel (%p662) target = $region112
      $region111: #{transformer_forward.6} parent=103 // pred_region
        %p665 = scmp.lt.s32.totalorder %s30, 1
        %s666 = scalar_select %p665, %s30, 1
        %s667 = smul.addr %s666, 8
        %s668 = scalar_lea.vmem %s1, %s667
      $region112: #{transformer_forward.6} parent=103 // pred_fallthru
        _
    $region104: #{transformer_forward.6} parent=5 // pred_fallthru
      _
    %p669 = scmp.le.s32.totalorder 1, %s30
    %p670 = scmp.lt.s32.totalorder %s30, 3
    %p671 = pnand %p669, %p670
    %p672 = pneg %p671
    // Predicated region
    $region113: #{transformer_forward.6} parent=5 // pred_check
      _
    $region114: #{transformer_forward.6} parent=5 // pred_check_branch
      %674 = sbr.rel (%p671) target = $region116
    $region115: #{transformer_forward.6} parent=5 // pred_region
      %s675 = ssub.s32 %s30, 1
      %p676 = scmp.lt.s32.totalorder %s35, 1
      %s677 = scalar_select %p676, %s35, 1
      %s678 = smul.addr %s677, 8
      %s679 = scalar_lea.vmem %s0, %s678
      %p680 = pneg %p56
      %p681 = pneg %p53
      %p682 = scmp.lt.s32.totalorder %s35, 1
      %s683 = scalar_select %p682, %s35, 1
      %s684 = smul.addr %s683, 8
      %s685 = scalar_lea.vmem %s1, %s684
      %p686 = pneg %p82
      %p687 = pneg %p79
      %p688 = pneg %p103
      %p689 = pneg %p100
      %p690 = pneg %p124
      %p691 = pneg %p121
      %p692 = pneg %p145
      %p693 = pneg %p142
      %p694 = pneg %p166
      %p695 = pneg %p163
      %p696 = pneg %p187
      %p697 = pneg %p184
      %p698 = pneg %p208
      %p699 = pneg %p205
      %p700 = pneg %p229
      %p701 = pneg %p226
      %p702 = pneg %p250
      %p703 = pneg %p247
      %p704 = pneg %p271
      %p705 = pneg %p268
      %p706 = pneg %p292
      %p707 = pneg %p289
      %p708 = pneg %p313
      %p709 = pneg %p310
      %p710 = pneg %p334
      %p711 = pneg %p331
      %p712 = pneg %p355
      %p713 = pneg %p352
      %p714 = pneg %p376
      %p715 = pneg %p373
      %p716 = pneg %p397
      %p717 = pneg %p394
      %p718 = pneg %p418
      %p719 = pneg %p415
      %p720 = pneg %p439
      %p721 = pneg %p436
      %p722 = pneg %p460
      %p723 = pneg %p457
      %p724 = pneg %p481
      %p725 = pneg %p478
      %p726 = pneg %p502
      %p727 = pneg %p499
      %p728 = pneg %p523
      %p729 = pneg %p520
      %p730 = pneg %p544
      %p731 = pneg %p541
      %p732 = pneg %p570
      %p733 = pneg %p567
      %p734 = scmp.lt.s32.totalorder %s35, 1
      %s735 = scalar_select %p734, %s35, 1
      %s736 = smul.addr %s735, 8
      %s737 = scalar_lea.vmem %s24, %s736
      %p738 = scmp.lt.s32.totalorder %s35, 1
      %s739 = scalar_select %p738, %s35, 1
      %s740 = smul.addr %s739, 8
      %s741 = scalar_lea.vmem %s0, %s740
      %p742 = scmp.lt.s32.totalorder %s35, 1
      %s743 = scalar_select %p742, %s35, 1
      %s744 = smul.addr %s743, 8
      %s745 = scalar_lea.vmem %s1, %s744
      %p746 = scmp.lt.s32.totalorder %s35, 1
      %s747 = scalar_select %p746, %s35, 1
      %s748 = smul.addr %s747, 8
      %s749 = scalar_lea.vmem %s24, %s748
      %v751 = vld [vmem:[%s741] sm:$0xff]
      %v752 = vld [vmem:[%s745] sm:$0xff]
      %v753 = vld [vmem:[%s2] sm:$0x1]
      %v754 = vld [vmem:[%s3] sm:$0x1]
      %vm755 = vcmask 261120
      %v756 = vsel %vm755, %v751, 0.0
      %757 = vadd.xlane.f32.xlu0 %v756
      %v758 = vpop.xlane.xlu0 %757
      %v759 = vrcp.pop 32.0
      %v760 = vmul.f32 %v758, %v759
      %v761 = vsub.f32 %v751, %v760
      %v762 = vmul.f32 %v761, %v761
      %v763 = vsel %vm755, %v762, 0.0
      %764 = vadd.xlane.f32.xlu0 %v763
      %v765 = vpop.xlane.xlu0 %764
      %v766 = vmul.f32 %v765, %v759
      %v767 = vadd.f32 %v766, 1e-05
      %v768 = vrsqrt.pop %v767
      %v769 = vmul.f32 %v761, %v768
      %v771 = vlaneseq
      %v772 = vshrl.u32 %v771, 7
      %v773 = vsub.s32 0, %v772
      %v774 = vrot.slane %v753, %v773
      %v776 = vmul.f32 %v769, %v774
      %v778 = vlaneseq
      %v779 = vshrl.u32 %v778, 7
      %v780 = vsub.s32 0, %v779
      %v781 = vrot.slane %v754, %v780
      %v783 = vadd.f32 %v776, %v781
      %v784 = vld [vmem:[%s4] sm:$0xf]
      %v785 = vld [vmem:[%s4 + $0x4] sm:$0xf]
      %v786 = vld [vmem:[%s4 + $0x8] sm:$0xf]
      %v787 = vld [vmem:[%s4 + $0xc] sm:$0xf]
      %v788 = vpack.c.bf16 %v783, %v783
      %v789 = vld [vmem:[%s5] sm:$0x1]
      %v791 = vlaneseq
      %v792 = vshrl.u32 %v791, 7
      %v793 = vsub.s32 0, %v792
      %v794 = vrot.slane %v789, %v793
      %v800 = vunpack.c.l.b16 %v784
      %v801 = vunpack.c.l.b16 %v785
      %v802 = vunpack.c.l.b16 %v786
      %v803 = vunpack.c.l.b16 %v787
      %v804 = vpack.c.b16 %v801, %v800
      %v805 = vpack.c.b16 %v803, %v802
      %v809 = vsel %vm755, %v788, 0
      %811 = vmatprep.subr.bf16.mxu0 0
      %812 = vmatpush1.bf16.msra.mxu0 %v804
      %813 = vmatprep.subr.bf16.mxu0 0
      %814 = vmatpush1.bf16.msra.mxu0 %v805
      %815 = vmatprep.subr.bf16.mxu0 0
      %816 = vmatpush1.bf16.msra.mxu0 0
      %817 = vmatprep.subr.bf16.mxu0 0
      %818 = vmatpush1.bf16.msra.mxu0 0
      %819 = vmatprep.subr.bf16.mxu0 0
      %820 = vmatpush1.bf16.msra.mxu0 0
      %821 = vmatprep.subr.bf16.mxu0 0
      %822 = vmatpush1.bf16.msra.mxu0 0
      %823 = vmatprep.subr.bf16.mxu0 0
      %824 = vmatpush1.bf16.msra.mxu0 0
      %825 = vmatprep.subr.bf16.mxu0 0
      %826 = vmatpush1.bf16.msra.mxu0 0
      %827 = vmatprep.subr.bf16.mxu0 0
      %828 = vmatpush1.bf16.msra.mxu0 0
      %829 = vmatprep.subr.bf16.mxu0 0
      %830 = vmatpush1.bf16.msra.mxu0 0
      %831 = vmatprep.subr.bf16.mxu0 0
      %832 = vmatpush1.bf16.msra.mxu0 0
      %833 = vmatprep.subr.bf16.mxu0 0
      %834 = vmatpush1.bf16.msra.mxu0 0
      %835 = vmatprep.subr.bf16.mxu0 0
      %836 = vmatpush1.bf16.msra.mxu0 0
      %837 = vmatprep.subr.bf16.mxu0 0
      %838 = vmatpush1.bf16.msra.mxu0 0
      %839 = vmatprep.subr.bf16.mxu0 0
      %840 = vmatpush1.bf16.msra.mxu0 0
      %841 = vmatprep.subr.bf16.mxu0 0
      %842 = vmatpush1.bf16.msra.mxu0 0
      %843 = vmatprep.mubr.bf16.mxu0 0
      %844 = vmatmul.mubr.bf16.gmra.mrb[0].mxu0 %v809
      %v845 = vpop.f32.mrb[0].mxu0
      %v846 = vadd.f32 %v794, %v845
      %v847 = vpop.f32.mrb[0].mxu0
      %v848 = vpop.f32.mrb[0].mxu0
      %v849 = vpop.f32.mrb[0].mxu0
      %850 = vdwg.mxu0
      %v851 = vmul.f32 %v846, 0.35355338
      %v852 = vpack.c.bf16 %v851, %v851
      %v853 = vpack.c.bf16 %v846, %v846
      %855 = vrot.lane.b32.xlu0 %v853, 96
      %v856 = vpop.permute.xlu0 %855
      %vm857 = vcmask 64512
      %v859 = vsel %vm857, %v852, 0
      %v862 = vsel %vm857, %v856, 0
      %864 = vmatprep.subr.bf16.mxu0 0
      %865 = vmatpush1.bf16.xpose.msra.mxu0 %v862
      %866 = vmatprep.subr.bf16.mxu0 0
      %867 = vmatpush1.bf16.xpose.msra.mxu0 0
      %868 = vmatprep.subr.bf16.mxu0 0
      %869 = vmatpush1.bf16.xpose.msra.mxu0 0
      %870 = vmatprep.subr.bf16.mxu0 0
      %871 = vmatpush1.bf16.xpose.msra.mxu0 0
      %872 = vmatprep.subr.bf16.mxu0 0
      %873 = vmatpush1.bf16.xpose.msra.mxu0 0
      %874 = vmatprep.subr.bf16.mxu0 0
      %875 = vmatpush1.bf16.xpose.msra.mxu0 0
      %876 = vmatprep.subr.bf16.mxu0 0
      %877 = vmatpush1.bf16.xpose.msra.mxu0 0
      %878 = vmatprep.subr.bf16.mxu0 0
      %879 = vmatpush1.bf16.xpose.msra.mxu0 0
      %880 = vmatprep.subr.bf16.mxu0 0
      %881 = vmatpush1.bf16.xpose.msra.mxu0 0
      %882 = vmatprep.subr.bf16.mxu0 0
      %883 = vmatpush1.bf16.xpose.msra.mxu0 0
      %884 = vmatprep.subr.bf16.mxu0 0
      %885 = vmatpush1.bf16.xpose.msra.mxu0 0
      %886 = vmatprep.subr.bf16.mxu0 0
      %887 = vmatpush1.bf16.xpose.msra.mxu0 0
      %888 = vmatprep.subr.bf16.mxu0 0
      %889 = vmatpush1.bf16.xpose.msra.mxu0 0
      %890 = vmatprep.subr.bf16.mxu0 0
      %891 = vmatpush1.bf16.xpose.msra.mxu0 0
      %892 = vmatprep.subr.bf16.mxu0 0
      %893 = vmatpush1.bf16.xpose.msra.mxu0 0
      %894 = vmatprep.subr.bf16.mxu0 0
      %895 = vmatpush1.bf16.xpose.msra.mxu0 0
      %896 = vmatprep.mubr.bf16.mxu0 0
      %897 = vmatmul.mubr.bf16.gmra.mrb[0].mxu0 %v859
      %v898 = vpop.f32.mrb[0].mxu0
      %v899 = vadd.f32 0.0, %v898
      %v900 = vpop.f32.mrb[0].mxu0
      %v901 = vpop.f32.mrb[0].mxu0
      %v902 = vpop.f32.mrb[0].mxu0
      %903 = vdwg.mxu0
      %v904 = vsel %vm857, %v899, -inf
      %905 = vmax.xlane.f32.xlu0 %v904
      %v906 = vpop.xlane.xlu0 %905
      %v907 = vsub.f32 %v899, %v906
      %v908 = vmul.f32 %v907, 1.442695
      %v909 = vpow.pop %v908
      %v910 = vsel %vm857, %v909, 0.0
      %911 = vadd.xlane.f32.xlu0 %v910
      %v912 = vpop.xlane.xlu0 %911
      %v913 = vrcp.pop %v912
      %v914 = vmul.f32 %v909, %v913
      %v915 = vpack.c.bf16 %v914, %v914
      %916 = vrot.lane.b32.xlu0 %v853, 64
      %v917 = vpop.permute.xlu0 %916
      %v919 = vsel %vm857, %v915, 0
      %vm921 = vcmask 1043456
      %v923 = vsel %vm921, %v917, 0
      %925 = vmatprep.subr.bf16.mxu0 0
      %926 = vmatpush1.bf16.msra.mxu0 %v923
      %927 = vmatprep.subr.bf16.mxu0 0
      %928 = vmatpush1.bf16.msra.mxu0 0
      %929 = vmatprep.subr.bf16.mxu0 0
      %930 = vmatpush1.bf16.msra.mxu0 0
      %931 = vmatprep.subr.bf16.mxu0 0
      %932 = vmatpush1.bf16.msra.mxu0 0
      %933 = vmatprep.subr.bf16.mxu0 0
      %934 = vmatpush1.bf16.msra.mxu0 0
      %935 = vmatprep.subr.bf16.mxu0 0
      %936 = vmatpush1.bf16.msra.mxu0 0
      %937 = vmatprep.subr.bf16.mxu0 0
      %938 = vmatpush1.bf16.msra.mxu0 0
      %939 = vmatprep.subr.bf16.mxu0 0
      %940 = vmatpush1.bf16.msra.mxu0 0
      %941 = vmatprep.subr.bf16.mxu0 0
      %942 = vmatpush1.bf16.msra.mxu0 0
      %943 = vmatprep.subr.bf16.mxu0 0
      %944 = vmatpush1.bf16.msra.mxu0 0
      %945 = vmatprep.subr.bf16.mxu0 0
      %946 = vmatpush1.bf16.msra.mxu0 0
      %947 = vmatprep.subr.bf16.mxu0 0
      %948 = vmatpush1.bf16.msra.mxu0 0
      %949 = vmatprep.subr.bf16.mxu0 0
      %950 = vmatpush1.bf16.msra.mxu0 0
      %951 = vmatprep.subr.bf16.mxu0 0
      %952 = vmatpush1.bf16.msra.mxu0 0
      %953 = vmatprep.subr.bf16.mxu0 0
      %954 = vmatpush1.bf16.msra.mxu0 0
      %955 = vmatprep.subr.bf16.mxu0 0
      %956 = vmatpush1.bf16.msra.mxu0 0
      %957 = vmatprep.mubr.bf16.mxu0 0
      %958 = vmatmul.mubr.bf16.gmra.mrb[0].mxu0 %v919
      %v959 = vpop.f32.mrb[0].mxu0
      %v960 = vadd.f32 0.0, %v959
      %v961 = vpop.f32.mrb[0].mxu0
      %v962 = vpop.f32.mrb[0].mxu0
      %v963 = vpop.f32.mrb[0].mxu0
      %964 = vdwg.mxu0
      %966 = vrot.lane.b32.xlu0 %v852, 120
      %v967 = vpop.permute.xlu0 %966
      %968 = vrot.lane.b32.xlu0 %v853, 88
      %v969 = vpop.permute.xlu0 %968
      %v971 = vsel %vm857, %v967, 0
      %v974 = vsel %vm857, %v969, 0
      %976 = vmatprep.subr.bf16.mxu0 0
      %977 = vmatpush1.bf16.xpose.msra.mxu0 %v974
      %978 = vmatprep.subr.bf16.mxu0 0
      %979 = vmatpush1.bf16.xpose.msra.mxu0 0
      %980 = vmatprep.subr.bf16.mxu0 0
      %981 = vmatpush1.bf16.xpose.msra.mxu0 0
      %982 = vmatprep.subr.bf16.mxu0 0
      %983 = vmatpush1.bf16.xpose.msra.mxu0 0
      %984 = vmatprep.subr.bf16.mxu0 0
      %985 = vmatpush1.bf16.xpose.msra.mxu0 0
      %986 = vmatprep.subr.bf16.mxu0 0
      %987 = vmatpush1.bf16.xpose.msra.mxu0 0
      %988 = vmatprep.subr.bf16.mxu0 0
      %989 = vmatpush1.bf16.xpose.msra.mxu0 0
      %990 = vmatprep.subr.bf16.mxu0 0
      %991 = vmatpush1.bf16.xpose.msra.mxu0 0
      %992 = vmatprep.subr.bf16.mxu0 0
      %993 = vmatpush1.bf16.xpose.msra.mxu0 0
      %994 = vmatprep.subr.bf16.mxu0 0
      %995 = vmatpush1.bf16.xpose.msra.mxu0 0
      %996 = vmatprep.subr.bf16.mxu0 0
      %997 = vmatpush1.bf16.xpose.msra.mxu0 0
      %998 = vmatprep.subr.bf16.mxu0 0
      %999 = vmatpush1.bf16.xpose.msra.mxu0 0
      %1000 = vmatprep.subr.bf16.mxu0 0
      %1001 = vmatpush1.bf16.xpose.msra.mxu0 0
      %1002 = vmatprep.subr.bf16.mxu0 0
      %1003 = vmatpush1.bf16.xpose.msra.mxu0 0
      %1004 = vmatprep.subr.bf16.mxu0 0
      %1005 = vmatpush1.bf16.xpose.msra.mxu0 0
      %1006 = vmatprep.subr.bf16.mxu0 0
      %1007 = vmatpush1.bf16.xpose.msra.mxu0 0
      %1008 = vmatprep.mubr.bf16.mxu0 0
      %1009 = vmatmul.mubr.bf16.gmra.mrb[0].mxu0 %v971
      %v1010 = vpop.f32.mrb[0].mxu0
      %v1011 = vadd.f32 0.0, %v1010
      %v1012 = vpop.f32.mrb[0].mxu0
      %v1013 = vpop.f32.mrb[0].mxu0
      %v1014 = vpop.f32.mrb[0].mxu0
      %1015 = vdwg.mxu0
      %v1016 = vsel %vm857, %v1011, -inf
      %1017 = vmax.xlane.f32.xlu0 %v1016
      %v1018 = vpop.xlane.xlu0 %1017
      %v1019 = vsub.f32 %v1011, %v1018
      %v1020 = vmul.f32 %v1019, 1.442695
      %v1021 = vpow.pop %v1020
      %v1022 = vsel %vm857, %v1021, 0.0
      %1023 = vadd.xlane.f32.xlu0 %v1022
      %v1024 = vpop.xlane.xlu0 %1023
      %v1025 = vrcp.pop %v1024
      %v1026 = vmul.f32 %v1021, %v1025
      %v1027 = vpack.c.bf16 %v1026, %v1026
      %1028 = vrot.lane.b32.xlu0 %v853, 56
      %v1029 = vpop.permute.xlu0 %1028
      %v1031 = vsel %vm857, %v1027, 0
      %v1034 = vsel %vm921, %v1029, 0
      %1036 = vmatprep.subr.bf16.mxu0 0
      %1037 = vmatpush1.bf16.msra.mxu0 %v1034
      %1038 = vmatprep.subr.bf16.mxu0 0
      %1039 = vmatpush1.bf16.msra.mxu0 0
      %1040 = vmatprep.subr.bf16.mxu0 0
      %1041 = vmatpush1.bf16.msra.mxu0 0
      %1042 = vmatprep.subr.bf16.mxu0 0
      %1043 = vmatpush1.bf16.msra.mxu0 0
      %1044 = vmatprep.subr.bf16.mxu0 0
      %1045 = vmatpush1.bf16.msra.mxu0 0
      %1046 = vmatprep.subr.bf16.mxu0 0
      %1047 = vmatpush1.bf16.msra.mxu0 0
      %1048 = vmatprep.subr.bf16.mxu0 0
      %1049 = vmatpush1.bf16.msra.mxu0 0
      %1050 = vmatprep.subr.bf16.mxu0 0
      %1051 = vmatpush1.bf16.msra.mxu0 0
      %1052 = vmatprep.subr.bf16.mxu0 0
      %1053 = vmatpush1.bf16.msra.mxu0 0
      %1054 = vmatprep.subr.bf16.mxu0 0
      %1055 = vmatpush1.bf16.msra.mxu0 0
      %1056 = vmatprep.subr.bf16.mxu0 0
      %1057 = vmatpush1.bf16.msra.mxu0 0
      %1058 = vmatprep.subr.bf16.mxu0 0
      %1059 = vmatpush1.bf16.msra.mxu0 0
      %1060 = vmatprep.subr.bf16.mxu0 0
      %1061 = vmatpush1.bf16.msra.mxu0 0
      %1062 = vmatprep.subr.bf16.mxu0 0
      %1063 = vmatpush1.bf16.msra.mxu0 0
      %1064 = vmatprep.subr.bf16.mxu0 0
      %1065 = vmatpush1.bf16.msra.mxu0 0
      %1066 = vmatprep.subr.bf16.mxu0 0
      %1067 = vmatpush1.bf16.msra.mxu0 0
      %1068 = vmatprep.mubr.bf16.mxu0 0
      %1069 = vmatmul.mubr.bf16.gmra.mrb[0].mxu0 %v1031
      %v1070 = vpop.f32.mrb[0].mxu0
      %v1071 = vadd.f32 0.0, %v1070
      %v1072 = vpop.f32.mrb[0].mxu0
      %v1073 = vpop.f32.mrb[0].mxu0
      %v1074 = vpop.f32.mrb[0].mxu0
      %1075 = vdwg.mxu0
      %1076 = vrot.lane.b32.xlu0 %v852, 112
      %v1077 = vpop.permute.xlu0 %1076
      %1078 = vrot.lane.b32.xlu0 %v853, 80
      %v1079 = vpop.permute.xlu0 %1078
      %v1081 = vsel %vm857, %v1077, 0
      %v1084 = vsel %vm857, %v1079, 0
      %1086 = vmatprep.subr.bf16.mxu0 0
      %1087 = vmatpush1.bf16.xpose.msra.mxu0 %v1084
      %1088 = vmatprep.subr.bf16.mxu0 0
      %1089 = vmatpush1.bf16.xpose.msra.mxu0 0
      %1090 = vmatprep.subr.bf16.mxu0 0
      %1091 = vmatpush1.bf16.xpose.msra.mxu0 0
      %1092 = vmatprep.subr.bf16.mxu0 0
      %1093 = vmatpush1.bf16.xpose.msra.mxu0 0
      %1094 = vmatprep.subr.bf16.mxu0 0
      %1095 = vmatpush1.bf16.xpose.msra.mxu0 0
      %1096 = vmatprep.subr.bf16.mxu0 0
      %1097 = vmatpush1.bf16.xpose.msra.mxu0 0
      %1098 = vmatprep.subr.bf16.mxu0 0
      %1099 = vmatpush1.bf16.xpose.msra.mxu0 0
      %1100 = vmatprep.subr.bf16.mxu0 0
      %1101 = vmatpush1.bf16.xpose.msra.mxu0 0
      %1102 = vmatprep.subr.bf16.mxu0 0
      %1103 = vmatpush1.bf16.xpose.msra.mxu0 0
      %1104 = vmatprep.subr.bf16.mxu0 0
      %1105 = vmatpush1.bf16.xpose.msra.mxu0 0
      %1106 = vmatprep.subr.bf16.mxu0 0
      %1107 = vmatpush1.bf16.xpose.msra.mxu0 0
      %1108 = vmatprep.subr.bf16.mxu0 0
      %1109 = vmatpush1.bf16.xpose.msra.mxu0 0
      %1110 = vmatprep.subr.bf16.mxu0 0
      %1111 = vmatpush1.bf16.xpose.msra.mxu0 0
      %1112 = vmatprep.subr.bf16.mxu0 0
      %1113 = vmatpush1.bf16.xpose.msra.mxu0 0
      %1114 = vmatprep.subr.bf16.mxu0 0
      %1115 = vmatpush1.bf16.xpose.msra.mxu0 0
      %1116 = vmatprep.subr.bf16.mxu0 0
      %1117 = vmatpush1.bf16.xpose.msra.mxu0 0
      %1118 = vmatprep.mubr.bf16.mxu0 0
      %1119 = vmatmul.mubr.bf16.gmra.mrb[0].mxu0 %v1081
      %v1120 = vpop.f32.mrb[0].mxu0
      %v1121 = vadd.f32 0.0, %v1120
      %v1122 = vpop.f32.mrb[0].mxu0
      %v1123 = vpop.f32.mrb[0].mxu0
      %v1124 = vpop.f32.mrb[0].mxu0
      %1125 = vdwg.mxu0
      %v1126 = vsel %vm857, %v1121, -inf
      %1127 = vmax.xlane.f32.xlu0 %v1126
      %v1128 = vpop.xlane.xlu0 %1127
      %v1129 = vsub.f32 %v1121, %v1128
      %v1130 = vmul.f32 %v1129, 1.442695
      %v1131 = vpow.pop %v1130
      %v1132 = vsel %vm857, %v1131, 0.0
      %1133 = vadd.xlane.f32.xlu0 %v1132
      %v1134 = vpop.xlane.xlu0 %1133
      %v1135 = vrcp.pop %v1134
      %v1136 = vmul.f32 %v1131, %v1135
      %v1137 = vpack.c.bf16 %v1136, %v1136
      %1138 = vrot.lane.b32.xlu0 %v853, 48
      %v1139 = vpop.permute.xlu0 %1138
      %v1141 = vsel %vm857, %v1137, 0
      %v1144 = vsel %vm921, %v1139, 0
      %1146 = vmatprep.subr.bf16.mxu0 0
      %1147 = vmatpush1.bf16.msra.mxu0 %v1144
      %1148 = vmatprep.subr.bf16.mxu0 0
      %1149 = vmatpush1.bf16.msra.mxu0 0
      %1150 = vmatprep.subr.bf16.mxu0 0
      %1151 = vmatpush1.bf16.msra.mxu0 0
      %1152 = vmatprep.subr.bf16.mxu0 0
      %1153 = vmatpush1.bf16.msra.mxu0 0
      %1154 = vmatprep.subr.bf16.mxu0 0
      %1155 = vmatpush1.bf16.msra.mxu0 0
      %1156 = vmatprep.subr.bf16.mxu0 0
      %1157 = vmatpush1.bf16.msra.mxu0 0
      %1158 = vmatprep.subr.bf16.mxu0 0
      %1159 = vmatpush1.bf16.msra.mxu0 0
      %1160 = vmatprep.subr.bf16.mxu0 0
      %1161 = vmatpush1.bf16.msra.mxu0 0
      %1162 = vmatprep.subr.bf16.mxu0 0
      %1163 = vmatpush1.bf16.msra.mxu0 0
      %1164 = vmatprep.subr.bf16.mxu0 0
      %1165 = vmatpush1.bf16.msra.mxu0 0
      %1166 = vmatprep.subr.bf16.mxu0 0
      %1167 = vmatpush1.bf16.msra.mxu0 0
      %1168 = vmatprep.subr.bf16.mxu0 0
      %1169 = vmatpush1.bf16.msra.mxu0 0
      %1170 = vmatprep.subr.bf16.mxu0 0
      %1171 = vmatpush1.bf16.msra.mxu0 0
      %1172 = vmatprep.subr.bf16.mxu0 0
      %1173 = vmatpush1.bf16.msra.mxu0 0
      %1174 = vmatprep.subr.bf16.mxu0 0
      %1175 = vmatpush1.bf16.msra.mxu0 0
      %1176 = vmatprep.subr.bf16.mxu0 0
      %1177 = vmatpush1.bf16.msra.mxu0 0
      %1178 = vmatprep.mubr.bf16.mxu0 0
      %1179 = vmatmul.mubr.bf16.gmra.mrb[0].mxu0 %v1141
      %v1180 = vpop.f32.mrb[0].mxu0
      %v1181 = vadd.f32 0.0, %v1180
      %v1182 = vpop.f32.mrb[0].mxu0
      %v1183 = vpop.f32.mrb[0].mxu0
      %v1184 = vpop.f32.mrb[0].mxu0
      %1185 = vdwg.mxu0
      %1186 = vrot.lane.b32.xlu0 %v852, 104
      %v1187 = vpop.permute.xlu0 %1186
      %1188 = vrot.lane.b32.xlu0 %v853, 72
      %v1189 = vpop.permute.xlu0 %1188
      %v1191 = vsel %vm857, %v1187, 0
      %v1194 = vsel %vm857, %v1189, 0
      %1196 = vmatprep.subr.bf16.mxu0 0
      %1197 = vmatpush1.bf16.xpose.msra.mxu0 %v1194
      %1198 = vmatprep.subr.bf16.mxu0 0
      %1199 = vmatpush1.bf16.xpose.msra.mxu0 0
      %1200 = vmatprep.subr.bf16.mxu0 0
      %1201 = vmatpush1.bf16.xpose.msra.mxu0 0
      %1202 = vmatprep.subr.bf16.mxu0 0
      %1203 = vmatpush1.bf16.xpose.msra.mxu0 0
      %1204 = vmatprep.subr.bf16.mxu0 0
      %1205 = vmatpush1.bf16.xpose.msra.mxu0 0
      %1206 = vmatprep.subr.bf16.mxu0 0
      %1207 = vmatpush1.bf16.xpose.msra.mxu0 0
      %1208 = vmatprep.subr.bf16.mxu0 0
      %1209 = vmatpush1.bf16.xpose.msra.mxu0 0
      %1210 = vmatprep.subr.bf16.mxu0 0
      %1211 = vmatpush1.bf16.xpose.msra.mxu0 0
      %1212 = vmatprep.subr.bf16.mxu0 0
      %1213 = vmatpush1.bf16.xpose.msra.mxu0 0
      %1214 = vmatprep.subr.bf16.mxu0 0
      %1215 = vmatpush1.bf16.xpose.msra.mxu0 0
      %1216 = vmatprep.subr.bf16.mxu0 0
      %1217 = vmatpush1.bf16.xpose.msra.mxu0 0
      %1218 = vmatprep.subr.bf16.mxu0 0
      %1219 = vmatpush1.bf16.xpose.msra.mxu0 0
      %1220 = vmatprep.subr.bf16.mxu0 0
      %1221 = vmatpush1.bf16.xpose.msra.mxu0 0
      %1222 = vmatprep.subr.bf16.mxu0 0
      %1223 = vmatpush1.bf16.xpose.msra.mxu0 0
      %1224 = vmatprep.subr.bf16.mxu0 0
      %1225 = vmatpush1.bf16.xpose.msra.mxu0 0
      %1226 = vmatprep.subr.bf16.mxu0 0
      %1227 = vmatpush1.bf16.xpose.msra.mxu0 0
      %1228 = vmatprep.mubr.bf16.mxu0 0
      %1229 = vmatmul.mubr.bf16.gmra.mrb[0].mxu0 %v1191
      %v1230 = vpop.f32.mrb[0].mxu0
      %v1231 = vadd.f32 0.0, %v1230
      %v1232 = vpop.f32.mrb[0].mxu0
      %v1233 = vpop.f32.mrb[0].mxu0
      %v1234 = vpop.f32.mrb[0].mxu0
      %1235 = vdwg.mxu0
      %v1236 = vsel %vm857, %v1231, -inf
      %1237 = vmax.xlane.f32.xlu0 %v1236
      %v1238 = vpop.xlane.xlu0 %1237
      %v1239 = vsub.f32 %v1231, %v1238
      %v1240 = vmul.f32 %v1239, 1.442695
      %v1241 = vpow.pop %v1240
      %v1242 = vsel %vm857, %v1241, 0.0
      %1243 = vadd.xlane.f32.xlu0 %v1242
      %v1244 = vpop.xlane.xlu0 %1243
      %v1245 = vrcp.pop %v1244
      %v1246 = vmul.f32 %v1241, %v1245
      %v1247 = vpack.c.bf16 %v1246, %v1246
      %1248 = vrot.lane.b32.xlu0 %v853, 40
      %v1249 = vpop.permute.xlu0 %1248
      %v1251 = vsel %vm857, %v1247, 0
      %v1254 = vsel %vm921, %v1249, 0
      %1256 = vmatprep.subr.bf16.mxu0 0
      %1257 = vmatpush1.bf16.msra.mxu0 %v1254
      %1258 = vmatprep.subr.bf16.mxu0 0
      %1259 = vmatpush1.bf16.msra.mxu0 0
      %1260 = vmatprep.subr.bf16.mxu0 0
      %1261 = vmatpush1.bf16.msra.mxu0 0
      %1262 = vmatprep.subr.bf16.mxu0 0
      %1263 = vmatpush1.bf16.msra.mxu0 0
      %1264 = vmatprep.subr.bf16.mxu0 0
      %1265 = vmatpush1.bf16.msra.mxu0 0
      %1266 = vmatprep.subr.bf16.mxu0 0
      %1267 = vmatpush1.bf16.msra.mxu0 0
      %1268 = vmatprep.subr.bf16.mxu0 0
      %1269 = vmatpush1.bf16.msra.mxu0 0
      %1270 = vmatprep.subr.bf16.mxu0 0
      %1271 = vmatpush1.bf16.msra.mxu0 0
      %1272 = vmatprep.subr.bf16.mxu0 0
      %1273 = vmatpush1.bf16.msra.mxu0 0
      %1274 = vmatprep.subr.bf16.mxu0 0
      %1275 = vmatpush1.bf16.msra.mxu0 0
      %1276 = vmatprep.subr.bf16.mxu0 0
      %1277 = vmatpush1.bf16.msra.mxu0 0
      %1278 = vmatprep.subr.bf16.mxu0 0
      %1279 = vmatpush1.bf16.msra.mxu0 0
      %1280 = vmatprep.subr.bf16.mxu0 0
      %1281 = vmatpush1.bf16.msra.mxu0 0
      %1282 = vmatprep.subr.bf16.mxu0 0
      %1283 = vmatpush1.bf16.msra.mxu0 0
      %1284 = vmatprep.subr.bf16.mxu0 0
      %1285 = vmatpush1.bf16.msra.mxu0 0
      %1286 = vmatprep.subr.bf16.mxu0 0
      %1287 = vmatpush1.bf16.msra.mxu0 0
      %1288 = vmatprep.mubr.bf16.mxu0 0
      %1289 = vmatmul.mubr.bf16.gmra.mrb[0].mxu0 %v1251
      %v1290 = vpop.f32.mrb[0].mxu0
      %v1291 = vadd.f32 0.0, %v1290
      %v1292 = vpop.f32.mrb[0].mxu0
      %v1293 = vpop.f32.mrb[0].mxu0
      %v1294 = vpop.f32.mrb[0].mxu0
      %1295 = vdwg.mxu0
      %1297 = vrot.lane.b32.xlu0 %v1071, 8
      %v1298 = vpop.permute.xlu0 %1297
      %1301 = vrot.lane.b32.xlu0 %v1181, 16
      %v1302 = vpop.permute.xlu0 %1301
      %1305 = vrot.lane.b32.xlu0 %v1291, 24
      %v1306 = vpop.permute.xlu0 %1305
      %v1308 = vsel %vm857, %v960, %v1298
      %vm1309 = vcmask 130048
      %v1310 = vsel %vm1309, %v1308, %v1302
      %vm1311 = vcmask 195584
      %v1312 = vsel %vm1311, %v1310, %v1306
      %v1313 = vld [vmem:[%s6] sm:$0xf]
      %v1314 = vld [vmem:[%s6 + $0x4] sm:$0xf]
      %v1315 = vld [vmem:[%s6 + $0x8] sm:$0xf]
      %v1316 = vld [vmem:[%s6 + $0xc] sm:$0xf]
      %v1317 = vpack.c.bf16 %v1312, %v1312
      %v1322 = vunpack.c.l.b16 %v1313
      %v1323 = vunpack.c.l.b16 %v1314
      %v1324 = vunpack.c.l.b16 %v1315
      %v1325 = vunpack.c.l.b16 %v1316
      %v1326 = vpack.c.b16 %v1323, %v1322
      %v1327 = vpack.c.b16 %v1325, %v1324
      %v1331 = vsel %vm755, %v1317, 0
      %1333 = vmatprep.subr.bf16.mxu0 0
      %1334 = vmatpush1.bf16.msra.mxu0 %v1326
      %1335 = vmatprep.subr.bf16.mxu0 0
      %1336 = vmatpush1.bf16.msra.mxu0 %v1327
      %1337 = vmatprep.subr.bf16.mxu0 0
      %1338 = vmatpush1.bf16.msra.mxu0 0
      %1339 = vmatprep.subr.bf16.mxu0 0
      %1340 = vmatpush1.bf16.msra.mxu0 0
      %1341 = vmatprep.subr.bf16.mxu0 0
      %1342 = vmatpush1.bf16.msra.mxu0 0
      %1343 = vmatprep.subr.bf16.mxu0 0
      %1344 = vmatpush1.bf16.msra.mxu0 0
      %1345 = vmatprep.subr.bf16.mxu0 0
      %1346 = vmatpush1.bf16.msra.mxu0 0
      %1347 = vmatprep.subr.bf16.mxu0 0
      %1348 = vmatpush1.bf16.msra.mxu0 0
      %1349 = vmatprep.subr.bf16.mxu0 0
      %1350 = vmatpush1.bf16.msra.mxu0 0
      %1351 = vmatprep.subr.bf16.mxu0 0
      %1352 = vmatpush1.bf16.msra.mxu0 0
      %1353 = vmatprep.subr.bf16.mxu0 0
      %1354 = vmatpush1.bf16.msra.mxu0 0
      %1355 = vmatprep.subr.bf16.mxu0 0
      %1356 = vmatpush1.bf16.msra.mxu0 0
      %1357 = vmatprep.subr.bf16.mxu0 0
      %1358 = vmatpush1.bf16.msra.mxu0 0
      %1359 = vmatprep.subr.bf16.mxu0 0
      %1360 = vmatpush1.bf16.msra.mxu0 0
      %1361 = vmatprep.subr.bf16.mxu0 0
      %1362 = vmatpush1.bf16.msra.mxu0 0
      %1363 = vmatprep.subr.bf16.mxu0 0
      %1364 = vmatpush1.bf16.msra.mxu0 0
      %1365 = vmatprep.mubr.bf16.mxu0 0
      %1366 = vmatmul.mubr.bf16.gmra.mrb[0].mxu0 %v1331
      %v1367 = vpop.f32.mrb[0].mxu0
      %v1368 = vadd.f32 0.0, %v1367
      %v1369 = vpop.f32.mrb[0].mxu0
      %v1370 = vpop.f32.mrb[0].mxu0
      %v1371 = vpop.f32.mrb[0].mxu0
      %1372 = vdwg.mxu0
      %v1373 = vadd.f32 %v751, %v1368
      %v1374 = vld [vmem:[%s7] sm:$0x1]
      %v1376 = vlaneseq
      %v1377 = vshrl.u32 %v1376, 7
      %v1378 = vsub.s32 0, %v1377
      %v1379 = vrot.slane %v1374, %v1378
      %v1381 = vadd.f32 %v1373, %v1379
      %v1382 = vld [vmem:[%s8] sm:$0x1]
      %v1383 = vld [vmem:[%s9] sm:$0x1]
      %v1384 = vsel %vm755, %v1381, 0.0
      %1385 = vadd.xlane.f32.xlu0 %v1384
      %v1386 = vpop.xlane.xlu0 %1385
      %v1387 = vmul.f32 %v1386, %v759
      %v1388 = vsub.f32 %v1381, %v1387
      %v1389 = vmul.f32 %v1388, %v1388
      %v1390 = vsel %vm755, %v1389, 0.0
      %1391 = vadd.xlane.f32.xlu0 %v1390
      %v1392 = vpop.xlane.xlu0 %1391
      %v1393 = vmul.f32 %v1392, %v759
      %v1394 = vadd.f32 %v1393, 1e-05
      %v1395 = vrsqrt.pop %v1394
      %v1396 = vmul.f32 %v1388, %v1395
      %v1398 = vlaneseq
      %v1399 = vshrl.u32 %v1398, 7
      %v1400 = vsub.s32 0, %v1399
      %v1401 = vrot.slane %v1382, %v1400
      %v1403 = vmul.f32 %v1396, %v1401
      %v1405 = vlaneseq
      %v1406 = vshrl.u32 %v1405, 7
      %v1407 = vsub.s32 0, %v1406
      %v1408 = vrot.slane %v1383, %v1407
      %v1410 = vadd.f32 %v1403, %v1408
      %v1411 = vld [vmem:[%s10] sm:$0xf]
      %v1412 = vld [vmem:[%s10 + $0x4] sm:$0xf]
      %v1413 = vld [vmem:[%s10 + $0x8] sm:$0xf]
      %v1414 = vld [vmem:[%s10 + $0xc] sm:$0xf]
      %v1415 = vpack.c.bf16 %v1410, %v1410
      %v1416 = vld [vmem:[%s11] sm:$0x1]
      %v1418 = vlaneseq
      %v1419 = vshrl.u32 %v1418, 7
      %v1420 = vsub.s32 0, %v1419
      %v1421 = vrot.slane %v1416, %v1420
      %v1427 = vunpack.c.l.b16 %v1411
      %v1428 = vunpack.c.l.b16 %v1412
      %v1429 = vunpack.c.l.b16 %v1413
      %v1430 = vunpack.c.l.b16 %v1414
      %v1431 = vpack.c.b16 %v1428, %v1427
      %v1432 = vpack.c.b16 %v1430, %v1429
      %v1436 = vsel %vm755, %v1415, 0
      %1438 = vmatprep.subr.bf16.mxu0 0
      %1439 = vmatpush1.bf16.msra.mxu0 %v1431
      %1440 = vmatprep.subr.bf16.mxu0 0
      %1441 = vmatpush1.bf16.msra.mxu0 %v1432
      %1442 = vmatprep.subr.bf16.mxu0 0
      %1443 = vmatpush1.bf16.msra.mxu0 0
      %1444 = vmatprep.subr.bf16.mxu0 0
      %1445 = vmatpush1.bf16.msra.mxu0 0
      %1446 = vmatprep.subr.bf16.mxu0 0
      %1447 = vmatpush1.bf16.msra.mxu0 0
      %1448 = vmatprep.subr.bf16.mxu0 0
      %1449 = vmatpush1.bf16.msra.mxu0 0
      %1450 = vmatprep.subr.bf16.mxu0 0
      %1451 = vmatpush1.bf16.msra.mxu0 0
      %1452 = vmatprep.subr.bf16.mxu0 0
      %1453 = vmatpush1.bf16.msra.mxu0 0
      %1454 = vmatprep.subr.bf16.mxu0 0
      %1455 = vmatpush1.bf16.msra.mxu0 0
      %1456 = vmatprep.subr.bf16.mxu0 0
      %1457 = vmatpush1.bf16.msra.mxu0 0
      %1458 = vmatprep.subr.bf16.mxu0 0
      %1459 = vmatpush1.bf16.msra.mxu0 0
      %1460 = vmatprep.subr.bf16.mxu0 0
      %1461 = vmatpush1.bf16.msra.mxu0 0
      %1462 = vmatprep.subr.bf16.mxu0 0
      %1463 = vmatpush1.bf16.msra.mxu0 0
      %1464 = vmatprep.subr.bf16.mxu0 0
      %1465 = vmatpush1.bf16.msra.mxu0 0
      %1466 = vmatprep.subr.bf16.mxu0 0
      %1467 = vmatpush1.bf16.msra.mxu0 0
      %1468 = vmatprep.subr.bf16.mxu0 0
      %1469 = vmatpush1.bf16.msra.mxu0 0
      %1470 = vmatprep.mubr.bf16.mxu0 0
      %1471 = vmatmul.mubr.bf16.gmra.mrb[0].mxu0 %v1436
      %v1472 = vpop.f32.mrb[0].mxu0
      %v1473 = vadd.f32 %v1421, %v1472
      %v1474 = vpop.f32.mrb[0].mxu0
      %v1475 = vpop.f32.mrb[0].mxu0
      %v1476 = vpop.f32.mrb[0].mxu0
      %1477 = vdwg.mxu0
      %v1478 = vld [vmem:[%s12] sm:$0xf]
      %v1479 = vld [vmem:[%s12 + $0x4] sm:$0xf]
      %v1480 = vld [vmem:[%s12 + $0x8] sm:$0xf]
      %v1481 = vld [vmem:[%s12 + $0xc] sm:$0xf]
      %v1482 = vpack.c.bf16 %v752, %v752
      %v1483 = vld [vmem:[%s13] sm:$0x1]
      %v1485 = vlaneseq
      %v1486 = vshrl.u32 %v1485, 7
      %v1487 = vsub.s32 0, %v1486
      %v1488 = vrot.slane %v1483, %v1487
      %v1494 = vunpack.c.l.b16 %v1478
      %v1495 = vunpack.c.l.b16 %v1479
      %v1496 = vunpack.c.l.b16 %v1480
      %v1497 = vunpack.c.l.b16 %v1481
      %v1498 = vpack.c.b16 %v1495, %v1494
      %v1499 = vpack.c.b16 %v1497, %v1496
      %v1503 = vsel %vm755, %v1482, 0
      %1505 = vmatprep.subr.bf16.mxu0 0
      %1506 = vmatpush1.bf16.msra.mxu0 %v1498
      %1507 = vmatprep.subr.bf16.mxu0 0
      %1508 = vmatpush1.bf16.msra.mxu0 %v1499
      %1509 = vmatprep.subr.bf16.mxu0 0
      %1510 = vmatpush1.bf16.msra.mxu0 0
      %1511 = vmatprep.subr.bf16.mxu0 0
      %1512 = vmatpush1.bf16.msra.mxu0 0
      %1513 = vmatprep.subr.bf16.mxu0 0
      %1514 = vmatpush1.bf16.msra.mxu0 0
      %1515 = vmatprep.subr.bf16.mxu0 0
      %1516 = vmatpush1.bf16.msra.mxu0 0
      %1517 = vmatprep.subr.bf16.mxu0 0
      %1518 = vmatpush1.bf16.msra.mxu0 0
      %1519 = vmatprep.subr.bf16.mxu0 0
      %1520 = vmatpush1.bf16.msra.mxu0 0
      %1521 = vmatprep.subr.bf16.mxu0 0
      %1522 = vmatpush1.bf16.msra.mxu0 0
      %1523 = vmatprep.subr.bf16.mxu0 0
      %1524 = vmatpush1.bf16.msra.mxu0 0
      %1525 = vmatprep.subr.bf16.mxu0 0
      %1526 = vmatpush1.bf16.msra.mxu0 0
      %1527 = vmatprep.subr.bf16.mxu0 0
      %1528 = vmatpush1.bf16.msra.mxu0 0
      %1529 = vmatprep.subr.bf16.mxu0 0
      %1530 = vmatpush1.bf16.msra.mxu0 0
      %1531 = vmatprep.subr.bf16.mxu0 0
      %1532 = vmatpush1.bf16.msra.mxu0 0
      %1533 = vmatprep.subr.bf16.mxu0 0
      %1534 = vmatpush1.bf16.msra.mxu0 0
      %1535 = vmatprep.subr.bf16.mxu0 0
      %1536 = vmatpush1.bf16.msra.mxu0 0
      %1537 = vmatprep.mubr.bf16.mxu0 0
      %1538 = vmatmul.mubr.bf16.gmra.mrb[0].mxu0 %v1503
      %v1539 = vpop.f32.mrb[0].mxu0
      %v1540 = vadd.f32 %v1488, %v1539
      %v1541 = vpop.f32.mrb[0].mxu0
      %v1542 = vpop.f32.mrb[0].mxu0
      %v1543 = vpop.f32.mrb[0].mxu0
      %1544 = vdwg.mxu0
      %v1545 = vmul.f32 %v1473, 0.35355338
      %v1546 = vpack.c.bf16 %v1545, %v1545
      %v1547 = vpack.c.bf16 %v1540, %v1540
      %v1549 = vsel %vm857, %v1546, 0
      %v1552 = vsel %vm857, %v1547, 0
      %1554 = vmatprep.subr.bf16.mxu0 0
      %1555 = vmatpush1.bf16.xpose.msra.mxu0 %v1552
      %1556 = vmatprep.subr.bf16.mxu0 0
      %1557 = vmatpush1.bf16.xpose.msra.mxu0 0
      %1558 = vmatprep.subr.bf16.mxu0 0
      %1559 = vmatpush1.bf16.xpose.msra.mxu0 0
      %1560 = vmatprep.subr.bf16.mxu0 0
      %1561 = vmatpush1.bf16.xpose.msra.mxu0 0
      %1562 = vmatprep.subr.bf16.mxu0 0
      %1563 = vmatpush1.bf16.xpose.msra.mxu0 0
      %1564 = vmatprep.subr.bf16.mxu0 0
      %1565 = vmatpush1.bf16.xpose.msra.mxu0 0
      %1566 = vmatprep.subr.bf16.mxu0 0
      %1567 = vmatpush1.bf16.xpose.msra.mxu0 0
      %1568 = vmatprep.subr.bf16.mxu0 0
      %1569 = vmatpush1.bf16.xpose.msra.mxu0 0
      %1570 = vmatprep.subr.bf16.mxu0 0
      %1571 = vmatpush1.bf16.xpose.msra.mxu0 0
      %1572 = vmatprep.subr.bf16.mxu0 0
      %1573 = vmatpush1.bf16.xpose.msra.mxu0 0
      %1574 = vmatprep.subr.bf16.mxu0 0
      %1575 = vmatpush1.bf16.xpose.msra.mxu0 0
      %1576 = vmatprep.subr.bf16.mxu0 0
      %1577 = vmatpush1.bf16.xpose.msra.mxu0 0
      %1578 = vmatprep.subr.bf16.mxu0 0
      %1579 = vmatpush1.bf16.xpose.msra.mxu0 0
      %1580 = vmatprep.subr.bf16.mxu0 0
      %1581 = vmatpush1.bf16.xpose.msra.mxu0 0
      %1582 = vmatprep.subr.bf16.mxu0 0
      %1583 = vmatpush1.bf16.xpose.msra.mxu0 0
      %1584 = vmatprep.subr.bf16.mxu0 0
      %1585 = vmatpush1.bf16.xpose.msra.mxu0 0
      %1586 = vmatprep.mubr.bf16.mxu0 0
      %1587 = vmatmul.mubr.bf16.gmra.mrb[0].mxu0 %v1549
      %v1588 = vpop.f32.mrb[0].mxu0
      %v1589 = vadd.f32 0.0, %v1588
      %v1590 = vpop.f32.mrb[0].mxu0
      %v1591 = vpop.f32.mrb[0].mxu0
      %v1592 = vpop.f32.mrb[0].mxu0
      %1593 = vdwg.mxu0
      %v1594 = vsel %vm857, %v1589, -inf
      %1595 = vmax.xlane.f32.xlu0 %v1594
      %v1596 = vpop.xlane.xlu0 %1595
      %v1597 = vsub.f32 %v1589, %v1596
      %v1598 = vmul.f32 %v1597, 1.442695
      %v1599 = vpow.pop %v1598
      %v1600 = vsel %vm857, %v1599, 0.0
      %1601 = vadd.xlane.f32.xlu0 %v1600
      %v1602 = vpop.xlane.xlu0 %1601
      %v1603 = vrcp.pop %v1602
      %v1604 = vmul.f32 %v1599, %v1603
      %v1605 = vpack.c.bf16 %v1604, %v1604
      %1607 = vrot.lane.b32.xlu0 %v1547, 96
      %v1608 = vpop.permute.xlu0 %1607
      %v1610 = vsel %vm857, %v1605, 0
      %v1613 = vsel %vm921, %v1608, 0
      %1615 = vmatprep.subr.bf16.mxu0 0
      %1616 = vmatpush1.bf16.msra.mxu0 %v1613
      %1617 = vmatprep.subr.bf16.mxu0 0
      %1618 = vmatpush1.bf16.msra.mxu0 0
      %1619 = vmatprep.subr.bf16.mxu0 0
      %1620 = vmatpush1.bf16.msra.mxu0 0
      %1621 = vmatprep.subr.bf16.mxu0 0
      %1622 = vmatpush1.bf16.msra.mxu0 0
      %1623 = vmatprep.subr.bf16.mxu0 0
      %1624 = vmatpush1.bf16.msra.mxu0 0
      %1625 = vmatprep.subr.bf16.mxu0 0
      %1626 = vmatpush1.bf16.msra.mxu0 0
      %1627 = vmatprep.subr.bf16.mxu0 0
      %1628 = vmatpush1.bf16.msra.mxu0 0
      %1629 = vmatprep.subr.bf16.mxu0 0
      %1630 = vmatpush1.bf16.msra.mxu0 0
      %1631 = vmatprep.subr.bf16.mxu0 0
      %1632 = vmatpush1.bf16.msra.mxu0 0
      %1633 = vmatprep.subr.bf16.mxu0 0
      %1634 = vmatpush1.bf16.msra.mxu0 0
      %1635 = vmatprep.subr.bf16.mxu0 0
      %1636 = vmatpush1.bf16.msra.mxu0 0
      %1637 = vmatprep.subr.bf16.mxu0 0
      %1638 = vmatpush1.bf16.msra.mxu0 0
      %1639 = vmatprep.subr.bf16.mxu0 0
      %1640 = vmatpush1.bf16.msra.mxu0 0
      %1641 = vmatprep.subr.bf16.mxu0 0
      %1642 = vmatpush1.bf16.msra.mxu0 0
      %1643 = vmatprep.subr.bf16.mxu0 0
      %1644 = vmatpush1.bf16.msra.mxu0 0
      %1645 = vmatprep.subr.bf16.mxu0 0
      %1646 = vmatpush1.bf16.msra.mxu0 0
      %1647 = vmatprep.mubr.bf16.mxu0 0
      %1648 = vmatmul.mubr.bf16.gmra.mrb[0].mxu0 %v1610
      %v1649 = vpop.f32.mrb[0].mxu0
      %v1650 = vadd.f32 0.0, %v1649
      %v1651 = vpop.f32.mrb[0].mxu0
      %v1652 = vpop.f32.mrb[0].mxu0
      %v1653 = vpop.f32.mrb[0].mxu0
      %1654 = vdwg.mxu0
      %1656 = vrot.lane.b32.xlu0 %v1546, 120
      %v1657 = vpop.permute.xlu0 %1656
      %1658 = vrot.lane.b32.xlu0 %v1547, 120
      %v1659 = vpop.permute.xlu0 %1658
      %v1661 = vsel %vm857, %v1657, 0
      %v1664 = vsel %vm857, %v1659, 0
      %1666 = vmatprep.subr.bf16.mxu0 0
      %1667 = vmatpush1.bf16.xpose.msra.mxu0 %v1664
      %1668 = vmatprep.subr.bf16.mxu0 0
      %1669 = vmatpush1.bf16.xpose.msra.mxu0 0
      %1670 = vmatprep.subr.bf16.mxu0 0
      %1671 = vmatpush1.bf16.xpose.msra.mxu0 0
      %1672 = vmatprep.subr.bf16.mxu0 0
      %1673 = vmatpush1.bf16.xpose.msra.mxu0 0
      %1674 = vmatprep.subr.bf16.mxu0 0
      %1675 = vmatpush1.bf16.xpose.msra.mxu0 0
      %1676 = vmatprep.subr.bf16.mxu0 0
      %1677 = vmatpush1.bf16.xpose.msra.mxu0 0
      %1678 = vmatprep.subr.bf16.mxu0 0
      %1679 = vmatpush1.bf16.xpose.msra.mxu0 0
      %1680 = vmatprep.subr.bf16.mxu0 0
      %1681 = vmatpush1.bf16.xpose.msra.mxu0 0
      %1682 = vmatprep.subr.bf16.mxu0 0
      %1683 = vmatpush1.bf16.xpose.msra.mxu0 0
      %1684 = vmatprep.subr.bf16.mxu0 0
      %1685 = vmatpush1.bf16.xpose.msra.mxu0 0
      %1686 = vmatprep.subr.bf16.mxu0 0
      %1687 = vmatpush1.bf16.xpose.msra.mxu0 0
      %1688 = vmatprep.subr.bf16.mxu0 0
      %1689 = vmatpush1.bf16.xpose.msra.mxu0 0
      %1690 = vmatprep.subr.bf16.mxu0 0
      %1691 = vmatpush1.bf16.xpose.msra.mxu0 0
      %1692 = vmatprep.subr.bf16.mxu0 0
      %1693 = vmatpush1.bf16.xpose.msra.mxu0 0
      %1694 = vmatprep.subr.bf16.mxu0 0
      %1695 = vmatpush1.bf16.xpose.msra.mxu0 0
      %1696 = vmatprep.subr.bf16.mxu0 0
      %1697 = vmatpush1.bf16.xpose.msra.mxu0 0
      %1698 = vmatprep.mubr.bf16.mxu0 0
      %1699 = vmatmul.mubr.bf16.gmra.mrb[0].mxu0 %v1661
      %v1700 = vpop.f32.mrb[0].mxu0
      %v1701 = vadd.f32 0.0, %v1700
      %v1702 = vpop.f32.mrb[0].mxu0
      %v1703 = vpop.f32.mrb[0].mxu0
      %v1704 = vpop.f32.mrb[0].mxu0
      %1705 = vdwg.mxu0
      %v1706 = vsel %vm857, %v1701, -inf
      %1707 = vmax.xlane.f32.xlu0 %v1706
      %v1708 = vpop.xlane.xlu0 %1707
      %v1709 = vsub.f32 %v1701, %v1708
      %v1710 = vmul.f32 %v1709, 1.442695
      %v1711 = vpow.pop %v1710
      %v1712 = vsel %vm857, %v1711, 0.0
      %1713 = vadd.xlane.f32.xlu0 %v1712
      %v1714 = vpop.xlane.xlu0 %1713
      %v1715 = vrcp.pop %v1714
      %v1716 = vmul.f32 %v1711, %v1715
      %v1717 = vpack.c.bf16 %v1716, %v1716
      %1718 = vrot.lane.b32.xlu0 %v1547, 88
      %v1719 = vpop.permute.xlu0 %1718
      %v1721 = vsel %vm857, %v1717, 0
      %v1724 = vsel %vm921, %v1719, 0
      %1726 = vmatprep.subr.bf16.mxu0 0
      %1727 = vmatpush1.bf16.msra.mxu0 %v1724
      %1728 = vmatprep.subr.bf16.mxu0 0
      %1729 = vmatpush1.bf16.msra.mxu0 0
      %1730 = vmatprep.subr.bf16.mxu0 0
      %1731 = vmatpush1.bf16.msra.mxu0 0
      %1732 = vmatprep.subr.bf16.mxu0 0
      %1733 = vmatpush1.bf16.msra.mxu0 0
      %1734 = vmatprep.subr.bf16.mxu0 0
      %1735 = vmatpush1.bf16.msra.mxu0 0
      %1736 = vmatprep.subr.bf16.mxu0 0
      %1737 = vmatpush1.bf16.msra.mxu0 0
      %1738 = vmatprep.subr.bf16.mxu0 0
      %1739 = vmatpush1.bf16.msra.mxu0 0
      %1740 = vmatprep.subr.bf16.mxu0 0
      %1741 = vmatpush1.bf16.msra.mxu0 0
      %1742 = vmatprep.subr.bf16.mxu0 0
      %1743 = vmatpush1.bf16.msra.mxu0 0
      %1744 = vmatprep.subr.bf16.mxu0 0
      %1745 = vmatpush1.bf16.msra.mxu0 0
      %1746 = vmatprep.subr.bf16.mxu0 0
      %1747 = vmatpush1.bf16.msra.mxu0 0
      %1748 = vmatprep.subr.bf16.mxu0 0
      %1749 = vmatpush1.bf16.msra.mxu0 0
      %1750 = vmatprep.subr.bf16.mxu0 0
      %1751 = vmatpush1.bf16.msra.mxu0 0
      %1752 = vmatprep.subr.bf16.mxu0 0
      %1753 = vmatpush1.bf16.msra.mxu0 0
      %1754 = vmatprep.subr.bf16.mxu0 0
      %1755 = vmatpush1.bf16.msra.mxu0 0
      %1756 = vmatprep.subr.bf16.mxu0 0
      %1757 = vmatpush1.bf16.msra.mxu0 0
      %1758 = vmatprep.mubr.bf16.mxu0 0
      %1759 = vmatmul.mubr.bf16.gmra.mrb[0].mxu0 %v1721
      %v1760 = vpop.f32.mrb[0].mxu0
      %v1761 = vadd.f32 0.0, %v1760
      %v1762 = vpop.f32.mrb[0].mxu0
      %v1763 = vpop.f32.mrb[0].mxu0
      %v1764 = vpop.f32.mrb[0].mxu0
      %1765 = vdwg.mxu0
      %1766 = vrot.lane.b32.xlu0 %v1546, 112
      %v1767 = vpop.permute.xlu0 %1766
      %1768 = vrot.lane.b32.xlu0 %v1547, 112
      %v1769 = vpop.permute.xlu0 %1768
      %v1771 = vsel %vm857, %v1767, 0
      %v1774 = vsel %vm857, %v1769, 0
      %1776 = vmatprep.subr.bf16.mxu0 0
      %1777 = vmatpush1.bf16.xpose.msra.mxu0 %v1774
      %1778 = vmatprep.subr.bf16.mxu0 0
      %1779 = vmatpush1.bf16.xpose.msra.mxu0 0
      %1780 = vmatprep.subr.bf16.mxu0 0
      %1781 = vmatpush1.bf16.xpose.msra.mxu0 0
      %1782 = vmatprep.subr.bf16.mxu0 0
      %1783 = vmatpush1.bf16.xpose.msra.mxu0 0
      %1784 = vmatprep.subr.bf16.mxu0 0
      %1785 = vmatpush1.bf16.xpose.msra.mxu0 0
      %1786 = vmatprep.subr.bf16.mxu0 0
      %1787 = vmatpush1.bf16.xpose.msra.mxu0 0
      %1788 = vmatprep.subr.bf16.mxu0 0
      %1789 = vmatpush1.bf16.xpose.msra.mxu0 0
      %1790 = vmatprep.subr.bf16.mxu0 0
      %1791 = vmatpush1.bf16.xpose.msra.mxu0 0
      %1792 = vmatprep.subr.bf16.mxu0 0
      %1793 = vmatpush1.bf16.xpose.msra.mxu0 0
      %1794 = vmatprep.subr.bf16.mxu0 0
      %1795 = vmatpush1.bf16.xpose.msra.mxu0 0
      %1796 = vmatprep.subr.bf16.mxu0 0
      %1797 = vmatpush1.bf16.xpose.msra.mxu0 0
      %1798 = vmatprep.subr.bf16.mxu0 0
      %1799 = vmatpush1.bf16.xpose.msra.mxu0 0
      %1800 = vmatprep.subr.bf16.mxu0 0
      %1801 = vmatpush1.bf16.xpose.msra.mxu0 0
      %1802 = vmatprep.subr.bf16.mxu0 0
      %1803 = vmatpush1.bf16.xpose.msra.mxu0 0
      %1804 = vmatprep.subr.bf16.mxu0 0
      %1805 = vmatpush1.bf16.xpose.msra.mxu0 0
      %1806 = vmatprep.subr.bf16.mxu0 0
      %1807 = vmatpush1.bf16.xpose.msra.mxu0 0
      %1808 = vmatprep.mubr.bf16.mxu0 0
      %1809 = vmatmul.mubr.bf16.gmra.mrb[0].mxu0 %v1771
      %v1810 = vpop.f32.mrb[0].mxu0
      %v1811 = vadd.f32 0.0, %v1810
      %v1812 = vpop.f32.mrb[0].mxu0
      %v1813 = vpop.f32.mrb[0].mxu0
      %v1814 = vpop.f32.mrb[0].mxu0
      %1815 = vdwg.mxu0
      %v1816 = vsel %vm857, %v1811, -inf
      %1817 = vmax.xlane.f32.xlu0 %v1816
      %v1818 = vpop.xlane.xlu0 %1817
      %v1819 = vsub.f32 %v1811, %v1818
      %v1820 = vmul.f32 %v1819, 1.442695
      %v1821 = vpow.pop %v1820
      %v1822 = vsel %vm857, %v1821, 0.0
      %1823 = vadd.xlane.f32.xlu0 %v1822
      %v1824 = vpop.xlane.xlu0 %1823
      %v1825 = vrcp.pop %v1824
      %v1826 = vmul.f32 %v1821, %v1825
      %v1827 = vpack.c.bf16 %v1826, %v1826
      %1828 = vrot.lane.b32.xlu0 %v1547, 80
      %v1829 = vpop.permute.xlu0 %1828
      %v1831 = vsel %vm857, %v1827, 0
      %v1834 = vsel %vm921, %v1829, 0
      %1836 = vmatprep.subr.bf16.mxu0 0
      %1837 = vmatpush1.bf16.msra.mxu0 %v1834
      %1838 = vmatprep.subr.bf16.mxu0 0
      %1839 = vmatpush1.bf16.msra.mxu0 0
      %1840 = vmatprep.subr.bf16.mxu0 0
      %1841 = vmatpush1.bf16.msra.mxu0 0
      %1842 = vmatprep.subr.bf16.mxu0 0
      %1843 = vmatpush1.bf16.msra.mxu0 0
      %1844 = vmatprep.subr.bf16.mxu0 0
      %1845 = vmatpush1.bf16.msra.mxu0 0
      %1846 = vmatprep.subr.bf16.mxu0 0
      %1847 = vmatpush1.bf16.msra.mxu0 0
      %1848 = vmatprep.subr.bf16.mxu0 0
      %1849 = vmatpush1.bf16.msra.mxu0 0
      %1850 = vmatprep.subr.bf16.mxu0 0
      %1851 = vmatpush1.bf16.msra.mxu0 0
      %1852 = vmatprep.subr.bf16.mxu0 0
      %1853 = vmatpush1.bf16.msra.mxu0 0
      %1854 = vmatprep.subr.bf16.mxu0 0
      %1855 = vmatpush1.bf16.msra.mxu0 0
      %1856 = vmatprep.subr.bf16.mxu0 0
      %1857 = vmatpush1.bf16.msra.mxu0 0
      %1858 = vmatprep.subr.bf16.mxu0 0
      %1859 = vmatpush1.bf16.msra.mxu0 0
      %1860 = vmatprep.subr.bf16.mxu0 0
      %1861 = vmatpush1.bf16.msra.mxu0 0
      %1862 = vmatprep.subr.bf16.mxu0 0
      %1863 = vmatpush1.bf16.msra.mxu0 0
      %1864 = vmatprep.subr.bf16.mxu0 0
      %1865 = vmatpush1.bf16.msra.mxu0 0
      %1866 = vmatprep.subr.bf16.mxu0 0
      %1867 = vmatpush1.bf16.msra.mxu0 0
      %1868 = vmatprep.mubr.bf16.mxu0 0
      %1869 = vmatmul.mubr.bf16.gmra.mrb[0].mxu0 %v1831
      %v1870 = vpop.f32.mrb[0].mxu0
      %v1871 = vadd.f32 0.0, %v1870
      %v1872 = vpop.f32.mrb[0].mxu0
      %v1873 = vpop.f32.mrb[0].mxu0
      %v1874 = vpop.f32.mrb[0].mxu0
      %1875 = vdwg.mxu0
      %1876 = vrot.lane.b32.xlu0 %v1546, 104
      %v1877 = vpop.permute.xlu0 %1876
      %1878 = vrot.lane.b32.xlu0 %v1547, 104
      %v1879 = vpop.permute.xlu0 %1878
      %v1881 = vsel %vm857, %v1877, 0
      %v1884 = vsel %vm857, %v1879, 0
      %1886 = vmatprep.subr.bf16.mxu0 0
      %1887 = vmatpush1.bf16.xpose.msra.mxu0 %v1884
      %1888 = vmatprep.subr.bf16.mxu0 0
      %1889 = vmatpush1.bf16.xpose.msra.mxu0 0
      %1890 = vmatprep.subr.bf16.mxu0 0
      %1891 = vmatpush1.bf16.xpose.msra.mxu0 0
      %1892 = vmatprep.subr.bf16.mxu0 0
      %1893 = vmatpush1.bf16.xpose.msra.mxu0 0
      %1894 = vmatprep.subr.bf16.mxu0 0
      %1895 = vmatpush1.bf16.xpose.msra.mxu0 0
      %1896 = vmatprep.subr.bf16.mxu0 0
      %1897 = vmatpush1.bf16.xpose.msra.mxu0 0
      %1898 = vmatprep.subr.bf16.mxu0 0
      %1899 = vmatpush1.bf16.xpose.msra.mxu0 0
      %1900 = vmatprep.subr.bf16.mxu0 0
      %1901 = vmatpush1.bf16.xpose.msra.mxu0 0
      %1902 = vmatprep.subr.bf16.mxu0 0
      %1903 = vmatpush1.bf16.xpose.msra.mxu0 0
      %1904 = vmatprep.subr.bf16.mxu0 0
      %1905 = vmatpush1.bf16.xpose.msra.mxu0 0
      %1906 = vmatprep.subr.bf16.mxu0 0
      %1907 = vmatpush1.bf16.xpose.msra.mxu0 0
      %1908 = vmatprep.subr.bf16.mxu0 0
      %1909 = vmatpush1.bf16.xpose.msra.mxu0 0
      %1910 = vmatprep.subr.bf16.mxu0 0
      %1911 = vmatpush1.bf16.xpose.msra.mxu0 0
      %1912 = vmatprep.subr.bf16.mxu0 0
      %1913 = vmatpush1.bf16.xpose.msra.mxu0 0
      %1914 = vmatprep.subr.bf16.mxu0 0
      %1915 = vmatpush1.bf16.xpose.msra.mxu0 0
      %1916 = vmatprep.subr.bf16.mxu0 0
      %1917 = vmatpush1.bf16.xpose.msra.mxu0 0
      %1918 = vmatprep.mubr.bf16.mxu0 0
      %1919 = vmatmul.mubr.bf16.gmra.mrb[0].mxu0 %v1881
      %v1920 = vpop.f32.mrb[0].mxu0
      %v1921 = vadd.f32 0.0, %v1920
      %v1922 = vpop.f32.mrb[0].mxu0
      %v1923 = vpop.f32.mrb[0].mxu0
      %v1924 = vpop.f32.mrb[0].mxu0
      %1925 = vdwg.mxu0
      %v1926 = vsel %vm857, %v1921, -inf
      %1927 = vmax.xlane.f32.xlu0 %v1926
      %v1928 = vpop.xlane.xlu0 %1927
      %v1929 = vsub.f32 %v1921, %v1928
      %v1930 = vmul.f32 %v1929, 1.442695
      %v1931 = vpow.pop %v1930
      %v1932 = vsel %vm857, %v1931, 0.0
      %1933 = vadd.xlane.f32.xlu0 %v1932
      %v1934 = vpop.xlane.xlu0 %1933
      %v1935 = vrcp.pop %v1934
      %v1936 = vmul.f32 %v1931, %v1935
      %v1937 = vpack.c.bf16 %v1936, %v1936
      %1938 = vrot.lane.b32.xlu0 %v1547, 72
      %v1939 = vpop.permute.xlu0 %1938
      %v1941 = vsel %vm857, %v1937, 0
      %v1944 = vsel %vm921, %v1939, 0
      %1946 = vmatprep.subr.bf16.mxu0 0
      %1947 = vmatpush1.bf16.msra.mxu0 %v1944
      %1948 = vmatprep.subr.bf16.mxu0 0
      %1949 = vmatpush1.bf16.msra.mxu0 0
      %1950 = vmatprep.subr.bf16.mxu0 0
      %1951 = vmatpush1.bf16.msra.mxu0 0
      %1952 = vmatprep.subr.bf16.mxu0 0
      %1953 = vmatpush1.bf16.msra.mxu0 0
      %1954 = vmatprep.subr.bf16.mxu0 0
      %1955 = vmatpush1.bf16.msra.mxu0 0
      %1956 = vmatprep.subr.bf16.mxu0 0
      %1957 = vmatpush1.bf16.msra.mxu0 0
      %1958 = vmatprep.subr.bf16.mxu0 0
      %1959 = vmatpush1.bf16.msra.mxu0 0
      %1960 = vmatprep.subr.bf16.mxu0 0
      %1961 = vmatpush1.bf16.msra.mxu0 0
      %1962 = vmatprep.subr.bf16.mxu0 0
      %1963 = vmatpush1.bf16.msra.mxu0 0
      %1964 = vmatprep.subr.bf16.mxu0 0
      %1965 = vmatpush1.bf16.msra.mxu0 0
      %1966 = vmatprep.subr.bf16.mxu0 0
      %1967 = vmatpush1.bf16.msra.mxu0 0
      %1968 = vmatprep.subr.bf16.mxu0 0
      %1969 = vmatpush1.bf16.msra.mxu0 0
      %1970 = vmatprep.subr.bf16.mxu0 0
      %1971 = vmatpush1.bf16.msra.mxu0 0
      %1972 = vmatprep.subr.bf16.mxu0 0
      %1973 = vmatpush1.bf16.msra.mxu0 0
      %1974 = vmatprep.subr.bf16.mxu0 0
      %1975 = vmatpush1.bf16.msra.mxu0 0
      %1976 = vmatprep.subr.bf16.mxu0 0
      %1977 = vmatpush1.bf16.msra.mxu0 0
      %1978 = vmatprep.mubr.bf16.mxu0 0
      %1979 = vmatmul.mubr.bf16.gmra.mrb[0].mxu0 %v1941
      %v1980 = vpop.f32.mrb[0].mxu0
      %v1981 = vadd.f32 0.0, %v1980
      %v1982 = vpop.f32.mrb[0].mxu0
      %v1983 = vpop.f32.mrb[0].mxu0
      %v1984 = vpop.f32.mrb[0].mxu0
      %1985 = vdwg.mxu0
      %1987 = vrot.lane.b32.xlu0 %v1761, 8
      %v1988 = vpop.permute.xlu0 %1987
      %1991 = vrot.lane.b32.xlu0 %v1871, 16
      %v1992 = vpop.permute.xlu0 %1991
      %1995 = vrot.lane.b32.xlu0 %v1981, 24
      %v1996 = vpop.permute.xlu0 %1995
      %v1998 = vsel %vm857, %v1650, %v1988
      %v1999 = vsel %vm1309, %v1998, %v1992
      %v2000 = vsel %vm1311, %v1999, %v1996
      %v2001 = vld [vmem:[%s14] sm:$0xf]
      %v2002 = vld [vmem:[%s14 + $0x4] sm:$0xf]
      %v2003 = vld [vmem:[%s14 + $0x8] sm:$0xf]
      %v2004 = vld [vmem:[%s14 + $0xc] sm:$0xf]
      %v2005 = vpack.c.bf16 %v2000, %v2000
      %v2010 = vunpack.c.l.b16 %v2001
      %v2011 = vunpack.c.l.b16 %v2002
      %v2012 = vunpack.c.l.b16 %v2003
      %v2013 = vunpack.c.l.b16 %v2004
      %v2014 = vpack.c.b16 %v2011, %v2010
      %v2015 = vpack.c.b16 %v2013, %v2012
      %v2019 = vsel %vm755, %v2005, 0
      %2021 = vmatprep.subr.bf16.mxu0 0
      %2022 = vmatpush1.bf16.msra.mxu0 %v2014
      %2023 = vmatprep.subr.bf16.mxu0 0
      %2024 = vmatpush1.bf16.msra.mxu0 %v2015
      %2025 = vmatprep.subr.bf16.mxu0 0
      %2026 = vmatpush1.bf16.msra.mxu0 0
      %2027 = vmatprep.subr.bf16.mxu0 0
      %2028 = vmatpush1.bf16.msra.mxu0 0
      %2029 = vmatprep.subr.bf16.mxu0 0
      %2030 = vmatpush1.bf16.msra.mxu0 0
      %2031 = vmatprep.subr.bf16.mxu0 0
      %2032 = vmatpush1.bf16.msra.mxu0 0
      %2033 = vmatprep.subr.bf16.mxu0 0
      %2034 = vmatpush1.bf16.msra.mxu0 0
      %2035 = vmatprep.subr.bf16.mxu0 0
      %2036 = vmatpush1.bf16.msra.mxu0 0
      %2037 = vmatprep.subr.bf16.mxu0 0
      %2038 = vmatpush1.bf16.msra.mxu0 0
      %2039 = vmatprep.subr.bf16.mxu0 0
      %2040 = vmatpush1.bf16.msra.mxu0 0
      %2041 = vmatprep.subr.bf16.mxu0 0
      %2042 = vmatpush1.bf16.msra.mxu0 0
      %2043 = vmatprep.subr.bf16.mxu0 0
      %2044 = vmatpush1.bf16.msra.mxu0 0
      %2045 = vmatprep.subr.bf16.mxu0 0
      %2046 = vmatpush1.bf16.msra.mxu0 0
      %2047 = vmatprep.subr.bf16.mxu0 0
      %2048 = vmatpush1.bf16.msra.mxu0 0
      %2049 = vmatprep.subr.bf16.mxu0 0
      %2050 = vmatpush1.bf16.msra.mxu0 0
      %2051 = vmatprep.subr.bf16.mxu0 0
      %2052 = vmatpush1.bf16.msra.mxu0 0
      %2053 = vmatprep.mubr.bf16.mxu0 0
      %2054 = vmatmul.mubr.bf16.gmra.mrb[0].mxu0 %v2019
      %v2055 = vpop.f32.mrb[0].mxu0
      %v2056 = vadd.f32 0.0, %v2055
      %v2057 = vpop.f32.mrb[0].mxu0
      %v2058 = vpop.f32.mrb[0].mxu0
      %v2059 = vpop.f32.mrb[0].mxu0
      %2060 = vdwg.mxu0
      %v2061 = vadd.f32 %v1381, %v2056
      %v2062 = vld [vmem:[%s15] sm:$0x1]
      %v2064 = vlaneseq
      %v2065 = vshrl.u32 %v2064, 7
      %v2066 = vsub.s32 0, %v2065
      %v2067 = vrot.slane %v2062, %v2066
      %v2069 = vadd.f32 %v2061, %v2067
      %v2070 = vld [vmem:[%s16] sm:$0x1]
      %v2071 = vld [vmem:[%s17] sm:$0x1]
      %v2072 = vsel %vm755, %v2069, 0.0
      %2073 = vadd.xlane.f32.xlu0 %v2072
      %v2074 = vpop.xlane.xlu0 %2073
      %v2075 = vmul.f32 %v2074, %v759
      %v2076 = vsub.f32 %v2069, %v2075
      %v2077 = vmul.f32 %v2076, %v2076
      %v2078 = vsel %vm755, %v2077, 0.0
      %2079 = vadd.xlane.f32.xlu0 %v2078
      %v2080 = vpop.xlane.xlu0 %2079
      %v2081 = vmul.f32 %v2080, %v759
      %v2082 = vadd.f32 %v2081, 1e-05
      %v2083 = vrsqrt.pop %v2082
      %v2084 = vmul.f32 %v2076, %v2083
      %v2086 = vlaneseq
      %v2087 = vshrl.u32 %v2086, 7
      %v2088 = vsub.s32 0, %v2087
      %v2089 = vrot.slane %v2070, %v2088
      %v2091 = vmul.f32 %v2084, %v2089
      %v2093 = vlaneseq
      %v2094 = vshrl.u32 %v2093, 7
      %v2095 = vsub.s32 0, %v2094
      %v2096 = vrot.slane %v2071, %v2095
      %v2098 = vadd.f32 %v2091, %v2096
      %v2099 = vld [vmem:[%s18] sm:$0xf]
      %v2100 = vld [vmem:[%s18 + $0x4] sm:$0xf]
      %v2101 = vld [vmem:[%s18 + $0x8] sm:$0xf]
      %v2102 = vld [vmem:[%s18 + $0xc] sm:$0xf]
      %v2103 = vpack.c.bf16 %v2098, %v2098
      %v2104 = vld [vmem:[%s19] sm:$0x1]
      %v2106 = vlaneseq
      %v2107 = vshrl.u32 %v2106, 7
      %v2108 = vsub.s32 0, %v2107
      %v2109 = vrot.slane %v2104, %v2108
      %v2115 = vunpack.c.l.b16 %v2099
      %v2116 = vunpack.c.l.b16 %v2100
      %v2117 = vunpack.c.l.b16 %v2101
      %v2118 = vunpack.c.l.b16 %v2102
      %v2119 = vpack.c.b16 %v2116, %v2115
      %v2120 = vpack.c.b16 %v2118, %v2117
      %v2124 = vsel %vm755, %v2103, 0
      %2126 = vmatprep.subr.bf16.mxu0 0
      %2127 = vmatpush1.bf16.msra.mxu0 %v2119
      %2128 = vmatprep.subr.bf16.mxu0 0
      %2129 = vmatpush1.bf16.msra.mxu0 %v2120
      %2130 = vmatprep.subr.bf16.mxu0 0
      %2131 = vmatpush1.bf16.msra.mxu0 0
      %2132 = vmatprep.subr.bf16.mxu0 0
      %2133 = vmatpush1.bf16.msra.mxu0 0
      %2134 = vmatprep.subr.bf16.mxu0 0
      %2135 = vmatpush1.bf16.msra.mxu0 0
      %2136 = vmatprep.subr.bf16.mxu0 0
      %2137 = vmatpush1.bf16.msra.mxu0 0
      %2138 = vmatprep.subr.bf16.mxu0 0
      %2139 = vmatpush1.bf16.msra.mxu0 0
      %2140 = vmatprep.subr.bf16.mxu0 0
      %2141 = vmatpush1.bf16.msra.mxu0 0
      %2142 = vmatprep.subr.bf16.mxu0 0
      %2143 = vmatpush1.bf16.msra.mxu0 0
      %2144 = vmatprep.subr.bf16.mxu0 0
      %2145 = vmatpush1.bf16.msra.mxu0 0
      %2146 = vmatprep.subr.bf16.mxu0 0
      %2147 = vmatpush1.bf16.msra.mxu0 0
      %2148 = vmatprep.subr.bf16.mxu0 0
      %2149 = vmatpush1.bf16.msra.mxu0 0
      %2150 = vmatprep.subr.bf16.mxu0 0
      %2151 = vmatpush1.bf16.msra.mxu0 0
      %2152 = vmatprep.subr.bf16.mxu0 0
      %2153 = vmatpush1.bf16.msra.mxu0 0
      %2154 = vmatprep.subr.bf16.mxu0 0
      %2155 = vmatpush1.bf16.msra.mxu0 0
      %2156 = vmatprep.subr.bf16.mxu0 0
      %2157 = vmatpush1.bf16.msra.mxu0 0
      %2158 = vmatprep.mubr.bf16.mxu0 0
      %2159 = vmatmul.mubr.bf16.gmra.mrb[0].mxu0 %v2124
      %v2160 = vpop.f32.mrb[0].mxu0
      %v2161 = vadd.f32 %v2109, %v2160
      %v2162 = vpop.f32.mrb[0].mxu0
      %v2163 = vpop.f32.mrb[0].mxu0
      %v2164 = vpop.f32.mrb[0].mxu0
      %2165 = vdwg.mxu0
      %v2166 = vmax.f32 %v2161, 0.0
      %v2167 = vld [vmem:[%s20] sm:$0xf]
      %v2168 = vld [vmem:[%s20 + $0x4] sm:$0xf]
      %v2169 = vld [vmem:[%s20 + $0x8] sm:$0xf]
      %v2170 = vld [vmem:[%s20 + $0xc] sm:$0xf]
      %v2171 = vld [vmem:[%s20 + $0x10] sm:$0xf]
      %v2172 = vld [vmem:[%s20 + $0x14] sm:$0xf]
      %v2173 = vld [vmem:[%s20 + $0x18] sm:$0xf]
      %v2174 = vld [vmem:[%s20 + $0x1c] sm:$0xf]
      %v2175 = vpack.c.bf16 %v2166, %v2166
      %v2184 = vunpack.c.l.b16 %v2167
      %v2185 = vunpack.c.l.b16 %v2168
      %v2186 = vunpack.c.l.b16 %v2169
      %v2187 = vunpack.c.l.b16 %v2170
      %v2188 = vunpack.c.l.b16 %v2171
      %v2189 = vunpack.c.l.b16 %v2172
      %v2190 = vunpack.c.l.b16 %v2173
      %v2191 = vunpack.c.l.b16 %v2174
      %v2192 = vpack.c.b16 %v2185, %v2184
      %v2193 = vpack.c.b16 %v2187, %v2186
      %v2194 = vpack.c.b16 %v2189, %v2188
      %v2195 = vpack.c.b16 %v2191, %v2190
      %vm2200 = vcmask 523264
      %v2202 = vsel %vm2200, %v2175, 0
      %2204 = vmatprep.subr.bf16.mxu0 0
      %2205 = vmatpush1.bf16.msra.mxu0 %v2192
      %2206 = vmatprep.subr.bf16.mxu0 0
      %2207 = vmatpush1.bf16.msra.mxu0 %v2193
      %2208 = vmatprep.subr.bf16.mxu0 0
      %2209 = vmatpush1.bf16.msra.mxu0 %v2194
      %2210 = vmatprep.subr.bf16.mxu0 0
      %2211 = vmatpush1.bf16.msra.mxu0 %v2195
      %2212 = vmatprep.subr.bf16.mxu0 0
      %2213 = vmatpush1.bf16.msra.mxu0 0
      %2214 = vmatprep.subr.bf16.mxu0 0
      %2215 = vmatpush1.bf16.msra.mxu0 0
      %2216 = vmatprep.subr.bf16.mxu0 0
      %2217 = vmatpush1.bf16.msra.mxu0 0
      %2218 = vmatprep.subr.bf16.mxu0 0
      %2219 = vmatpush1.bf16.msra.mxu0 0
      %2220 = vmatprep.subr.bf16.mxu0 0
      %2221 = vmatpush1.bf16.msra.mxu0 0
      %2222 = vmatprep.subr.bf16.mxu0 0
      %2223 = vmatpush1.bf16.msra.mxu0 0
      %2224 = vmatprep.subr.bf16.mxu0 0
      %2225 = vmatpush1.bf16.msra.mxu0 0
      %2226 = vmatprep.subr.bf16.mxu0 0
      %2227 = vmatpush1.bf16.msra.mxu0 0
      %2228 = vmatprep.subr.bf16.mxu0 0
      %2229 = vmatpush1.bf16.msra.mxu0 0
      %2230 = vmatprep.subr.bf16.mxu0 0
      %2231 = vmatpush1.bf16.msra.mxu0 0
      %2232 = vmatprep.subr.bf16.mxu0 0
      %2233 = vmatpush1.bf16.msra.mxu0 0
      %2234 = vmatprep.subr.bf16.mxu0 0
      %2235 = vmatpush1.bf16.msra.mxu0 0
      %2236 = vmatprep.mubr.bf16.mxu0 0
      %2237 = vmatmul.mubr.bf16.gmra.mrb[0].mxu0 %v2202
      %v2238 = vpop.f32.mrb[0].mxu0
      %v2239 = vadd.f32 0.0, %v2238
      %v2240 = vpop.f32.mrb[0].mxu0
      %v2241 = vpop.f32.mrb[0].mxu0
      %v2242 = vpop.f32.mrb[0].mxu0
      %2243 = vdwg.mxu0
      %v2244 = vadd.f32 %v2069, %v2239
      %v2245 = vld [vmem:[%s21] sm:$0x1]
      %v2247 = vlaneseq
      %v2248 = vshrl.u32 %v2247, 7
      %v2249 = vsub.s32 0, %v2248
      %v2250 = vrot.slane %v2245, %v2249
      %v2252 = vadd.f32 %v2244, %v2250
      %2253 = vst.msk [vmem:[%s749] sm:$0xff] %vm755, %v2252
      %p2254 = scmp.lt.s32.totalorder %s35, 1
      %s2255 = scalar_select %p2254, %s35, 1
      %s2256 = smul.addr %s2255, 8
      %s2257 = scalar_lea.vmem %s24, %s2256
      // Predicated region
      $region117: #{transformer_forward.6} parent=115 // pred_check
        %p2258 = pneg %p567
      $region118: #{transformer_forward.6} parent=115 // pred_check_branch
        %2260 = sbr.rel (%p2258) target = $region120
      $region119: #{transformer_forward.6} parent=115 // pred_region
        _
      $region120: #{transformer_forward.6} parent=115 // pred_fallthru
        _
    $region116: #{transformer_forward.6} parent=5 // pred_fallthru
      _
    %p2261 = scmp.le.s32.totalorder 2, %s30
    // Predicated region
    $region121: #{transformer_forward.6} parent=5 // pred_check
      %p2262 = pneg %p2261
    $region122: #{transformer_forward.6} parent=5 // pred_check_branch
      %2264 = sbr.rel (%p2262) target = $region124
    $region123: #{transformer_forward.6} parent=5 // pred_region
      %s2265 = ssub.s32 %s30, 2
      // Predicated region
      $region125: #{transformer_forward.6} parent=123 // pred_check
        %p2266 = pneg %p573
      $region126: #{transformer_forward.6} parent=123 // pred_check_branch
        %2268 = sbr.rel (%p2266) target = $region128
      $region127: #{transformer_forward.6} parent=123 // pred_region
        %p2269 = scmp.lt.s32.totalorder %s36, 1
        %s2270 = scalar_select %p2269, %s36, 1
        %s2271 = smul.addr %s2270, 8
        %s2272 = scalar_lea.vmem %s24, %s2271
      $region128: #{transformer_forward.6} parent=123 // pred_fallthru
        _
    $region124: #{transformer_forward.6} parent=5 // pred_fallthru
      _
  $region6: #{transformer_forward.6} parent=0 // loop_footer
    %s34 = sadd.s32 1, %s30
  $region7: #{transformer_forward.6} parent=0 // loop_footer_branch
    %29 = sbr.rel target = $region3
  $region8: #{transformer_forward.6} parent=0 // loop_exit
    _

// kernel: transformer_forward.7
$region0: #{transformer_forward.7}
  #allocation0 [shape = 'u32[]', space=smem, size = 0x4, offset = 0x4, fixed_abs, tag = 'smem constant byte address 0x4 - core index']
  #allocation1 [shape = 'u32[144,128]{1,0:T(1,128)}', space=vmem, size = 0x12000, scoped, tag = 'internal scratch']
  %s0 = inlined_call_operand.vmem [shape: f32[2,8,32], index: 0, kind: input, shape index: {}]
  %s1 = inlined_call_operand.vmem [shape: f32[2,8,32], index: 1, kind: input, shape index: {}]
  %s2 = inlined_call_operand.vmem [shape: f32[1,32], index: 2, kind: input, shape index: {}]
  %s3 = inlined_call_operand.vmem [shape: f32[1,32], index: 3, kind: input, shape index: {}]
  %s4 = inlined_call_operand.vmem [shape: bf16[32,96], index: 4, kind: input, shape index: {}]
  %s5 = inlined_call_operand.vmem [shape: f32[1,96], index: 5, kind: input, shape index: {}]
  %s6 = inlined_call_operand.vmem [shape: bf16[32,32], index: 6, kind: input, shape index: {}]
  %s7 = inlined_call_operand.vmem [shape: f32[1,32], index: 7, kind: input, shape index: {}]
  %s8 = inlined_call_operand.vmem [shape: f32[1,32], index: 8, kind: input, shape index: {}]
  %s9 = inlined_call_operand.vmem [shape: f32[1,32], index: 9, kind: input, shape index: {}]
  %s10 = inlined_call_operand.vmem [shape: bf16[32,32], index: 10, kind: input, shape index: {}]
  %s11 = inlined_call_operand.vmem [shape: f32[1,32], index: 11, kind: input, shape index: {}]
  %s12 = inlined_call_operand.vmem [shape: bf16[32,64], index: 12, kind: input, shape index: {}]
  %s13 = inlined_call_operand.vmem [shape: f32[1,64], index: 13, kind: input, shape index: {}]
  %s14 = inlined_call_operand.vmem [shape: bf16[32,32], index: 14, kind: input, shape index: {}]
  %s15 = inlined_call_operand.vmem [shape: f32[1,32], index: 15, kind: input, shape index: {}]
  %s16 = inlined_call_operand.vmem [shape: f32[1,32], index: 16, kind: input, shape index: {}]
  %s17 = inlined_call_operand.hbm [shape: f32[1,32], index: 17, kind: input, shape index: {}]
  %s18 = inlined_call_operand.vmem [shape: bf16[32,64], index: 18, kind: input, shape index: {}]
  %s19 = inlined_call_operand.hbm [shape: f32[1,64], index: 19, kind: input, shape index: {}]
  %s20 = inlined_call_operand.vmem [shape: bf16[64,32], index: 20, kind: input, shape index: {}]
  %s21 = inlined_call_operand.hbm [shape: f32[1,32], index: 21, kind: input, shape index: {}]
  %s22 = inlined_call_operand.vmem [shape: f32[1,32], index: 22, kind: input, shape index: {}]
  %s23 = inlined_call_operand.vmem [shape: f32[1,32], index: 23, kind: input, shape index: {}]
  %s24 = inlined_call_operand.hbm [shape: f32[2,8,32], index: 24, kind: output, shape index: {}]
  %s25 = sld [smem:[#allocation0]]
  $region141: #{transformer_forward.7} parent=0
    _
  %s27 = ssub.s32 1, %s25
  %s28 = scalar_select 0, %s27, %s25
  $region1: #{transformer_forward.7} parent=0
    #allocation2 [shape = 'u8[512]{0}', space=vmem, size = 0x400, scoped, tag = 'input window, operand 17, single buffered']
    #allocation3 [shape = 's32[2]{0}', space=sflag, size = 0x8, scoped, tag = 'scoped memory for transformer_forward.7']
    #allocation4 [shape = 's32[2]{0}', space=sflag, size = 0x8, scoped, tag = 'scoped memory for transformer_forward.7']
    #allocation5 [shape = 'u8[512]{0}', space=vmem, size = 0x400, scoped, tag = 'input window, operand 19, single buffered']
    #allocation6 [shape = 's32[1]{0}', space=sflag, size = 0x4, scoped, tag = 'scoped memory for transformer_forward.7']
    #allocation7 [shape = 'u8[512]{0}', space=vmem, size = 0x400, scoped, tag = 'input window, operand 21, single buffered']
    #allocation8 [shape = 'u8[8192]{0}', space=vmem, size = 0x2000, scoped, tag = 'output window, operand 0']
    %29 = vsyncpa [#allocation3], 0
    %30 = vsyncpa [#allocation6], 0
    %31 = vsyncpa [#allocation4], 0
    %s32 = scalar_lea.sflag [#allocation4], 1
    %33 = vsyncpa %s32, 0
    loop: start=0, step=1, limit=4
    $region2: #{transformer_forward.7} parent=1 // loop_pre_header
      _
    $region3: #{transformer_forward.7} parent=1 // loop_header
      %s35 = sphi 0, %s39
      %p36 = scmp.ge.s32.totalorder %s35, 4
      %s45 = sphi 0, %s47
      %s48 = sphi 0, %s45
      %s49 = sphi 0, %s48
      %s65 = sphi 0, %s49
      %s71 = sphi 0, %s73
      %s74 = sphi 0, %s71
      %s75 = sphi 0, %s74
      %s91 = sphi 0, %s75
      %s95 = sphi 0, %s95
      %s97 = sphi 0, %s95
      %s98 = sphi 0, %s97
      %s112 = sphi 0, %s98
      %s116 = sphi 0, %s116
      %s118 = sphi 0, %s116
      %s119 = sphi 0, %s118
      %s133 = sphi 0, %s119
      %s137 = sphi 0, %s137
      %s139 = sphi 0, %s137
      %s140 = sphi 0, %s139
      %s154 = sphi 0, %s140
      %s158 = sphi 0, %s158
      %s160 = sphi 0, %s158
      %s161 = sphi 0, %s160
      %s175 = sphi 0, %s161
      %s179 = sphi 0, %s179
      %s181 = sphi 0, %s179
      %s182 = sphi 0, %s181
      %s196 = sphi 0, %s182
      %s200 = sphi 0, %s200
      %s202 = sphi 0, %s200
      %s203 = sphi 0, %s202
      %s217 = sphi 0, %s203
      %s221 = sphi 0, %s221
      %s223 = sphi 0, %s221
      %s224 = sphi 0, %s223
      %s238 = sphi 0, %s224
      %s242 = sphi 0, %s242
      %s244 = sphi 0, %s242
      %s245 = sphi 0, %s244
      %s259 = sphi 0, %s245
      %s263 = sphi 0, %s263
      %s265 = sphi 0, %s263
      %s266 = sphi 0, %s265
      %s280 = sphi 0, %s266
      %s284 = sphi 0, %s284
      %s286 = sphi 0, %s284
      %s287 = sphi 0, %s286
      %s301 = sphi 0, %s287
      %s305 = sphi 0, %s305
      %s307 = sphi 0, %s305
      %s308 = sphi 0, %s307
      %s322 = sphi 0, %s308
      %s326 = sphi 0, %s326
      %s328 = sphi 0, %s326
      %s329 = sphi 0, %s328
      %s343 = sphi 0, %s329
      %s347 = sphi 0, %s347
      %s349 = sphi 0, %s347
      %s350 = sphi 0, %s349
      %s364 = sphi 0, %s350
      %s368 = sphi 0, %s368
      %s370 = sphi 0, %s368
      %s371 = sphi 0, %s370
      %s385 = sphi 0, %s371
      %s389 = sphi 0, %s389
      %s391 = sphi 0, %s389
      %s392 = sphi 0, %s391
      %s406 = sphi 0, %s392
      %s410 = sphi 0, %s410
      %s412 = sphi 0, %s410
      %s413 = sphi 0, %s412
      %s427 = sphi 0, %s413
      %s431 = sphi 0, %s431
      %s433 = sphi 0, %s431
      %s434 = sphi 0, %s433
      %s448 = sphi 0, %s434
      %s452 = sphi 0, %s452
      %s454 = sphi 0, %s452
      %s455 = sphi 0, %s454
      %s469 = sphi 0, %s455
      %s473 = sphi 0, %s473
      %s475 = sphi 0, %s473
      %s476 = sphi 0, %s475
      %s490 = sphi 0, %s476
      %s494 = sphi 0, %s494
      %s496 = sphi 0, %s494
      %s497 = sphi 0, %s496
      %s511 = sphi 0, %s497
      %s515 = sphi 0, %s515
      %s517 = sphi 0, %s515
      %s518 = sphi 0, %s517
      %s532 = sphi 0, %s518
      %s536 = sphi 0, %s536
      %s538 = sphi 0, %s536
      %s539 = sphi 0, %s538
      %s553 = sphi 0, %s539
      %s559 = sphi 0, %s561
      %s562 = sphi 0, %s559
      %s563 = sphi 0, %s562
      %s579 = sphi 0, %s563
    $region4: #{transformer_forward.7} parent=1 // loop_header_branch
      %38 = sbr.rel (%p36) target = $region8
    $region5: #{transformer_forward.7} parent=1 // loop_body
      %s40 = ssub.s32 %s35, 1
      %s41 = ssub.s32 %s35, 2
      %s42 = sadd.s32 %s35, 1
      %s43 = ssub.s32 %s35, %s42
      %p44 = scmp.eq.s32.totalorder %s43, 0
      %s46 = sadd.s32 %s45, 1
      %s47 = scalar_select %p44, %s45, %s46
      %p50 = pneg %p44
      %p51 = scmp.eq.s32.totalorder %s35, 1
      %p52 = por %p50, %p51
      %p53 = scmp.ne.s32.totalorder %s45, %s48
      %p54 = scmp.eq.s32.totalorder %s35, 0
      %p55 = por %p53, %p54
      %p56 = scmp.ne.s32.totalorder %s45, %s48
      %p57 = scmp.eq.s32.totalorder %s40, 1
      %p58 = por %p56, %p57
      %p59 = scmp.ne.s32.totalorder %s48, %s49
      %p60 = scmp.eq.s32.totalorder %s40, 0
      %p61 = por %p59, %p60
      %p62 = scmp.ne.s32.totalorder %s48, %s49
      %p63 = scmp.eq.s32.totalorder %s41, 1
      %p64 = por %p62, %p63
      %p66 = scmp.ne.s32.totalorder %s49, %s65
      %p67 = scmp.eq.s32.totalorder %s41, 0
      %p68 = por %p66, %p67
      %s69 = ssub.s32 %s35, %s42
      %p70 = scmp.eq.s32.totalorder %s69, 0
      %s72 = sadd.s32 %s71, 1
      %s73 = scalar_select %p70, %s71, %s72
      %p76 = pneg %p70
      %p77 = scmp.eq.s32.totalorder %s35, 1
      %p78 = por %p76, %p77
      %p79 = scmp.ne.s32.totalorder %s71, %s74
      %p80 = scmp.eq.s32.totalorder %s35, 0
      %p81 = por %p79, %p80
      %p82 = scmp.ne.s32.totalorder %s71, %s74
      %p83 = scmp.eq.s32.totalorder %s40, 1
      %p84 = por %p82, %p83
      %p85 = scmp.ne.s32.totalorder %s74, %s75
      %p86 = scmp.eq.s32.totalorder %s40, 0
      %p87 = por %p85, %p86
      %p88 = scmp.ne.s32.totalorder %s74, %s75
      %p89 = scmp.eq.s32.totalorder %s41, 1
      %p90 = por %p88, %p89
      %p92 = scmp.ne.s32.totalorder %s75, %s91
      %p93 = scmp.eq.s32.totalorder %s41, 0
      %p94 = por %p92, %p93
      %s96 = sadd.s32 %s95, 1
      %p99 = scmp.eq.s32.totalorder %s35, 1
      %p100 = scmp.ne.s32.totalorder %s95, %s97
      %p101 = scmp.eq.s32.totalorder %s35, 0
      %p102 = por %p100, %p101
      %p103 = scmp.ne.s32.totalorder %s95, %s97
      %p104 = scmp.eq.s32.totalorder %s40, 1
      %p105 = por %p103, %p104
      %p106 = scmp.ne.s32.totalorder %s97, %s98
      %p107 = scmp.eq.s32.totalorder %s40, 0
      %p108 = por %p106, %p107
      %p109 = scmp.ne.s32.totalorder %s97, %s98
      %p110 = scmp.eq.s32.totalorder %s41, 1
      %p111 = por %p109, %p110
      %p113 = scmp.ne.s32.totalorder %s98, %s112
      %p114 = scmp.eq.s32.totalorder %s41, 0
      %p115 = por %p113, %p114
      %s117 = sadd.s32 %s116, 1
      %p120 = scmp.eq.s32.totalorder %s35, 1
      %p121 = scmp.ne.s32.totalorder %s116, %s118
      %p122 = scmp.eq.s32.totalorder %s35, 0
      %p123 = por %p121, %p122
      %p124 = scmp.ne.s32.totalorder %s116, %s118
      %p125 = scmp.eq.s32.totalorder %s40, 1
      %p126 = por %p124, %p125
      %p127 = scmp.ne.s32.totalorder %s118, %s119
      %p128 = scmp.eq.s32.totalorder %s40, 0
      %p129 = por %p127, %p128
      %p130 = scmp.ne.s32.totalorder %s118, %s119
      %p131 = scmp.eq.s32.totalorder %s41, 1
      %p132 = por %p130, %p131
      %p134 = scmp.ne.s32.totalorder %s119, %s133
      %p135 = scmp.eq.s32.totalorder %s41, 0
      %p136 = por %p134, %p135
      %s138 = sadd.s32 %s137, 1
      %p141 = scmp.eq.s32.totalorder %s35, 1
      %p142 = scmp.ne.s32.totalorder %s137, %s139
      %p143 = scmp.eq.s32.totalorder %s35, 0
      %p144 = por %p142, %p143
      %p145 = scmp.ne.s32.totalorder %s137, %s139
      %p146 = scmp.eq.s32.totalorder %s40, 1
      %p147 = por %p145, %p146
      %p148 = scmp.ne.s32.totalorder %s139, %s140
      %p149 = scmp.eq.s32.totalorder %s40, 0
      %p150 = por %p148, %p149
      %p151 = scmp.ne.s32.totalorder %s139, %s140
      %p152 = scmp.eq.s32.totalorder %s41, 1
      %p153 = por %p151, %p152
      %p155 = scmp.ne.s32.totalorder %s140, %s154
      %p156 = scmp.eq.s32.totalorder %s41, 0
      %p157 = por %p155, %p156
      %s159 = sadd.s32 %s158, 1
      %p162 = scmp.eq.s32.totalorder %s35, 1
      %p163 = scmp.ne.s32.totalorder %s158, %s160
      %p164 = scmp.eq.s32.totalorder %s35, 0
      %p165 = por %p163, %p164
      %p166 = scmp.ne.s32.totalorder %s158, %s160
      %p167 = scmp.eq.s32.totalorder %s40, 1
      %p168 = por %p166, %p167
      %p169 = scmp.ne.s32.totalorder %s160, %s161
      %p170 = scmp.eq.s32.totalorder %s40, 0
      %p171 = por %p169, %p170
      %p172 = scmp.ne.s32.totalorder %s160, %s161
      %p173 = scmp.eq.s32.totalorder %s41, 1
      %p174 = por %p172, %p173
      %p176 = scmp.ne.s32.totalorder %s161, %s175
      %p177 = scmp.eq.s32.totalorder %s41, 0
      %p178 = por %p176, %p177
      %s180 = sadd.s32 %s179, 1
      %p183 = scmp.eq.s32.totalorder %s35, 1
      %p184 = scmp.ne.s32.totalorder %s179, %s181
      %p185 = scmp.eq.s32.totalorder %s35, 0
      %p186 = por %p184, %p185
      %p187 = scmp.ne.s32.totalorder %s179, %s181
      %p188 = scmp.eq.s32.totalorder %s40, 1
      %p189 = por %p187, %p188
      %p190 = scmp.ne.s32.totalorder %s181, %s182
      %p191 = scmp.eq.s32.totalorder %s40, 0
      %p192 = por %p190, %p191
      %p193 = scmp.ne.s32.totalorder %s181, %s182
      %p194 = scmp.eq.s32.totalorder %s41, 1
      %p195 = por %p193, %p194
      %p197 = scmp.ne.s32.totalorder %s182, %s196
      %p198 = scmp.eq.s32.totalorder %s41, 0
      %p199 = por %p197, %p198
      %s201 = sadd.s32 %s200, 1
      %p204 = scmp.eq.s32.totalorder %s35, 1
      %p205 = scmp.ne.s32.totalorder %s200, %s202
      %p206 = scmp.eq.s32.totalorder %s35, 0
      %p207 = por %p205, %p206
      %p208 = scmp.ne.s32.totalorder %s200, %s202
      %p209 = scmp.eq.s32.totalorder %s40, 1
      %p210 = por %p208, %p209
      %p211 = scmp.ne.s32.totalorder %s202, %s203
      %p212 = scmp.eq.s32.totalorder %s40, 0
      %p213 = por %p211, %p212
      %p214 = scmp.ne.s32.totalorder %s202, %s203
      %p215 = scmp.eq.s32.totalorder %s41, 1
      %p216 = por %p214, %p215
      %p218 = scmp.ne.s32.totalorder %s203, %s217
      %p219 = scmp.eq.s32.totalorder %s41, 0
      %p220 = por %p218, %p219
      %s222 = sadd.s32 %s221, 1
      %p225 = scmp.eq.s32.totalorder %s35, 1
      %p226 = scmp.ne.s32.totalorder %s221, %s223
      %p227 = scmp.eq.s32.totalorder %s35, 0
      %p228 = por %p226, %p227
      %p229 = scmp.ne.s32.totalorder %s221, %s223
      %p230 = scmp.eq.s32.totalorder %s40, 1
      %p231 = por %p229, %p230
      %p232 = scmp.ne.s32.totalorder %s223, %s224
      %p233 = scmp.eq.s32.totalorder %s40, 0
      %p234 = por %p232, %p233
      %p235 = scmp.ne.s32.totalorder %s223, %s224
      %p236 = scmp.eq.s32.totalorder %s41, 1
      %p237 = por %p235, %p236
      %p239 = scmp.ne.s32.totalorder %s224, %s238
      %p240 = scmp.eq.s32.totalorder %s41, 0
      %p241 = por %p239, %p240
      %s243 = sadd.s32 %s242, 1
      %p246 = scmp.eq.s32.totalorder %s35, 1
      %p247 = scmp.ne.s32.totalorder %s242, %s244
      %p248 = scmp.eq.s32.totalorder %s35, 0
      %p249 = por %p247, %p248
      %p250 = scmp.ne.s32.totalorder %s242, %s244
      %p251 = scmp.eq.s32.totalorder %s40, 1
      %p252 = por %p250, %p251
      %p253 = scmp.ne.s32.totalorder %s244, %s245
      %p254 = scmp.eq.s32.totalorder %s40, 0
      %p255 = por %p253, %p254
      %p256 = scmp.ne.s32.totalorder %s244, %s245
      %p257 = scmp.eq.s32.totalorder %s41, 1
      %p258 = por %p256, %p257
      %p260 = scmp.ne.s32.totalorder %s245, %s259
      %p261 = scmp.eq.s32.totalorder %s41, 0
      %p262 = por %p260, %p261
      %s264 = sadd.s32 %s263, 1
      %p267 = scmp.eq.s32.totalorder %s35, 1
      %p268 = scmp.ne.s32.totalorder %s263, %s265
      %p269 = scmp.eq.s32.totalorder %s35, 0
      %p270 = por %p268, %p269
      %p271 = scmp.ne.s32.totalorder %s263, %s265
      %p272 = scmp.eq.s32.totalorder %s40, 1
      %p273 = por %p271, %p272
      %p274 = scmp.ne.s32.totalorder %s265, %s266
      %p275 = scmp.eq.s32.totalorder %s40, 0
      %p276 = por %p274, %p275
      %p277 = scmp.ne.s32.totalorder %s265, %s266
      %p278 = scmp.eq.s32.totalorder %s41, 1
      %p279 = por %p277, %p278
      %p281 = scmp.ne.s32.totalorder %s266, %s280
      %p282 = scmp.eq.s32.totalorder %s41, 0
      %p283 = por %p281, %p282
      %s285 = sadd.s32 %s284, 1
      %p288 = scmp.eq.s32.totalorder %s35, 1
      %p289 = scmp.ne.s32.totalorder %s284, %s286
      %p290 = scmp.eq.s32.totalorder %s35, 0
      %p291 = por %p289, %p290
      %p292 = scmp.ne.s32.totalorder %s284, %s286
      %p293 = scmp.eq.s32.totalorder %s40, 1
      %p294 = por %p292, %p293
      %p295 = scmp.ne.s32.totalorder %s286, %s287
      %p296 = scmp.eq.s32.totalorder %s40, 0
      %p297 = por %p295, %p296
      %p298 = scmp.ne.s32.totalorder %s286, %s287
      %p299 = scmp.eq.s32.totalorder %s41, 1
      %p300 = por %p298, %p299
      %p302 = scmp.ne.s32.totalorder %s287, %s301
      %p303 = scmp.eq.s32.totalorder %s41, 0
      %p304 = por %p302, %p303
      %s306 = sadd.s32 %s305, 1
      %p309 = scmp.eq.s32.totalorder %s35, 1
      %p310 = scmp.ne.s32.totalorder %s305, %s307
      %p311 = scmp.eq.s32.totalorder %s35, 0
      %p312 = por %p310, %p311
      %p313 = scmp.ne.s32.totalorder %s305, %s307
      %p314 = scmp.eq.s32.totalorder %s40, 1
      %p315 = por %p313, %p314
      %p316 = scmp.ne.s32.totalorder %s307, %s308
      %p317 = scmp.eq.s32.totalorder %s40, 0
      %p318 = por %p316, %p317
      %p319 = scmp.ne.s32.totalorder %s307, %s308
      %p320 = scmp.eq.s32.totalorder %s41, 1
      %p321 = por %p319, %p320
      %p323 = scmp.ne.s32.totalorder %s308, %s322
      %p324 = scmp.eq.s32.totalorder %s41, 0
      %p325 = por %p323, %p324
      %s327 = sadd.s32 %s326, 1
      %p330 = scmp.eq.s32.totalorder %s35, 1
      %p331 = scmp.ne.s32.totalorder %s326, %s328
      %p332 = scmp.eq.s32.totalorder %s35, 0
      %p333 = por %p331, %p332
      %p334 = scmp.ne.s32.totalorder %s326, %s328
      %p335 = scmp.eq.s32.totalorder %s40, 1
      %p336 = por %p334, %p335
      %p337 = scmp.ne.s32.totalorder %s328, %s329
      %p338 = scmp.eq.s32.totalorder %s40, 0
      %p339 = por %p337, %p338
      %p340 = scmp.ne.s32.totalorder %s328, %s329
      %p341 = scmp.eq.s32.totalorder %s41, 1
      %p342 = por %p340, %p341
      %p344 = scmp.ne.s32.totalorder %s329, %s343
      %p345 = scmp.eq.s32.totalorder %s41, 0
      %p346 = por %p344, %p345
      %s348 = sadd.s32 %s347, 1
      %p351 = scmp.eq.s32.totalorder %s35, 1
      %p352 = scmp.ne.s32.totalorder %s347, %s349
      %p353 = scmp.eq.s32.totalorder %s35, 0
      %p354 = por %p352, %p353
      %p355 = scmp.ne.s32.totalorder %s347, %s349
      %p356 = scmp.eq.s32.totalorder %s40, 1
      %p357 = por %p355, %p356
      %p358 = scmp.ne.s32.totalorder %s349, %s350
      %p359 = scmp.eq.s32.totalorder %s40, 0
      %p360 = por %p358, %p359
      %p361 = scmp.ne.s32.totalorder %s349, %s350
      %p362 = scmp.eq.s32.totalorder %s41, 1
      %p363 = por %p361, %p362
      %p365 = scmp.ne.s32.totalorder %s350, %s364
      %p366 = scmp.eq.s32.totalorder %s41, 0
      %p367 = por %p365, %p366
      %s369 = sadd.s32 %s368, 1
      %p372 = scmp.eq.s32.totalorder %s35, 1
      %p373 = scmp.ne.s32.totalorder %s368, %s370
      %p374 = scmp.eq.s32.totalorder %s35, 0
      %p375 = por %p373, %p374
      %p376 = scmp.ne.s32.totalorder %s368, %s370
      %p377 = scmp.eq.s32.totalorder %s40, 1
      %p378 = por %p376, %p377
      %p379 = scmp.ne.s32.totalorder %s370, %s371
      %p380 = scmp.eq.s32.totalorder %s40, 0
      %p381 = por %p379, %p380
      %p382 = scmp.ne.s32.totalorder %s370, %s371
      %p383 = scmp.eq.s32.totalorder %s41, 1
      %p384 = por %p382, %p383
      %p386 = scmp.ne.s32.totalorder %s371, %s385
      %p387 = scmp.eq.s32.totalorder %s41, 0
      %p388 = por %p386, %p387
      %s390 = sadd.s32 %s389, 1
      %p393 = scmp.eq.s32.totalorder %s35, 1
      %p394 = scmp.ne.s32.totalorder %s389, %s391
      %p395 = scmp.eq.s32.totalorder %s35, 0
      %p396 = por %p394, %p395
      %p397 = scmp.ne.s32.totalorder %s389, %s391
      %p398 = scmp.eq.s32.totalorder %s40, 1
      %p399 = por %p397, %p398
      %p400 = scmp.ne.s32.totalorder %s391, %s392
      %p401 = scmp.eq.s32.totalorder %s40, 0
      %p402 = por %p400, %p401
      %p403 = scmp.ne.s32.totalorder %s391, %s392
      %p404 = scmp.eq.s32.totalorder %s41, 1
      %p405 = por %p403, %p404
      %p407 = scmp.ne.s32.totalorder %s392, %s406
      %p408 = scmp.eq.s32.totalorder %s41, 0
      %p409 = por %p407, %p408
      %s411 = sadd.s32 %s410, 1
      %p414 = scmp.eq.s32.totalorder %s35, 1
      %p415 = scmp.ne.s32.totalorder %s410, %s412
      %p416 = scmp.eq.s32.totalorder %s35, 0
      %p417 = por %p415, %p416
      %p418 = scmp.ne.s32.totalorder %s410, %s412
      %p419 = scmp.eq.s32.totalorder %s40, 1
      %p420 = por %p418, %p419
      %p421 = scmp.ne.s32.totalorder %s412, %s413
      %p422 = scmp.eq.s32.totalorder %s40, 0
      %p423 = por %p421, %p422
      %p424 = scmp.ne.s32.totalorder %s412, %s413
      %p425 = scmp.eq.s32.totalorder %s41, 1
      %p426 = por %p424, %p425
      %p428 = scmp.ne.s32.totalorder %s413, %s427
      %p429 = scmp.eq.s32.totalorder %s41, 0
      %p430 = por %p428, %p429
      %s432 = sadd.s32 %s431, 1
      %p435 = scmp.eq.s32.totalorder %s35, 1
      %p436 = scmp.ne.s32.totalorder %s431, %s433
      %p437 = scmp.eq.s32.totalorder %s35, 0
      %p438 = por %p436, %p437
      %p439 = scmp.ne.s32.totalorder %s431, %s433
      %p440 = scmp.eq.s32.totalorder %s40, 1
      %p441 = por %p439, %p440
      %p442 = scmp.ne.s32.totalorder %s433, %s434
      %p443 = scmp.eq.s32.totalorder %s40, 0
      %p444 = por %p442, %p443
      %p445 = scmp.ne.s32.totalorder %s433, %s434
      %p446 = scmp.eq.s32.totalorder %s41, 1
      %p447 = por %p445, %p446
      %p449 = scmp.ne.s32.totalorder %s434, %s448
      %p450 = scmp.eq.s32.totalorder %s41, 0
      %p451 = por %p449, %p450
      %s453 = sadd.s32 %s452, 1
      %p456 = scmp.eq.s32.totalorder %s35, 1
      %p457 = scmp.ne.s32.totalorder %s452, %s454
      %p458 = scmp.eq.s32.totalorder %s35, 0
      %p459 = por %p457, %p458
      %p460 = scmp.ne.s32.totalorder %s452, %s454
      %p461 = scmp.eq.s32.totalorder %s40, 1
      %p462 = por %p460, %p461
      %p463 = scmp.ne.s32.totalorder %s454, %s455
      %p464 = scmp.eq.s32.totalorder %s40, 0
      %p465 = por %p463, %p464
      %p466 = scmp.ne.s32.totalorder %s454, %s455
      %p467 = scmp.eq.s32.totalorder %s41, 1
      %p468 = por %p466, %p467
      %p470 = scmp.ne.s32.totalorder %s455, %s469
      %p471 = scmp.eq.s32.totalorder %s41, 0
      %p472 = por %p470, %p471
      %s474 = sadd.s32 %s473, 1
      %p477 = scmp.eq.s32.totalorder %s35, 1
      %p478 = scmp.ne.s32.totalorder %s473, %s475
      %p479 = scmp.eq.s32.totalorder %s35, 0
      %p480 = por %p478, %p479
      %p481 = scmp.ne.s32.totalorder %s473, %s475
      %p482 = scmp.eq.s32.totalorder %s40, 1
      %p483 = por %p481, %p482
      %p484 = scmp.ne.s32.totalorder %s475, %s476
      %p485 = scmp.eq.s32.totalorder %s40, 0
      %p486 = por %p484, %p485
      %p487 = scmp.ne.s32.totalorder %s475, %s476
      %p488 = scmp.eq.s32.totalorder %s41, 1
      %p489 = por %p487, %p488
      %p491 = scmp.ne.s32.totalorder %s476, %s490
      %p492 = scmp.eq.s32.totalorder %s41, 0
      %p493 = por %p491, %p492
      %s495 = sadd.s32 %s494, 1
      %p498 = scmp.eq.s32.totalorder %s35, 1
      %p499 = scmp.ne.s32.totalorder %s494, %s496
      %p500 = scmp.eq.s32.totalorder %s35, 0
      %p501 = por %p499, %p500
      %p502 = scmp.ne.s32.totalorder %s494, %s496
      %p503 = scmp.eq.s32.totalorder %s40, 1
      %p504 = por %p502, %p503
      %p505 = scmp.ne.s32.totalorder %s496, %s497
      %p506 = scmp.eq.s32.totalorder %s40, 0
      %p507 = por %p505, %p506
      %p508 = scmp.ne.s32.totalorder %s496, %s497
      %p509 = scmp.eq.s32.totalorder %s41, 1
      %p510 = por %p508, %p509
      %p512 = scmp.ne.s32.totalorder %s497, %s511
      %p513 = scmp.eq.s32.totalorder %s41, 0
      %p514 = por %p512, %p513
      %s516 = sadd.s32 %s515, 1
      %p519 = scmp.eq.s32.totalorder %s35, 1
      %p520 = scmp.ne.s32.totalorder %s515, %s517
      %p521 = scmp.eq.s32.totalorder %s35, 0
      %p522 = por %p520, %p521
      %p523 = scmp.ne.s32.totalorder %s515, %s517
      %p524 = scmp.eq.s32.totalorder %s40, 1
      %p525 = por %p523, %p524
      %p526 = scmp.ne.s32.totalorder %s517, %s518
      %p527 = scmp.eq.s32.totalorder %s40, 0
      %p528 = por %p526, %p527
      %p529 = scmp.ne.s32.totalorder %s517, %s518
      %p530 = scmp.eq.s32.totalorder %s41, 1
      %p531 = por %p529, %p530
      %p533 = scmp.ne.s32.totalorder %s518, %s532
      %p534 = scmp.eq.s32.totalorder %s41, 0
      %p535 = por %p533, %p534
      %s537 = sadd.s32 %s536, 1
      %p540 = scmp.eq.s32.totalorder %s35, 1
      %p541 = scmp.ne.s32.totalorder %s536, %s538
      %p542 = scmp.eq.s32.totalorder %s35, 0
      %p543 = por %p541, %p542
      %p544 = scmp.ne.s32.totalorder %s536, %s538
      %p545 = scmp.eq.s32.totalorder %s40, 1
      %p546 = por %p544, %p545
      %p547 = scmp.ne.s32.totalorder %s538, %s539
      %p548 = scmp.eq.s32.totalorder %s40, 0
      %p549 = por %p547, %p548
      %p550 = scmp.ne.s32.totalorder %s538, %s539
      %p551 = scmp.eq.s32.totalorder %s41, 1
      %p552 = por %p550, %p551
      %p554 = scmp.ne.s32.totalorder %s539, %s553
      %p555 = scmp.eq.s32.totalorder %s41, 0
      %p556 = por %p554, %p555
      %s557 = ssub.s32 %s35, %s42
      %p558 = scmp.eq.s32.totalorder %s557, 0
      %s560 = sadd.s32 %s559, 1
      %s561 = scalar_select %p558, %s559, %s560
      %p564 = pneg %p558
      %p565 = scmp.eq.s32.totalorder %s35, 1
      %p566 = por %p564, %p565
      %p567 = scmp.ne.s32.totalorder %s559, %s562
      %p568 = scmp.eq.s32.totalorder %s35, 0
      %p569 = por %p567, %p568
      %p570 = scmp.ne.s32.totalorder %s559, %s562
      %p571 = scmp.eq.s32.totalorder %s40, 1
      %p572 = por %p570, %p571
      %p573 = scmp.ne.s32.totalorder %s562, %s563
      %p574 = scmp.eq.s32.totalorder %s40, 0
      %p575 = por %p573, %p574
      %p576 = scmp.ne.s32.totalorder %s562, %s563
      %p577 = scmp.eq.s32.totalorder %s41, 1
      %p578 = por %p576, %p577
      %p580 = scmp.ne.s32.totalorder %s563, %s579
      %p581 = scmp.eq.s32.totalorder %s41, 0
      %p582 = por %p580, %p581
      %p583 = scmp.le.s32.totalorder 1, %s35
      %p584 = scmp.lt.s32.totalorder %s35, 3
      %p585 = pnand %p583, %p584
      %p586 = pneg %p585
      // Predicated region
      $region9: #{transformer_forward.7} parent=5 // pred_check
        _
      $region10: #{transformer_forward.7} parent=5 // pred_check_branch
        %588 = sbr.rel (%p585) target = $region12
      $region11: #{transformer_forward.7} parent=5 // pred_region
        %s589 = ssub.s32 %s35, 1
        // Predicated region
        $region13: #{transformer_forward.7} parent=11 // pred_check
          %p590 = pneg %p108
        $region14: #{transformer_forward.7} parent=11 // pred_check_branch
          %592 = sbr.rel (%p590) target = $region16
        $region15: #{transformer_forward.7} parent=11 // pred_region
          _
        $region16: #{transformer_forward.7} parent=11 // pred_fallthru
          _
        // Predicated region
        $region17: #{transformer_forward.7} parent=11 // pred_check
          %p593 = pneg %p129
        $region18: #{transformer_forward.7} parent=11 // pred_check_branch
          %595 = sbr.rel (%p593) target = $region20
        $region19: #{transformer_forward.7} parent=11 // pred_region
          _
        $region20: #{transformer_forward.7} parent=11 // pred_fallthru
          _
        // Predicated region
        $region21: #{transformer_forward.7} parent=11 // pred_check
          %p596 = pneg %p150
        $region22: #{transformer_forward.7} parent=11 // pred_check_branch
          %598 = sbr.rel (%p596) target = $region24
        $region23: #{transformer_forward.7} parent=11 // pred_region
          _
        $region24: #{transformer_forward.7} parent=11 // pred_fallthru
          _
        // Predicated region
        $region25: #{transformer_forward.7} parent=11 // pred_check
          %p599 = pneg %p171
        $region26: #{transformer_forward.7} parent=11 // pred_check_branch
          %601 = sbr.rel (%p599) target = $region28
        $region27: #{transformer_forward.7} parent=11 // pred_region
          _
        $region28: #{transformer_forward.7} parent=11 // pred_fallthru
          _
        // Predicated region
        $region29: #{transformer_forward.7} parent=11 // pred_check
          %p602 = pneg %p192
        $region30: #{transformer_forward.7} parent=11 // pred_check_branch
          %604 = sbr.rel (%p602) target = $region32
        $region31: #{transformer_forward.7} parent=11 // pred_region
          _
        $region32: #{transformer_forward.7} parent=11 // pred_fallthru
          _
        // Predicated region
        $region33: #{transformer_forward.7} parent=11 // pred_check
          %p605 = pneg %p213
        $region34: #{transformer_forward.7} parent=11 // pred_check_branch
          %607 = sbr.rel (%p605) target = $region36
        $region35: #{transformer_forward.7} parent=11 // pred_region
          _
        $region36: #{transformer_forward.7} parent=11 // pred_fallthru
          _
        // Predicated region
        $region37: #{transformer_forward.7} parent=11 // pred_check
          %p608 = pneg %p234
        $region38: #{transformer_forward.7} parent=11 // pred_check_branch
          %610 = sbr.rel (%p608) target = $region40
        $region39: #{transformer_forward.7} parent=11 // pred_region
          _
        $region40: #{transformer_forward.7} parent=11 // pred_fallthru
          _
        // Predicated region
        $region41: #{transformer_forward.7} parent=11 // pred_check
          %p611 = pneg %p255
        $region42: #{transformer_forward.7} parent=11 // pred_check_branch
          %613 = sbr.rel (%p611) target = $region44
        $region43: #{transformer_forward.7} parent=11 // pred_region
          _
        $region44: #{transformer_forward.7} parent=11 // pred_fallthru
          _
        // Predicated region
        $region45: #{transformer_forward.7} parent=11 // pred_check
          %p614 = pneg %p276
        $region46: #{transformer_forward.7} parent=11 // pred_check_branch
          %616 = sbr.rel (%p614) target = $region48
        $region47: #{transformer_forward.7} parent=11 // pred_region
          _
        $region48: #{transformer_forward.7} parent=11 // pred_fallthru
          _
        // Predicated region
        $region49: #{transformer_forward.7} parent=11 // pred_check
          %p617 = pneg %p297
        $region50: #{transformer_forward.7} parent=11 // pred_check_branch
          %619 = sbr.rel (%p617) target = $region52
        $region51: #{transformer_forward.7} parent=11 // pred_region
          _
        $region52: #{transformer_forward.7} parent=11 // pred_fallthru
          _
        // Predicated region
        $region53: #{transformer_forward.7} parent=11 // pred_check
          %p620 = pneg %p318
        $region54: #{transformer_forward.7} parent=11 // pred_check_branch
          %622 = sbr.rel (%p620) target = $region56
        $region55: #{transformer_forward.7} parent=11 // pred_region
          _
        $region56: #{transformer_forward.7} parent=11 // pred_fallthru
          _
        // Predicated region
        $region57: #{transformer_forward.7} parent=11 // pred_check
          %p623 = pneg %p339
        $region58: #{transformer_forward.7} parent=11 // pred_check_branch
          %625 = sbr.rel (%p623) target = $region60
        $region59: #{transformer_forward.7} parent=11 // pred_region
          _
        $region60: #{transformer_forward.7} parent=11 // pred_fallthru
          _
        // Predicated region
        $region61: #{transformer_forward.7} parent=11 // pred_check
          %p626 = pneg %p360
        $region62: #{transformer_forward.7} parent=11 // pred_check_branch
          %628 = sbr.rel (%p626) target = $region64
        $region63: #{transformer_forward.7} parent=11 // pred_region
          _
        $region64: #{transformer_forward.7} parent=11 // pred_fallthru
          _
        // Predicated region
        $region65: #{transformer_forward.7} parent=11 // pred_check
          %p629 = pneg %p381
        $region66: #{transformer_forward.7} parent=11 // pred_check_branch
          %631 = sbr.rel (%p629) target = $region68
        $region67: #{transformer_forward.7} parent=11 // pred_region
          _
        $region68: #{transformer_forward.7} parent=11 // pred_fallthru
          _
        // Predicated region
        $region69: #{transformer_forward.7} parent=11 // pred_check
          %p632 = pneg %p402
        $region70: #{transformer_forward.7} parent=11 // pred_check_branch
          %634 = sbr.rel (%p632) target = $region72
        $region71: #{transformer_forward.7} parent=11 // pred_region
          _
        $region72: #{transformer_forward.7} parent=11 // pred_fallthru
          _
        // Predicated region
        $region73: #{transformer_forward.7} parent=11 // pred_check
          %p635 = pneg %p423
        $region74: #{transformer_forward.7} parent=11 // pred_check_branch
          %637 = sbr.rel (%p635) target = $region76
        $region75: #{transformer_forward.7} parent=11 // pred_region
          %s639 = ssub.s32 16, 16
          %640 = vsyncadd [#allocation3], %s639
          %s642 = sshll.u32 [#allocation2], 4
          %s643 = int_to_ptr.vmem [resolvable:$true] %s642
          %645 = dma.hbm_to_vmem [thread:$0]  %s17, 16, %s643, [#allocation3]
        $region76: #{transformer_forward.7} parent=11 // pred_fallthru
          _
        // Predicated region
        $region77: #{transformer_forward.7} parent=11 // pred_check
          %p646 = pneg %p444
        $region78: #{transformer_forward.7} parent=11 // pred_check_branch
          %648 = sbr.rel (%p646) target = $region80
        $region79: #{transformer_forward.7} parent=11 // pred_region
          _
        $region80: #{transformer_forward.7} parent=11 // pred_fallthru
          _
        // Predicated region
        $region81: #{transformer_forward.7} parent=11 // pred_check
          %p649 = pneg %p465
        $region82: #{transformer_forward.7} parent=11 // pred_check_branch
          %651 = sbr.rel (%p649) target = $region84
        $region83: #{transformer_forward.7} parent=11 // pred_region
          %s653 = ssub.s32 16, 16
          %654 = vsyncadd [#allocation6], %s653
          %s656 = sshll.u32 [#allocation5], 4
          %s657 = int_to_ptr.vmem [resolvable:$true] %s656
          %659 = dma.hbm_to_vmem [thread:$0]  %s19, 16, %s657, [#allocation6]
        $region84: #{transformer_forward.7} parent=11 // pred_fallthru
          _
        // Predicated region
        $region85: #{transformer_forward.7} parent=11 // pred_check
          %p660 = pneg %p486
        $region86: #{transformer_forward.7} parent=11 // pred_check_branch
          %662 = sbr.rel (%p660) target = $region88
        $region87: #{transformer_forward.7} parent=11 // pred_region
          _
        $region88: #{transformer_forward.7} parent=11 // pred_fallthru
          _
        // Predicated region
        $region89: #{transformer_forward.7} parent=11 // pred_check
          %p663 = pneg %p507
        $region90: #{transformer_forward.7} parent=11 // pred_check_branch
          %665 = sbr.rel (%p663) target = $region92
        $region91: #{transformer_forward.7} parent=11 // pred_region
          %s667 = ssub.s32 16, 16
          %668 = vsyncadd [#allocation6], %s667
          %s670 = sshll.u32 [#allocation7], 4
          %s671 = int_to_ptr.vmem [resolvable:$true] %s670
          %673 = dma.hbm_to_vmem [thread:$0]  %s21, 16, %s671, [#allocation6]
        $region92: #{transformer_forward.7} parent=11 // pred_fallthru
          _
        // Predicated region
        $region93: #{transformer_forward.7} parent=11 // pred_check
          %p674 = pneg %p528
        $region94: #{transformer_forward.7} parent=11 // pred_check_branch
          %676 = sbr.rel (%p674) target = $region96
        $region95: #{transformer_forward.7} parent=11 // pred_region
          _
        $region96: #{transformer_forward.7} parent=11 // pred_fallthru
          _
        // Predicated region
        $region97: #{transformer_forward.7} parent=11 // pred_check
          %p677 = pneg %p549
        $region98: #{transformer_forward.7} parent=11 // pred_check_branch
          %679 = sbr.rel (%p677) target = $region100
        $region99: #{transformer_forward.7} parent=11 // pred_region
          _
        $region100: #{transformer_forward.7} parent=11 // pred_fallthru
          _
      $region12: #{transformer_forward.7} parent=5 // pred_fallthru
        _
      %p680 = scmp.lt.s32.totalorder %s35, 2
      // Predicated region
      $region101: #{transformer_forward.7} parent=5 // pred_check
        %p681 = pneg %p680
      $region102: #{transformer_forward.7} parent=5 // pred_check_branch
        %683 = sbr.rel (%p681) target = $region104
      $region103: #{transformer_forward.7} parent=5 // pred_region
        // Predicated region
        $region105: #{transformer_forward.7} parent=103 // pred_check
          %p684 = pneg %p55
        $region106: #{transformer_forward.7} parent=103 // pred_check_branch
          %686 = sbr.rel (%p684) target = $region108
        $region107: #{transformer_forward.7} parent=103 // pred_region
          %p687 = scmp.lt.s32.totalorder %s35, 1
          %s688 = scalar_select %p687, %s35, 1
          %s689 = smul.addr %s688, 8
          %s690 = scalar_lea.vmem %s0, %s689
        $region108: #{transformer_forward.7} parent=103 // pred_fallthru
          _
        // Predicated region
        $region109: #{transformer_forward.7} parent=103 // pred_check
          %p691 = pneg %p81
        $region110: #{transformer_forward.7} parent=103 // pred_check_branch
          %693 = sbr.rel (%p691) target = $region112
        $region111: #{transformer_forward.7} parent=103 // pred_region
          %p694 = scmp.lt.s32.totalorder %s35, 1
          %s695 = scalar_select %p694, %s35, 1
          %s696 = smul.addr %s695, 8
          %s697 = scalar_lea.vmem %s1, %s696
        $region112: #{transformer_forward.7} parent=103 // pred_fallthru
          _
      $region104: #{transformer_forward.7} parent=5 // pred_fallthru
        _
      %p698 = scmp.le.s32.totalorder 1, %s35
      %p699 = scmp.lt.s32.totalorder %s35, 3
      %p700 = pnand %p698, %p699
      %p701 = pneg %p700
      // Predicated region
      $region113: #{transformer_forward.7} parent=5 // pred_check
        _
      $region114: #{transformer_forward.7} parent=5 // pred_check_branch
        %703 = sbr.rel (%p700) target = $region116
      $region115: #{transformer_forward.7} parent=5 // pred_region
        %s704 = ssub.s32 %s35, 1
        // Predicated region
        $region117: #{transformer_forward.7} parent=115 // pred_check
          %p705 = pneg %p423
        $region118: #{transformer_forward.7} parent=115 // pred_check_branch
          %707 = sbr.rel (%p705) target = $region120
        $region119: #{transformer_forward.7} parent=115 // pred_region
          %708 = dma.done [#allocation3], 16
        $region120: #{transformer_forward.7} parent=115 // pred_fallthru
          _
        // Predicated region
        $region121: #{transformer_forward.7} parent=115 // pred_check
          %p709 = pneg %p465
        $region122: #{transformer_forward.7} parent=115 // pred_check_branch
          %711 = sbr.rel (%p709) target = $region124
        $region123: #{transformer_forward.7} parent=115 // pred_region
          %712 = dma.done [#allocation6], 16
        $region124: #{transformer_forward.7} parent=115 // pred_fallthru
          _
        // Predicated region
        $region125: #{transformer_forward.7} parent=115 // pred_check
          %p713 = pneg %p507
        $region126: #{transformer_forward.7} parent=115 // pred_check_branch
          %715 = sbr.rel (%p713) target = $region128
        $region127: #{transformer_forward.7} parent=115 // pred_region
          %716 = dma.done [#allocation6], 16
        $region128: #{transformer_forward.7} parent=115 // pred_fallthru
          _
        %p717 = scmp.lt.s32.totalorder %s40, 1
        %s718 = scalar_select %p717, %s40, 1
        %s719 = smul.addr %s718, 8
        %s720 = scalar_lea.vmem %s0, %s719
        %p721 = pneg %p61
        %p722 = pneg %p58
        %p723 = scmp.lt.s32.totalorder %s40, 1
        %s724 = scalar_select %p723, %s40, 1
        %s725 = smul.addr %s724, 8
        %s726 = scalar_lea.vmem %s1, %s725
        %p727 = pneg %p87
        %p728 = pneg %p84
        %p729 = pneg %p108
        %p730 = pneg %p105
        %p731 = pneg %p129
        %p732 = pneg %p126
        %p733 = pneg %p150
        %p734 = pneg %p147
        %p735 = pneg %p171
        %p736 = pneg %p168
        %p737 = pneg %p192
        %p738 = pneg %p189
        %p739 = pneg %p213
        %p740 = pneg %p210
        %p741 = pneg %p234
        %p742 = pneg %p231
        %p743 = pneg %p255
        %p744 = pneg %p252
        %p745 = pneg %p276
        %p746 = pneg %p273
        %p747 = pneg %p297
        %p748 = pneg %p294
        %p749 = pneg %p318
        %p750 = pneg %p315
        %p751 = pneg %p339
        %p752 = pneg %p336
        %p753 = pneg %p360
        %p754 = pneg %p357
        %p755 = pneg %p381
        %p756 = pneg %p378
        %p757 = pneg %p402
        %p758 = pneg %p399
        %p759 = pneg %p423
        %p760 = pneg %p420
        %p761 = pneg %p444
        %p762 = pneg %p441
        %p763 = pneg %p465
        %p764 = pneg %p462
        %p765 = pneg %p486
        %p766 = pneg %p483
        %p767 = pneg %p507
        %p768 = pneg %p504
        %p769 = pneg %p528
        %p770 = pneg %p525
        %p771 = pneg %p549
        %p772 = pneg %p546
        %p773 = pneg %p575
        %p774 = pneg %p572
        %s775 = sand.u32 %s562, 1
        %s776 = scalar_lea.sflag [#allocation4], %s775
        %s777 = sand.u32 %s562, 1
        %s778 = smul.addr %s777, 8
        %s779 = scalar_lea.vmem [#allocation8], %s778
        %p780 = scmp.lt.s32.totalorder %s40, 1
        %s781 = scalar_select %p780, %s40, 1
        %s782 = smul.addr %s781, 8
        %s783 = scalar_lea.vmem %s0, %s782
        %p784 = scmp.lt.s32.totalorder %s40, 1
        %s785 = scalar_select %p784, %s40, 1
        %s786 = smul.addr %s785, 8
        %s787 = scalar_lea.vmem %s1, %s786
        %v789 = vld [vmem:[%s783] sm:$0xff]
        %v790 = vld [vmem:[%s787] sm:$0xff]
        %v791 = vld [vmem:[%s2] sm:$0x1]
        %v792 = vld [vmem:[%s3] sm:$0x1]
        %vm793 = vcmask 261120
        %v794 = vsel %vm793, %v789, 0.0
        %795 = vadd.xlane.f32.xlu0 %v794
        %v796 = vpop.xlane.xlu0 %795
        %v797 = vrcp.pop 32.0
        %v798 = vmul.f32 %v796, %v797
        %v799 = vsub.f32 %v789, %v798
        %v800 = vmul.f32 %v799, %v799
        %v801 = vsel %vm793, %v800, 0.0
        %802 = vadd.xlane.f32.xlu0 %v801
        %v803 = vpop.xlane.xlu0 %802
        %v804 = vmul.f32 %v803, %v797
        %v805 = vadd.f32 %v804, 1e-05
        %v806 = vrsqrt.pop %v805
        %v807 = vmul.f32 %v799, %v806
        %v809 = vlaneseq
        %v810 = vshrl.u32 %v809, 7
        %v811 = vsub.s32 0, %v810
        %v812 = vrot.slane %v791, %v811
        %v814 = vmul.f32 %v807, %v812
        %v816 = vlaneseq
        %v817 = vshrl.u32 %v816, 7
        %v818 = vsub.s32 0, %v817
        %v819 = vrot.slane %v792, %v818
        %v821 = vadd.f32 %v814, %v819
        %v822 = vld [vmem:[%s4] sm:$0xf]
        %v823 = vld [vmem:[%s4 + $0x4] sm:$0xf]
        %v824 = vld [vmem:[%s4 + $0x8] sm:$0xf]
        %v825 = vld [vmem:[%s4 + $0xc] sm:$0xf]
        %v826 = vpack.c.bf16 %v821, %v821
        %v827 = vld [vmem:[%s5] sm:$0x1]
        %v829 = vlaneseq
        %v830 = vshrl.u32 %v829, 7
        %v831 = vsub.s32 0, %v830
        %v832 = vrot.slane %v827, %v831
        %v838 = vunpack.c.l.b16 %v822
        %v839 = vunpack.c.l.b16 %v823
        %v840 = vunpack.c.l.b16 %v824
        %v841 = vunpack.c.l.b16 %v825
        %v842 = vpack.c.b16 %v839, %v838
        %v843 = vpack.c.b16 %v841, %v840
        %v847 = vsel %vm793, %v826, 0
        %849 = vmatprep.subr.bf16.mxu0 0
        %850 = vmatpush1.bf16.msra.mxu0 %v842
        %851 = vmatprep.subr.bf16.mxu0 0
        %852 = vmatpush1.bf16.msra.mxu0 %v843
        %853 = vmatprep.subr.bf16.mxu0 0
        %854 = vmatpush1.bf16.msra.mxu0 0
        %855 = vmatprep.subr.bf16.mxu0 0
        %856 = vmatpush1.bf16.msra.mxu0 0
        %857 = vmatprep.subr.bf16.mxu0 0
        %858 = vmatpush1.bf16.msra.mxu0 0
        %859 = vmatprep.subr.bf16.mxu0 0
        %860 = vmatpush1.bf16.msra.mxu0 0
        %861 = vmatprep.subr.bf16.mxu0 0
        %862 = vmatpush1.bf16.msra.mxu0 0
        %863 = vmatprep.subr.bf16.mxu0 0
        %864 = vmatpush1.bf16.msra.mxu0 0
        %865 = vmatprep.subr.bf16.mxu0 0
        %866 = vmatpush1.bf16.msra.mxu0 0
        %867 = vmatprep.subr.bf16.mxu0 0
        %868 = vmatpush1.bf16.msra.mxu0 0
        %869 = vmatprep.subr.bf16.mxu0 0
        %870 = vmatpush1.bf16.msra.mxu0 0
        %871 = vmatprep.subr.bf16.mxu0 0
        %872 = vmatpush1.bf16.msra.mxu0 0
        %873 = vmatprep.subr.bf16.mxu0 0
        %874 = vmatpush1.bf16.msra.mxu0 0
        %875 = vmatprep.subr.bf16.mxu0 0
        %876 = vmatpush1.bf16.msra.mxu0 0
        %877 = vmatprep.subr.bf16.mxu0 0
        %878 = vmatpush1.bf16.msra.mxu0 0
        %879 = vmatprep.subr.bf16.mxu0 0
        %880 = vmatpush1.bf16.msra.mxu0 0
        %881 = vmatprep.mubr.bf16.mxu0 0
        %882 = vmatmul.mubr.bf16.gmra.mrb[0].mxu0 %v847
        %v883 = vpop.f32.mrb[0].mxu0
        %v884 = vadd.f32 %v832, %v883
        %v885 = vpop.f32.mrb[0].mxu0
        %v886 = vpop.f32.mrb[0].mxu0
        %v887 = vpop.f32.mrb[0].mxu0
        %888 = vdwg.mxu0
        %v889 = vmul.f32 %v884, 0.35355338
        %v890 = vpack.c.bf16 %v889, %v889
        %v891 = vpack.c.bf16 %v884, %v884
        %893 = vrot.lane.b32.xlu0 %v891, 96
        %v894 = vpop.permute.xlu0 %893
        %vm895 = vcmask 64512
        %v897 = vsel %vm895, %v890, 0
        %v900 = vsel %vm895, %v894, 0
        %902 = vmatprep.subr.bf16.mxu0 0
        %903 = vmatpush1.bf16.xpose.msra.mxu0 %v900
        %904 = vmatprep.subr.bf16.mxu0 0
        %905 = vmatpush1.bf16.xpose.msra.mxu0 0
        %906 = vmatprep.subr.bf16.mxu0 0
        %907 = vmatpush1.bf16.xpose.msra.mxu0 0
        %908 = vmatprep.subr.bf16.mxu0 0
        %909 = vmatpush1.bf16.xpose.msra.mxu0 0
        %910 = vmatprep.subr.bf16.mxu0 0
        %911 = vmatpush1.bf16.xpose.msra.mxu0 0
        %912 = vmatprep.subr.bf16.mxu0 0
        %913 = vmatpush1.bf16.xpose.msra.mxu0 0
        %914 = vmatprep.subr.bf16.mxu0 0
        %915 = vmatpush1.bf16.xpose.msra.mxu0 0
        %916 = vmatprep.subr.bf16.mxu0 0
        %917 = vmatpush1.bf16.xpose.msra.mxu0 0
        %918 = vmatprep.subr.bf16.mxu0 0
        %919 = vmatpush1.bf16.xpose.msra.mxu0 0
        %920 = vmatprep.subr.bf16.mxu0 0
        %921 = vmatpush1.bf16.xpose.msra.mxu0 0
        %922 = vmatprep.subr.bf16.mxu0 0
        %923 = vmatpush1.bf16.xpose.msra.mxu0 0
        %924 = vmatprep.subr.bf16.mxu0 0
        %925 = vmatpush1.bf16.xpose.msra.mxu0 0
        %926 = vmatprep.subr.bf16.mxu0 0
        %927 = vmatpush1.bf16.xpose.msra.mxu0 0
        %928 = vmatprep.subr.bf16.mxu0 0
        %929 = vmatpush1.bf16.xpose.msra.mxu0 0
        %930 = vmatprep.subr.bf16.mxu0 0
        %931 = vmatpush1.bf16.xpose.msra.mxu0 0
        %932 = vmatprep.subr.bf16.mxu0 0
        %933 = vmatpush1.bf16.xpose.msra.mxu0 0
        %934 = vmatprep.mubr.bf16.mxu0 0
        %935 = vmatmul.mubr.bf16.gmra.mrb[0].mxu0 %v897
        %v936 = vpop.f32.mrb[0].mxu0
        %v937 = vadd.f32 0.0, %v936
        %v938 = vpop.f32.mrb[0].mxu0
        %v939 = vpop.f32.mrb[0].mxu0
        %v940 = vpop.f32.mrb[0].mxu0
        %941 = vdwg.mxu0
        %v942 = vsel %vm895, %v937, -inf
        %943 = vmax.xlane.f32.xlu0 %v942
        %v944 = vpop.xlane.xlu0 %943
        %v945 = vsub.f32 %v937, %v944
        %v946 = vmul.f32 %v945, 1.442695
        %v947 = vpow.pop %v946
        %v948 = vsel %vm895, %v947, 0.0
        %949 = vadd.xlane.f32.xlu0 %v948
        %v950 = vpop.xlane.xlu0 %949
        %v951 = vrcp.pop %v950
        %v952 = vmul.f32 %v947, %v951
        %v953 = vpack.c.bf16 %v952, %v952
        %954 = vrot.lane.b32.xlu0 %v891, 64
        %v955 = vpop.permute.xlu0 %954
        %v957 = vsel %vm895, %v953, 0
        %vm959 = vcmask 1043456
        %v961 = vsel %vm959, %v955, 0
        %963 = vmatprep.subr.bf16.mxu0 0
        %964 = vmatpush1.bf16.msra.mxu0 %v961
        %965 = vmatprep.subr.bf16.mxu0 0
        %966 = vmatpush1.bf16.msra.mxu0 0
        %967 = vmatprep.subr.bf16.mxu0 0
        %968 = vmatpush1.bf16.msra.mxu0 0
        %969 = vmatprep.subr.bf16.mxu0 0
        %970 = vmatpush1.bf16.msra.mxu0 0
        %971 = vmatprep.subr.bf16.mxu0 0
        %972 = vmatpush1.bf16.msra.mxu0 0
        %973 = vmatprep.subr.bf16.mxu0 0
        %974 = vmatpush1.bf16.msra.mxu0 0
        %975 = vmatprep.subr.bf16.mxu0 0
        %976 = vmatpush1.bf16.msra.mxu0 0
        %977 = vmatprep.subr.bf16.mxu0 0
        %978 = vmatpush1.bf16.msra.mxu0 0
        %979 = vmatprep.subr.bf16.mxu0 0
        %980 = vmatpush1.bf16.msra.mxu0 0
        %981 = vmatprep.subr.bf16.mxu0 0
        %982 = vmatpush1.bf16.msra.mxu0 0
        %983 = vmatprep.subr.bf16.mxu0 0
        %984 = vmatpush1.bf16.msra.mxu0 0
        %985 = vmatprep.subr.bf16.mxu0 0
        %986 = vmatpush1.bf16.msra.mxu0 0
        %987 = vmatprep.subr.bf16.mxu0 0
        %988 = vmatpush1.bf16.msra.mxu0 0
        %989 = vmatprep.subr.bf16.mxu0 0
        %990 = vmatpush1.bf16.msra.mxu0 0
        %991 = vmatprep.subr.bf16.mxu0 0
        %992 = vmatpush1.bf16.msra.mxu0 0
        %993 = vmatprep.subr.bf16.mxu0 0
        %994 = vmatpush1.bf16.msra.mxu0 0
        %995 = vmatprep.mubr.bf16.mxu0 0
        %996 = vmatmul.mubr.bf16.gmra.mrb[0].mxu0 %v957
        %v997 = vpop.f32.mrb[0].mxu0
        %v998 = vadd.f32 0.0, %v997
        %v999 = vpop.f32.mrb[0].mxu0
        %v1000 = vpop.f32.mrb[0].mxu0
        %v1001 = vpop.f32.mrb[0].mxu0
        %1002 = vdwg.mxu0
        %1004 = vrot.lane.b32.xlu0 %v890, 120
        %v1005 = vpop.permute.xlu0 %1004
        %1006 = vrot.lane.b32.xlu0 %v891, 88
        %v1007 = vpop.permute.xlu0 %1006
        %v1009 = vsel %vm895, %v1005, 0
        %v1012 = vsel %vm895, %v1007, 0
        %1014 = vmatprep.subr.bf16.mxu0 0
        %1015 = vmatpush1.bf16.xpose.msra.mxu0 %v1012
        %1016 = vmatprep.subr.bf16.mxu0 0
        %1017 = vmatpush1.bf16.xpose.msra.mxu0 0
        %1018 = vmatprep.subr.bf16.mxu0 0
        %1019 = vmatpush1.bf16.xpose.msra.mxu0 0
        %1020 = vmatprep.subr.bf16.mxu0 0
        %1021 = vmatpush1.bf16.xpose.msra.mxu0 0
        %1022 = vmatprep.subr.bf16.mxu0 0
        %1023 = vmatpush1.bf16.xpose.msra.mxu0 0
        %1024 = vmatprep.subr.bf16.mxu0 0
        %1025 = vmatpush1.bf16.xpose.msra.mxu0 0
        %1026 = vmatprep.subr.bf16.mxu0 0
        %1027 = vmatpush1.bf16.xpose.msra.mxu0 0
        %1028 = vmatprep.subr.bf16.mxu0 0
        %1029 = vmatpush1.bf16.xpose.msra.mxu0 0
        %1030 = vmatprep.subr.bf16.mxu0 0
        %1031 = vmatpush1.bf16.xpose.msra.mxu0 0
        %1032 = vmatprep.subr.bf16.mxu0 0
        %1033 = vmatpush1.bf16.xpose.msra.mxu0 0
        %1034 = vmatprep.subr.bf16.mxu0 0
        %1035 = vmatpush1.bf16.xpose.msra.mxu0 0
        %1036 = vmatprep.subr.bf16.mxu0 0
        %1037 = vmatpush1.bf16.xpose.msra.mxu0 0
        %1038 = vmatprep.subr.bf16.mxu0 0
        %1039 = vmatpush1.bf16.xpose.msra.mxu0 0
        %1040 = vmatprep.subr.bf16.mxu0 0
        %1041 = vmatpush1.bf16.xpose.msra.mxu0 0
        %1042 = vmatprep.subr.bf16.mxu0 0
        %1043 = vmatpush1.bf16.xpose.msra.mxu0 0
        %1044 = vmatprep.subr.bf16.mxu0 0
        %1045 = vmatpush1.bf16.xpose.msra.mxu0 0
        %1046 = vmatprep.mubr.bf16.mxu0 0
        %1047 = vmatmul.mubr.bf16.gmra.mrb[0].mxu0 %v1009
        %v1048 = vpop.f32.mrb[0].mxu0
        %v1049 = vadd.f32 0.0, %v1048
        %v1050 = vpop.f32.mrb[0].mxu0
        %v1051 = vpop.f32.mrb[0].mxu0
        %v1052 = vpop.f32.mrb[0].mxu0
        %1053 = vdwg.mxu0
        %v1054 = vsel %vm895, %v1049, -inf
        %1055 = vmax.xlane.f32.xlu0 %v1054
        %v1056 = vpop.xlane.xlu0 %1055
        %v1057 = vsub.f32 %v1049, %v1056
        %v1058 = vmul.f32 %v1057, 1.442695
        %v1059 = vpow.pop %v1058
        %v1060 = vsel %vm895, %v1059, 0.0
        %1061 = vadd.xlane.f32.xlu0 %v1060
        %v1062 = vpop.xlane.xlu0 %1061
        %v1063 = vrcp.pop %v1062
        %v1064 = vmul.f32 %v1059, %v1063
        %v1065 = vpack.c.bf16 %v1064, %v1064
        %1066 = vrot.lane.b32.xlu0 %v891, 56
        %v1067 = vpop.permute.xlu0 %1066
        %v1069 = vsel %vm895, %v1065, 0
        %v1072 = vsel %vm959, %v1067, 0
        %1074 = vmatprep.subr.bf16.mxu0 0
        %1075 = vmatpush1.bf16.msra.mxu0 %v1072
        %1076 = vmatprep.subr.bf16.mxu0 0
        %1077 = vmatpush1.bf16.msra.mxu0 0
        %1078 = vmatprep.subr.bf16.mxu0 0
        %1079 = vmatpush1.bf16.msra.mxu0 0
        %1080 = vmatprep.subr.bf16.mxu0 0
        %1081 = vmatpush1.bf16.msra.mxu0 0
        %1082 = vmatprep.subr.bf16.mxu0 0
        %1083 = vmatpush1.bf16.msra.mxu0 0
        %1084 = vmatprep.subr.bf16.mxu0 0
        %1085 = vmatpush1.bf16.msra.mxu0 0
        %1086 = vmatprep.subr.bf16.mxu0 0
        %1087 = vmatpush1.bf16.msra.mxu0 0
        %1088 = vmatprep.subr.bf16.mxu0 0
        %1089 = vmatpush1.bf16.msra.mxu0 0
        %1090 = vmatprep.subr.bf16.mxu0 0
        %1091 = vmatpush1.bf16.msra.mxu0 0
        %1092 = vmatprep.subr.bf16.mxu0 0
        %1093 = vmatpush1.bf16.msra.mxu0 0
        %1094 = vmatprep.subr.bf16.mxu0 0
        %1095 = vmatpush1.bf16.msra.mxu0 0
        %1096 = vmatprep.subr.bf16.mxu0 0
        %1097 = vmatpush1.bf16.msra.mxu0 0
        %1098 = vmatprep.subr.bf16.mxu0 0
        %1099 = vmatpush1.bf16.msra.mxu0 0
        %1100 = vmatprep.subr.bf16.mxu0 0
        %1101 = vmatpush1.bf16.msra.mxu0 0
        %1102 = vmatprep.subr.bf16.mxu0 0
        %1103 = vmatpush1.bf16.msra.mxu0 0
        %1104 = vmatprep.subr.bf16.mxu0 0
        %1105 = vmatpush1.bf16.msra.mxu0 0
        %1106 = vmatprep.mubr.bf16.mxu0 0
        %1107 = vmatmul.mubr.bf16.gmra.mrb[0].mxu0 %v1069
        %v1108 = vpop.f32.mrb[0].mxu0
        %v1109 = vadd.f32 0.0, %v1108
        %v1110 = vpop.f32.mrb[0].mxu0
        %v1111 = vpop.f32.mrb[0].mxu0
        %v1112 = vpop.f32.mrb[0].mxu0
        %1113 = vdwg.mxu0
        %1114 = vrot.lane.b32.xlu0 %v890, 112
        %v1115 = vpop.permute.xlu0 %1114
        %1116 = vrot.lane.b32.xlu0 %v891, 80
        %v1117 = vpop.permute.xlu0 %1116
        %v1119 = vsel %vm895, %v1115, 0
        %v1122 = vsel %vm895, %v1117, 0
        %1124 = vmatprep.subr.bf16.mxu0 0
        %1125 = vmatpush1.bf16.xpose.msra.mxu0 %v1122
        %1126 = vmatprep.subr.bf16.mxu0 0
        %1127 = vmatpush1.bf16.xpose.msra.mxu0 0
        %1128 = vmatprep.subr.bf16.mxu0 0
        %1129 = vmatpush1.bf16.xpose.msra.mxu0 0
        %1130 = vmatprep.subr.bf16.mxu0 0
        %1131 = vmatpush1.bf16.xpose.msra.mxu0 0
        %1132 = vmatprep.subr.bf16.mxu0 0
        %1133 = vmatpush1.bf16.xpose.msra.mxu0 0
        %1134 = vmatprep.subr.bf16.mxu0 0
        %1135 = vmatpush1.bf16.xpose.msra.mxu0 0
        %1136 = vmatprep.subr.bf16.mxu0 0
        %1137 = vmatpush1.bf16.xpose.msra.mxu0 0
        %1138 = vmatprep.subr.bf16.mxu0 0
        %1139 = vmatpush1.bf16.xpose.msra.mxu0 0
        %1140 = vmatprep.subr.bf16.mxu0 0
        %1141 = vmatpush1.bf16.xpose.msra.mxu0 0
        %1142 = vmatprep.subr.bf16.mxu0 0
        %1143 = vmatpush1.bf16.xpose.msra.mxu0 0
        %1144 = vmatprep.subr.bf16.mxu0 0
        %1145 = vmatpush1.bf16.xpose.msra.mxu0 0
        %1146 = vmatprep.subr.bf16.mxu0 0
        %1147 = vmatpush1.bf16.xpose.msra.mxu0 0
        %1148 = vmatprep.subr.bf16.mxu0 0
        %1149 = vmatpush1.bf16.xpose.msra.mxu0 0
        %1150 = vmatprep.subr.bf16.mxu0 0
        %1151 = vmatpush1.bf16.xpose.msra.mxu0 0
        %1152 = vmatprep.subr.bf16.mxu0 0
        %1153 = vmatpush1.bf16.xpose.msra.mxu0 0
        %1154 = vmatprep.subr.bf16.mxu0 0
        %1155 = vmatpush1.bf16.xpose.msra.mxu0 0
        %1156 = vmatprep.mubr.bf16.mxu0 0
        %1157 = vmatmul.mubr.bf16.gmra.mrb[0].mxu0 %v1119
        %v1158 = vpop.f32.mrb[0].mxu0
        %v1159 = vadd.f32 0.0, %v1158
        %v1160 = vpop.f32.mrb[0].mxu0
        %v1161 = vpop.f32.mrb[0].mxu0
        %v1162 = vpop.f32.mrb[0].mxu0
        %1163 = vdwg.mxu0
        %v1164 = vsel %vm895, %v1159, -inf
        %1165 = vmax.xlane.f32.xlu0 %v1164
        %v1166 = vpop.xlane.xlu0 %1165
        %v1167 = vsub.f32 %v1159, %v1166
        %v1168 = vmul.f32 %v1167, 1.442695
        %v1169 = vpow.pop %v1168
        %v1170 = vsel %vm895, %v1169, 0.0
        %1171 = vadd.xlane.f32.xlu0 %v1170
        %v1172 = vpop.xlane.xlu0 %1171
        %v1173 = vrcp.pop %v1172
        %v1174 = vmul.f32 %v1169, %v1173
        %v1175 = vpack.c.bf16 %v1174, %v1174
        %1176 = vrot.lane.b32.xlu0 %v891, 48
        %v1177 = vpop.permute.xlu0 %1176
        %v1179 = vsel %vm895, %v1175, 0
        %v1182 = vsel %vm959, %v1177, 0
        %1184 = vmatprep.subr.bf16.mxu0 0
        %1185 = vmatpush1.bf16.msra.mxu0 %v1182
        %1186 = vmatprep.subr.bf16.mxu0 0
        %1187 = vmatpush1.bf16.msra.mxu0 0
        %1188 = vmatprep.subr.bf16.mxu0 0
        %1189 = vmatpush1.bf16.msra.mxu0 0
        %1190 = vmatprep.subr.bf16.mxu0 0
        %1191 = vmatpush1.bf16.msra.mxu0 0
        %1192 = vmatprep.subr.bf16.mxu0 0
        %1193 = vmatpush1.bf16.msra.mxu0 0
        %1194 = vmatprep.subr.bf16.mxu0 0
        %1195 = vmatpush1.bf16.msra.mxu0 0
        %1196 = vmatprep.subr.bf16.mxu0 0
        %1197 = vmatpush1.bf16.msra.mxu0 0
        %1198 = vmatprep.subr.bf16.mxu0 0
        %1199 = vmatpush1.bf16.msra.mxu0 0
        %1200 = vmatprep.subr.bf16.mxu0 0
        %1201 = vmatpush1.bf16.msra.mxu0 0
        %1202 = vmatprep.subr.bf16.mxu0 0
        %1203 = vmatpush1.bf16.msra.mxu0 0
        %1204 = vmatprep.subr.bf16.mxu0 0
        %1205 = vmatpush1.bf16.msra.mxu0 0
        %1206 = vmatprep.subr.bf16.mxu0 0
        %1207 = vmatpush1.bf16.msra.mxu0 0
        %1208 = vmatprep.subr.bf16.mxu0 0
        %1209 = vmatpush1.bf16.msra.mxu0 0
        %1210 = vmatprep.subr.bf16.mxu0 0
        %1211 = vmatpush1.bf16.msra.mxu0 0
        %1212 = vmatprep.subr.bf16.mxu0 0
        %1213 = vmatpush1.bf16.msra.mxu0 0
        %1214 = vmatprep.subr.bf16.mxu0 0
        %1215 = vmatpush1.bf16.msra.mxu0 0
        %1216 = vmatprep.mubr.bf16.mxu0 0
        %1217 = vmatmul.mubr.bf16.gmra.mrb[0].mxu0 %v1179
        %v1218 = vpop.f32.mrb[0].mxu0
        %v1219 = vadd.f32 0.0, %v1218
        %v1220 = vpop.f32.mrb[0].mxu0
        %v1221 = vpop.f32.mrb[0].mxu0
        %v1222 = vpop.f32.mrb[0].mxu0
        %1223 = vdwg.mxu0
        %1224 = vrot.lane.b32.xlu0 %v890, 104
        %v1225 = vpop.permute.xlu0 %1224
        %1226 = vrot.lane.b32.xlu0 %v891, 72
        %v1227 = vpop.permute.xlu0 %1226
        %v1229 = vsel %vm895, %v1225, 0
        %v1232 = vsel %vm895, %v1227, 0
        %1234 = vmatprep.subr.bf16.mxu0 0
        %1235 = vmatpush1.bf16.xpose.msra.mxu0 %v1232
        %1236 = vmatprep.subr.bf16.mxu0 0
        %1237 = vmatpush1.bf16.xpose.msra.mxu0 0
        %1238 = vmatprep.subr.bf16.mxu0 0
        %1239 = vmatpush1.bf16.xpose.msra.mxu0 0
        %1240 = vmatprep.subr.bf16.mxu0 0
        %1241 = vmatpush1.bf16.xpose.msra.mxu0 0
        %1242 = vmatprep.subr.bf16.mxu0 0
        %1243 = vmatpush1.bf16.xpose.msra.mxu0 0
        %1244 = vmatprep.subr.bf16.mxu0 0
        %1245 = vmatpush1.bf16.xpose.msra.mxu0 0
        %1246 = vmatprep.subr.bf16.mxu0 0
        %1247 = vmatpush1.bf16.xpose.msra.mxu0 0
        %1248 = vmatprep.subr.bf16.mxu0 0
        %1249 = vmatpush1.bf16.xpose.msra.mxu0 0
        %1250 = vmatprep.subr.bf16.mxu0 0
        %1251 = vmatpush1.bf16.xpose.msra.mxu0 0
        %1252 = vmatprep.subr.bf16.mxu0 0
        %1253 = vmatpush1.bf16.xpose.msra.mxu0 0
        %1254 = vmatprep.subr.bf16.mxu0 0
        %1255 = vmatpush1.bf16.xpose.msra.mxu0 0
        %1256 = vmatprep.subr.bf16.mxu0 0
        %1257 = vmatpush1.bf16.xpose.msra.mxu0 0
        %1258 = vmatprep.subr.bf16.mxu0 0
        %1259 = vmatpush1.bf16.xpose.msra.mxu0 0
        %1260 = vmatprep.subr.bf16.mxu0 0
        %1261 = vmatpush1.bf16.xpose.msra.mxu0 0
        %1262 = vmatprep.subr.bf16.mxu0 0
        %1263 = vmatpush1.bf16.xpose.msra.mxu0 0
        %1264 = vmatprep.subr.bf16.mxu0 0
        %1265 = vmatpush1.bf16.xpose.msra.mxu0 0
        %1266 = vmatprep.mubr.bf16.mxu0 0
        %1267 = vmatmul.mubr.bf16.gmra.mrb[0].mxu0 %v1229
        %v1268 = vpop.f32.mrb[0].mxu0
        %v1269 = vadd.f32 0.0, %v1268
        %v1270 = vpop.f32.mrb[0].mxu0
        %v1271 = vpop.f32.mrb[0].mxu0
        %v1272 = vpop.f32.mrb[0].mxu0
        %1273 = vdwg.mxu0
        %v1274 = vsel %vm895, %v1269, -inf
        %1275 = vmax.xlane.f32.xlu0 %v1274
        %v1276 = vpop.xlane.xlu0 %1275
        %v1277 = vsub.f32 %v1269, %v1276
        %v1278 = vmul.f32 %v1277, 1.442695
        %v1279 = vpow.pop %v1278
        %v1280 = vsel %vm895, %v1279, 0.0
        %1281 = vadd.xlane.f32.xlu0 %v1280
        %v1282 = vpop.xlane.xlu0 %1281
        %v1283 = vrcp.pop %v1282
        %v1284 = vmul.f32 %v1279, %v1283
        %v1285 = vpack.c.bf16 %v1284, %v1284
        %1286 = vrot.lane.b32.xlu0 %v891, 40
        %v1287 = vpop.permute.xlu0 %1286
        %v1289 = vsel %vm895, %v1285, 0
        %v1292 = vsel %vm959, %v1287, 0
        %1294 = vmatprep.subr.bf16.mxu0 0
        %1295 = vmatpush1.bf16.msra.mxu0 %v1292
        %1296 = vmatprep.subr.bf16.mxu0 0
        %1297 = vmatpush1.bf16.msra.mxu0 0
        %1298 = vmatprep.subr.bf16.mxu0 0
        %1299 = vmatpush1.bf16.msra.mxu0 0
        %1300 = vmatprep.subr.bf16.mxu0 0
        %1301 = vmatpush1.bf16.msra.mxu0 0
        %1302 = vmatprep.subr.bf16.mxu0 0
        %1303 = vmatpush1.bf16.msra.mxu0 0
        %1304 = vmatprep.subr.bf16.mxu0 0
        %1305 = vmatpush1.bf16.msra.mxu0 0
        %1306 = vmatprep.subr.bf16.mxu0 0
        %1307 = vmatpush1.bf16.msra.mxu0 0
        %1308 = vmatprep.subr.bf16.mxu0 0
        %1309 = vmatpush1.bf16.msra.mxu0 0
        %1310 = vmatprep.subr.bf16.mxu0 0
        %1311 = vmatpush1.bf16.msra.mxu0 0
        %1312 = vmatprep.subr.bf16.mxu0 0
        %1313 = vmatpush1.bf16.msra.mxu0 0
        %1314 = vmatprep.subr.bf16.mxu0 0
        %1315 = vmatpush1.bf16.msra.mxu0 0
        %1316 = vmatprep.subr.bf16.mxu0 0
        %1317 = vmatpush1.bf16.msra.mxu0 0
        %1318 = vmatprep.subr.bf16.mxu0 0
        %1319 = vmatpush1.bf16.msra.mxu0 0
        %1320 = vmatprep.subr.bf16.mxu0 0
        %1321 = vmatpush1.bf16.msra.mxu0 0
        %1322 = vmatprep.subr.bf16.mxu0 0
        %1323 = vmatpush1.bf16.msra.mxu0 0
        %1324 = vmatprep.subr.bf16.mxu0 0
        %1325 = vmatpush1.bf16.msra.mxu0 0
        %1326 = vmatprep.mubr.bf16.mxu0 0
        %1327 = vmatmul.mubr.bf16.gmra.mrb[0].mxu0 %v1289
        %v1328 = vpop.f32.mrb[0].mxu0
        %v1329 = vadd.f32 0.0, %v1328
        %v1330 = vpop.f32.mrb[0].mxu0
        %v1331 = vpop.f32.mrb[0].mxu0
        %v1332 = vpop.f32.mrb[0].mxu0
        %1333 = vdwg.mxu0
        %1335 = vrot.lane.b32.xlu0 %v1109, 8
        %v1336 = vpop.permute.xlu0 %1335
        %1339 = vrot.lane.b32.xlu0 %v1219, 16
        %v1340 = vpop.permute.xlu0 %1339
        %1343 = vrot.lane.b32.xlu0 %v1329, 24
        %v1344 = vpop.permute.xlu0 %1343
        %v1346 = vsel %vm895, %v998, %v1336
        %vm1347 = vcmask 130048
        %v1348 = vsel %vm1347, %v1346, %v1340
        %vm1349 = vcmask 195584
        %v1350 = vsel %vm1349, %v1348, %v1344
        %v1351 = vld [vmem:[%s6] sm:$0xf]
        %v1352 = vld [vmem:[%s6 + $0x4] sm:$0xf]
        %v1353 = vld [vmem:[%s6 + $0x8] sm:$0xf]
        %v1354 = vld [vmem:[%s6 + $0xc] sm:$0xf]
        %v1355 = vpack.c.bf16 %v1350, %v1350
        %v1360 = vunpack.c.l.b16 %v1351
        %v1361 = vunpack.c.l.b16 %v1352
        %v1362 = vunpack.c.l.b16 %v1353
        %v1363 = vunpack.c.l.b16 %v1354
        %v1364 = vpack.c.b16 %v1361, %v1360
        %v1365 = vpack.c.b16 %v1363, %v1362
        %v1369 = vsel %vm793, %v1355, 0
        %1371 = vmatprep.subr.bf16.mxu0 0
        %1372 = vmatpush1.bf16.msra.mxu0 %v1364
        %1373 = vmatprep.subr.bf16.mxu0 0
        %1374 = vmatpush1.bf16.msra.mxu0 %v1365
        %1375 = vmatprep.subr.bf16.mxu0 0
        %1376 = vmatpush1.bf16.msra.mxu0 0
        %1377 = vmatprep.subr.bf16.mxu0 0
        %1378 = vmatpush1.bf16.msra.mxu0 0
        %1379 = vmatprep.subr.bf16.mxu0 0
        %1380 = vmatpush1.bf16.msra.mxu0 0
        %1381 = vmatprep.subr.bf16.mxu0 0
        %1382 = vmatpush1.bf16.msra.mxu0 0
        %1383 = vmatprep.subr.bf16.mxu0 0
        %1384 = vmatpush1.bf16.msra.mxu0 0
        %1385 = vmatprep.subr.bf16.mxu0 0
        %1386 = vmatpush1.bf16.msra.mxu0 0
        %1387 = vmatprep.subr.bf16.mxu0 0
        %1388 = vmatpush1.bf16.msra.mxu0 0
        %1389 = vmatprep.subr.bf16.mxu0 0
        %1390 = vmatpush1.bf16.msra.mxu0 0
        %1391 = vmatprep.subr.bf16.mxu0 0
        %1392 = vmatpush1.bf16.msra.mxu0 0
        %1393 = vmatprep.subr.bf16.mxu0 0
        %1394 = vmatpush1.bf16.msra.mxu0 0
        %1395 = vmatprep.subr.bf16.mxu0 0
        %1396 = vmatpush1.bf16.msra.mxu0 0
        %1397 = vmatprep.subr.bf16.mxu0 0
        %1398 = vmatpush1.bf16.msra.mxu0 0
        %1399 = vmatprep.subr.bf16.mxu0 0
        %1400 = vmatpush1.bf16.msra.mxu0 0
        %1401 = vmatprep.subr.bf16.mxu0 0
        %1402 = vmatpush1.bf16.msra.mxu0 0
        %1403 = vmatprep.mubr.bf16.mxu0 0
        %1404 = vmatmul.mubr.bf16.gmra.mrb[0].mxu0 %v1369
        %v1405 = vpop.f32.mrb[0].mxu0
        %v1406 = vadd.f32 0.0, %v1405
        %v1407 = vpop.f32.mrb[0].mxu0
        %v1408 = vpop.f32.mrb[0].mxu0
        %v1409 = vpop.f32.mrb[0].mxu0
        %1410 = vdwg.mxu0
        %v1411 = vadd.f32 %v789, %v1406
        %v1412 = vld [vmem:[%s7] sm:$0x1]
        %v1414 = vlaneseq
        %v1415 = vshrl.u32 %v1414, 7
        %v1416 = vsub.s32 0, %v1415
        %v1417 = vrot.slane %v1412, %v1416
        %v1419 = vadd.f32 %v1411, %v1417
        %v1420 = vld [vmem:[%s8] sm:$0x1]
        %v1421 = vld [vmem:[%s9] sm:$0x1]
        %v1422 = vsel %vm793, %v1419, 0.0
        %1423 = vadd.xlane.f32.xlu0 %v1422
        %v1424 = vpop.xlane.xlu0 %1423
        %v1425 = vmul.f32 %v1424, %v797
        %v1426 = vsub.f32 %v1419, %v1425
        %v1427 = vmul.f32 %v1426, %v1426
        %v1428 = vsel %vm793, %v1427, 0.0
        %1429 = vadd.xlane.f32.xlu0 %v1428
        %v1430 = vpop.xlane.xlu0 %1429
        %v1431 = vmul.f32 %v1430, %v797
        %v1432 = vadd.f32 %v1431, 1e-05
        %v1433 = vrsqrt.pop %v1432
        %v1434 = vmul.f32 %v1426, %v1433
        %v1436 = vlaneseq
        %v1437 = vshrl.u32 %v1436, 7
        %v1438 = vsub.s32 0, %v1437
        %v1439 = vrot.slane %v1420, %v1438
        %v1441 = vmul.f32 %v1434, %v1439
        %v1443 = vlaneseq
        %v1444 = vshrl.u32 %v1443, 7
        %v1445 = vsub.s32 0, %v1444
        %v1446 = vrot.slane %v1421, %v1445
        %v1448 = vadd.f32 %v1441, %v1446
        %v1449 = vld [vmem:[%s10] sm:$0xf]
        %v1450 = vld [vmem:[%s10 + $0x4] sm:$0xf]
        %v1451 = vld [vmem:[%s10 + $0x8] sm:$0xf]
        %v1452 = vld [vmem:[%s10 + $0xc] sm:$0xf]
        %v1453 = vpack.c.bf16 %v1448, %v1448
        %v1454 = vld [vmem:[%s11] sm:$0x1]
        %v1456 = vlaneseq
        %v1457 = vshrl.u32 %v1456, 7
        %v1458 = vsub.s32 0, %v1457
        %v1459 = vrot.slane %v1454, %v1458
        %v1465 = vunpack.c.l.b16 %v1449
        %v1466 = vunpack.c.l.b16 %v1450
        %v1467 = vunpack.c.l.b16 %v1451
        %v1468 = vunpack.c.l.b16 %v1452
        %v1469 = vpack.c.b16 %v1466, %v1465
        %v1470 = vpack.c.b16 %v1468, %v1467
        %v1474 = vsel %vm793, %v1453, 0
        %1476 = vmatprep.subr.bf16.mxu0 0
        %1477 = vmatpush1.bf16.msra.mxu0 %v1469
        %1478 = vmatprep.subr.bf16.mxu0 0
        %1479 = vmatpush1.bf16.msra.mxu0 %v1470
        %1480 = vmatprep.subr.bf16.mxu0 0
        %1481 = vmatpush1.bf16.msra.mxu0 0
        %1482 = vmatprep.subr.bf16.mxu0 0
        %1483 = vmatpush1.bf16.msra.mxu0 0
        %1484 = vmatprep.subr.bf16.mxu0 0
        %1485 = vmatpush1.bf16.msra.mxu0 0
        %1486 = vmatprep.subr.bf16.mxu0 0
        %1487 = vmatpush1.bf16.msra.mxu0 0
        %1488 = vmatprep.subr.bf16.mxu0 0
        %1489 = vmatpush1.bf16.msra.mxu0 0
        %1490 = vmatprep.subr.bf16.mxu0 0
        %1491 = vmatpush1.bf16.msra.mxu0 0
        %1492 = vmatprep.subr.bf16.mxu0 0
        %1493 = vmatpush1.bf16.msra.mxu0 0
        %1494 = vmatprep.subr.bf16.mxu0 0
        %1495 = vmatpush1.bf16.msra.mxu0 0
        %1496 = vmatprep.subr.bf16.mxu0 0
        %1497 = vmatpush1.bf16.msra.mxu0 0
        %1498 = vmatprep.subr.bf16.mxu0 0
        %1499 = vmatpush1.bf16.msra.mxu0 0
        %1500 = vmatprep.subr.bf16.mxu0 0
        %1501 = vmatpush1.bf16.msra.mxu0 0
        %1502 = vmatprep.subr.bf16.mxu0 0
        %1503 = vmatpush1.bf16.msra.mxu0 0
        %1504 = vmatprep.subr.bf16.mxu0 0
        %1505 = vmatpush1.bf16.msra.mxu0 0
        %1506 = vmatprep.subr.bf16.mxu0 0
        %1507 = vmatpush1.bf16.msra.mxu0 0
        %1508 = vmatprep.mubr.bf16.mxu0 0
        %1509 = vmatmul.mubr.bf16.gmra.mrb[0].mxu0 %v1474
        %v1510 = vpop.f32.mrb[0].mxu0
        %v1511 = vadd.f32 %v1459, %v1510
        %v1512 = vpop.f32.mrb[0].mxu0
        %v1513 = vpop.f32.mrb[0].mxu0
        %v1514 = vpop.f32.mrb[0].mxu0
        %1515 = vdwg.mxu0
        %v1516 = vld [vmem:[%s12] sm:$0xf]
        %v1517 = vld [vmem:[%s12 + $0x4] sm:$0xf]
        %v1518 = vld [vmem:[%s12 + $0x8] sm:$0xf]
        %v1519 = vld [vmem:[%s12 + $0xc] sm:$0xf]
        %v1520 = vpack.c.bf16 %v790, %v790
        %v1521 = vld [vmem:[%s13] sm:$0x1]
        %v1523 = vlaneseq
        %v1524 = vshrl.u32 %v1523, 7
        %v1525 = vsub.s32 0, %v1524
        %v1526 = vrot.slane %v1521, %v1525
        %v1532 = vunpack.c.l.b16 %v1516
        %v1533 = vunpack.c.l.b16 %v1517
        %v1534 = vunpack.c.l.b16 %v1518
        %v1535 = vunpack.c.l.b16 %v1519
        %v1536 = vpack.c.b16 %v1533, %v1532
        %v1537 = vpack.c.b16 %v1535, %v1534
        %v1541 = vsel %vm793, %v1520, 0
        %1543 = vmatprep.subr.bf16.mxu0 0
        %1544 = vmatpush1.bf16.msra.mxu0 %v1536
        %1545 = vmatprep.subr.bf16.mxu0 0
        %1546 = vmatpush1.bf16.msra.mxu0 %v1537
        %1547 = vmatprep.subr.bf16.mxu0 0
        %1548 = vmatpush1.bf16.msra.mxu0 0
        %1549 = vmatprep.subr.bf16.mxu0 0
        %1550 = vmatpush1.bf16.msra.mxu0 0
        %1551 = vmatprep.subr.bf16.mxu0 0
        %1552 = vmatpush1.bf16.msra.mxu0 0
        %1553 = vmatprep.subr.bf16.mxu0 0
        %1554 = vmatpush1.bf16.msra.mxu0 0
        %1555 = vmatprep.subr.bf16.mxu0 0
        %1556 = vmatpush1.bf16.msra.mxu0 0
        %1557 = vmatprep.subr.bf16.mxu0 0
        %1558 = vmatpush1.bf16.msra.mxu0 0
        %1559 = vmatprep.subr.bf16.mxu0 0
        %1560 = vmatpush1.bf16.msra.mxu0 0
        %1561 = vmatprep.subr.bf16.mxu0 0
        %1562 = vmatpush1.bf16.msra.mxu0 0
        %1563 = vmatprep.subr.bf16.mxu0 0
        %1564 = vmatpush1.bf16.msra.mxu0 0
        %1565 = vmatprep.subr.bf16.mxu0 0
        %1566 = vmatpush1.bf16.msra.mxu0 0
        %1567 = vmatprep.subr.bf16.mxu0 0
        %1568 = vmatpush1.bf16.msra.mxu0 0
        %1569 = vmatprep.subr.bf16.mxu0 0
        %1570 = vmatpush1.bf16.msra.mxu0 0
        %1571 = vmatprep.subr.bf16.mxu0 0
        %1572 = vmatpush1.bf16.msra.mxu0 0
        %1573 = vmatprep.subr.bf16.mxu0 0
        %1574 = vmatpush1.bf16.msra.mxu0 0
        %1575 = vmatprep.mubr.bf16.mxu0 0
        %1576 = vmatmul.mubr.bf16.gmra.mrb[0].mxu0 %v1541
        %v1577 = vpop.f32.mrb[0].mxu0
        %v1578 = vadd.f32 %v1526, %v1577
        %v1579 = vpop.f32.mrb[0].mxu0
        %v1580 = vpop.f32.mrb[0].mxu0
        %v1581 = vpop.f32.mrb[0].mxu0
        %1582 = vdwg.mxu0
        %v1583 = vmul.f32 %v1511, 0.35355338
        %v1584 = vpack.c.bf16 %v1583, %v1583
        %v1585 = vpack.c.bf16 %v1578, %v1578
        %v1587 = vsel %vm895, %v1584, 0
        %v1590 = vsel %vm895, %v1585, 0
        %1592 = vmatprep.subr.bf16.mxu0 0
        %1593 = vmatpush1.bf16.xpose.msra.mxu0 %v1590
        %1594 = vmatprep.subr.bf16.mxu0 0
        %1595 = vmatpush1.bf16.xpose.msra.mxu0 0
        %1596 = vmatprep.subr.bf16.mxu0 0
        %1597 = vmatpush1.bf16.xpose.msra.mxu0 0
        %1598 = vmatprep.subr.bf16.mxu0 0
        %1599 = vmatpush1.bf16.xpose.msra.mxu0 0
        %1600 = vmatprep.subr.bf16.mxu0 0
        %1601 = vmatpush1.bf16.xpose.msra.mxu0 0
        %1602 = vmatprep.subr.bf16.mxu0 0
        %1603 = vmatpush1.bf16.xpose.msra.mxu0 0
        %1604 = vmatprep.subr.bf16.mxu0 0
        %1605 = vmatpush1.bf16.xpose.msra.mxu0 0
        %1606 = vmatprep.subr.bf16.mxu0 0
        %1607 = vmatpush1.bf16.xpose.msra.mxu0 0
        %1608 = vmatprep.subr.bf16.mxu0 0
        %1609 = vmatpush1.bf16.xpose.msra.mxu0 0
        %1610 = vmatprep.subr.bf16.mxu0 0
        %1611 = vmatpush1.bf16.xpose.msra.mxu0 0
        %1612 = vmatprep.subr.bf16.mxu0 0
        %1613 = vmatpush1.bf16.xpose.msra.mxu0 0
        %1614 = vmatprep.subr.bf16.mxu0 0
        %1615 = vmatpush1.bf16.xpose.msra.mxu0 0
        %1616 = vmatprep.subr.bf16.mxu0 0
        %1617 = vmatpush1.bf16.xpose.msra.mxu0 0
        %1618 = vmatprep.subr.bf16.mxu0 0
        %1619 = vmatpush1.bf16.xpose.msra.mxu0 0
        %1620 = vmatprep.subr.bf16.mxu0 0
        %1621 = vmatpush1.bf16.xpose.msra.mxu0 0
        %1622 = vmatprep.subr.bf16.mxu0 0
        %1623 = vmatpush1.bf16.xpose.msra.mxu0 0
        %1624 = vmatprep.mubr.bf16.mxu0 0
        %1625 = vmatmul.mubr.bf16.gmra.mrb[0].mxu0 %v1587
        %v1626 = vpop.f32.mrb[0].mxu0
        %v1627 = vadd.f32 0.0, %v1626
        %v1628 = vpop.f32.mrb[0].mxu0
        %v1629 = vpop.f32.mrb[0].mxu0
        %v1630 = vpop.f32.mrb[0].mxu0
        %1631 = vdwg.mxu0
        %v1632 = vsel %vm895, %v1627, -inf
        %1633 = vmax.xlane.f32.xlu0 %v1632
        %v1634 = vpop.xlane.xlu0 %1633
        %v1635 = vsub.f32 %v1627, %v1634
        %v1636 = vmul.f32 %v1635, 1.442695
        %v1637 = vpow.pop %v1636
        %v1638 = vsel %vm895, %v1637, 0.0
        %1639 = vadd.xlane.f32.xlu0 %v1638
        %v1640 = vpop.xlane.xlu0 %1639
        %v1641 = vrcp.pop %v1640
        %v1642 = vmul.f32 %v1637, %v1641
        %v1643 = vpack.c.bf16 %v1642, %v1642
        %1645 = vrot.lane.b32.xlu0 %v1585, 96
        %v1646 = vpop.permute.xlu0 %1645
        %v1648 = vsel %vm895, %v1643, 0
        %v1651 = vsel %vm959, %v1646, 0
        %1653 = vmatprep.subr.bf16.mxu0 0
        %1654 = vmatpush1.bf16.msra.mxu0 %v1651
        %1655 = vmatprep.subr.bf16.mxu0 0
        %1656 = vmatpush1.bf16.msra.mxu0 0
        %1657 = vmatprep.subr.bf16.mxu0 0
        %1658 = vmatpush1.bf16.msra.mxu0 0
        %1659 = vmatprep.subr.bf16.mxu0 0
        %1660 = vmatpush1.bf16.msra.mxu0 0
        %1661 = vmatprep.subr.bf16.mxu0 0
        %1662 = vmatpush1.bf16.msra.mxu0 0
        %1663 = vmatprep.subr.bf16.mxu0 0
        %1664 = vmatpush1.bf16.msra.mxu0 0
        %1665 = vmatprep.subr.bf16.mxu0 0
        %1666 = vmatpush1.bf16.msra.mxu0 0
        %1667 = vmatprep.subr.bf16.mxu0 0
        %1668 = vmatpush1.bf16.msra.mxu0 0
        %1669 = vmatprep.subr.bf16.mxu0 0
        %1670 = vmatpush1.bf16.msra.mxu0 0
        %1671 = vmatprep.subr.bf16.mxu0 0
        %1672 = vmatpush1.bf16.msra.mxu0 0
        %1673 = vmatprep.subr.bf16.mxu0 0
        %1674 = vmatpush1.bf16.msra.mxu0 0
        %1675 = vmatprep.subr.bf16.mxu0 0
        %1676 = vmatpush1.bf16.msra.mxu0 0
        %1677 = vmatprep.subr.bf16.mxu0 0
        %1678 = vmatpush1.bf16.msra.mxu0 0
        %1679 = vmatprep.subr.bf16.mxu0 0
        %1680 = vmatpush1.bf16.msra.mxu0 0
        %1681 = vmatprep.subr.bf16.mxu0 0
        %1682 = vmatpush1.bf16.msra.mxu0 0
        %1683 = vmatprep.subr.bf16.mxu0 0
        %1684 = vmatpush1.bf16.msra.mxu0 0
        %1685 = vmatprep.mubr.bf16.mxu0 0
        %1686 = vmatmul.mubr.bf16.gmra.mrb[0].mxu0 %v1648
        %v1687 = vpop.f32.mrb[0].mxu0
        %v1688 = vadd.f32 0.0, %v1687
        %v1689 = vpop.f32.mrb[0].mxu0
        %v1690 = vpop.f32.mrb[0].mxu0
        %v1691 = vpop.f32.mrb[0].mxu0
        %1692 = vdwg.mxu0
        %1694 = vrot.lane.b32.xlu0 %v1584, 120
        %v1695 = vpop.permute.xlu0 %1694
        %1696 = vrot.lane.b32.xlu0 %v1585, 120
        %v1697 = vpop.permute.xlu0 %1696
        %v1699 = vsel %vm895, %v1695, 0
        %v1702 = vsel %vm895, %v1697, 0
        %1704 = vmatprep.subr.bf16.mxu0 0
        %1705 = vmatpush1.bf16.xpose.msra.mxu0 %v1702
        %1706 = vmatprep.subr.bf16.mxu0 0
        %1707 = vmatpush1.bf16.xpose.msra.mxu0 0
        %1708 = vmatprep.subr.bf16.mxu0 0
        %1709 = vmatpush1.bf16.xpose.msra.mxu0 0
        %1710 = vmatprep.subr.bf16.mxu0 0
        %1711 = vmatpush1.bf16.xpose.msra.mxu0 0
        %1712 = vmatprep.subr.bf16.mxu0 0
        %1713 = vmatpush1.bf16.xpose.msra.mxu0 0
        %1714 = vmatprep.subr.bf16.mxu0 0
        %1715 = vmatpush1.bf16.xpose.msra.mxu0 0
        %1716 = vmatprep.subr.bf16.mxu0 0
        %1717 = vmatpush1.bf16.xpose.msra.mxu0 0
        %1718 = vmatprep.subr.bf16.mxu0 0
        %1719 = vmatpush1.bf16.xpose.msra.mxu0 0
        %1720 = vmatprep.subr.bf16.mxu0 0
        %1721 = vmatpush1.bf16.xpose.msra.mxu0 0
        %1722 = vmatprep.subr.bf16.mxu0 0
        %1723 = vmatpush1.bf16.xpose.msra.mxu0 0
        %1724 = vmatprep.subr.bf16.mxu0 0
        %1725 = vmatpush1.bf16.xpose.msra.mxu0 0
        %1726 = vmatprep.subr.bf16.mxu0 0
        %1727 = vmatpush1.bf16.xpose.msra.mxu0 0
        %1728 = vmatprep.subr.bf16.mxu0 0
        %1729 = vmatpush1.bf16.xpose.msra.mxu0 0
        %1730 = vmatprep.subr.bf16.mxu0 0
        %1731 = vmatpush1.bf16.xpose.msra.mxu0 0
        %1732 = vmatprep.subr.bf16.mxu0 0
        %1733 = vmatpush1.bf16.xpose.msra.mxu0 0
        %1734 = vmatprep.subr.bf16.mxu0 0
        %1735 = vmatpush1.bf16.xpose.msra.mxu0 0
        %1736 = vmatprep.mubr.bf16.mxu0 0
        %1737 = vmatmul.mubr.bf16.gmra.mrb[0].mxu0 %v1699
        %v1738 = vpop.f32.mrb[0].mxu0
        %v1739 = vadd.f32 0.0, %v1738
        %v1740 = vpop.f32.mrb[0].mxu0
        %v1741 = vpop.f32.mrb[0].mxu0
        %v1742 = vpop.f32.mrb[0].mxu0
        %1743 = vdwg.mxu0
        %v1744 = vsel %vm895, %v1739, -inf
        %1745 = vmax.xlane.f32.xlu0 %v1744
        %v1746 = vpop.xlane.xlu0 %1745
        %v1747 = vsub.f32 %v1739, %v1746
        %v1748 = vmul.f32 %v1747, 1.442695
        %v1749 = vpow.pop %v1748
        %v1750 = vsel %vm895, %v1749, 0.0
        %1751 = vadd.xlane.f32.xlu0 %v1750
        %v1752 = vpop.xlane.xlu0 %1751
        %v1753 = vrcp.pop %v1752
        %v1754 = vmul.f32 %v1749, %v1753
        %v1755 = vpack.c.bf16 %v1754, %v1754
        %1756 = vrot.lane.b32.xlu0 %v1585, 88
        %v1757 = vpop.permute.xlu0 %1756
        %v1759 = vsel %vm895, %v1755, 0
        %v1762 = vsel %vm959, %v1757, 0
        %1764 = vmatprep.subr.bf16.mxu0 0
        %1765 = vmatpush1.bf16.msra.mxu0 %v1762
        %1766 = vmatprep.subr.bf16.mxu0 0
        %1767 = vmatpush1.bf16.msra.mxu0 0
        %1768 = vmatprep.subr.bf16.mxu0 0
        %1769 = vmatpush1.bf16.msra.mxu0 0
        %1770 = vmatprep.subr.bf16.mxu0 0
        %1771 = vmatpush1.bf16.msra.mxu0 0
        %1772 = vmatprep.subr.bf16.mxu0 0
        %1773 = vmatpush1.bf16.msra.mxu0 0
        %1774 = vmatprep.subr.bf16.mxu0 0
        %1775 = vmatpush1.bf16.msra.mxu0 0
        %1776 = vmatprep.subr.bf16.mxu0 0
        %1777 = vmatpush1.bf16.msra.mxu0 0
        %1778 = vmatprep.subr.bf16.mxu0 0
        %1779 = vmatpush1.bf16.msra.mxu0 0
        %1780 = vmatprep.subr.bf16.mxu0 0
        %1781 = vmatpush1.bf16.msra.mxu0 0
        %1782 = vmatprep.subr.bf16.mxu0 0
        %1783 = vmatpush1.bf16.msra.mxu0 0
        %1784 = vmatprep.subr.bf16.mxu0 0
        %1785 = vmatpush1.bf16.msra.mxu0 0
        %1786 = vmatprep.subr.bf16.mxu0 0
        %1787 = vmatpush1.bf16.msra.mxu0 0
        %1788 = vmatprep.subr.bf16.mxu0 0
        %1789 = vmatpush1.bf16.msra.mxu0 0
        %1790 = vmatprep.subr.bf16.mxu0 0
        %1791 = vmatpush1.bf16.msra.mxu0 0
        %1792 = vmatprep.subr.bf16.mxu0 0
        %1793 = vmatpush1.bf16.msra.mxu0 0
        %1794 = vmatprep.subr.bf16.mxu0 0
        %1795 = vmatpush1.bf16.msra.mxu0 0
        %1796 = vmatprep.mubr.bf16.mxu0 0
        %1797 = vmatmul.mubr.bf16.gmra.mrb[0].mxu0 %v1759
        %v1798 = vpop.f32.mrb[0].mxu0
        %v1799 = vadd.f32 0.0, %v1798
        %v1800 = vpop.f32.mrb[0].mxu0
        %v1801 = vpop.f32.mrb[0].mxu0
        %v1802 = vpop.f32.mrb[0].mxu0
        %1803 = vdwg.mxu0
        %1804 = vrot.lane.b32.xlu0 %v1584, 112
        %v1805 = vpop.permute.xlu0 %1804
        %1806 = vrot.lane.b32.xlu0 %v1585, 112
        %v1807 = vpop.permute.xlu0 %1806
        %v1809 = vsel %vm895, %v1805, 0
        %v1812 = vsel %vm895, %v1807, 0
        %1814 = vmatprep.subr.bf16.mxu0 0
        %1815 = vmatpush1.bf16.xpose.msra.mxu0 %v1812
        %1816 = vmatprep.subr.bf16.mxu0 0
        %1817 = vmatpush1.bf16.xpose.msra.mxu0 0
        %1818 = vmatprep.subr.bf16.mxu0 0
        %1819 = vmatpush1.bf16.xpose.msra.mxu0 0
        %1820 = vmatprep.subr.bf16.mxu0 0
        %1821 = vmatpush1.bf16.xpose.msra.mxu0 0
        %1822 = vmatprep.subr.bf16.mxu0 0
        %1823 = vmatpush1.bf16.xpose.msra.mxu0 0
        %1824 = vmatprep.subr.bf16.mxu0 0
        %1825 = vmatpush1.bf16.xpose.msra.mxu0 0
        %1826 = vmatprep.subr.bf16.mxu0 0
        %1827 = vmatpush1.bf16.xpose.msra.mxu0 0
        %1828 = vmatprep.subr.bf16.mxu0 0
        %1829 = vmatpush1.bf16.xpose.msra.mxu0 0
        %1830 = vmatprep.subr.bf16.mxu0 0
        %1831 = vmatpush1.bf16.xpose.msra.mxu0 0
        %1832 = vmatprep.subr.bf16.mxu0 0
        %1833 = vmatpush1.bf16.xpose.msra.mxu0 0
        %1834 = vmatprep.subr.bf16.mxu0 0
        %1835 = vmatpush1.bf16.xpose.msra.mxu0 0
        %1836 = vmatprep.subr.bf16.mxu0 0
        %1837 = vmatpush1.bf16.xpose.msra.mxu0 0
        %1838 = vmatprep.subr.bf16.mxu0 0
        %1839 = vmatpush1.bf16.xpose.msra.mxu0 0
        %1840 = vmatprep.subr.bf16.mxu0 0
        %1841 = vmatpush1.bf16.xpose.msra.mxu0 0
        %1842 = vmatprep.subr.bf16.mxu0 0
        %1843 = vmatpush1.bf16.xpose.msra.mxu0 0
        %1844 = vmatprep.subr.bf16.mxu0 0
        %1845 = vmatpush1.bf16.xpose.msra.mxu0 0
        %1846 = vmatprep.mubr.bf16.mxu0 0
        %1847 = vmatmul.mubr.bf16.gmra.mrb[0].mxu0 %v1809
        %v1848 = vpop.f32.mrb[0].mxu0
        %v1849 = vadd.f32 0.0, %v1848
        %v1850 = vpop.f32.mrb[0].mxu0
        %v1851 = vpop.f32.mrb[0].mxu0
        %v1852 = vpop.f32.mrb[0].mxu0
        %1853 = vdwg.mxu0
        %v1854 = vsel %vm895, %v1849, -inf
        %1855 = vmax.xlane.f32.xlu0 %v1854
        %v1856 = vpop.xlane.xlu0 %1855
        %v1857 = vsub.f32 %v1849, %v1856
        %v1858 = vmul.f32 %v1857, 1.442695
        %v1859 = vpow.pop %v1858
        %v1860 = vsel %vm895, %v1859, 0.0
        %1861 = vadd.xlane.f32.xlu0 %v1860
        %v1862 = vpop.xlane.xlu0 %1861
        %v1863 = vrcp.pop %v1862
        %v1864 = vmul.f32 %v1859, %v1863
        %v1865 = vpack.c.bf16 %v1864, %v1864
        %1866 = vrot.lane.b32.xlu0 %v1585, 80
        %v1867 = vpop.permute.xlu0 %1866
        %v1869 = vsel %vm895, %v1865, 0
        %v1872 = vsel %vm959, %v1867, 0
        %1874 = vmatprep.subr.bf16.mxu0 0
        %1875 = vmatpush1.bf16.msra.mxu0 %v1872
        %1876 = vmatprep.subr.bf16.mxu0 0
        %1877 = vmatpush1.bf16.msra.mxu0 0
        %1878 = vmatprep.subr.bf16.mxu0 0
        %1879 = vmatpush1.bf16.msra.mxu0 0
        %1880 = vmatprep.subr.bf16.mxu0 0
        %1881 = vmatpush1.bf16.msra.mxu0 0
        %1882 = vmatprep.subr.bf16.mxu0 0
        %1883 = vmatpush1.bf16.msra.mxu0 0
        %1884 = vmatprep.subr.bf16.mxu0 0
        %1885 = vmatpush1.bf16.msra.mxu0 0
        %1886 = vmatprep.subr.bf16.mxu0 0
        %1887 = vmatpush1.bf16.msra.mxu0 0
        %1888 = vmatprep.subr.bf16.mxu0 0
        %1889 = vmatpush1.bf16.msra.mxu0 0
        %1890 = vmatprep.subr.bf16.mxu0 0
        %1891 = vmatpush1.bf16.msra.mxu0 0
        %1892 = vmatprep.subr.bf16.mxu0 0
        %1893 = vmatpush1.bf16.msra.mxu0 0
        %1894 = vmatprep.subr.bf16.mxu0 0
        %1895 = vmatpush1.bf16.msra.mxu0 0
        %1896 = vmatprep.subr.bf16.mxu0 0
        %1897 = vmatpush1.bf16.msra.mxu0 0
        %1898 = vmatprep.subr.bf16.mxu0 0
        %1899 = vmatpush1.bf16.msra.mxu0 0
        %1900 = vmatprep.subr.bf16.mxu0 0
        %1901 = vmatpush1.bf16.msra.mxu0 0
        %1902 = vmatprep.subr.bf16.mxu0 0
        %1903 = vmatpush1.bf16.msra.mxu0 0
        %1904 = vmatprep.subr.bf16.mxu0 0
        %1905 = vmatpush1.bf16.msra.mxu0 0
        %1906 = vmatprep.mubr.bf16.mxu0 0
        %1907 = vmatmul.mubr.bf16.gmra.mrb[0].mxu0 %v1869
        %v1908 = vpop.f32.mrb[0].mxu0
        %v1909 = vadd.f32 0.0, %v1908
        %v1910 = vpop.f32.mrb[0].mxu0
        %v1911 = vpop.f32.mrb[0].mxu0
        %v1912 = vpop.f32.mrb[0].mxu0
        %1913 = vdwg.mxu0
        %1914 = vrot.lane.b32.xlu0 %v1584, 104
        %v1915 = vpop.permute.xlu0 %1914
        %1916 = vrot.lane.b32.xlu0 %v1585, 104
        %v1917 = vpop.permute.xlu0 %1916
        %v1919 = vsel %vm895, %v1915, 0
        %v1922 = vsel %vm895, %v1917, 0
        %1924 = vmatprep.subr.bf16.mxu0 0
        %1925 = vmatpush1.bf16.xpose.msra.mxu0 %v1922
        %1926 = vmatprep.subr.bf16.mxu0 0
        %1927 = vmatpush1.bf16.xpose.msra.mxu0 0
        %1928 = vmatprep.subr.bf16.mxu0 0
        %1929 = vmatpush1.bf16.xpose.msra.mxu0 0
        %1930 = vmatprep.subr.bf16.mxu0 0
        %1931 = vmatpush1.bf16.xpose.msra.mxu0 0
        %1932 = vmatprep.subr.bf16.mxu0 0
        %1933 = vmatpush1.bf16.xpose.msra.mxu0 0
        %1934 = vmatprep.subr.bf16.mxu0 0
        %1935 = vmatpush1.bf16.xpose.msra.mxu0 0
        %1936 = vmatprep.subr.bf16.mxu0 0
        %1937 = vmatpush1.bf16.xpose.msra.mxu0 0
        %1938 = vmatprep.subr.bf16.mxu0 0
        %1939 = vmatpush1.bf16.xpose.msra.mxu0 0
        %1940 = vmatprep.subr.bf16.mxu0 0
        %1941 = vmatpush1.bf16.xpose.msra.mxu0 0
        %1942 = vmatprep.subr.bf16.mxu0 0
        %1943 = vmatpush1.bf16.xpose.msra.mxu0 0
        %1944 = vmatprep.subr.bf16.mxu0 0
        %1945 = vmatpush1.bf16.xpose.msra.mxu0 0
        %1946 = vmatprep.subr.bf16.mxu0 0
        %1947 = vmatpush1.bf16.xpose.msra.mxu0 0
        %1948 = vmatprep.subr.bf16.mxu0 0
        %1949 = vmatpush1.bf16.xpose.msra.mxu0 0
        %1950 = vmatprep.subr.bf16.mxu0 0
        %1951 = vmatpush1.bf16.xpose.msra.mxu0 0
        %1952 = vmatprep.subr.bf16.mxu0 0
        %1953 = vmatpush1.bf16.xpose.msra.mxu0 0
        %1954 = vmatprep.subr.bf16.mxu0 0
        %1955 = vmatpush1.bf16.xpose.msra.mxu0 0
        %1956 = vmatprep.mubr.bf16.mxu0 0
        %1957 = vmatmul.mubr.bf16.gmra.mrb[0].mxu0 %v1919
        %v1958 = vpop.f32.mrb[0].mxu0
        %v1959 = vadd.f32 0.0, %v1958
        %v1960 = vpop.f32.mrb[0].mxu0
        %v1961 = vpop.f32.mrb[0].mxu0
        %v1962 = vpop.f32.mrb[0].mxu0
        %1963 = vdwg.mxu0
        %v1964 = vsel %vm895, %v1959, -inf
        %1965 = vmax.xlane.f32.xlu0 %v1964
        %v1966 = vpop.xlane.xlu0 %1965
        %v1967 = vsub.f32 %v1959, %v1966
        %v1968 = vmul.f32 %v1967, 1.442695
        %v1969 = vpow.pop %v1968
        %v1970 = vsel %vm895, %v1969, 0.0
        %1971 = vadd.xlane.f32.xlu0 %v1970
        %v1972 = vpop.xlane.xlu0 %1971
        %v1973 = vrcp.pop %v1972
        %v1974 = vmul.f32 %v1969, %v1973
        %v1975 = vpack.c.bf16 %v1974, %v1974
        %1976 = vrot.lane.b32.xlu0 %v1585, 72
        %v1977 = vpop.permute.xlu0 %1976
        %v1979 = vsel %vm895, %v1975, 0
        %v1982 = vsel %vm959, %v1977, 0
        %1984 = vmatprep.subr.bf16.mxu0 0
        %1985 = vmatpush1.bf16.msra.mxu0 %v1982
        %1986 = vmatprep.subr.bf16.mxu0 0
        %1987 = vmatpush1.bf16.msra.mxu0 0
        %1988 = vmatprep.subr.bf16.mxu0 0
        %1989 = vmatpush1.bf16.msra.mxu0 0
        %1990 = vmatprep.subr.bf16.mxu0 0
        %1991 = vmatpush1.bf16.msra.mxu0 0
        %1992 = vmatprep.subr.bf16.mxu0 0
        %1993 = vmatpush1.bf16.msra.mxu0 0
        %1994 = vmatprep.subr.bf16.mxu0 0
        %1995 = vmatpush1.bf16.msra.mxu0 0
        %1996 = vmatprep.subr.bf16.mxu0 0
        %1997 = vmatpush1.bf16.msra.mxu0 0
        %1998 = vmatprep.subr.bf16.mxu0 0
        %1999 = vmatpush1.bf16.msra.mxu0 0
        %2000 = vmatprep.subr.bf16.mxu0 0
        %2001 = vmatpush1.bf16.msra.mxu0 0
        %2002 = vmatprep.subr.bf16.mxu0 0
        %2003 = vmatpush1.bf16.msra.mxu0 0
        %2004 = vmatprep.subr.bf16.mxu0 0
        %2005 = vmatpush1.bf16.msra.mxu0 0
        %2006 = vmatprep.subr.bf16.mxu0 0
        %2007 = vmatpush1.bf16.msra.mxu0 0
        %2008 = vmatprep.subr.bf16.mxu0 0
        %2009 = vmatpush1.bf16.msra.mxu0 0
        %2010 = vmatprep.subr.bf16.mxu0 0
        %2011 = vmatpush1.bf16.msra.mxu0 0
        %2012 = vmatprep.subr.bf16.mxu0 0
        %2013 = vmatpush1.bf16.msra.mxu0 0
        %2014 = vmatprep.subr.bf16.mxu0 0
        %2015 = vmatpush1.bf16.msra.mxu0 0
        %2016 = vmatprep.mubr.bf16.mxu0 0
        %2017 = vmatmul.mubr.bf16.gmra.mrb[0].mxu0 %v1979
        %v2018 = vpop.f32.mrb[0].mxu0
        %v2019 = vadd.f32 0.0, %v2018
        %v2020 = vpop.f32.mrb[0].mxu0
        %v2021 = vpop.f32.mrb[0].mxu0
        %v2022 = vpop.f32.mrb[0].mxu0
        %2023 = vdwg.mxu0
        %2025 = vrot.lane.b32.xlu0 %v1799, 8
        %v2026 = vpop.permute.xlu0 %2025
        %2029 = vrot.lane.b32.xlu0 %v1909, 16
        %v2030 = vpop.permute.xlu0 %2029
        %2033 = vrot.lane.b32.xlu0 %v2019, 24
        %v2034 = vpop.permute.xlu0 %2033
        %v2036 = vsel %vm895, %v1688, %v2026
        %v2037 = vsel %vm1347, %v2036, %v2030
        %v2038 = vsel %vm1349, %v2037, %v2034
        %v2039 = vld [vmem:[%s14] sm:$0xf]
        %v2040 = vld [vmem:[%s14 + $0x4] sm:$0xf]
        %v2041 = vld [vmem:[%s14 + $0x8] sm:$0xf]
        %v2042 = vld [vmem:[%s14 + $0xc] sm:$0xf]
        %v2043 = vpack.c.bf16 %v2038, %v2038
        %v2048 = vunpack.c.l.b16 %v2039
        %v2049 = vunpack.c.l.b16 %v2040
        %v2050 = vunpack.c.l.b16 %v2041
        %v2051 = vunpack.c.l.b16 %v2042
        %v2052 = vpack.c.b16 %v2049, %v2048
        %v2053 = vpack.c.b16 %v2051, %v2050
        %v2057 = vsel %vm793, %v2043, 0
        %2059 = vmatprep.subr.bf16.mxu0 0
        %2060 = vmatpush1.bf16.msra.mxu0 %v2052
        %2061 = vmatprep.subr.bf16.mxu0 0
        %2062 = vmatpush1.bf16.msra.mxu0 %v2053
        %2063 = vmatprep.subr.bf16.mxu0 0
        %2064 = vmatpush1.bf16.msra.mxu0 0
        %2065 = vmatprep.subr.bf16.mxu0 0
        %2066 = vmatpush1.bf16.msra.mxu0 0
        %2067 = vmatprep.subr.bf16.mxu0 0
        %2068 = vmatpush1.bf16.msra.mxu0 0
        %2069 = vmatprep.subr.bf16.mxu0 0
        %2070 = vmatpush1.bf16.msra.mxu0 0
        %2071 = vmatprep.subr.bf16.mxu0 0
        %2072 = vmatpush1.bf16.msra.mxu0 0
        %2073 = vmatprep.subr.bf16.mxu0 0
        %2074 = vmatpush1.bf16.msra.mxu0 0
        %2075 = vmatprep.subr.bf16.mxu0 0
        %2076 = vmatpush1.bf16.msra.mxu0 0
        %2077 = vmatprep.subr.bf16.mxu0 0
        %2078 = vmatpush1.bf16.msra.mxu0 0
        %2079 = vmatprep.subr.bf16.mxu0 0
        %2080 = vmatpush1.bf16.msra.mxu0 0
        %2081 = vmatprep.subr.bf16.mxu0 0
        %2082 = vmatpush1.bf16.msra.mxu0 0
        %2083 = vmatprep.subr.bf16.mxu0 0
        %2084 = vmatpush1.bf16.msra.mxu0 0
        %2085 = vmatprep.subr.bf16.mxu0 0
        %2086 = vmatpush1.bf16.msra.mxu0 0
        %2087 = vmatprep.subr.bf16.mxu0 0
        %2088 = vmatpush1.bf16.msra.mxu0 0
        %2089 = vmatprep.subr.bf16.mxu0 0
        %2090 = vmatpush1.bf16.msra.mxu0 0
        %2091 = vmatprep.mubr.bf16.mxu0 0
        %2092 = vmatmul.mubr.bf16.gmra.mrb[0].mxu0 %v2057
        %v2093 = vpop.f32.mrb[0].mxu0
        %v2094 = vadd.f32 0.0, %v2093
        %v2095 = vpop.f32.mrb[0].mxu0
        %v2096 = vpop.f32.mrb[0].mxu0
        %v2097 = vpop.f32.mrb[0].mxu0
        %2098 = vdwg.mxu0
        %v2099 = vadd.f32 %v1419, %v2094
        %v2100 = vld [vmem:[%s15] sm:$0x1]
        %v2102 = vlaneseq
        %v2103 = vshrl.u32 %v2102, 7
        %v2104 = vsub.s32 0, %v2103
        %v2105 = vrot.slane %v2100, %v2104
        %v2107 = vadd.f32 %v2099, %v2105
        %v2108 = vld [vmem:[%s16] sm:$0x1]
        %v2109 = vld [vmem:[#allocation2] sm:$0x1]
        %v2110 = vsel %vm793, %v2107, 0.0
        %2111 = vadd.xlane.f32.xlu0 %v2110
        %v2112 = vpop.xlane.xlu0 %2111
        %v2113 = vmul.f32 %v2112, %v797
        %v2114 = vsub.f32 %v2107, %v2113
        %v2115 = vmul.f32 %v2114, %v2114
        %v2116 = vsel %vm793, %v2115, 0.0
        %2117 = vadd.xlane.f32.xlu0 %v2116
        %v2118 = vpop.xlane.xlu0 %2117
        %v2119 = vmul.f32 %v2118, %v797
        %v2120 = vadd.f32 %v2119, 1e-05
        %v2121 = vrsqrt.pop %v2120
        %v2122 = vmul.f32 %v2114, %v2121
        %v2124 = vlaneseq
        %v2125 = vshrl.u32 %v2124, 7
        %v2126 = vsub.s32 0, %v2125
        %v2127 = vrot.slane %v2108, %v2126
        %v2129 = vmul.f32 %v2122, %v2127
        %v2131 = vlaneseq
        %v2132 = vshrl.u32 %v2131, 7
        %v2133 = vsub.s32 0, %v2132
        %v2134 = vrot.slane %v2109, %v2133
        %v2136 = vadd.f32 %v2129, %v2134
        %v2137 = vld [vmem:[%s18] sm:$0xf]
        %v2138 = vld [vmem:[%s18 + $0x4] sm:$0xf]
        %v2139 = vld [vmem:[%s18 + $0x8] sm:$0xf]
        %v2140 = vld [vmem:[%s18 + $0xc] sm:$0xf]
        %v2141 = vpack.c.bf16 %v2136, %v2136
        %v2142 = vld [vmem:[#allocation5] sm:$0x1]
        %v2144 = vlaneseq
        %v2145 = vshrl.u32 %v2144, 7
        %v2146 = vsub.s32 0, %v2145
        %v2147 = vrot.slane %v2142, %v2146
        %v2153 = vunpack.c.l.b16 %v2137
        %v2154 = vunpack.c.l.b16 %v2138
        %v2155 = vunpack.c.l.b16 %v2139
        %v2156 = vunpack.c.l.b16 %v2140
        %v2157 = vpack.c.b16 %v2154, %v2153
        %v2158 = vpack.c.b16 %v2156, %v2155
        %v2162 = vsel %vm793, %v2141, 0
        %2164 = vmatprep.subr.bf16.mxu0 0
        %2165 = vmatpush1.bf16.msra.mxu0 %v2157
        %2166 = vmatprep.subr.bf16.mxu0 0
        %2167 = vmatpush1.bf16.msra.mxu0 %v2158
        %2168 = vmatprep.subr.bf16.mxu0 0
        %2169 = vmatpush1.bf16.msra.mxu0 0
        %2170 = vmatprep.subr.bf16.mxu0 0
        %2171 = vmatpush1.bf16.msra.mxu0 0
        %2172 = vmatprep.subr.bf16.mxu0 0
        %2173 = vmatpush1.bf16.msra.mxu0 0
        %2174 = vmatprep.subr.bf16.mxu0 0
        %2175 = vmatpush1.bf16.msra.mxu0 0
        %2176 = vmatprep.subr.bf16.mxu0 0
        %2177 = vmatpush1.bf16.msra.mxu0 0
        %2178 = vmatprep.subr.bf16.mxu0 0
        %2179 = vmatpush1.bf16.msra.mxu0 0
        %2180 = vmatprep.subr.bf16.mxu0 0
        %2181 = vmatpush1.bf16.msra.mxu0 0
        %2182 = vmatprep.subr.bf16.mxu0 0
        %2183 = vmatpush1.bf16.msra.mxu0 0
        %2184 = vmatprep.subr.bf16.mxu0 0
        %2185 = vmatpush1.bf16.msra.mxu0 0
        %2186 = vmatprep.subr.bf16.mxu0 0
        %2187 = vmatpush1.bf16.msra.mxu0 0
        %2188 = vmatprep.subr.bf16.mxu0 0
        %2189 = vmatpush1.bf16.msra.mxu0 0
        %2190 = vmatprep.subr.bf16.mxu0 0
        %2191 = vmatpush1.bf16.msra.mxu0 0
        %2192 = vmatprep.subr.bf16.mxu0 0
        %2193 = vmatpush1.bf16.msra.mxu0 0
        %2194 = vmatprep.subr.bf16.mxu0 0
        %2195 = vmatpush1.bf16.msra.mxu0 0
        %2196 = vmatprep.mubr.bf16.mxu0 0
        %2197 = vmatmul.mubr.bf16.gmra.mrb[0].mxu0 %v2162
        %v2198 = vpop.f32.mrb[0].mxu0
        %v2199 = vadd.f32 %v2147, %v2198
        %v2200 = vpop.f32.mrb[0].mxu0
        %v2201 = vpop.f32.mrb[0].mxu0
        %v2202 = vpop.f32.mrb[0].mxu0
        %2203 = vdwg.mxu0
        %v2204 = vmax.f32 %v2199, 0.0
        %v2205 = vld [vmem:[%s20] sm:$0xf]
        %v2206 = vld [vmem:[%s20 + $0x4] sm:$0xf]
        %v2207 = vld [vmem:[%s20 + $0x8] sm:$0xf]
        %v2208 = vld [vmem:[%s20 + $0xc] sm:$0xf]
        %v2209 = vld [vmem:[%s20 + $0x10] sm:$0xf]
        %v2210 = vld [vmem:[%s20 + $0x14] sm:$0xf]
        %v2211 = vld [vmem:[%s20 + $0x18] sm:$0xf]
        %v2212 = vld [vmem:[%s20 + $0x1c] sm:$0xf]
        %v2213 = vpack.c.bf16 %v2204, %v2204
        %v2222 = vunpack.c.l.b16 %v2205
        %v2223 = vunpack.c.l.b16 %v2206
        %v2224 = vunpack.c.l.b16 %v2207
        %v2225 = vunpack.c.l.b16 %v2208
        %v2226 = vunpack.c.l.b16 %v2209
        %v2227 = vunpack.c.l.b16 %v2210
        %v2228 = vunpack.c.l.b16 %v2211
        %v2229 = vunpack.c.l.b16 %v2212
        %v2230 = vpack.c.b16 %v2223, %v2222
        %v2231 = vpack.c.b16 %v2225, %v2224
        %v2232 = vpack.c.b16 %v2227, %v2226
        %v2233 = vpack.c.b16 %v2229, %v2228
        %vm2238 = vcmask 523264
        %v2240 = vsel %vm2238, %v2213, 0
        %2242 = vmatprep.subr.bf16.mxu0 0
        %2243 = vmatpush1.bf16.msra.mxu0 %v2230
        %2244 = vmatprep.subr.bf16.mxu0 0
        %2245 = vmatpush1.bf16.msra.mxu0 %v2231
        %2246 = vmatprep.subr.bf16.mxu0 0
        %2247 = vmatpush1.bf16.msra.mxu0 %v2232
        %2248 = vmatprep.subr.bf16.mxu0 0
        %2249 = vmatpush1.bf16.msra.mxu0 %v2233
        %2250 = vmatprep.subr.bf16.mxu0 0
        %2251 = vmatpush1.bf16.msra.mxu0 0
        %2252 = vmatprep.subr.bf16.mxu0 0
        %2253 = vmatpush1.bf16.msra.mxu0 0
        %2254 = vmatprep.subr.bf16.mxu0 0
        %2255 = vmatpush1.bf16.msra.mxu0 0
        %2256 = vmatprep.subr.bf16.mxu0 0
        %2257 = vmatpush1.bf16.msra.mxu0 0
        %2258 = vmatprep.subr.bf16.mxu0 0
        %2259 = vmatpush1.bf16.msra.mxu0 0
        %2260 = vmatprep.subr.bf16.mxu0 0
        %2261 = vmatpush1.bf16.msra.mxu0 0
        %2262 = vmatprep.subr.bf16.mxu0 0
        %2263 = vmatpush1.bf16.msra.mxu0 0
        %2264 = vmatprep.subr.bf16.mxu0 0
        %2265 = vmatpush1.bf16.msra.mxu0 0
        %2266 = vmatprep.subr.bf16.mxu0 0
        %2267 = vmatpush1.bf16.msra.mxu0 0
        %2268 = vmatprep.subr.bf16.mxu0 0
        %2269 = vmatpush1.bf16.msra.mxu0 0
        %2270 = vmatprep.subr.bf16.mxu0 0
        %2271 = vmatpush1.bf16.msra.mxu0 0
        %2272 = vmatprep.subr.bf16.mxu0 0
        %2273 = vmatpush1.bf16.msra.mxu0 0
        %2274 = vmatprep.mubr.bf16.mxu0 0
        %2275 = vmatmul.mubr.bf16.gmra.mrb[0].mxu0 %v2240
        %v2276 = vpop.f32.mrb[0].mxu0
        %v2277 = vadd.f32 0.0, %v2276
        %v2278 = vpop.f32.mrb[0].mxu0
        %v2279 = vpop.f32.mrb[0].mxu0
        %v2280 = vpop.f32.mrb[0].mxu0
        %2281 = vdwg.mxu0
        %v2282 = vadd.f32 %v2107, %v2277
        %v2283 = vld [vmem:[#allocation7] sm:$0x1]
        %v2285 = vlaneseq
        %v2286 = vshrl.u32 %v2285, 7
        %v2287 = vsub.s32 0, %v2286
        %v2288 = vrot.slane %v2283, %v2287
        %v2290 = vadd.f32 %v2282, %v2288
        %v2291 = vld [vmem:[%s22] sm:$0x1]
        %v2292 = vld [vmem:[%s23] sm:$0x1]
        %v2293 = vsel %vm793, %v2290, 0.0
        %2294 = vadd.xlane.f32.xlu0 %v2293
        %v2295 = vpop.xlane.xlu0 %2294
        %v2296 = vmul.f32 %v2295, %v797
        %v2297 = vsub.f32 %v2290, %v2296
        %v2298 = vmul.f32 %v2297, %v2297
        %v2299 = vsel %vm793, %v2298, 0.0
        %2300 = vadd.xlane.f32.xlu0 %v2299
        %v2301 = vpop.xlane.xlu0 %2300
        %v2302 = vmul.f32 %v2301, %v797
        %v2303 = vadd.f32 %v2302, 1e-05
        %v2304 = vrsqrt.pop %v2303
        %v2305 = vmul.f32 %v2297, %v2304
        %v2307 = vlaneseq
        %v2308 = vshrl.u32 %v2307, 7
        %v2309 = vsub.s32 0, %v2308
        %v2310 = vrot.slane %v2291, %v2309
        %v2312 = vmul.f32 %v2305, %v2310
        %v2314 = vlaneseq
        %v2315 = vshrl.u32 %v2314, 7
        %v2316 = vsub.s32 0, %v2315
        %v2317 = vrot.slane %v2292, %v2316
        %v2319 = vadd.f32 %v2312, %v2317
        %2320 = vst.msk [vmem:[%s779] sm:$0xff] %vm793, %v2319
        %s2321 = sand.u32 %s562, 1
        %s2322 = scalar_lea.sflag [#allocation4], %s2321
        %s2323 = sand.u32 %s562, 1
        %s2324 = smul.addr %s2323, 8
        %s2325 = scalar_lea.vmem [#allocation8], %s2324
        // Predicated region
        $region129: #{transformer_forward.7} parent=115 // pred_check
          %p2326 = pneg %p572
        $region130: #{transformer_forward.7} parent=115 // pred_check_branch
          %2328 = sbr.rel (%p2326) target = $region132
        $region131: #{transformer_forward.7} parent=115 // pred_region
          %s2330 = ssub.s32 128, 128
          %2331 = vsyncadd %s2322, %s2330
          %s2332 = smul.addr %s40, 128
          %s2333 = scalar_lea.hbm %s24, %s2332
          %s2335 = sshll.u32 %s2325, 4
          %s2336 = int_to_ptr.vmem [resolvable:$true] %s2335
          %2338 = dma.vmem_to_hbm [thread:$0]  %s2336, 128, %s2333, %s2322
        $region132: #{transformer_forward.7} parent=115 // pred_fallthru
          _
      $region116: #{transformer_forward.7} parent=5 // pred_fallthru
        _
      %p2339 = scmp.le.s32.totalorder 2, %s35
      // Predicated region
      $region133: #{transformer_forward.7} parent=5 // pred_check
        %p2340 = pneg %p2339
      $region134: #{transformer_forward.7} parent=5 // pred_check_branch
        %2342 = sbr.rel (%p2340) target = $region136
      $region135: #{transformer_forward.7} parent=5 // pred_region
        %s2343 = ssub.s32 %s35, 2
        // Predicated region
        $region137: #{transformer_forward.7} parent=135 // pred_check
          %p2344 = pneg %p578
        $region138: #{transformer_forward.7} parent=135 // pred_check_branch
          %2346 = sbr.rel (%p2344) target = $region140
        $region139: #{transformer_forward.7} parent=135 // pred_region
          %s2347 = sand.u32 %s563, 1
          %s2348 = scalar_lea.sflag [#allocation4], %s2347
          %s2349 = sand.u32 %s563, 1
          %s2350 = smul.addr %s2349, 8
          %s2351 = scalar_lea.vmem [#allocation8], %s2350
          %2352 = dma.done %s2348, 128
        $region140: #{transformer_forward.7} parent=135 // pred_fallthru
          _
      $region136: #{transformer_forward.7} parent=5 // pred_fallthru
        _
    $region6: #{transformer_forward.7} parent=1 // loop_footer
      %s39 = sadd.s32 1, %s35
    $region7: #{transformer_forward.7} parent=1 // loop_footer_branch
      %34 = sbr.rel target = $region3
    $region8: #{transformer_forward.7} parent=1 // loop_exit
      _
    %2353 = vsyncpa [#allocation3], 1
    %s2354 = scalar_lea.sflag [#allocation3], 1
    %2355 = vsyncpa %s2354, 1
    %2356 = vsyncpa [#allocation6], 1
    %2357 = vsyncpa [#allocation4], 1
    %s2358 = scalar_lea.sflag [#allocation4], 1
    %2359 = vsyncpa %s2358, 1

</llo_original>
